<compile_context>
chip_gen: v6e
topology: v6e:2x2x1
jax: 0.10.0
libtpu: 0.0.40
codegen_flags: <defaults>
</compile_context>

<pallas_src>
import numpy as np
import jax
import jax.numpy as jnp
from jax.experimental import pallas as pl
from jax.experimental.pallas import tpu as pltpu


MATMUL_DTYPE = jnp.bfloat16       # MXU operand dtype; accumulation stays f32
VMEM_LIMIT = 64 * 1024 * 1024     # explicit scoped-VMEM budget (<= v7x physical)


def _round_up(x, m):
    return (x + m - 1) // m * m


# ----------------------------------------------------------------------------
# LSTM kernel: masked hidden states only (vocab projection hoisted out)
# ----------------------------------------------------------------------------
def make_lstm_kernel(num_layers, hidden_p, tt, bb):
    Hp = hidden_p
    L = num_layers
    TT = tt
    BB = bb

    def kernel(*refs):
        # refs: len_ref, x_ref, L x (wx, wh, b), out_ref, h_scr, c_scr
        len_ref, x_ref = refs[0], refs[1]
        layer_refs = [tuple(refs[2 + 3 * l: 5 + 3 * l]) for l in range(L)]
        out_ref = refs[2 + 3 * L]
        h_scr, c_scr = refs[3 + 3 * L], refs[4 + 3 * L]

        # h/c persist across the sequential time axis; reset at the first
        # time block of every batch block (time axis is grid axis 1).
        @pl.when(pl.program_id(1) == 0)
        def _():
            h_scr[...] = jnp.zeros_like(h_scr)
            c_scr[...] = jnp.zeros_like(c_scr)

        t_base = pl.program_id(1) * TT
        lens = len_ref[...]                                   # (BB, 1) int32

        # Hoist state loads and bias broadcasts out of the unrolled time loop.
        h = [h_scr[l] for l in range(L)]                      # f32 (BB, Hp)
        c = [c_scr[l] for l in range(L)]                      # f32 (BB, Hp)
        b = [jnp.broadcast_to(layer_refs[l][2][...], (BB, 4 * Hp))
             for l in range(L)]                               # f32 (BB, 4Hp)

        # TT is small and static -> full unroll (scheduler visibility).
        for t in range(TT):
            m = (t_base + t) < lens                           # (BB, 1) bool
            inp_bf = x_ref[t]                                 # bf16 (BB, E)
            for l in range(L):
                wx_ref, wh_ref, _ = layer_refs[l]
                # two MXU dots (no concat), f32 accumulation
                gates = (jnp.dot(inp_bf, wx_ref[...],
                                 preferred_element_type=jnp.float32)
                         + jnp.dot(h[l].astype(MATMUL_DTYPE), wh_ref[...],
                                   preferred_element_type=jnp.float32)
                         + b[l])
                # gate order after host reorder: (i, f, o, g); Hp is a
                # multiple of 128 so every slice is vreg-aligned.
                sig = jax.nn.sigmoid(gates[:, :3 * Hp])       # one EUP pass
                i_g = sig[:, 0 * Hp:1 * Hp]
                f_g = sig[:, 1 * Hp:2 * Hp]
                o_g = sig[:, 2 * Hp:3 * Hp]
                g_g = jnp.tanh(gates[:, 3 * Hp:4 * Hp])
                c_new = f_g * c[l] + i_g * g_g
                h_new = o_g * jnp.tanh(c_new)
                # packed sequence: padded steps are not processed -> freeze
                h[l] = jnp.where(m, h_new, h[l])
                c[l] = jnp.where(m, c_new, c[l])
                inp_bf = h[l].astype(MATMUL_DTYPE)
            # pad_packed_sequence zeroes padded outputs before the Linear
            out_ref[t] = jnp.where(m, h[L - 1], 0.0).astype(out_ref.dtype)

        # single write-back of the carried state per block
        for l in range(L):
            h_scr[l] = h[l]
            c_scr[l] = c[l]

    return kernel


def lstm_forward(x_tm, lengths_i32, layers, hidden_p, tt=8):
    """x_tm: (Tp, Bp, E) bf16 time-major; lengths_i32: (Bp, 1) int32.
       layers: list of (wx (Din,4Hp) bf16, wh (Hp,4Hp) bf16, b (1,4Hp) f32)."""
    Tp, Bp, E = x_tm.shape
    Hp = hidden_p
    L = len(layers)
    assert Tp % tt == 0 and Bp % 8 == 0

    # Batch-block axis: one block at small batch; split (bf16-friendly 16-row
    # blocks) at larger batches so v7x megacore can run both TensorCores.
    bb = 16 if (Bp >= 32 and Bp % 16 == 0) else Bp

    inputs = [lengths_i32, x_tm]
    in_specs = [
        pl.BlockSpec((bb, 1), lambda bi, ti: (bi, 0)),
        pl.BlockSpec((tt, bb, E), lambda bi, ti: (ti, bi, 0)),
    ]
    for wx, wh, b in layers:
        inputs.extend([wx, wh, b])
        in_specs.append(pl.BlockSpec(wx.shape, lambda bi, ti: (0, 0)))
        in_specs.append(pl.BlockSpec(wh.shape, lambda bi, ti: (0, 0)))
        in_specs.append(pl.BlockSpec(b.shape, lambda bi, ti: (0, 0)))
    # TODO(synk): for H >= 1024 on v7x (64 MiB VMEM), single-buffer the
    # resident weights (pipeline_mode=pl.Buffered(1)) or block the 4H columns.

    out_spec = pl.BlockSpec((tt, bb, Hp), lambda bi, ti: (ti, bi, 0))

    flops = 2 * Tp * Bp * sum(int(wx.shape[0]) * int(wx.shape[1])
                              + int(wh.shape[0]) * int(wh.shape[1])
                              for wx, wh, _ in layers)
    trans = Tp * Bp * L * 5 * Hp
    bytes_accessed = (2 * int(x_tm.size) + 2 * Tp * Bp * Hp
                      + sum(2 * (int(wx.size) + int(wh.size)) + 4 * int(b.size)
                            for wx, wh, b in layers)
                      + 4 * int(lengths_i32.size))

    return pl.pallas_call(
        make_lstm_kernel(L, Hp, tt, bb),
        out_shape=jax.ShapeDtypeStruct((Tp, Bp, Hp), MATMUL_DTYPE),
        grid_spec=pltpu.PrefetchScalarGridSpec(
            num_scalar_prefetch=0,
            grid=(Bp // bb, Tp // tt),
            in_specs=in_specs,
            out_specs=out_spec,
            scratch_shapes=[
                pltpu.VMEM((L, bb, Hp), jnp.float32),   # h state (persists)
                pltpu.VMEM((L, bb, Hp), jnp.float32),   # c state (persists)
            ],
        ),
        compiler_params=pltpu.CompilerParams(
            dimension_semantics=("parallel", "arbitrary"),
            vmem_limit_bytes=VMEM_LIMIT),
        cost_estimate=pl.CostEstimate(flops=flops, transcendentals=trans,
                                      bytes_accessed=bytes_accessed),
    )(*inputs)


# ----------------------------------------------------------------------------
# Hoisted output projection: tiled matmul with single-pass weight streaming
# ----------------------------------------------------------------------------
def _linear_kernel(x_ref, w_ref, b_ref, o_ref):
    o_ref[...] = (jnp.dot(x_ref[...], w_ref[...],
                          preferred_element_type=jnp.float32) + b_ref[...])


def linear_layer(x, w, b, tn=512):
    """x: (M, K) bf16, w: (K, N) bf16, b: (N,) f32 -> (M, N) f32."""
    M, K = x.shape
    N = w.shape[1]
    tn = min(tn, _round_up(N, 128))
    Np = _round_up(N, tn)
    # Single row strip when M is small -> each (K, tn) weight tile is DMA'd
    # from HBM exactly once (the projection is HBM-bandwidth-bound).
    tm = _round_up(M, 8) if M <= 512 else 256
    Mp = _round_up(M, tm)
    xp = jnp.pad(x, ((0, Mp - M), (0, 0)))
    wp = jnp.pad(w, ((0, 0), (0, Np - N)))
    bp = jnp.pad(b.reshape(1, -1), ((0, 0), (0, Np - N)))

    flops = 2 * Mp * K * Np
    bytes_accessed = 2 * (Mp * K + K * Np) + 4 * (Np + Mp * Np)

    out = pl.pallas_call(
        _linear_kernel,
        out_shape=jax.ShapeDtypeStruct((Mp, Np), jnp.float32),
        grid_spec=pltpu.PrefetchScalarGridSpec(
            num_scalar_prefetch=0,
            grid=(Np // tn, Mp // tm),          # N outer, M inner
            in_specs=[pl.BlockSpec((tm, K), lambda j, i: (i, 0)),
                      pl.BlockSpec((K, tn), lambda j, i: (0, j)),
                      pl.BlockSpec((1, tn), lambda j, i: (0, j))],
            out_specs=pl.BlockSpec((tm, tn), lambda j, i: (i, j)),
        ),
        compiler_params=pltpu.CompilerParams(
            dimension_semantics=("parallel", "parallel"),
            vmem_limit_bytes=VMEM_LIMIT),
        cost_estimate=pl.CostEstimate(flops=flops, transcendentals=0,
                                      bytes_accessed=bytes_accessed),
    )(xp, wp, bp)
    return out[:M, :N]


# ----------------------------------------------------------------------------
# One-time parameter preparation (hoisted out of the per-call path)
# ----------------------------------------------------------------------------
def _reorder_pad_gates(w, H, Hp):
    """PyTorch packs gates (i,f,g,o) along dim 0; kernel uses (i,f,o,g).
       Each gate block is zero-padded from H to Hp rows (lane-dense Hp)."""
    i_, f_, g_, o_ = jnp.split(w, 4, axis=0)
    pad_cfg = ((0, Hp - H),) + ((0, 0),) * (w.ndim - 1)
    return jnp.concatenate([jnp.pad(p, pad_cfg) for p in (i_, f_, o_, g_)],
                           axis=0)


def prepare_decoder_params(params):
    H = params["hidden_dim"]
    Hp = _round_up(H, 128)                       # lane-dense hidden dim

    prepared_layers = []
    for li, lp in enumerate(params["layers"]):
        w_ih = _reorder_pad_gates(lp["w_ih"].astype(jnp.float32), H, Hp)
        w_hh = _reorder_pad_gates(lp["w_hh"].astype(jnp.float32), H, Hp)
        b = _reorder_pad_gates((lp["b_ih"] + lp["b_hh"]).astype(jnp.float32),
                               H, Hp)
        if li > 0:                               # pad input dim H -> Hp
            w_ih = jnp.pad(w_ih, ((0, 0), (0, Hp - H)))
        w_hh = jnp.pad(w_hh, ((0, 0), (0, Hp - H)))
        wx = w_ih.T.astype(MATMUL_DTYPE)         # (Din_p, 4Hp) bf16
        wh = w_hh.T.astype(MATMUL_DTYPE)         # (Hp,   4Hp) bf16
        prepared_layers.append((wx, wh, b.reshape(1, -1)))

    w_lin = jnp.pad(params["w_lin"].T.astype(jnp.float32),
                    ((0, Hp - H), (0, 0))).astype(MATMUL_DTYPE)   # (Hp, V) bf16
    b_lin = params["b_lin"].astype(jnp.float32)

    return dict(embedding=params["embedding"].astype(jnp.float32),
                layers=prepared_layers, w_lin=w_lin, b_lin=b_lin,
                hidden_dim=H, hidden_dim_p=Hp,
                num_layers=params["num_layers"])


# ----------------------------------------------------------------------------
# Wrapper (full Decoder.forward)
# ----------------------------------------------------------------------------
def decoder_forward(feature, caption, lengths, prep, tt=8):
    """feature: (B, E) f32, caption: (B, S) i32, lengths: host ints (desc)."""
    Hp = prep["hidden_dim_p"]

    # glue: embedding gather + concat feature as t == 0
    emb = prep["embedding"][caption]                             # (B, S, E)
    x = jnp.concatenate([feature[:, None, :].astype(jnp.float32), emb], axis=1)
    B, T, E = x.shape

    lengths = np.asarray(lengths, dtype=np.int32)                # host-static
    t_max = int(lengths.max())                                   # pad_packed len

    Bp = _round_up(max(B, 8), 8)
    Tp = _round_up(T, tt)
    x_tm = jnp.transpose(x, (1, 0, 2))                           # (T, B, E)
    x_tm = jnp.pad(x_tm, ((0, Tp - T), (0, Bp - B), (0, 0))).astype(MATMUL_DTYPE)
    len_pad = np.zeros((Bp, 1), np.int32)
    len_pad[:B, 0] = lengths
    len_pad = jnp.asarray(len_pad)

    # sequential LSTM kernel -> masked hidden states (time-major, bf16)
    out_h_tm = lstm_forward(x_tm, len_pad, prep["layers"], Hp, tt=tt)

    # TODO(synk): fold this small (t_max, B, Hp) transpose into the projection
    # kernel's index_map once block shapes allow per-row batch blocks.
    out_h = jnp.transpose(out_h_tm[:t_max, :B], (1, 0, 2)).reshape(B * t_max, Hp)
    logits = linear_layer(out_h, prep["w_lin"], prep["b_lin"])
    return logits                                                # == out.view(-1, V)


# ----------------------------------------------------------------------------
# Pure-JAX reference (PyTorch layout / gate order) for a correctness check
# ----------------------------------------------------------------------------
def decoder_forward_ref(feature, caption, lengths, params):
    H = params["hidden_dim"]
    L = params["num_layers"]
    emb = params["embedding"][caption]
    x = jnp.concatenate([feature[:, None, :], emb], axis=1)
    B, T, E = x.shape
    lengths = np.asarray(lengths)
    mask = (np.arange(T)[None, :] < lengths[:, None]).astype(np.float32)
    h = [jnp.zeros((B, H), jnp.float32) for _ in range(L)]
    c = [jnp.zeros((B, H), jnp.float32) for _ in range(L)]
    outs = []
    for t in range(T):
        m = jnp.asarray(mask[:, t:t + 1])
        inp = x[:, t, :]
        for l in range(L):
            lp = params["layers"][l]
            gates = (inp @ lp["w_ih"].T + lp["b_ih"]
                     + h[l] @ lp["w_hh"].T + lp["b_hh"])
            i_g = jax.nn.sigmoid(gates[:, 0 * H:1 * H])
            f_g = jax.nn.sigmoid(gates[:, 1 * H:2 * H])
            g_g = jnp.tanh(gates[:, 2 * H:3 * H])
            o_g = jax.nn.sigmoid(gates[:, 3 * H:4 * H])
            c_new = f_g * c[l] + i_g * g_g
            h_new = o_g * jnp.tanh(c_new)
            h[l] = m * h_new + (1.0 - m) * h[l]
            c[l] = m * c_new + (1.0 - m) * c[l]
            inp = h[l]
        outs.append(m * inp)
    out_h = jnp.stack(outs, axis=1)                       # (B, T, H)
    logits = out_h @ params["w_lin"].T + params["b_lin"]  # (B, T, V)
    return logits[:, :int(lengths.max())].reshape(-1, logits.shape[-1])


# ----------------------------------------------------------------------------
# Deterministic parameter init (shapes follow the PyTorch module __init__)
# ----------------------------------------------------------------------------
def init_params(key, vocab_size, embed_dim, hidden_dim, num_layers):
    bound = 1.0 / np.sqrt(hidden_dim)
    keys = jax.random.split(key, 3 + 4 * num_layers)
    ki = iter(range(len(keys)))

    embedding = 0.1 * jax.random.normal(
        keys[next(ki)], (vocab_size, embed_dim), jnp.float32)  # TEXT.vocab stand-in

    layers = []
    for l in range(num_layers):
        in_dim = embed_dim if l == 0 else hidden_dim
        w_ih = jax.random.uniform(keys[next(ki)], (4 * hidden_dim, in_dim),
                                  jnp.float32, -bound, bound)
        w_hh = jax.random.uniform(keys[next(ki)], (4 * hidden_dim, hidden_dim),
                                  jnp.float32, -bound, bound)
        b_ih = jax.random.uniform(keys[next(ki)], (4 * hidden_dim,),
                                  jnp.float32, -bound, bound)
        b_hh = jax.random.uniform(keys[next(ki)], (4 * hidden_dim,),
                                  jnp.float32, -bound, bound)
        layers.append(dict(w_ih=w_ih, w_hh=w_hh, b_ih=b_ih, b_hh=b_hh))

    w_lin = jax.random.uniform(keys[next(ki)], (vocab_size, hidden_dim),
                               jnp.float32, -bound, bound)
    b_lin = jax.random.uniform(keys[next(ki)], (vocab_size,),
                               jnp.float32, -bound, bound)

    return dict(embedding=embedding, layers=layers,
                w_lin=w_lin, b_lin=b_lin,
                hidden_dim=hidden_dim, num_layers=num_layers)


# ----------------------------------------------------------------------------
if __name__ == "__main__":
    B, S = 2, 7                    # batch, caption length  ->  T = 1 + S = 8
    vocab_size, embed_dim, hidden_dim, num_layers = 32, 16, 32, 2

    key = jax.random.PRNGKey(0)
    k_p, k_f, k_c = jax.random.split(key, 3)

    params = init_params(k_p, vocab_size, embed_dim, hidden_dim, num_layers)
    prep = prepare_decoder_params(params)      # one-time weight prep (hoisted)

    feature = jax.random.normal(k_f, (B, embed_dim), jnp.float32)
    caption = jax.random.randint(k_c, (B, S), 0, vocab_size, jnp.int32)
    lengths = [8, 6]               # sorted descending (pack_padded_sequence contract)

    out = decoder_forward(feature, caption, lengths, prep, tt=8)
    out = jax.block_until_ready(out)

    ref = jax.block_until_ready(decoder_forward_ref(feature, caption, lengths, params))
    assert out.shape == (B * max(lengths), vocab_size), out.shape
    # bf16 matmul operands + bf16 hidden-state storage -> loosened tolerance
    np.testing.assert_allclose(np.asarray(out), np.asarray(ref),
                               atol=5e-2, rtol=5e-2)

    print("KERNEL_OK")
</pallas_src>

<mosaic_0001>
module attributes {stable_mosaic.version = 11 : i64} {
  func.func @kernel(%arg0: i32, %arg1: i32, %arg2: memref<8x1xi32, #tpu.memory_space<vmem>>, %arg3: memref<8x8x16xbf16, #tpu.memory_space<vmem>>, %arg4: memref<16x512xbf16, #tpu.memory_space<vmem>>, %arg5: memref<128x512xbf16, #tpu.memory_space<vmem>>, %arg6: memref<1x512xf32, #tpu.memory_space<vmem>>, %arg7: memref<128x512xbf16, #tpu.memory_space<vmem>>, %arg8: memref<128x512xbf16, #tpu.memory_space<vmem>>, %arg9: memref<1x512xf32, #tpu.memory_space<vmem>>, %arg10: memref<8x8x128xbf16, #tpu.memory_space<vmem>>, %arg11: memref<2x8x128xf32, #tpu.memory_space<vmem>>, %arg12: memref<2x8x128xf32, #tpu.memory_space<vmem>>) attributes {dimension_semantics = [#tpu.dimension_semantics<parallel>, #tpu.dimension_semantics<arbitrary>], iteration_bounds = array<i64: 1, 1>, scalar_prefetch = 0 : i64, scratch_operands = 2 : i64, tpu.core_type = #tpu.core_type<tc>, window_params = [{transform_indices = @transform_0, window_bounds = array<i64: 8, 1>}, {transform_indices = @transform_1, window_bounds = array<i64: 8, 8, 16>}, {pipeline_mode = #tpu.pipeline_mode<synchronous>, transform_indices = @transform_2, window_bounds = array<i64: 16, 512>}, {pipeline_mode = #tpu.pipeline_mode<synchronous>, transform_indices = @transform_3, window_bounds = array<i64: 128, 512>}, {pipeline_mode = #tpu.pipeline_mode<synchronous>, transform_indices = @transform_4, window_bounds = array<i64: 1, 512>}, {pipeline_mode = #tpu.pipeline_mode<synchronous>, transform_indices = @transform_5, window_bounds = array<i64: 128, 512>}, {pipeline_mode = #tpu.pipeline_mode<synchronous>, transform_indices = @transform_6, window_bounds = array<i64: 128, 512>}, {pipeline_mode = #tpu.pipeline_mode<synchronous>, transform_indices = @transform_7, window_bounds = array<i64: 1, 512>}, {transform_indices = @transform_8, window_bounds = array<i64: 8, 8, 128>}]} {
    %c0_i32 = arith.constant 0 : i32
    %0 = arith.cmpi eq, %arg1, %c0_i32 : i32
    %1 = arith.extui %0 : i1 to i32
    %c0_i32_0 = arith.constant 0 : i32
    %2 = arith.cmpi ne, %1, %c0_i32_0 : i32
    scf.if %2 {
      %cst_191 = arith.constant 0.000000e+00 : f32
      %607 = vector.broadcast %cst_191 : f32 to vector<2x8x128xf32>
      %c0_192 = arith.constant 0 : index
      %c0_193 = arith.constant 0 : index
      %c0_194 = arith.constant 0 : index
      %608 = vector.load %arg11[%c0_192, %c0_193, %c0_194] : memref<2x8x128xf32, #tpu.memory_space<vmem>>, vector<2x8x128xf32>
      tpu.vector_store %arg11[%c0_192, %c0_193, %c0_194], %607 {strides = array<i32>} : memref<2x8x128xf32, #tpu.memory_space<vmem>>, vector<2x8x128xf32>,
      %cst_195 = arith.constant 0.000000e+00 : f32
      %609 = vector.broadcast %cst_195 : f32 to vector<2x8x128xf32>
      %c0_196 = arith.constant 0 : index
      %c0_197 = arith.constant 0 : index
      %c0_198 = arith.constant 0 : index
      %610 = vector.load %arg12[%c0_196, %c0_197, %c0_198] : memref<2x8x128xf32, #tpu.memory_space<vmem>>, vector<2x8x128xf32>
      tpu.vector_store %arg12[%c0_196, %c0_197, %c0_198], %609 {strides = array<i32>} : memref<2x8x128xf32, #tpu.memory_space<vmem>>, vector<2x8x128xf32>,
    } else {
    }
    %c8_i32 = arith.constant 8 : i32
    %3 = arith.muli %arg1, %c8_i32 : i32
    %c0 = arith.constant 0 : index
    %c0_1 = arith.constant 0 : index
    %4 = vector.load %arg2[%c0, %c0_1] : memref<8x1xi32, #tpu.memory_space<vmem>>, vector<8x1xi32>
    %c0_2 = arith.constant 0 : index
    %c0_3 = arith.constant 0 : index
    %c0_4 = arith.constant 0 : index
    %5 = vector.load %arg11[%c0_2, %c0_3, %c0_4] : memref<2x8x128xf32, #tpu.memory_space<vmem>>, vector<1x8x128xf32>
    %6 = vector.shape_cast %5 : vector<1x8x128xf32> to vector<8x128xf32>
    %c1 = arith.constant 1 : index
    %c0_5 = arith.constant 0 : index
    %c0_6 = arith.constant 0 : index
    %7 = vector.load %arg11[%c1, %c0_5, %c0_6] : memref<2x8x128xf32, #tpu.memory_space<vmem>>, vector<1x8x128xf32>
    %8 = vector.shape_cast %7 : vector<1x8x128xf32> to vector<8x128xf32>
    %c0_7 = arith.constant 0 : index
    %c0_8 = arith.constant 0 : index
    %c0_9 = arith.constant 0 : index
    %9 = vector.load %arg12[%c0_7, %c0_8, %c0_9] : memref<2x8x128xf32, #tpu.memory_space<vmem>>, vector<1x8x128xf32>
    %10 = vector.shape_cast %9 : vector<1x8x128xf32> to vector<8x128xf32>
    %c1_10 = arith.constant 1 : index
    %c0_11 = arith.constant 0 : index
    %c0_12 = arith.constant 0 : index
    %11 = vector.load %arg12[%c1_10, %c0_11, %c0_12] : memref<2x8x128xf32, #tpu.memory_space<vmem>>, vector<1x8x128xf32>
    %12 = vector.shape_cast %11 : vector<1x8x128xf32> to vector<8x128xf32>
    %c0_13 = arith.constant 0 : index
    %c0_14 = arith.constant 0 : index
    %13 = vector.load %arg6[%c0_13, %c0_14] : memref<1x512xf32, #tpu.memory_space<vmem>>, vector<1x512xf32>
    %14 = vector.shape_cast %13 : vector<1x512xf32> to vector<1x512xf32>
    %15 = vector.broadcast %14 : vector<1x512xf32> to vector<8x512xf32>
    %c0_15 = arith.constant 0 : index
    %c0_16 = arith.constant 0 : index
    %16 = vector.load %arg9[%c0_15, %c0_16] : memref<1x512xf32, #tpu.memory_space<vmem>>, vector<1x512xf32>
    %17 = vector.shape_cast %16 : vector<1x512xf32> to vector<1x512xf32>
    %18 = vector.broadcast %17 : vector<1x512xf32> to vector<8x512xf32>
    %c0_i32_17 = arith.constant 0 : i32
    %19 = arith.addi %3, %c0_i32_17 : i32
    %20 = vector.broadcast %19 : i32 to vector<8x1xi32>
    %21 = arith.cmpi slt, %20, %4 : vector<8x1xi32>
    %c0_18 = arith.constant 0 : index
    %c0_19 = arith.constant 0 : index
    %c0_20 = arith.constant 0 : index
    %22 = vector.load %arg3[%c0_18, %c0_19, %c0_20] : memref<8x8x16xbf16, #tpu.memory_space<vmem>>, vector<1x8x16xbf16>
    %23 = vector.shape_cast %22 : vector<1x8x16xbf16> to vector<8x16xbf16>
    %c0_21 = arith.constant 0 : index
    %c0_22 = arith.constant 0 : index
    %24 = vector.load %arg4[%c0_21, %c0_22] : memref<16x512xbf16, #tpu.memory_space<vmem>>, vector<16x512xbf16>
    %cst = arith.constant dense<0.000000e+00> : vector<8x512xf32>
    %25 = tpu.matmul %23, %24, %cst {dimension_numbers = #tpu.dot_dimension_numbers<[1], [0], [0], [1], [0, 0, 1, 1], [], []>} : vector<8x16xbf16>, vector<16x512xbf16>, vector<8x512xf32> -> vector<8x512xf32>
    %26 = arith.truncf %6 : vector<8x128xf32> to vector<8x128xbf16>
    %c0_23 = arith.constant 0 : index
    %c0_24 = arith.constant 0 : index
    %27 = vector.load %arg5[%c0_23, %c0_24] : memref<128x512xbf16, #tpu.memory_space<vmem>>, vector<128x512xbf16>
    %cst_25 = arith.constant dense<0.000000e+00> : vector<8x512xf32>
    %28 = tpu.matmul %26, %27, %cst_25 {dimension_numbers = #tpu.dot_dimension_numbers<[1], [0], [0], [1], [0, 0, 1, 1], [], []>} : vector<8x128xbf16>, vector<128x512xbf16>, vector<8x512xf32> -> vector<8x512xf32>
    %29 = arith.addf %25, %28 : vector<8x512xf32>
    %30 = arith.addf %29, %15 : vector<8x512xf32>
    %31 = vector.extract_strided_slice %30 {offsets = [0, 0], sizes = [8, 384], strides = [1, 1]} : vector<8x512xf32> to vector<8x384xf32>
    %32 = arith.negf %31 : vector<8x384xf32>
    %33 = math.exp %32 : vector<8x384xf32>
    %cst_26 = arith.constant 1.000000e+00 : f32
    %34 = vector.broadcast %cst_26 : f32 to vector<8x384xf32>
    %35 = arith.addf %34, %33 : vector<8x384xf32>
    %36 = arith.divf %34, %35 : vector<8x384xf32>
    %37 = vector.extract_strided_slice %36 {offsets = [0, 0], sizes = [8, 128], strides = [1, 1]} : vector<8x384xf32> to vector<8x128xf32>
    %38 = vector.extract_strided_slice %36 {offsets = [0, 128], sizes = [8, 128], strides = [1, 1]} : vector<8x384xf32> to vector<8x128xf32>
    %39 = vector.extract_strided_slice %36 {offsets = [0, 256], sizes = [8, 128], strides = [1, 1]} : vector<8x384xf32> to vector<8x128xf32>
    %40 = vector.extract_strided_slice %30 {offsets = [0, 384], sizes = [8, 128], strides = [1, 1]} : vector<8x512xf32> to vector<8x128xf32>
    %41 = math.tanh %40 : vector<8x128xf32>
    %42 = arith.mulf %38, %10 : vector<8x128xf32>
    %43 = arith.mulf %37, %41 : vector<8x128xf32>
    %44 = arith.addf %42, %43 : vector<8x128xf32>
    %45 = math.tanh %44 : vector<8x128xf32>
    %46 = arith.mulf %39, %45 : vector<8x128xf32>
    %47 = vector.shape_cast %21 : vector<8x1xi1> to vector<8x1xi1>
    %48 = vector.broadcast %47 : vector<8x1xi1> to vector<8x128xi1>
    %49 = arith.select %48, %46, %6 : vector<8x128xi1>, vector<8x128xf32>
    %50 = vector.shape_cast %21 : vector<8x1xi1> to vector<8x1xi1>
    %51 = vector.broadcast %50 : vector<8x1xi1> to vector<8x128xi1>
    %52 = arith.select %51, %44, %10 : vector<8x128xi1>, vector<8x128xf32>
    %53 = arith.truncf %49 : vector<8x128xf32> to vector<8x128xbf16>
    %c0_27 = arith.constant 0 : index
    %c0_28 = arith.constant 0 : index
    %54 = vector.load %arg7[%c0_27, %c0_28] : memref<128x512xbf16, #tpu.memory_space<vmem>>, vector<128x512xbf16>
    %cst_29 = arith.constant dense<0.000000e+00> : vector<8x512xf32>
    %55 = tpu.matmul %53, %54, %cst_29 {dimension_numbers = #tpu.dot_dimension_numbers<[1], [0], [0], [1], [0, 0, 1, 1], [], []>} : vector<8x128xbf16>, vector<128x512xbf16>, vector<8x512xf32> -> vector<8x512xf32>
    %56 = arith.truncf %8 : vector<8x128xf32> to vector<8x128xbf16>
    %c0_30 = arith.constant 0 : index
    %c0_31 = arith.constant 0 : index
    %57 = vector.load %arg8[%c0_30, %c0_31] : memref<128x512xbf16, #tpu.memory_space<vmem>>, vector<128x512xbf16>
    %cst_32 = arith.constant dense<0.000000e+00> : vector<8x512xf32>
    %58 = tpu.matmul %56, %57, %cst_32 {dimension_numbers = #tpu.dot_dimension_numbers<[1], [0], [0], [1], [0, 0, 1, 1], [], []>} : vector<8x128xbf16>, vector<128x512xbf16>, vector<8x512xf32> -> vector<8x512xf32>
    %59 = arith.addf %55, %58 : vector<8x512xf32>
    %60 = arith.addf %59, %18 : vector<8x512xf32>
    %61 = vector.extract_strided_slice %60 {offsets = [0, 0], sizes = [8, 384], strides = [1, 1]} : vector<8x512xf32> to vector<8x384xf32>
    %62 = arith.negf %61 : vector<8x384xf32>
    %63 = math.exp %62 : vector<8x384xf32>
    %cst_33 = arith.constant 1.000000e+00 : f32
    %64 = vector.broadcast %cst_33 : f32 to vector<8x384xf32>
    %65 = arith.addf %64, %63 : vector<8x384xf32>
    %66 = arith.divf %64, %65 : vector<8x384xf32>
    %67 = vector.extract_strided_slice %66 {offsets = [0, 0], sizes = [8, 128], strides = [1, 1]} : vector<8x384xf32> to vector<8x128xf32>
    %68 = vector.extract_strided_slice %66 {offsets = [0, 128], sizes = [8, 128], strides = [1, 1]} : vector<8x384xf32> to vector<8x128xf32>
    %69 = vector.extract_strided_slice %66 {offsets = [0, 256], sizes = [8, 128], strides = [1, 1]} : vector<8x384xf32> to vector<8x128xf32>
    %70 = vector.extract_strided_slice %60 {offsets = [0, 384], sizes = [8, 128], strides = [1, 1]} : vector<8x512xf32> to vector<8x128xf32>
    %71 = math.tanh %70 : vector<8x128xf32>
    %72 = arith.mulf %68, %12 : vector<8x128xf32>
    %73 = arith.mulf %67, %71 : vector<8x128xf32>
    %74 = arith.addf %72, %73 : vector<8x128xf32>
    %75 = math.tanh %74 : vector<8x128xf32>
    %76 = arith.mulf %69, %75 : vector<8x128xf32>
    %77 = vector.shape_cast %21 : vector<8x1xi1> to vector<8x1xi1>
    %78 = vector.broadcast %77 : vector<8x1xi1> to vector<8x128xi1>
    %79 = arith.select %78, %76, %8 : vector<8x128xi1>, vector<8x128xf32>
    %80 = vector.shape_cast %21 : vector<8x1xi1> to vector<8x1xi1>
    %81 = vector.broadcast %80 : vector<8x1xi1> to vector<8x128xi1>
    %82 = arith.select %81, %74, %12 : vector<8x128xi1>, vector<8x128xf32>
    %cst_34 = arith.constant 0.000000e+00 : f32
    %83 = vector.shape_cast %21 : vector<8x1xi1> to vector<8x1xi1>
    %84 = vector.broadcast %83 : vector<8x1xi1> to vector<8x128xi1>
    %85 = vector.broadcast %cst_34 : f32 to vector<8x128xf32>
    %86 = arith.select %84, %79, %85 : vector<8x128xi1>, vector<8x128xf32>
    %87 = arith.truncf %86 : vector<8x128xf32> to vector<8x128xbf16>
    %c0_35 = arith.constant 0 : index
    %c0_36 = arith.constant 0 : index
    %c0_37 = arith.constant 0 : index
    %88 = vector.load %arg10[%c0_35, %c0_36, %c0_37] : memref<8x8x128xbf16, #tpu.memory_space<vmem>>, vector<1x8x128xbf16>
    %89 = vector.shape_cast %88 : vector<1x8x128xbf16> to vector<8x128xbf16>
    %90 = vector.shape_cast %87 : vector<8x128xbf16> to vector<1x8x128xbf16>
    tpu.vector_store %arg10[%c0_35, %c0_36, %c0_37], %90 {strides = array<i32>} : memref<8x8x128xbf16, #tpu.memory_space<vmem>>, vector<1x8x128xbf16>,
    %c1_i32 = arith.constant 1 : i32
    %91 = arith.addi %3, %c1_i32 : i32
    %92 = vector.broadcast %91 : i32 to vector<8x1xi32>
    %93 = arith.cmpi slt, %92, %4 : vector<8x1xi32>
    %c1_38 = arith.constant 1 : index
    %c0_39 = arith.constant 0 : index
    %c0_40 = arith.constant 0 : index
    %94 = vector.load %arg3[%c1_38, %c0_39, %c0_40] : memref<8x8x16xbf16, #tpu.memory_space<vmem>>, vector<1x8x16xbf16>
    %95 = vector.shape_cast %94 : vector<1x8x16xbf16> to vector<8x16xbf16>
    %c0_41 = arith.constant 0 : index
    %c0_42 = arith.constant 0 : index
    %96 = vector.load %arg4[%c0_41, %c0_42] : memref<16x512xbf16, #tpu.memory_space<vmem>>, vector<16x512xbf16>
    %cst_43 = arith.constant dense<0.000000e+00> : vector<8x512xf32>
    %97 = tpu.matmul %95, %96, %cst_43 {dimension_numbers = #tpu.dot_dimension_numbers<[1], [0], [0], [1], [0, 0, 1, 1], [], []>} : vector<8x16xbf16>, vector<16x512xbf16>, vector<8x512xf32> -> vector<8x512xf32>
    %98 = arith.truncf %49 : vector<8x128xf32> to vector<8x128xbf16>
    %c0_44 = arith.constant 0 : index
    %c0_45 = arith.constant 0 : index
    %99 = vector.load %arg5[%c0_44, %c0_45] : memref<128x512xbf16, #tpu.memory_space<vmem>>, vector<128x512xbf16>
    %cst_46 = arith.constant dense<0.000000e+00> : vector<8x512xf32>
    %100 = tpu.matmul %98, %99, %cst_46 {dimension_numbers = #tpu.dot_dimension_numbers<[1], [0], [0], [1], [0, 0, 1, 1], [], []>} : vector<8x128xbf16>, vector<128x512xbf16>, vector<8x512xf32> -> vector<8x512xf32>
    %101 = arith.addf %97, %100 : vector<8x512xf32>
    %102 = arith.addf %101, %15 : vector<8x512xf32>
    %103 = vector.extract_strided_slice %102 {offsets = [0, 0], sizes = [8, 384], strides = [1, 1]} : vector<8x512xf32> to vector<8x384xf32>
    %104 = arith.negf %103 : vector<8x384xf32>
    %105 = math.exp %104 : vector<8x384xf32>
    %cst_47 = arith.constant 1.000000e+00 : f32
    %106 = vector.broadcast %cst_47 : f32 to vector<8x384xf32>
    %107 = arith.addf %106, %105 : vector<8x384xf32>
    %108 = arith.divf %106, %107 : vector<8x384xf32>
    %109 = vector.extract_strided_slice %108 {offsets = [0, 0], sizes = [8, 128], strides = [1, 1]} : vector<8x384xf32> to vector<8x128xf32>
    %110 = vector.extract_strided_slice %108 {offsets = [0, 128], sizes = [8, 128], strides = [1, 1]} : vector<8x384xf32> to vector<8x128xf32>
    %111 = vector.extract_strided_slice %108 {offsets = [0, 256], sizes = [8, 128], strides = [1, 1]} : vector<8x384xf32> to vector<8x128xf32>
    %112 = vector.extract_strided_slice %102 {offsets = [0, 384], sizes = [8, 128], strides = [1, 1]} : vector<8x512xf32> to vector<8x128xf32>
    %113 = math.tanh %112 : vector<8x128xf32>
    %114 = arith.mulf %110, %52 : vector<8x128xf32>
    %115 = arith.mulf %109, %113 : vector<8x128xf32>
    %116 = arith.addf %114, %115 : vector<8x128xf32>
    %117 = math.tanh %116 : vector<8x128xf32>
    %118 = arith.mulf %111, %117 : vector<8x128xf32>
    %119 = vector.shape_cast %93 : vector<8x1xi1> to vector<8x1xi1>
    %120 = vector.broadcast %119 : vector<8x1xi1> to vector<8x128xi1>
    %121 = arith.select %120, %118, %49 : vector<8x128xi1>, vector<8x128xf32>
    %122 = vector.shape_cast %93 : vector<8x1xi1> to vector<8x1xi1>
    %123 = vector.broadcast %122 : vector<8x1xi1> to vector<8x128xi1>
    %124 = arith.select %123, %116, %52 : vector<8x128xi1>, vector<8x128xf32>
    %125 = arith.truncf %121 : vector<8x128xf32> to vector<8x128xbf16>
    %c0_48 = arith.constant 0 : index
    %c0_49 = arith.constant 0 : index
    %126 = vector.load %arg7[%c0_48, %c0_49] : memref<128x512xbf16, #tpu.memory_space<vmem>>, vector<128x512xbf16>
    %cst_50 = arith.constant dense<0.000000e+00> : vector<8x512xf32>
    %127 = tpu.matmul %125, %126, %cst_50 {dimension_numbers = #tpu.dot_dimension_numbers<[1], [0], [0], [1], [0, 0, 1, 1], [], []>} : vector<8x128xbf16>, vector<128x512xbf16>, vector<8x512xf32> -> vector<8x512xf32>
    %128 = arith.truncf %79 : vector<8x128xf32> to vector<8x128xbf16>
    %c0_51 = arith.constant 0 : index
    %c0_52 = arith.constant 0 : index
    %129 = vector.load %arg8[%c0_51, %c0_52] : memref<128x512xbf16, #tpu.memory_space<vmem>>, vector<128x512xbf16>
    %cst_53 = arith.constant dense<0.000000e+00> : vector<8x512xf32>
    %130 = tpu.matmul %128, %129, %cst_53 {dimension_numbers = #tpu.dot_dimension_numbers<[1], [0], [0], [1], [0, 0, 1, 1], [], []>} : vector<8x128xbf16>, vector<128x512xbf16>, vector<8x512xf32> -> vector<8x512xf32>
    %131 = arith.addf %127, %130 : vector<8x512xf32>
    %132 = arith.addf %131, %18 : vector<8x512xf32>
    %133 = vector.extract_strided_slice %132 {offsets = [0, 0], sizes = [8, 384], strides = [1, 1]} : vector<8x512xf32> to vector<8x384xf32>
    %134 = arith.negf %133 : vector<8x384xf32>
    %135 = math.exp %134 : vector<8x384xf32>
    %cst_54 = arith.constant 1.000000e+00 : f32
    %136 = vector.broadcast %cst_54 : f32 to vector<8x384xf32>
    %137 = arith.addf %136, %135 : vector<8x384xf32>
    %138 = arith.divf %136, %137 : vector<8x384xf32>
    %139 = vector.extract_strided_slice %138 {offsets = [0, 0], sizes = [8, 128], strides = [1, 1]} : vector<8x384xf32> to vector<8x128xf32>
    %140 = vector.extract_strided_slice %138 {offsets = [0, 128], sizes = [8, 128], strides = [1, 1]} : vector<8x384xf32> to vector<8x128xf32>
    %141 = vector.extract_strided_slice %138 {offsets = [0, 256], sizes = [8, 128], strides = [1, 1]} : vector<8x384xf32> to vector<8x128xf32>
    %142 = vector.extract_strided_slice %132 {offsets = [0, 384], sizes = [8, 128], strides = [1, 1]} : vector<8x512xf32> to vector<8x128xf32>
    %143 = math.tanh %142 : vector<8x128xf32>
    %144 = arith.mulf %140, %82 : vector<8x128xf32>
    %145 = arith.mulf %139, %143 : vector<8x128xf32>
    %146 = arith.addf %144, %145 : vector<8x128xf32>
    %147 = math.tanh %146 : vector<8x128xf32>
    %148 = arith.mulf %141, %147 : vector<8x128xf32>
    %149 = vector.shape_cast %93 : vector<8x1xi1> to vector<8x1xi1>
    %150 = vector.broadcast %149 : vector<8x1xi1> to vector<8x128xi1>
    %151 = arith.select %150, %148, %79 : vector<8x128xi1>, vector<8x128xf32>
    %152 = vector.shape_cast %93 : vector<8x1xi1> to vector<8x1xi1>
    %153 = vector.broadcast %152 : vector<8x1xi1> to vector<8x128xi1>
    %154 = arith.select %153, %146, %82 : vector<8x128xi1>, vector<8x128xf32>
    %cst_55 = arith.constant 0.000000e+00 : f32
    %155 = vector.shape_cast %93 : vector<8x1xi1> to vector<8x1xi1>
    %156 = vector.broadcast %155 : vector<8x1xi1> to vector<8x128xi1>
    %157 = vector.broadcast %cst_55 : f32 to vector<8x128xf32>
    %158 = arith.select %156, %151, %157 : vector<8x128xi1>, vector<8x128xf32>
    %159 = arith.truncf %158 : vector<8x128xf32> to vector<8x128xbf16>
    %c1_56 = arith.constant 1 : index
    %c0_57 = arith.constant 0 : index
    %c0_58 = arith.constant 0 : index
    %160 = vector.load %arg10[%c1_56, %c0_57, %c0_58] : memref<8x8x128xbf16, #tpu.memory_space<vmem>>, vector<1x8x128xbf16>
    %161 = vector.shape_cast %160 : vector<1x8x128xbf16> to vector<8x128xbf16>
    %162 = vector.shape_cast %159 : vector<8x128xbf16> to vector<1x8x128xbf16>
    tpu.vector_store %arg10[%c1_56, %c0_57, %c0_58], %162 {strides = array<i32>} : memref<8x8x128xbf16, #tpu.memory_space<vmem>>, vector<1x8x128xbf16>,
    %c2_i32 = arith.constant 2 : i32
    %163 = arith.addi %3, %c2_i32 : i32
    %164 = vector.broadcast %163 : i32 to vector<8x1xi32>
    %165 = arith.cmpi slt, %164, %4 : vector<8x1xi32>
    %c2 = arith.constant 2 : index
    %c0_59 = arith.constant 0 : index
    %c0_60 = arith.constant 0 : index
    %166 = vector.load %arg3[%c2, %c0_59, %c0_60] : memref<8x8x16xbf16, #tpu.memory_space<vmem>>, vector<1x8x16xbf16>
    %167 = vector.shape_cast %166 : vector<1x8x16xbf16> to vector<8x16xbf16>
    %c0_61 = arith.constant 0 : index
    %c0_62 = arith.constant 0 : index
    %168 = vector.load %arg4[%c0_61, %c0_62] : memref<16x512xbf16, #tpu.memory_space<vmem>>, vector<16x512xbf16>
    %cst_63 = arith.constant dense<0.000000e+00> : vector<8x512xf32>
    %169 = tpu.matmul %167, %168, %cst_63 {dimension_numbers = #tpu.dot_dimension_numbers<[1], [0], [0], [1], [0, 0, 1, 1], [], []>} : vector<8x16xbf16>, vector<16x512xbf16>, vector<8x512xf32> -> vector<8x512xf32>
    %170 = arith.truncf %121 : vector<8x128xf32> to vector<8x128xbf16>
    %c0_64 = arith.constant 0 : index
    %c0_65 = arith.constant 0 : index
    %171 = vector.load %arg5[%c0_64, %c0_65] : memref<128x512xbf16, #tpu.memory_space<vmem>>, vector<128x512xbf16>
    %cst_66 = arith.constant dense<0.000000e+00> : vector<8x512xf32>
    %172 = tpu.matmul %170, %171, %cst_66 {dimension_numbers = #tpu.dot_dimension_numbers<[1], [0], [0], [1], [0, 0, 1, 1], [], []>} : vector<8x128xbf16>, vector<128x512xbf16>, vector<8x512xf32> -> vector<8x512xf32>
    %173 = arith.addf %169, %172 : vector<8x512xf32>
    %174 = arith.addf %173, %15 : vector<8x512xf32>
    %175 = vector.extract_strided_slice %174 {offsets = [0, 0], sizes = [8, 384], strides = [1, 1]} : vector<8x512xf32> to vector<8x384xf32>
    %176 = arith.negf %175 : vector<8x384xf32>
    %177 = math.exp %176 : vector<8x384xf32>
    %cst_67 = arith.constant 1.000000e+00 : f32
    %178 = vector.broadcast %cst_67 : f32 to vector<8x384xf32>
    %179 = arith.addf %178, %177 : vector<8x384xf32>
    %180 = arith.divf %178, %179 : vector<8x384xf32>
    %181 = vector.extract_strided_slice %180 {offsets = [0, 0], sizes = [8, 128], strides = [1, 1]} : vector<8x384xf32> to vector<8x128xf32>
    %182 = vector.extract_strided_slice %180 {offsets = [0, 128], sizes = [8, 128], strides = [1, 1]} : vector<8x384xf32> to vector<8x128xf32>
    %183 = vector.extract_strided_slice %180 {offsets = [0, 256], sizes = [8, 128], strides = [1, 1]} : vector<8x384xf32> to vector<8x128xf32>
    %184 = vector.extract_strided_slice %174 {offsets = [0, 384], sizes = [8, 128], strides = [1, 1]} : vector<8x512xf32> to vector<8x128xf32>
    %185 = math.tanh %184 : vector<8x128xf32>
    %186 = arith.mulf %182, %124 : vector<8x128xf32>
    %187 = arith.mulf %181, %185 : vector<8x128xf32>
    %188 = arith.addf %186, %187 : vector<8x128xf32>
    %189 = math.tanh %188 : vector<8x128xf32>
    %190 = arith.mulf %183, %189 : vector<8x128xf32>
    %191 = vector.shape_cast %165 : vector<8x1xi1> to vector<8x1xi1>
    %192 = vector.broadcast %191 : vector<8x1xi1> to vector<8x128xi1>
    %193 = arith.select %192, %190, %121 : vector<8x128xi1>, vector<8x128xf32>
    %194 = vector.shape_cast %165 : vector<8x1xi1> to vector<8x1xi1>
    %195 = vector.broadcast %194 : vector<8x1xi1> to vector<8x128xi1>
    %196 = arith.select %195, %188, %124 : vector<8x128xi1>, vector<8x128xf32>
    %197 = arith.truncf %193 : vector<8x128xf32> to vector<8x128xbf16>
    %c0_68 = arith.constant 0 : index
    %c0_69 = arith.constant 0 : index
    %198 = vector.load %arg7[%c0_68, %c0_69] : memref<128x512xbf16, #tpu.memory_space<vmem>>, vector<128x512xbf16>
    %cst_70 = arith.constant dense<0.000000e+00> : vector<8x512xf32>
    %199 = tpu.matmul %197, %198, %cst_70 {dimension_numbers = #tpu.dot_dimension_numbers<[1], [0], [0], [1], [0, 0, 1, 1], [], []>} : vector<8x128xbf16>, vector<128x512xbf16>, vector<8x512xf32> -> vector<8x512xf32>
    %200 = arith.truncf %151 : vector<8x128xf32> to vector<8x128xbf16>
    %c0_71 = arith.constant 0 : index
    %c0_72 = arith.constant 0 : index
    %201 = vector.load %arg8[%c0_71, %c0_72] : memref<128x512xbf16, #tpu.memory_space<vmem>>, vector<128x512xbf16>
    %cst_73 = arith.constant dense<0.000000e+00> : vector<8x512xf32>
    %202 = tpu.matmul %200, %201, %cst_73 {dimension_numbers = #tpu.dot_dimension_numbers<[1], [0], [0], [1], [0, 0, 1, 1], [], []>} : vector<8x128xbf16>, vector<128x512xbf16>, vector<8x512xf32> -> vector<8x512xf32>
    %203 = arith.addf %199, %202 : vector<8x512xf32>
    %204 = arith.addf %203, %18 : vector<8x512xf32>
    %205 = vector.extract_strided_slice %204 {offsets = [0, 0], sizes = [8, 384], strides = [1, 1]} : vector<8x512xf32> to vector<8x384xf32>
    %206 = arith.negf %205 : vector<8x384xf32>
    %207 = math.exp %206 : vector<8x384xf32>
    %cst_74 = arith.constant 1.000000e+00 : f32
    %208 = vector.broadcast %cst_74 : f32 to vector<8x384xf32>
    %209 = arith.addf %208, %207 : vector<8x384xf32>
    %210 = arith.divf %208, %209 : vector<8x384xf32>
    %211 = vector.extract_strided_slice %210 {offsets = [0, 0], sizes = [8, 128], strides = [1, 1]} : vector<8x384xf32> to vector<8x128xf32>
    %212 = vector.extract_strided_slice %210 {offsets = [0, 128], sizes = [8, 128], strides = [1, 1]} : vector<8x384xf32> to vector<8x128xf32>
    %213 = vector.extract_strided_slice %210 {offsets = [0, 256], sizes = [8, 128], strides = [1, 1]} : vector<8x384xf32> to vector<8x128xf32>
    %214 = vector.extract_strided_slice %204 {offsets = [0, 384], sizes = [8, 128], strides = [1, 1]} : vector<8x512xf32> to vector<8x128xf32>
    %215 = math.tanh %214 : vector<8x128xf32>
    %216 = arith.mulf %212, %154 : vector<8x128xf32>
    %217 = arith.mulf %211, %215 : vector<8x128xf32>
    %218 = arith.addf %216, %217 : vector<8x128xf32>
    %219 = math.tanh %218 : vector<8x128xf32>
    %220 = arith.mulf %213, %219 : vector<8x128xf32>
    %221 = vector.shape_cast %165 : vector<8x1xi1> to vector<8x1xi1>
    %222 = vector.broadcast %221 : vector<8x1xi1> to vector<8x128xi1>
    %223 = arith.select %222, %220, %151 : vector<8x128xi1>, vector<8x128xf32>
    %224 = vector.shape_cast %165 : vector<8x1xi1> to vector<8x1xi1>
    %225 = vector.broadcast %224 : vector<8x1xi1> to vector<8x128xi1>
    %226 = arith.select %225, %218, %154 : vector<8x128xi1>, vector<8x128xf32>
    %cst_75 = arith.constant 0.000000e+00 : f32
    %227 = vector.shape_cast %165 : vector<8x1xi1> to vector<8x1xi1>
    %228 = vector.broadcast %227 : vector<8x1xi1> to vector<8x128xi1>
    %229 = vector.broadcast %cst_75 : f32 to vector<8x128xf32>
    %230 = arith.select %228, %223, %229 : vector<8x128xi1>, vector<8x128xf32>
    %231 = arith.truncf %230 : vector<8x128xf32> to vector<8x128xbf16>
    %c2_76 = arith.constant 2 : index
    %c0_77 = arith.constant 0 : index
    %c0_78 = arith.constant 0 : index
    %232 = vector.load %arg10[%c2_76, %c0_77, %c0_78] : memref<8x8x128xbf16, #tpu.memory_space<vmem>>, vector<1x8x128xbf16>
    %233 = vector.shape_cast %232 : vector<1x8x128xbf16> to vector<8x128xbf16>
    %234 = vector.shape_cast %231 : vector<8x128xbf16> to vector<1x8x128xbf16>
    tpu.vector_store %arg10[%c2_76, %c0_77, %c0_78], %234 {strides = array<i32>} : memref<8x8x128xbf16, #tpu.memory_space<vmem>>, vector<1x8x128xbf16>,
    %c3_i32 = arith.constant 3 : i32
    %235 = arith.addi %3, %c3_i32 : i32
    %236 = vector.broadcast %235 : i32 to vector<8x1xi32>
    %237 = arith.cmpi slt, %236, %4 : vector<8x1xi32>
    %c3 = arith.constant 3 : index
    %c0_79 = arith.constant 0 : index
    %c0_80 = arith.constant 0 : index
    %238 = vector.load %arg3[%c3, %c0_79, %c0_80] : memref<8x8x16xbf16, #tpu.memory_space<vmem>>, vector<1x8x16xbf16>
    %239 = vector.shape_cast %238 : vector<1x8x16xbf16> to vector<8x16xbf16>
    %c0_81 = arith.constant 0 : index
    %c0_82 = arith.constant 0 : index
    %240 = vector.load %arg4[%c0_81, %c0_82] : memref<16x512xbf16, #tpu.memory_space<vmem>>, vector<16x512xbf16>
    %cst_83 = arith.constant dense<0.000000e+00> : vector<8x512xf32>
    %241 = tpu.matmul %239, %240, %cst_83 {dimension_numbers = #tpu.dot_dimension_numbers<[1], [0], [0], [1], [0, 0, 1, 1], [], []>} : vector<8x16xbf16>, vector<16x512xbf16>, vector<8x512xf32> -> vector<8x512xf32>
    %242 = arith.truncf %193 : vector<8x128xf32> to vector<8x128xbf16>
    %c0_84 = arith.constant 0 : index
    %c0_85 = arith.constant 0 : index
    %243 = vector.load %arg5[%c0_84, %c0_85] : memref<128x512xbf16, #tpu.memory_space<vmem>>, vector<128x512xbf16>
    %cst_86 = arith.constant dense<0.000000e+00> : vector<8x512xf32>
    %244 = tpu.matmul %242, %243, %cst_86 {dimension_numbers = #tpu.dot_dimension_numbers<[1], [0], [0], [1], [0, 0, 1, 1], [], []>} : vector<8x128xbf16>, vector<128x512xbf16>, vector<8x512xf32> -> vector<8x512xf32>
    %245 = arith.addf %241, %244 : vector<8x512xf32>
    %246 = arith.addf %245, %15 : vector<8x512xf32>
    %247 = vector.extract_strided_slice %246 {offsets = [0, 0], sizes = [8, 384], strides = [1, 1]} : vector<8x512xf32> to vector<8x384xf32>
    %248 = arith.negf %247 : vector<8x384xf32>
    %249 = math.exp %248 : vector<8x384xf32>
    %cst_87 = arith.constant 1.000000e+00 : f32
    %250 = vector.broadcast %cst_87 : f32 to vector<8x384xf32>
    %251 = arith.addf %250, %249 : vector<8x384xf32>
    %252 = arith.divf %250, %251 : vector<8x384xf32>
    %253 = vector.extract_strided_slice %252 {offsets = [0, 0], sizes = [8, 128], strides = [1, 1]} : vector<8x384xf32> to vector<8x128xf32>
    %254 = vector.extract_strided_slice %252 {offsets = [0, 128], sizes = [8, 128], strides = [1, 1]} : vector<8x384xf32> to vector<8x128xf32>
    %255 = vector.extract_strided_slice %252 {offsets = [0, 256], sizes = [8, 128], strides = [1, 1]} : vector<8x384xf32> to vector<8x128xf32>
    %256 = vector.extract_strided_slice %246 {offsets = [0, 384], sizes = [8, 128], strides = [1, 1]} : vector<8x512xf32> to vector<8x128xf32>
    %257 = math.tanh %256 : vector<8x128xf32>
    %258 = arith.mulf %254, %196 : vector<8x128xf32>
    %259 = arith.mulf %253, %257 : vector<8x128xf32>
    %260 = arith.addf %258, %259 : vector<8x128xf32>
    %261 = math.tanh %260 : vector<8x128xf32>
    %262 = arith.mulf %255, %261 : vector<8x128xf32>
    %263 = vector.shape_cast %237 : vector<8x1xi1> to vector<8x1xi1>
    %264 = vector.broadcast %263 : vector<8x1xi1> to vector<8x128xi1>
    %265 = arith.select %264, %262, %193 : vector<8x128xi1>, vector<8x128xf32>
    %266 = vector.shape_cast %237 : vector<8x1xi1> to vector<8x1xi1>
    %267 = vector.broadcast %266 : vector<8x1xi1> to vector<8x128xi1>
    %268 = arith.select %267, %260, %196 : vector<8x128xi1>, vector<8x128xf32>
    %269 = arith.truncf %265 : vector<8x128xf32> to vector<8x128xbf16>
    %c0_88 = arith.constant 0 : index
    %c0_89 = arith.constant 0 : index
    %270 = vector.load %arg7[%c0_88, %c0_89] : memref<128x512xbf16, #tpu.memory_space<vmem>>, vector<128x512xbf16>
    %cst_90 = arith.constant dense<0.000000e+00> : vector<8x512xf32>
    %271 = tpu.matmul %269, %270, %cst_90 {dimension_numbers = #tpu.dot_dimension_numbers<[1], [0], [0], [1], [0, 0, 1, 1], [], []>} : vector<8x128xbf16>, vector<128x512xbf16>, vector<8x512xf32> -> vector<8x512xf32>
    %272 = arith.truncf %223 : vector<8x128xf32> to vector<8x128xbf16>
    %c0_91 = arith.constant 0 : index
    %c0_92 = arith.constant 0 : index
    %273 = vector.load %arg8[%c0_91, %c0_92] : memref<128x512xbf16, #tpu.memory_space<vmem>>, vector<128x512xbf16>
    %cst_93 = arith.constant dense<0.000000e+00> : vector<8x512xf32>
    %274 = tpu.matmul %272, %273, %cst_93 {dimension_numbers = #tpu.dot_dimension_numbers<[1], [0], [0], [1], [0, 0, 1, 1], [], []>} : vector<8x128xbf16>, vector<128x512xbf16>, vector<8x512xf32> -> vector<8x512xf32>
    %275 = arith.addf %271, %274 : vector<8x512xf32>
    %276 = arith.addf %275, %18 : vector<8x512xf32>
    %277 = vector.extract_strided_slice %276 {offsets = [0, 0], sizes = [8, 384], strides = [1, 1]} : vector<8x512xf32> to vector<8x384xf32>
    %278 = arith.negf %277 : vector<8x384xf32>
    %279 = math.exp %278 : vector<8x384xf32>
    %cst_94 = arith.constant 1.000000e+00 : f32
    %280 = vector.broadcast %cst_94 : f32 to vector<8x384xf32>
    %281 = arith.addf %280, %279 : vector<8x384xf32>
    %282 = arith.divf %280, %281 : vector<8x384xf32>
    %283 = vector.extract_strided_slice %282 {offsets = [0, 0], sizes = [8, 128], strides = [1, 1]} : vector<8x384xf32> to vector<8x128xf32>
    %284 = vector.extract_strided_slice %282 {offsets = [0, 128], sizes = [8, 128], strides = [1, 1]} : vector<8x384xf32> to vector<8x128xf32>
    %285 = vector.extract_strided_slice %282 {offsets = [0, 256], sizes = [8, 128], strides = [1, 1]} : vector<8x384xf32> to vector<8x128xf32>
    %286 = vector.extract_strided_slice %276 {offsets = [0, 384], sizes = [8, 128], strides = [1, 1]} : vector<8x512xf32> to vector<8x128xf32>
    %287 = math.tanh %286 : vector<8x128xf32>
    %288 = arith.mulf %284, %226 : vector<8x128xf32>
    %289 = arith.mulf %283, %287 : vector<8x128xf32>
    %290 = arith.addf %288, %289 : vector<8x128xf32>
    %291 = math.tanh %290 : vector<8x128xf32>
    %292 = arith.mulf %285, %291 : vector<8x128xf32>
    %293 = vector.shape_cast %237 : vector<8x1xi1> to vector<8x1xi1>
    %294 = vector.broadcast %293 : vector<8x1xi1> to vector<8x128xi1>
    %295 = arith.select %294, %292, %223 : vector<8x128xi1>, vector<8x128xf32>
    %296 = vector.shape_cast %237 : vector<8x1xi1> to vector<8x1xi1>
    %297 = vector.broadcast %296 : vector<8x1xi1> to vector<8x128xi1>
    %298 = arith.select %297, %290, %226 : vector<8x128xi1>, vector<8x128xf32>
    %cst_95 = arith.constant 0.000000e+00 : f32
    %299 = vector.shape_cast %237 : vector<8x1xi1> to vector<8x1xi1>
    %300 = vector.broadcast %299 : vector<8x1xi1> to vector<8x128xi1>
    %301 = vector.broadcast %cst_95 : f32 to vector<8x128xf32>
    %302 = arith.select %300, %295, %301 : vector<8x128xi1>, vector<8x128xf32>
    %303 = arith.truncf %302 : vector<8x128xf32> to vector<8x128xbf16>
    %c3_96 = arith.constant 3 : index
    %c0_97 = arith.constant 0 : index
    %c0_98 = arith.constant 0 : index
    %304 = vector.load %arg10[%c3_96, %c0_97, %c0_98] : memref<8x8x128xbf16, #tpu.memory_space<vmem>>, vector<1x8x128xbf16>
    %305 = vector.shape_cast %304 : vector<1x8x128xbf16> to vector<8x128xbf16>
    %306 = vector.shape_cast %303 : vector<8x128xbf16> to vector<1x8x128xbf16>
    tpu.vector_store %arg10[%c3_96, %c0_97, %c0_98], %306 {strides = array<i32>} : memref<8x8x128xbf16, #tpu.memory_space<vmem>>, vector<1x8x128xbf16>,
    %c4_i32 = arith.constant 4 : i32
    %307 = arith.addi %3, %c4_i32 : i32
    %308 = vector.broadcast %307 : i32 to vector<8x1xi32>
    %309 = arith.cmpi slt, %308, %4 : vector<8x1xi32>
    %c4 = arith.constant 4 : index
    %c0_99 = arith.constant 0 : index
    %c0_100 = arith.constant 0 : index
    %310 = vector.load %arg3[%c4, %c0_99, %c0_100] : memref<8x8x16xbf16, #tpu.memory_space<vmem>>, vector<1x8x16xbf16>
    %311 = vector.shape_cast %310 : vector<1x8x16xbf16> to vector<8x16xbf16>
    %c0_101 = arith.constant 0 : index
    %c0_102 = arith.constant 0 : index
    %312 = vector.load %arg4[%c0_101, %c0_102] : memref<16x512xbf16, #tpu.memory_space<vmem>>, vector<16x512xbf16>
    %cst_103 = arith.constant dense<0.000000e+00> : vector<8x512xf32>
    %313 = tpu.matmul %311, %312, %cst_103 {dimension_numbers = #tpu.dot_dimension_numbers<[1], [0], [0], [1], [0, 0, 1, 1], [], []>} : vector<8x16xbf16>, vector<16x512xbf16>, vector<8x512xf32> -> vector<8x512xf32>
    %314 = arith.truncf %265 : vector<8x128xf32> to vector<8x128xbf16>
    %c0_104 = arith.constant 0 : index
    %c0_105 = arith.constant 0 : index
    %315 = vector.load %arg5[%c0_104, %c0_105] : memref<128x512xbf16, #tpu.memory_space<vmem>>, vector<128x512xbf16>
    %cst_106 = arith.constant dense<0.000000e+00> : vector<8x512xf32>
    %316 = tpu.matmul %314, %315, %cst_106 {dimension_numbers = #tpu.dot_dimension_numbers<[1], [0], [0], [1], [0, 0, 1, 1], [], []>} : vector<8x128xbf16>, vector<128x512xbf16>, vector<8x512xf32> -> vector<8x512xf32>
    %317 = arith.addf %313, %316 : vector<8x512xf32>
    %318 = arith.addf %317, %15 : vector<8x512xf32>
    %319 = vector.extract_strided_slice %318 {offsets = [0, 0], sizes = [8, 384], strides = [1, 1]} : vector<8x512xf32> to vector<8x384xf32>
    %320 = arith.negf %319 : vector<8x384xf32>
    %321 = math.exp %320 : vector<8x384xf32>
    %cst_107 = arith.constant 1.000000e+00 : f32
    %322 = vector.broadcast %cst_107 : f32 to vector<8x384xf32>
    %323 = arith.addf %322, %321 : vector<8x384xf32>
    %324 = arith.divf %322, %323 : vector<8x384xf32>
    %325 = vector.extract_strided_slice %324 {offsets = [0, 0], sizes = [8, 128], strides = [1, 1]} : vector<8x384xf32> to vector<8x128xf32>
    %326 = vector.extract_strided_slice %324 {offsets = [0, 128], sizes = [8, 128], strides = [1, 1]} : vector<8x384xf32> to vector<8x128xf32>
    %327 = vector.extract_strided_slice %324 {offsets = [0, 256], sizes = [8, 128], strides = [1, 1]} : vector<8x384xf32> to vector<8x128xf32>
    %328 = vector.extract_strided_slice %318 {offsets = [0, 384], sizes = [8, 128], strides = [1, 1]} : vector<8x512xf32> to vector<8x128xf32>
    %329 = math.tanh %328 : vector<8x128xf32>
    %330 = arith.mulf %326, %268 : vector<8x128xf32>
    %331 = arith.mulf %325, %329 : vector<8x128xf32>
    %332 = arith.addf %330, %331 : vector<8x128xf32>
    %333 = math.tanh %332 : vector<8x128xf32>
    %334 = arith.mulf %327, %333 : vector<8x128xf32>
    %335 = vector.shape_cast %309 : vector<8x1xi1> to vector<8x1xi1>
    %336 = vector.broadcast %335 : vector<8x1xi1> to vector<8x128xi1>
    %337 = arith.select %336, %334, %265 : vector<8x128xi1>, vector<8x128xf32>
    %338 = vector.shape_cast %309 : vector<8x1xi1> to vector<8x1xi1>
    %339 = vector.broadcast %338 : vector<8x1xi1> to vector<8x128xi1>
    %340 = arith.select %339, %332, %268 : vector<8x128xi1>, vector<8x128xf32>
    %341 = arith.truncf %337 : vector<8x128xf32> to vector<8x128xbf16>
    %c0_108 = arith.constant 0 : index
    %c0_109 = arith.constant 0 : index
    %342 = vector.load %arg7[%c0_108, %c0_109] : memref<128x512xbf16, #tpu.memory_space<vmem>>, vector<128x512xbf16>
    %cst_110 = arith.constant dense<0.000000e+00> : vector<8x512xf32>
    %343 = tpu.matmul %341, %342, %cst_110 {dimension_numbers = #tpu.dot_dimension_numbers<[1], [0], [0], [1], [0, 0, 1, 1], [], []>} : vector<8x128xbf16>, vector<128x512xbf16>, vector<8x512xf32> -> vector<8x512xf32>
    %344 = arith.truncf %295 : vector<8x128xf32> to vector<8x128xbf16>
    %c0_111 = arith.constant 0 : index
    %c0_112 = arith.constant 0 : index
    %345 = vector.load %arg8[%c0_111, %c0_112] : memref<128x512xbf16, #tpu.memory_space<vmem>>, vector<128x512xbf16>
    %cst_113 = arith.constant dense<0.000000e+00> : vector<8x512xf32>
    %346 = tpu.matmul %344, %345, %cst_113 {dimension_numbers = #tpu.dot_dimension_numbers<[1], [0], [0], [1], [0, 0, 1, 1], [], []>} : vector<8x128xbf16>, vector<128x512xbf16>, vector<8x512xf32> -> vector<8x512xf32>
    %347 = arith.addf %343, %346 : vector<8x512xf32>
    %348 = arith.addf %347, %18 : vector<8x512xf32>
    %349 = vector.extract_strided_slice %348 {offsets = [0, 0], sizes = [8, 384], strides = [1, 1]} : vector<8x512xf32> to vector<8x384xf32>
    %350 = arith.negf %349 : vector<8x384xf32>
    %351 = math.exp %350 : vector<8x384xf32>
    %cst_114 = arith.constant 1.000000e+00 : f32
    %352 = vector.broadcast %cst_114 : f32 to vector<8x384xf32>
    %353 = arith.addf %352, %351 : vector<8x384xf32>
    %354 = arith.divf %352, %353 : vector<8x384xf32>
    %355 = vector.extract_strided_slice %354 {offsets = [0, 0], sizes = [8, 128], strides = [1, 1]} : vector<8x384xf32> to vector<8x128xf32>
    %356 = vector.extract_strided_slice %354 {offsets = [0, 128], sizes = [8, 128], strides = [1, 1]} : vector<8x384xf32> to vector<8x128xf32>
    %357 = vector.extract_strided_slice %354 {offsets = [0, 256], sizes = [8, 128], strides = [1, 1]} : vector<8x384xf32> to vector<8x128xf32>
    %358 = vector.extract_strided_slice %348 {offsets = [0, 384], sizes = [8, 128], strides = [1, 1]} : vector<8x512xf32> to vector<8x128xf32>
    %359 = math.tanh %358 : vector<8x128xf32>
    %360 = arith.mulf %356, %298 : vector<8x128xf32>
    %361 = arith.mulf %355, %359 : vector<8x128xf32>
    %362 = arith.addf %360, %361 : vector<8x128xf32>
    %363 = math.tanh %362 : vector<8x128xf32>
    %364 = arith.mulf %357, %363 : vector<8x128xf32>
    %365 = vector.shape_cast %309 : vector<8x1xi1> to vector<8x1xi1>
    %366 = vector.broadcast %365 : vector<8x1xi1> to vector<8x128xi1>
    %367 = arith.select %366, %364, %295 : vector<8x128xi1>, vector<8x128xf32>
    %368 = vector.shape_cast %309 : vector<8x1xi1> to vector<8x1xi1>
    %369 = vector.broadcast %368 : vector<8x1xi1> to vector<8x128xi1>
    %370 = arith.select %369, %362, %298 : vector<8x128xi1>, vector<8x128xf32>
    %cst_115 = arith.constant 0.000000e+00 : f32
    %371 = vector.shape_cast %309 : vector<8x1xi1> to vector<8x1xi1>
    %372 = vector.broadcast %371 : vector<8x1xi1> to vector<8x128xi1>
    %373 = vector.broadcast %cst_115 : f32 to vector<8x128xf32>
    %374 = arith.select %372, %367, %373 : vector<8x128xi1>, vector<8x128xf32>
    %375 = arith.truncf %374 : vector<8x128xf32> to vector<8x128xbf16>
    %c4_116 = arith.constant 4 : index
    %c0_117 = arith.constant 0 : index
    %c0_118 = arith.constant 0 : index
    %376 = vector.load %arg10[%c4_116, %c0_117, %c0_118] : memref<8x8x128xbf16, #tpu.memory_space<vmem>>, vector<1x8x128xbf16>
    %377 = vector.shape_cast %376 : vector<1x8x128xbf16> to vector<8x128xbf16>
    %378 = vector.shape_cast %375 : vector<8x128xbf16> to vector<1x8x128xbf16>
    tpu.vector_store %arg10[%c4_116, %c0_117, %c0_118], %378 {strides = array<i32>} : memref<8x8x128xbf16, #tpu.memory_space<vmem>>, vector<1x8x128xbf16>,
    %c5_i32 = arith.constant 5 : i32
    %379 = arith.addi %3, %c5_i32 : i32
    %380 = vector.broadcast %379 : i32 to vector<8x1xi32>
    %381 = arith.cmpi slt, %380, %4 : vector<8x1xi32>
    %c5 = arith.constant 5 : index
    %c0_119 = arith.constant 0 : index
    %c0_120 = arith.constant 0 : index
    %382 = vector.load %arg3[%c5, %c0_119, %c0_120] : memref<8x8x16xbf16, #tpu.memory_space<vmem>>, vector<1x8x16xbf16>
    %383 = vector.shape_cast %382 : vector<1x8x16xbf16> to vector<8x16xbf16>
    %c0_121 = arith.constant 0 : index
    %c0_122 = arith.constant 0 : index
    %384 = vector.load %arg4[%c0_121, %c0_122] : memref<16x512xbf16, #tpu.memory_space<vmem>>, vector<16x512xbf16>
    %cst_123 = arith.constant dense<0.000000e+00> : vector<8x512xf32>
    %385 = tpu.matmul %383, %384, %cst_123 {dimension_numbers = #tpu.dot_dimension_numbers<[1], [0], [0], [1], [0, 0, 1, 1], [], []>} : vector<8x16xbf16>, vector<16x512xbf16>, vector<8x512xf32> -> vector<8x512xf32>
    %386 = arith.truncf %337 : vector<8x128xf32> to vector<8x128xbf16>
    %c0_124 = arith.constant 0 : index
    %c0_125 = arith.constant 0 : index
    %387 = vector.load %arg5[%c0_124, %c0_125] : memref<128x512xbf16, #tpu.memory_space<vmem>>, vector<128x512xbf16>
    %cst_126 = arith.constant dense<0.000000e+00> : vector<8x512xf32>
    %388 = tpu.matmul %386, %387, %cst_126 {dimension_numbers = #tpu.dot_dimension_numbers<[1], [0], [0], [1], [0, 0, 1, 1], [], []>} : vector<8x128xbf16>, vector<128x512xbf16>, vector<8x512xf32> -> vector<8x512xf32>
    %389 = arith.addf %385, %388 : vector<8x512xf32>
    %390 = arith.addf %389, %15 : vector<8x512xf32>
    %391 = vector.extract_strided_slice %390 {offsets = [0, 0], sizes = [8, 384], strides = [1, 1]} : vector<8x512xf32> to vector<8x384xf32>
    %392 = arith.negf %391 : vector<8x384xf32>
    %393 = math.exp %392 : vector<8x384xf32>
    %cst_127 = arith.constant 1.000000e+00 : f32
    %394 = vector.broadcast %cst_127 : f32 to vector<8x384xf32>
    %395 = arith.addf %394, %393 : vector<8x384xf32>
    %396 = arith.divf %394, %395 : vector<8x384xf32>
    %397 = vector.extract_strided_slice %396 {offsets = [0, 0], sizes = [8, 128], strides = [1, 1]} : vector<8x384xf32> to vector<8x128xf32>
    %398 = vector.extract_strided_slice %396 {offsets = [0, 128], sizes = [8, 128], strides = [1, 1]} : vector<8x384xf32> to vector<8x128xf32>
    %399 = vector.extract_strided_slice %396 {offsets = [0, 256], sizes = [8, 128], strides = [1, 1]} : vector<8x384xf32> to vector<8x128xf32>
    %400 = vector.extract_strided_slice %390 {offsets = [0, 384], sizes = [8, 128], strides = [1, 1]} : vector<8x512xf32> to vector<8x128xf32>
    %401 = math.tanh %400 : vector<8x128xf32>
    %402 = arith.mulf %398, %340 : vector<8x128xf32>
    %403 = arith.mulf %397, %401 : vector<8x128xf32>
    %404 = arith.addf %402, %403 : vector<8x128xf32>
    %405 = math.tanh %404 : vector<8x128xf32>
    %406 = arith.mulf %399, %405 : vector<8x128xf32>
    %407 = vector.shape_cast %381 : vector<8x1xi1> to vector<8x1xi1>
    %408 = vector.broadcast %407 : vector<8x1xi1> to vector<8x128xi1>
    %409 = arith.select %408, %406, %337 : vector<8x128xi1>, vector<8x128xf32>
    %410 = vector.shape_cast %381 : vector<8x1xi1> to vector<8x1xi1>
    %411 = vector.broadcast %410 : vector<8x1xi1> to vector<8x128xi1>
    %412 = arith.select %411, %404, %340 : vector<8x128xi1>, vector<8x128xf32>
    %413 = arith.truncf %409 : vector<8x128xf32> to vector<8x128xbf16>
    %c0_128 = arith.constant 0 : index
    %c0_129 = arith.constant 0 : index
    %414 = vector.load %arg7[%c0_128, %c0_129] : memref<128x512xbf16, #tpu.memory_space<vmem>>, vector<128x512xbf16>
    %cst_130 = arith.constant dense<0.000000e+00> : vector<8x512xf32>
    %415 = tpu.matmul %413, %414, %cst_130 {dimension_numbers = #tpu.dot_dimension_numbers<[1], [0], [0], [1], [0, 0, 1, 1], [], []>} : vector<8x128xbf16>, vector<128x512xbf16>, vector<8x512xf32> -> vector<8x512xf32>
    %416 = arith.truncf %367 : vector<8x128xf32> to vector<8x128xbf16>
    %c0_131 = arith.constant 0 : index
    %c0_132 = arith.constant 0 : index
    %417 = vector.load %arg8[%c0_131, %c0_132] : memref<128x512xbf16, #tpu.memory_space<vmem>>, vector<128x512xbf16>
    %cst_133 = arith.constant dense<0.000000e+00> : vector<8x512xf32>
    %418 = tpu.matmul %416, %417, %cst_133 {dimension_numbers = #tpu.dot_dimension_numbers<[1], [0], [0], [1], [0, 0, 1, 1], [], []>} : vector<8x128xbf16>, vector<128x512xbf16>, vector<8x512xf32> -> vector<8x512xf32>
    %419 = arith.addf %415, %418 : vector<8x512xf32>
    %420 = arith.addf %419, %18 : vector<8x512xf32>
    %421 = vector.extract_strided_slice %420 {offsets = [0, 0], sizes = [8, 384], strides = [1, 1]} : vector<8x512xf32> to vector<8x384xf32>
    %422 = arith.negf %421 : vector<8x384xf32>
    %423 = math.exp %422 : vector<8x384xf32>
    %cst_134 = arith.constant 1.000000e+00 : f32
    %424 = vector.broadcast %cst_134 : f32 to vector<8x384xf32>
    %425 = arith.addf %424, %423 : vector<8x384xf32>
    %426 = arith.divf %424, %425 : vector<8x384xf32>
    %427 = vector.extract_strided_slice %426 {offsets = [0, 0], sizes = [8, 128], strides = [1, 1]} : vector<8x384xf32> to vector<8x128xf32>
    %428 = vector.extract_strided_slice %426 {offsets = [0, 128], sizes = [8, 128], strides = [1, 1]} : vector<8x384xf32> to vector<8x128xf32>
    %429 = vector.extract_strided_slice %426 {offsets = [0, 256], sizes = [8, 128], strides = [1, 1]} : vector<8x384xf32> to vector<8x128xf32>
    %430 = vector.extract_strided_slice %420 {offsets = [0, 384], sizes = [8, 128], strides = [1, 1]} : vector<8x512xf32> to vector<8x128xf32>
    %431 = math.tanh %430 : vector<8x128xf32>
    %432 = arith.mulf %428, %370 : vector<8x128xf32>
    %433 = arith.mulf %427, %431 : vector<8x128xf32>
    %434 = arith.addf %432, %433 : vector<8x128xf32>
    %435 = math.tanh %434 : vector<8x128xf32>
    %436 = arith.mulf %429, %435 : vector<8x128xf32>
    %437 = vector.shape_cast %381 : vector<8x1xi1> to vector<8x1xi1>
    %438 = vector.broadcast %437 : vector<8x1xi1> to vector<8x128xi1>
    %439 = arith.select %438, %436, %367 : vector<8x128xi1>, vector<8x128xf32>
    %440 = vector.shape_cast %381 : vector<8x1xi1> to vector<8x1xi1>
    %441 = vector.broadcast %440 : vector<8x1xi1> to vector<8x128xi1>
    %442 = arith.select %441, %434, %370 : vector<8x128xi1>, vector<8x128xf32>
    %cst_135 = arith.constant 0.000000e+00 : f32
    %443 = vector.shape_cast %381 : vector<8x1xi1> to vector<8x1xi1>
    %444 = vector.broadcast %443 : vector<8x1xi1> to vector<8x128xi1>
    %445 = vector.broadcast %cst_135 : f32 to vector<8x128xf32>
    %446 = arith.select %444, %439, %445 : vector<8x128xi1>, vector<8x128xf32>
    %447 = arith.truncf %446 : vector<8x128xf32> to vector<8x128xbf16>
    %c5_136 = arith.constant 5 : index
    %c0_137 = arith.constant 0 : index
    %c0_138 = arith.constant 0 : index
    %448 = vector.load %arg10[%c5_136, %c0_137, %c0_138] : memref<8x8x128xbf16, #tpu.memory_space<vmem>>, vector<1x8x128xbf16>
    %449 = vector.shape_cast %448 : vector<1x8x128xbf16> to vector<8x128xbf16>
    %450 = vector.shape_cast %447 : vector<8x128xbf16> to vector<1x8x128xbf16>
    tpu.vector_store %arg10[%c5_136, %c0_137, %c0_138], %450 {strides = array<i32>} : memref<8x8x128xbf16, #tpu.memory_space<vmem>>, vector<1x8x128xbf16>,
    %c6_i32 = arith.constant 6 : i32
    %451 = arith.addi %3, %c6_i32 : i32
    %452 = vector.broadcast %451 : i32 to vector<8x1xi32>
    %453 = arith.cmpi slt, %452, %4 : vector<8x1xi32>
    %c6 = arith.constant 6 : index
    %c0_139 = arith.constant 0 : index
    %c0_140 = arith.constant 0 : index
    %454 = vector.load %arg3[%c6, %c0_139, %c0_140] : memref<8x8x16xbf16, #tpu.memory_space<vmem>>, vector<1x8x16xbf16>
    %455 = vector.shape_cast %454 : vector<1x8x16xbf16> to vector<8x16xbf16>
    %c0_141 = arith.constant 0 : index
    %c0_142 = arith.constant 0 : index
    %456 = vector.load %arg4[%c0_141, %c0_142] : memref<16x512xbf16, #tpu.memory_space<vmem>>, vector<16x512xbf16>
    %cst_143 = arith.constant dense<0.000000e+00> : vector<8x512xf32>
    %457 = tpu.matmul %455, %456, %cst_143 {dimension_numbers = #tpu.dot_dimension_numbers<[1], [0], [0], [1], [0, 0, 1, 1], [], []>} : vector<8x16xbf16>, vector<16x512xbf16>, vector<8x512xf32> -> vector<8x512xf32>
    %458 = arith.truncf %409 : vector<8x128xf32> to vector<8x128xbf16>
    %c0_144 = arith.constant 0 : index
    %c0_145 = arith.constant 0 : index
    %459 = vector.load %arg5[%c0_144, %c0_145] : memref<128x512xbf16, #tpu.memory_space<vmem>>, vector<128x512xbf16>
    %cst_146 = arith.constant dense<0.000000e+00> : vector<8x512xf32>
    %460 = tpu.matmul %458, %459, %cst_146 {dimension_numbers = #tpu.dot_dimension_numbers<[1], [0], [0], [1], [0, 0, 1, 1], [], []>} : vector<8x128xbf16>, vector<128x512xbf16>, vector<8x512xf32> -> vector<8x512xf32>
    %461 = arith.addf %457, %460 : vector<8x512xf32>
    %462 = arith.addf %461, %15 : vector<8x512xf32>
    %463 = vector.extract_strided_slice %462 {offsets = [0, 0], sizes = [8, 384], strides = [1, 1]} : vector<8x512xf32> to vector<8x384xf32>
    %464 = arith.negf %463 : vector<8x384xf32>
    %465 = math.exp %464 : vector<8x384xf32>
    %cst_147 = arith.constant 1.000000e+00 : f32
    %466 = vector.broadcast %cst_147 : f32 to vector<8x384xf32>
    %467 = arith.addf %466, %465 : vector<8x384xf32>
    %468 = arith.divf %466, %467 : vector<8x384xf32>
    %469 = vector.extract_strided_slice %468 {offsets = [0, 0], sizes = [8, 128], strides = [1, 1]} : vector<8x384xf32> to vector<8x128xf32>
    %470 = vector.extract_strided_slice %468 {offsets = [0, 128], sizes = [8, 128], strides = [1, 1]} : vector<8x384xf32> to vector<8x128xf32>
    %471 = vector.extract_strided_slice %468 {offsets = [0, 256], sizes = [8, 128], strides = [1, 1]} : vector<8x384xf32> to vector<8x128xf32>
    %472 = vector.extract_strided_slice %462 {offsets = [0, 384], sizes = [8, 128], strides = [1, 1]} : vector<8x512xf32> to vector<8x128xf32>
    %473 = math.tanh %472 : vector<8x128xf32>
    %474 = arith.mulf %470, %412 : vector<8x128xf32>
    %475 = arith.mulf %469, %473 : vector<8x128xf32>
    %476 = arith.addf %474, %475 : vector<8x128xf32>
    %477 = math.tanh %476 : vector<8x128xf32>
    %478 = arith.mulf %471, %477 : vector<8x128xf32>
    %479 = vector.shape_cast %453 : vector<8x1xi1> to vector<8x1xi1>
    %480 = vector.broadcast %479 : vector<8x1xi1> to vector<8x128xi1>
    %481 = arith.select %480, %478, %409 : vector<8x128xi1>, vector<8x128xf32>
    %482 = vector.shape_cast %453 : vector<8x1xi1> to vector<8x1xi1>
    %483 = vector.broadcast %482 : vector<8x1xi1> to vector<8x128xi1>
    %484 = arith.select %483, %476, %412 : vector<8x128xi1>, vector<8x128xf32>
    %485 = arith.truncf %481 : vector<8x128xf32> to vector<8x128xbf16>
    %c0_148 = arith.constant 0 : index
    %c0_149 = arith.constant 0 : index
    %486 = vector.load %arg7[%c0_148, %c0_149] : memref<128x512xbf16, #tpu.memory_space<vmem>>, vector<128x512xbf16>
    %cst_150 = arith.constant dense<0.000000e+00> : vector<8x512xf32>
    %487 = tpu.matmul %485, %486, %cst_150 {dimension_numbers = #tpu.dot_dimension_numbers<[1], [0], [0], [1], [0, 0, 1, 1], [], []>} : vector<8x128xbf16>, vector<128x512xbf16>, vector<8x512xf32> -> vector<8x512xf32>
    %488 = arith.truncf %439 : vector<8x128xf32> to vector<8x128xbf16>
    %c0_151 = arith.constant 0 : index
    %c0_152 = arith.constant 0 : index
    %489 = vector.load %arg8[%c0_151, %c0_152] : memref<128x512xbf16, #tpu.memory_space<vmem>>, vector<128x512xbf16>
    %cst_153 = arith.constant dense<0.000000e+00> : vector<8x512xf32>
    %490 = tpu.matmul %488, %489, %cst_153 {dimension_numbers = #tpu.dot_dimension_numbers<[1], [0], [0], [1], [0, 0, 1, 1], [], []>} : vector<8x128xbf16>, vector<128x512xbf16>, vector<8x512xf32> -> vector<8x512xf32>
    %491 = arith.addf %487, %490 : vector<8x512xf32>
    %492 = arith.addf %491, %18 : vector<8x512xf32>
    %493 = vector.extract_strided_slice %492 {offsets = [0, 0], sizes = [8, 384], strides = [1, 1]} : vector<8x512xf32> to vector<8x384xf32>
    %494 = arith.negf %493 : vector<8x384xf32>
    %495 = math.exp %494 : vector<8x384xf32>
    %cst_154 = arith.constant 1.000000e+00 : f32
    %496 = vector.broadcast %cst_154 : f32 to vector<8x384xf32>
    %497 = arith.addf %496, %495 : vector<8x384xf32>
    %498 = arith.divf %496, %497 : vector<8x384xf32>
    %499 = vector.extract_strided_slice %498 {offsets = [0, 0], sizes = [8, 128], strides = [1, 1]} : vector<8x384xf32> to vector<8x128xf32>
    %500 = vector.extract_strided_slice %498 {offsets = [0, 128], sizes = [8, 128], strides = [1, 1]} : vector<8x384xf32> to vector<8x128xf32>
    %501 = vector.extract_strided_slice %498 {offsets = [0, 256], sizes = [8, 128], strides = [1, 1]} : vector<8x384xf32> to vector<8x128xf32>
    %502 = vector.extract_strided_slice %492 {offsets = [0, 384], sizes = [8, 128], strides = [1, 1]} : vector<8x512xf32> to vector<8x128xf32>
    %503 = math.tanh %502 : vector<8x128xf32>
    %504 = arith.mulf %500, %442 : vector<8x128xf32>
    %505 = arith.mulf %499, %503 : vector<8x128xf32>
    %506 = arith.addf %504, %505 : vector<8x128xf32>
    %507 = math.tanh %506 : vector<8x128xf32>
    %508 = arith.mulf %501, %507 : vector<8x128xf32>
    %509 = vector.shape_cast %453 : vector<8x1xi1> to vector<8x1xi1>
    %510 = vector.broadcast %509 : vector<8x1xi1> to vector<8x128xi1>
    %511 = arith.select %510, %508, %439 : vector<8x128xi1>, vector<8x128xf32>
    %512 = vector.shape_cast %453 : vector<8x1xi1> to vector<8x1xi1>
    %513 = vector.broadcast %512 : vector<8x1xi1> to vector<8x128xi1>
    %514 = arith.select %513, %506, %442 : vector<8x128xi1>, vector<8x128xf32>
    %cst_155 = arith.constant 0.000000e+00 : f32
    %515 = vector.shape_cast %453 : vector<8x1xi1> to vector<8x1xi1>
    %516 = vector.broadcast %515 : vector<8x1xi1> to vector<8x128xi1>
    %517 = vector.broadcast %cst_155 : f32 to vector<8x128xf32>
    %518 = arith.select %516, %511, %517 : vector<8x128xi1>, vector<8x128xf32>
    %519 = arith.truncf %518 : vector<8x128xf32> to vector<8x128xbf16>
    %c6_156 = arith.constant 6 : index
    %c0_157 = arith.constant 0 : index
    %c0_158 = arith.constant 0 : index
    %520 = vector.load %arg10[%c6_156, %c0_157, %c0_158] : memref<8x8x128xbf16, #tpu.memory_space<vmem>>, vector<1x8x128xbf16>
    %521 = vector.shape_cast %520 : vector<1x8x128xbf16> to vector<8x128xbf16>
    %522 = vector.shape_cast %519 : vector<8x128xbf16> to vector<1x8x128xbf16>
    tpu.vector_store %arg10[%c6_156, %c0_157, %c0_158], %522 {strides = array<i32>} : memref<8x8x128xbf16, #tpu.memory_space<vmem>>, vector<1x8x128xbf16>,
    %c7_i32 = arith.constant 7 : i32
    %523 = arith.addi %3, %c7_i32 : i32
    %524 = vector.broadcast %523 : i32 to vector<8x1xi32>
    %525 = arith.cmpi slt, %524, %4 : vector<8x1xi32>
    %c7 = arith.constant 7 : index
    %c0_159 = arith.constant 0 : index
    %c0_160 = arith.constant 0 : index
    %526 = vector.load %arg3[%c7, %c0_159, %c0_160] : memref<8x8x16xbf16, #tpu.memory_space<vmem>>, vector<1x8x16xbf16>
    %527 = vector.shape_cast %526 : vector<1x8x16xbf16> to vector<8x16xbf16>
    %c0_161 = arith.constant 0 : index
    %c0_162 = arith.constant 0 : index
    %528 = vector.load %arg4[%c0_161, %c0_162] : memref<16x512xbf16, #tpu.memory_space<vmem>>, vector<16x512xbf16>
    %cst_163 = arith.constant dense<0.000000e+00> : vector<8x512xf32>
    %529 = tpu.matmul %527, %528, %cst_163 {dimension_numbers = #tpu.dot_dimension_numbers<[1], [0], [0], [1], [0, 0, 1, 1], [], []>} : vector<8x16xbf16>, vector<16x512xbf16>, vector<8x512xf32> -> vector<8x512xf32>
    %530 = arith.truncf %481 : vector<8x128xf32> to vector<8x128xbf16>
    %c0_164 = arith.constant 0 : index
    %c0_165 = arith.constant 0 : index
    %531 = vector.load %arg5[%c0_164, %c0_165] : memref<128x512xbf16, #tpu.memory_space<vmem>>, vector<128x512xbf16>
    %cst_166 = arith.constant dense<0.000000e+00> : vector<8x512xf32>
    %532 = tpu.matmul %530, %531, %cst_166 {dimension_numbers = #tpu.dot_dimension_numbers<[1], [0], [0], [1], [0, 0, 1, 1], [], []>} : vector<8x128xbf16>, vector<128x512xbf16>, vector<8x512xf32> -> vector<8x512xf32>
    %533 = arith.addf %529, %532 : vector<8x512xf32>
    %534 = arith.addf %533, %15 : vector<8x512xf32>
    %535 = vector.extract_strided_slice %534 {offsets = [0, 0], sizes = [8, 384], strides = [1, 1]} : vector<8x512xf32> to vector<8x384xf32>
    %536 = arith.negf %535 : vector<8x384xf32>
    %537 = math.exp %536 : vector<8x384xf32>
    %cst_167 = arith.constant 1.000000e+00 : f32
    %538 = vector.broadcast %cst_167 : f32 to vector<8x384xf32>
    %539 = arith.addf %538, %537 : vector<8x384xf32>
    %540 = arith.divf %538, %539 : vector<8x384xf32>
    %541 = vector.extract_strided_slice %540 {offsets = [0, 0], sizes = [8, 128], strides = [1, 1]} : vector<8x384xf32> to vector<8x128xf32>
    %542 = vector.extract_strided_slice %540 {offsets = [0, 128], sizes = [8, 128], strides = [1, 1]} : vector<8x384xf32> to vector<8x128xf32>
    %543 = vector.extract_strided_slice %540 {offsets = [0, 256], sizes = [8, 128], strides = [1, 1]} : vector<8x384xf32> to vector<8x128xf32>
    %544 = vector.extract_strided_slice %534 {offsets = [0, 384], sizes = [8, 128], strides = [1, 1]} : vector<8x512xf32> to vector<8x128xf32>
    %545 = math.tanh %544 : vector<8x128xf32>
    %546 = arith.mulf %542, %484 : vector<8x128xf32>
    %547 = arith.mulf %541, %545 : vector<8x128xf32>
    %548 = arith.addf %546, %547 : vector<8x128xf32>
    %549 = math.tanh %548 : vector<8x128xf32>
    %550 = arith.mulf %543, %549 : vector<8x128xf32>
    %551 = vector.shape_cast %525 : vector<8x1xi1> to vector<8x1xi1>
    %552 = vector.broadcast %551 : vector<8x1xi1> to vector<8x128xi1>
    %553 = arith.select %552, %550, %481 : vector<8x128xi1>, vector<8x128xf32>
    %554 = vector.shape_cast %525 : vector<8x1xi1> to vector<8x1xi1>
    %555 = vector.broadcast %554 : vector<8x1xi1> to vector<8x128xi1>
    %556 = arith.select %555, %548, %484 : vector<8x128xi1>, vector<8x128xf32>
    %557 = arith.truncf %553 : vector<8x128xf32> to vector<8x128xbf16>
    %c0_168 = arith.constant 0 : index
    %c0_169 = arith.constant 0 : index
    %558 = vector.load %arg7[%c0_168, %c0_169] : memref<128x512xbf16, #tpu.memory_space<vmem>>, vector<128x512xbf16>
    %cst_170 = arith.constant dense<0.000000e+00> : vector<8x512xf32>
    %559 = tpu.matmul %557, %558, %cst_170 {dimension_numbers = #tpu.dot_dimension_numbers<[1], [0], [0], [1], [0, 0, 1, 1], [], []>} : vector<8x128xbf16>, vector<128x512xbf16>, vector<8x512xf32> -> vector<8x512xf32>
    %560 = arith.truncf %511 : vector<8x128xf32> to vector<8x128xbf16>
    %c0_171 = arith.constant 0 : index
    %c0_172 = arith.constant 0 : index
    %561 = vector.load %arg8[%c0_171, %c0_172] : memref<128x512xbf16, #tpu.memory_space<vmem>>, vector<128x512xbf16>
    %cst_173 = arith.constant dense<0.000000e+00> : vector<8x512xf32>
    %562 = tpu.matmul %560, %561, %cst_173 {dimension_numbers = #tpu.dot_dimension_numbers<[1], [0], [0], [1], [0, 0, 1, 1], [], []>} : vector<8x128xbf16>, vector<128x512xbf16>, vector<8x512xf32> -> vector<8x512xf32>
    %563 = arith.addf %559, %562 : vector<8x512xf32>
    %564 = arith.addf %563, %18 : vector<8x512xf32>
    %565 = vector.extract_strided_slice %564 {offsets = [0, 0], sizes = [8, 384], strides = [1, 1]} : vector<8x512xf32> to vector<8x384xf32>
    %566 = arith.negf %565 : vector<8x384xf32>
    %567 = math.exp %566 : vector<8x384xf32>
    %cst_174 = arith.constant 1.000000e+00 : f32
    %568 = vector.broadcast %cst_174 : f32 to vector<8x384xf32>
    %569 = arith.addf %568, %567 : vector<8x384xf32>
    %570 = arith.divf %568, %569 : vector<8x384xf32>
    %571 = vector.extract_strided_slice %570 {offsets = [0, 0], sizes = [8, 128], strides = [1, 1]} : vector<8x384xf32> to vector<8x128xf32>
    %572 = vector.extract_strided_slice %570 {offsets = [0, 128], sizes = [8, 128], strides = [1, 1]} : vector<8x384xf32> to vector<8x128xf32>
    %573 = vector.extract_strided_slice %570 {offsets = [0, 256], sizes = [8, 128], strides = [1, 1]} : vector<8x384xf32> to vector<8x128xf32>
    %574 = vector.extract_strided_slice %564 {offsets = [0, 384], sizes = [8, 128], strides = [1, 1]} : vector<8x512xf32> to vector<8x128xf32>
    %575 = math.tanh %574 : vector<8x128xf32>
    %576 = arith.mulf %572, %514 : vector<8x128xf32>
    %577 = arith.mulf %571, %575 : vector<8x128xf32>
    %578 = arith.addf %576, %577 : vector<8x128xf32>
    %579 = math.tanh %578 : vector<8x128xf32>
    %580 = arith.mulf %573, %579 : vector<8x128xf32>
    %581 = vector.shape_cast %525 : vector<8x1xi1> to vector<8x1xi1>
    %582 = vector.broadcast %581 : vector<8x1xi1> to vector<8x128xi1>
    %583 = arith.select %582, %580, %511 : vector<8x128xi1>, vector<8x128xf32>
    %584 = vector.shape_cast %525 : vector<8x1xi1> to vector<8x1xi1>
    %585 = vector.broadcast %584 : vector<8x1xi1> to vector<8x128xi1>
    %586 = arith.select %585, %578, %514 : vector<8x128xi1>, vector<8x128xf32>
    %cst_175 = arith.constant 0.000000e+00 : f32
    %587 = vector.shape_cast %525 : vector<8x1xi1> to vector<8x1xi1>
    %588 = vector.broadcast %587 : vector<8x1xi1> to vector<8x128xi1>
    %589 = vector.broadcast %cst_175 : f32 to vector<8x128xf32>
    %590 = arith.select %588, %583, %589 : vector<8x128xi1>, vector<8x128xf32>
    %591 = arith.truncf %590 : vector<8x128xf32> to vector<8x128xbf16>
    %c7_176 = arith.constant 7 : index
    %c0_177 = arith.constant 0 : index
    %c0_178 = arith.constant 0 : index
    %592 = vector.load %arg10[%c7_176, %c0_177, %c0_178] : memref<8x8x128xbf16, #tpu.memory_space<vmem>>, vector<1x8x128xbf16>
    %593 = vector.shape_cast %592 : vector<1x8x128xbf16> to vector<8x128xbf16>
    %594 = vector.shape_cast %591 : vector<8x128xbf16> to vector<1x8x128xbf16>
    tpu.vector_store %arg10[%c7_176, %c0_177, %c0_178], %594 {strides = array<i32>} : memref<8x8x128xbf16, #tpu.memory_space<vmem>>, vector<1x8x128xbf16>,
    %c0_179 = arith.constant 0 : index
    %c0_180 = arith.constant 0 : index
    %c0_181 = arith.constant 0 : index
    %595 = vector.load %arg11[%c0_179, %c0_180, %c0_181] : memref<2x8x128xf32, #tpu.memory_space<vmem>>, vector<1x8x128xf32>
    %596 = vector.shape_cast %595 : vector<1x8x128xf32> to vector<8x128xf32>
    %597 = vector.shape_cast %553 : vector<8x128xf32> to vector<1x8x128xf32>
    tpu.vector_store %arg11[%c0_179, %c0_180, %c0_181], %597 {strides = array<i32>} : memref<2x8x128xf32, #tpu.memory_space<vmem>>, vector<1x8x128xf32>,
    %c0_182 = arith.constant 0 : index
    %c0_183 = arith.constant 0 : index
    %c0_184 = arith.constant 0 : index
    %598 = vector.load %arg12[%c0_182, %c0_183, %c0_184] : memref<2x8x128xf32, #tpu.memory_space<vmem>>, vector<1x8x128xf32>
    %599 = vector.shape_cast %598 : vector<1x8x128xf32> to vector<8x128xf32>
    %600 = vector.shape_cast %556 : vector<8x128xf32> to vector<1x8x128xf32>
    tpu.vector_store %arg12[%c0_182, %c0_183, %c0_184], %600 {strides = array<i32>} : memref<2x8x128xf32, #tpu.memory_space<vmem>>, vector<1x8x128xf32>,
    %c1_185 = arith.constant 1 : index
    %c0_186 = arith.constant 0 : index
    %c0_187 = arith.constant 0 : index
    %601 = vector.load %arg11[%c1_185, %c0_186, %c0_187] : memref<2x8x128xf32, #tpu.memory_space<vmem>>, vector<1x8x128xf32>
    %602 = vector.shape_cast %601 : vector<1x8x128xf32> to vector<8x128xf32>
    %603 = vector.shape_cast %583 : vector<8x128xf32> to vector<1x8x128xf32>
    tpu.vector_store %arg11[%c1_185, %c0_186, %c0_187], %603 {strides = array<i32>} : memref<2x8x128xf32, #tpu.memory_space<vmem>>, vector<1x8x128xf32>,
    %c1_188 = arith.constant 1 : index
    %c0_189 = arith.constant 0 : index
    %c0_190 = arith.constant 0 : index
    %604 = vector.load %arg12[%c1_188, %c0_189, %c0_190] : memref<2x8x128xf32, #tpu.memory_space<vmem>>, vector<1x8x128xf32>
    %605 = vector.shape_cast %604 : vector<1x8x128xf32> to vector<8x128xf32>
    %606 = vector.shape_cast %586 : vector<8x128xf32> to vector<1x8x128xf32>
    tpu.vector_store %arg12[%c1_188, %c0_189, %c0_190], %606 {strides = array<i32>} : memref<2x8x128xf32, #tpu.memory_space<vmem>>, vector<1x8x128xf32>,
    return
  }
  func.func @transform_0(%arg0: i32, %arg1: i32) -> (i32, i32) {
    %c0_i32 = arith.constant 0 : i32
    %c0_i32_0 = arith.constant 0 : i32
    return %arg0, %c0_i32 : i32, i32
  }
  func.func @transform_1(%arg0: i32, %arg1: i32) -> (i32, i32, i32) {
    %c0_i32 = arith.constant 0 : i32
    %c0_i32_0 = arith.constant 0 : i32
    return %arg1, %arg0, %c0_i32 : i32, i32, i32
  }
  func.func @transform_2(%arg0: i32, %arg1: i32) -> (i32, i32) {
    %c0_i32 = arith.constant 0 : i32
    %c0_i32_0 = arith.constant 0 : i32
    %c0_i32_1 = arith.constant 0 : i32
    return %c0_i32, %c0_i32_0 : i32, i32
  }
  func.func @transform_3(%arg0: i32, %arg1: i32) -> (i32, i32) {
    %c0_i32 = arith.constant 0 : i32
    %c0_i32_0 = arith.constant 0 : i32
    %c0_i32_1 = arith.constant 0 : i32
    return %c0_i32, %c0_i32_0 : i32, i32
  }
  func.func @transform_4(%arg0: i32, %arg1: i32) -> (i32, i32) {
    %c0_i32 = arith.constant 0 : i32
    %c0_i32_0 = arith.constant 0 : i32
    %c0_i32_1 = arith.constant 0 : i32
    return %c0_i32, %c0_i32_0 : i32, i32
  }
  func.func @transform_5(%arg0: i32, %arg1: i32) -> (i32, i32) {
    %c0_i32 = arith.constant 0 : i32
    %c0_i32_0 = arith.constant 0 : i32
    %c0_i32_1 = arith.constant 0 : i32
    return %c0_i32, %c0_i32_0 : i32, i32
  }
  func.func @transform_6(%arg0: i32, %arg1: i32) -> (i32, i32) {
    %c0_i32 = arith.constant 0 : i32
    %c0_i32_0 = arith.constant 0 : i32
    %c0_i32_1 = arith.constant 0 : i32
    return %c0_i32, %c0_i32_0 : i32, i32
  }
  func.func @transform_7(%arg0: i32, %arg1: i32) -> (i32, i32) {
    %c0_i32 = arith.constant 0 : i32
    %c0_i32_0 = arith.constant 0 : i32
    %c0_i32_1 = arith.constant 0 : i32
    return %c0_i32, %c0_i32_0 : i32, i32
  }
  func.func @transform_8(%arg0: i32, %arg1: i32) -> (i32, i32, i32) {
    %c0_i32 = arith.constant 0 : i32
    %c0_i32_0 = arith.constant 0 : i32
    return %arg1, %arg0, %c0_i32 : i32, i32, i32
  }
}

</mosaic_0001>

<llo_original>
// kernel: tpu_custom_call.1
$region0: #{tpu_custom_call.1}
  #allocation0 [shape = 'u32[]', space=smem, size = 0x4, offset = 0x4, fixed_abs, tag = 'smem constant byte address 0x4 - core index']
  #allocation1 [shape = 'u32[144,128]{1,0:T(1,128)}', space=vmem, size = 0x12000, scoped, tag = 'internal scratch']
  #allocation2 [shape = 'f32[2,8,128]{2,1,0:T(8,128)}', space=vmem, size = 0x2000, scoped, tag = 'scratch operand']
  #allocation3 [shape = 'f32[2,8,128]{2,1,0:T(8,128)}', space=vmem, size = 0x2000, scoped, tag = 'scratch operand']
  %s0 = inlined_call_operand.vmem [shape: s32[8,1], index: 0, kind: input, shape index: {}]
  %s1 = inlined_call_operand.hbm [shape: bf16[8,8,16], index: 1, kind: input, shape index: {}]
  %s2 = inlined_call_operand.hbm [shape: bf16[16,512], index: 2, kind: input, shape index: {}]
  %s3 = inlined_call_operand.hbm [shape: bf16[128,512], index: 3, kind: input, shape index: {}]
  %s4 = inlined_call_operand.vmem [shape: f32[1,512], index: 4, kind: input, shape index: {}]
  %s5 = inlined_call_operand.hbm [shape: bf16[128,512], index: 5, kind: input, shape index: {}]
  %s6 = inlined_call_operand.hbm [shape: bf16[128,512], index: 6, kind: input, shape index: {}]
  %s7 = inlined_call_operand.vmem [shape: f32[1,512], index: 7, kind: input, shape index: {}]
  %s8 = inlined_call_operand.hbm [shape: bf16[8,8,128], index: 8, kind: output, shape index: {}]
  %s9 = sld [smem:[#allocation0]]
  $region66: #{tpu_custom_call.1} parent=0
    _
  %s11 = ssub.s32 1, %s9
  %s12 = scalar_select 0, %s11, %s9
  $region1: #{tpu_custom_call.1} parent=0
    #allocation4 [shape = 'u8[16384]{0}', space=vmem, size = 0x4000, scoped, tag = 'input window, operand 1, single buffered']
    #allocation5 [shape = 's32[1]{0}', space=sflag, size = 0x4, scoped, tag = 'scoped memory for tpu_custom_call.1']
    #allocation6 [shape = 's32[1]{0}', space=sflag, size = 0x4, scoped, tag = 'scoped memory for tpu_custom_call.1']
    #allocation7 [shape = 'u8[16384]{0}', space=vmem, size = 0x4000, scoped, tag = 'input window, operand 2, single buffered']
    #allocation8 [shape = 's32[1]{0}', space=sflag, size = 0x4, scoped, tag = 'scoped memory for tpu_custom_call.1']
    #allocation9 [shape = 'u8[131072]{0}', space=vmem, size = 0x20000, scoped, tag = 'input window, operand 3, single buffered']
    #allocation10 [shape = 'u8[131072]{0}', space=vmem, size = 0x20000, scoped, tag = 'input window, operand 5, single buffered']
    #allocation11 [shape = 's32[1]{0}', space=sflag, size = 0x4, scoped, tag = 'scoped memory for tpu_custom_call.1']
    #allocation12 [shape = 'u8[131072]{0}', space=vmem, size = 0x20000, scoped, tag = 'input window, operand 6, single buffered']
    #allocation13 [shape = 'u8[16384]{0}', space=vmem, size = 0x4000, scoped, tag = 'output window, operand 0, single buffered']
    %13 = vsyncpa [#allocation5], 0
    %14 = vsyncpa [#allocation8], 0
    %15 = vsyncpa [#allocation11], 0
    %16 = vsyncpa [#allocation6], 0
    // Predicated region
    $region2: #{tpu_custom_call.1} parent=1 // pred_check
      _
    $region3: #{tpu_custom_call.1} parent=1 // pred_check_branch
      %18 = sbr.rel (0) target = $region5
    $region4: #{tpu_custom_call.1} parent=1 // pred_region
      _
    $region5: #{tpu_custom_call.1} parent=1 // pred_fallthru
      _
    // Predicated region
    $region6: #{tpu_custom_call.1} parent=1 // pred_check
      _
    $region7: #{tpu_custom_call.1} parent=1 // pred_check_branch
      %20 = sbr.rel (0) target = $region9
    $region8: #{tpu_custom_call.1} parent=1 // pred_region
      %s22 = ssub.s32 512, 512
      %23 = vsyncadd [#allocation5], %s22
      %s24 = sshll.u32 [#allocation4], 4
      %s25 = int_to_ptr.vmem [resolvable:$true] %s24
      %30 = dma.hbm_to_vmem [thread:$0]  %s1, 512, %s25, [#allocation5], 64, 64, 4
    $region9: #{tpu_custom_call.1} parent=1 // pred_fallthru
      _
    // Predicated region
    $region10: #{tpu_custom_call.1} parent=1 // pred_check
      _
    $region11: #{tpu_custom_call.1} parent=1 // pred_check_branch
      %32 = sbr.rel (0) target = $region13
    $region12: #{tpu_custom_call.1} parent=1 // pred_region
      %s34 = ssub.s32 512, 512
      %35 = vsyncadd [#allocation8], %s34
      %s36 = sshll.u32 [#allocation7], 4
      %s37 = int_to_ptr.vmem [resolvable:$true] %s36
      %42 = dma.hbm_to_vmem [thread:$0]  %s2, 512, %s37, [#allocation8], 256, 256, 16
    $region13: #{tpu_custom_call.1} parent=1 // pred_fallthru
      _
    // Predicated region
    $region14: #{tpu_custom_call.1} parent=1 // pred_check
      _
    $region15: #{tpu_custom_call.1} parent=1 // pred_check_branch
      %44 = sbr.rel (0) target = $region17
    $region16: #{tpu_custom_call.1} parent=1 // pred_region
      %s46 = ssub.s32 4096, 4096
      %47 = vsyncadd [#allocation8], %s46
      %s48 = sshll.u32 [#allocation9], 4
      %s49 = int_to_ptr.vmem [resolvable:$true] %s48
      %54 = dma.hbm_to_vmem [thread:$0]  %s3, 4096, %s49, [#allocation8], 256, 256, 16
    $region17: #{tpu_custom_call.1} parent=1 // pred_fallthru
      _
    // Predicated region
    $region18: #{tpu_custom_call.1} parent=1 // pred_check
      _
    $region19: #{tpu_custom_call.1} parent=1 // pred_check_branch
      %56 = sbr.rel (0) target = $region21
    $region20: #{tpu_custom_call.1} parent=1 // pred_region
      _
    $region21: #{tpu_custom_call.1} parent=1 // pred_fallthru
      _
    // Predicated region
    $region22: #{tpu_custom_call.1} parent=1 // pred_check
      _
    $region23: #{tpu_custom_call.1} parent=1 // pred_check_branch
      %58 = sbr.rel (0) target = $region25
    $region24: #{tpu_custom_call.1} parent=1 // pred_region
      %s60 = ssub.s32 4096, 4096
      %61 = vsyncadd [#allocation11], %s60
      %s62 = sshll.u32 [#allocation10], 4
      %s63 = int_to_ptr.vmem [resolvable:$true] %s62
      %68 = dma.hbm_to_vmem [thread:$0]  %s5, 4096, %s63, [#allocation11], 256, 256, 16
    $region25: #{tpu_custom_call.1} parent=1 // pred_fallthru
      _
    // Predicated region
    $region26: #{tpu_custom_call.1} parent=1 // pred_check
      _
    $region27: #{tpu_custom_call.1} parent=1 // pred_check_branch
      %70 = sbr.rel (0) target = $region29
    $region28: #{tpu_custom_call.1} parent=1 // pred_region
      %s72 = ssub.s32 4096, 4096
      %73 = vsyncadd [#allocation11], %s72
      %s74 = sshll.u32 [#allocation12], 4
      %s75 = int_to_ptr.vmem [resolvable:$true] %s74
      %80 = dma.hbm_to_vmem [thread:$0]  %s6, 4096, %s75, [#allocation11], 256, 256, 16
    $region29: #{tpu_custom_call.1} parent=1 // pred_fallthru
      _
    // Predicated region
    $region30: #{tpu_custom_call.1} parent=1 // pred_check
      _
    $region31: #{tpu_custom_call.1} parent=1 // pred_check_branch
      %82 = sbr.rel (0) target = $region33
    $region32: #{tpu_custom_call.1} parent=1 // pred_region
      _
    $region33: #{tpu_custom_call.1} parent=1 // pred_fallthru
      _
    // Predicated region
    $region34: #{tpu_custom_call.1} parent=1 // pred_check
      _
    $region35: #{tpu_custom_call.1} parent=1 // pred_check_branch
      %84 = sbr.rel (0) target = $region37
    $region36: #{tpu_custom_call.1} parent=1 // pred_region
      %85 = dma.done [#allocation5], 512
    $region37: #{tpu_custom_call.1} parent=1 // pred_fallthru
      _
    // Predicated region
    $region38: #{tpu_custom_call.1} parent=1 // pred_check
      _
    $region39: #{tpu_custom_call.1} parent=1 // pred_check_branch
      %87 = sbr.rel (0) target = $region41
    $region40: #{tpu_custom_call.1} parent=1 // pred_region
      %88 = dma.done [#allocation8], 512
    $region41: #{tpu_custom_call.1} parent=1 // pred_fallthru
      _
    // Predicated region
    $region42: #{tpu_custom_call.1} parent=1 // pred_check
      _
    $region43: #{tpu_custom_call.1} parent=1 // pred_check_branch
      %90 = sbr.rel (0) target = $region45
    $region44: #{tpu_custom_call.1} parent=1 // pred_region
      %91 = dma.done [#allocation8], 4096
    $region45: #{tpu_custom_call.1} parent=1 // pred_fallthru
      _
    // Predicated region
    $region46: #{tpu_custom_call.1} parent=1 // pred_check
      _
    $region47: #{tpu_custom_call.1} parent=1 // pred_check_branch
      %93 = sbr.rel (0) target = $region49
    $region48: #{tpu_custom_call.1} parent=1 // pred_region
      %94 = dma.done [#allocation11], 4096
    $region49: #{tpu_custom_call.1} parent=1 // pred_fallthru
      _
    // Predicated region
    $region50: #{tpu_custom_call.1} parent=1 // pred_check
      _
    $region51: #{tpu_custom_call.1} parent=1 // pred_check_branch
      %96 = sbr.rel (0) target = $region53
    $region52: #{tpu_custom_call.1} parent=1 // pred_region
      %97 = dma.done [#allocation11], 4096
    $region53: #{tpu_custom_call.1} parent=1 // pred_fallthru
      _
    %p99 = scmp.eq.s32.totalorder 0, 0
    // Predicated region
    $region54: #{tpu_custom_call.1} parent=1 // pred_check
      %p100 = pneg %p99
    $region55: #{tpu_custom_call.1} parent=1 // pred_check_branch
      %102 = sbr.rel (%p100) target = $region57
    $region56: #{tpu_custom_call.1} parent=1 // pred_region
      %103 = vst [vmem:[#allocation2] sm:$0xff] 0.0
      %104 = vst [vmem:[#allocation2 + $0x8] sm:$0xff] 0.0
      %105 = vst [vmem:[#allocation3] sm:$0xff] 0.0
      %106 = vst [vmem:[#allocation3 + $0x8] sm:$0xff] 0.0
    $region57: #{tpu_custom_call.1} parent=1 // pred_fallthru
      _
    %s107 = smul.u32 0, 8
    %v108 = vld [vmem:[%s0] sm:$0xff]
    %v109 = vld [vmem:[#allocation2] sm:$0xff]
    %s110 = scalar_lea.vmem [#allocation2], 8
    %v111 = vld [vmem:[%s110] sm:$0xff]
    %v112 = vld [vmem:[#allocation3] sm:$0xff]
    %s113 = scalar_lea.vmem [#allocation3], 8
    %v114 = vld [vmem:[%s113] sm:$0xff]
    %v115 = vld [vmem:[%s4] sm:$0xf]
    %v117 = vlaneseq
    %v118 = vshrl.u32 %v117, 7
    %v119 = vsub.s32 0, %v118
    %v120 = vrot.slane %v115, %v119
    %v121 = vlaneseq
    %v122 = vshrl.u32 %v121, 7
    %v123 = vsub.s32 1, %v122
    %v124 = vrot.slane %v115, %v123
    %v125 = vlaneseq
    %v126 = vshrl.u32 %v125, 7
    %v127 = vsub.s32 2, %v126
    %v128 = vrot.slane %v115, %v127
    %v129 = vlaneseq
    %v130 = vshrl.u32 %v129, 7
    %v131 = vsub.s32 3, %v130
    %v132 = vrot.slane %v115, %v131
    %v137 = vld [vmem:[%s7] sm:$0xf]
    %v139 = vlaneseq
    %v140 = vshrl.u32 %v139, 7
    %v141 = vsub.s32 0, %v140
    %v142 = vrot.slane %v137, %v141
    %v143 = vlaneseq
    %v144 = vshrl.u32 %v143, 7
    %v145 = vsub.s32 1, %v144
    %v146 = vrot.slane %v137, %v145
    %v147 = vlaneseq
    %v148 = vshrl.u32 %v147, 7
    %v149 = vsub.s32 2, %v148
    %v150 = vrot.slane %v137, %v149
    %v151 = vlaneseq
    %v152 = vshrl.u32 %v151, 7
    %v153 = vsub.s32 3, %v152
    %v154 = vrot.slane %v137, %v153
    %v159 = vstv %s107
    %vm160 = vcmp.lt.s32.totalorder %v159, %v108
    %v161 = vld [vmem:[#allocation4] sm:$0xf]
    %v162 = vld [vmem:[#allocation7] sm:$0xff]
    %v163 = vld [vmem:[#allocation7 + $0x8] sm:$0xff]
    %v164 = vld [vmem:[#allocation7 + $0x10] sm:$0xff]
    %v165 = vld [vmem:[#allocation7 + $0x18] sm:$0xff]
    %v166 = vpack.c.bf16 %v109, %v109
    %v167 = vld [vmem:[#allocation9] sm:$0xff]
    %v168 = vld [vmem:[#allocation9 + $0x8] sm:$0xff]
    %v169 = vld [vmem:[#allocation9 + $0x10] sm:$0xff]
    %v170 = vld [vmem:[#allocation9 + $0x18] sm:$0xff]
    %v171 = vld [vmem:[#allocation9 + $0x20] sm:$0xff]
    %v172 = vld [vmem:[#allocation9 + $0x28] sm:$0xff]
    %v173 = vld [vmem:[#allocation9 + $0x30] sm:$0xff]
    %v174 = vld [vmem:[#allocation9 + $0x38] sm:$0xff]
    %v175 = vld [vmem:[#allocation9 + $0x40] sm:$0xff]
    %v176 = vld [vmem:[#allocation9 + $0x48] sm:$0xff]
    %v177 = vld [vmem:[#allocation9 + $0x50] sm:$0xff]
    %v178 = vld [vmem:[#allocation9 + $0x58] sm:$0xff]
    %v179 = vld [vmem:[#allocation9 + $0x60] sm:$0xff]
    %v180 = vld [vmem:[#allocation9 + $0x68] sm:$0xff]
    %v181 = vld [vmem:[#allocation9 + $0x70] sm:$0xff]
    %v182 = vld [vmem:[#allocation9 + $0x78] sm:$0xff]
    %v183 = vld [vmem:[#allocation9 + $0x80] sm:$0xff]
    %v184 = vld [vmem:[#allocation9 + $0x88] sm:$0xff]
    %v185 = vld [vmem:[#allocation9 + $0x90] sm:$0xff]
    %v186 = vld [vmem:[#allocation9 + $0x98] sm:$0xff]
    %v187 = vld [vmem:[#allocation9 + $0xa0] sm:$0xff]
    %v188 = vld [vmem:[#allocation9 + $0xa8] sm:$0xff]
    %v189 = vld [vmem:[#allocation9 + $0xb0] sm:$0xff]
    %v190 = vld [vmem:[#allocation9 + $0xb8] sm:$0xff]
    %v191 = vld [vmem:[#allocation9 + $0xc0] sm:$0xff]
    %v192 = vld [vmem:[#allocation9 + $0xc8] sm:$0xff]
    %v193 = vld [vmem:[#allocation9 + $0xd0] sm:$0xff]
    %v194 = vld [vmem:[#allocation9 + $0xd8] sm:$0xff]
    %v195 = vld [vmem:[#allocation9 + $0xe0] sm:$0xff]
    %v196 = vld [vmem:[#allocation9 + $0xe8] sm:$0xff]
    %v197 = vld [vmem:[#allocation9 + $0xf0] sm:$0xff]
    %v198 = vld [vmem:[#allocation9 + $0xf8] sm:$0xff]
    %v231 = vunpack.c.l.b16 %v167
    %v232 = vunpack.c.h.b16 %v167
    %v233 = vunpack.c.l.b16 %v168
    %v234 = vunpack.c.h.b16 %v168
    %v235 = vunpack.c.l.b16 %v169
    %v236 = vunpack.c.h.b16 %v169
    %v237 = vunpack.c.l.b16 %v170
    %v238 = vunpack.c.h.b16 %v170
    %v239 = vunpack.c.l.b16 %v171
    %v240 = vunpack.c.h.b16 %v171
    %v241 = vunpack.c.l.b16 %v172
    %v242 = vunpack.c.h.b16 %v172
    %v243 = vunpack.c.l.b16 %v173
    %v244 = vunpack.c.h.b16 %v173
    %v245 = vunpack.c.l.b16 %v174
    %v246 = vunpack.c.h.b16 %v174
    %v247 = vunpack.c.l.b16 %v175
    %v248 = vunpack.c.h.b16 %v175
    %v249 = vunpack.c.l.b16 %v176
    %v250 = vunpack.c.h.b16 %v176
    %v251 = vunpack.c.l.b16 %v177
    %v252 = vunpack.c.h.b16 %v177
    %v253 = vunpack.c.l.b16 %v178
    %v254 = vunpack.c.h.b16 %v178
    %v255 = vunpack.c.l.b16 %v179
    %v256 = vunpack.c.h.b16 %v179
    %v257 = vunpack.c.l.b16 %v180
    %v258 = vunpack.c.h.b16 %v180
    %v259 = vunpack.c.l.b16 %v181
    %v260 = vunpack.c.h.b16 %v181
    %v261 = vunpack.c.l.b16 %v182
    %v262 = vunpack.c.h.b16 %v182
    %v263 = vunpack.c.l.b16 %v183
    %v264 = vunpack.c.h.b16 %v183
    %v265 = vunpack.c.l.b16 %v184
    %v266 = vunpack.c.h.b16 %v184
    %v267 = vunpack.c.l.b16 %v185
    %v268 = vunpack.c.h.b16 %v185
    %v269 = vunpack.c.l.b16 %v186
    %v270 = vunpack.c.h.b16 %v186
    %v271 = vunpack.c.l.b16 %v187
    %v272 = vunpack.c.h.b16 %v187
    %v273 = vunpack.c.l.b16 %v188
    %v274 = vunpack.c.h.b16 %v188
    %v275 = vunpack.c.l.b16 %v189
    %v276 = vunpack.c.h.b16 %v189
    %v277 = vunpack.c.l.b16 %v190
    %v278 = vunpack.c.h.b16 %v190
    %v279 = vunpack.c.l.b16 %v191
    %v280 = vunpack.c.h.b16 %v191
    %v281 = vunpack.c.l.b16 %v192
    %v282 = vunpack.c.h.b16 %v192
    %v283 = vunpack.c.l.b16 %v193
    %v284 = vunpack.c.h.b16 %v193
    %v285 = vunpack.c.l.b16 %v194
    %v286 = vunpack.c.h.b16 %v194
    %v287 = vunpack.c.l.b16 %v195
    %v288 = vunpack.c.h.b16 %v195
    %v289 = vunpack.c.l.b16 %v196
    %v290 = vunpack.c.h.b16 %v196
    %v291 = vunpack.c.l.b16 %v197
    %v292 = vunpack.c.h.b16 %v197
    %v293 = vunpack.c.l.b16 %v198
    %v294 = vunpack.c.h.b16 %v198
    %v295 = vpack.c.b16 %v235, %v231
    %v296 = vpack.c.b16 %v236, %v232
    %v297 = vpack.c.b16 %v237, %v233
    %v298 = vpack.c.b16 %v238, %v234
    %v299 = vpack.c.b16 %v243, %v239
    %v300 = vpack.c.b16 %v244, %v240
    %v301 = vpack.c.b16 %v245, %v241
    %v302 = vpack.c.b16 %v246, %v242
    %v303 = vpack.c.b16 %v251, %v247
    %v304 = vpack.c.b16 %v252, %v248
    %v305 = vpack.c.b16 %v253, %v249
    %v306 = vpack.c.b16 %v254, %v250
    %v307 = vpack.c.b16 %v259, %v255
    %v308 = vpack.c.b16 %v260, %v256
    %v309 = vpack.c.b16 %v261, %v257
    %v310 = vpack.c.b16 %v262, %v258
    %v311 = vpack.c.b16 %v267, %v263
    %v312 = vpack.c.b16 %v268, %v264
    %v313 = vpack.c.b16 %v269, %v265
    %v314 = vpack.c.b16 %v270, %v266
    %v315 = vpack.c.b16 %v275, %v271
    %v316 = vpack.c.b16 %v276, %v272
    %v317 = vpack.c.b16 %v277, %v273
    %v318 = vpack.c.b16 %v278, %v274
    %v319 = vpack.c.b16 %v283, %v279
    %v320 = vpack.c.b16 %v284, %v280
    %v321 = vpack.c.b16 %v285, %v281
    %v322 = vpack.c.b16 %v286, %v282
    %v323 = vpack.c.b16 %v291, %v287
    %v324 = vpack.c.b16 %v292, %v288
    %v325 = vpack.c.b16 %v293, %v289
    %v326 = vpack.c.b16 %v294, %v290
    %359 = vmatprep.subr.bf16.mxu0 %v324
    %360 = vmatpush1.bf16.msra.mxu0 %v323
    %361 = vmatprep.subr.bf16.mxu0 %v320
    %362 = vmatpush1.bf16.msra.mxu0 %v319
    %363 = vmatprep.subr.bf16.mxu0 %v316
    %364 = vmatpush1.bf16.msra.mxu0 %v315
    %365 = vmatprep.subr.bf16.mxu0 %v312
    %366 = vmatpush1.bf16.msra.mxu0 %v311
    %367 = vmatprep.subr.bf16.mxu0 %v308
    %368 = vmatpush1.bf16.msra.mxu0 %v307
    %369 = vmatprep.subr.bf16.mxu0 %v304
    %370 = vmatpush1.bf16.msra.mxu0 %v303
    %371 = vmatprep.subr.bf16.mxu0 %v300
    %372 = vmatpush1.bf16.msra.mxu0 %v299
    %373 = vmatprep.subr.bf16.mxu0 %v296
    %374 = vmatpush1.bf16.msra.mxu0 %v295
    %375 = vmatprep.subr.bf16.mxu0 0
    %376 = vmatpush2.bf16.msra.mxu0 0
    %377 = vmatprep.subr.bf16.mxu0 0
    %378 = vmatpush2.bf16.msra.mxu0 0
    %379 = vmatprep.subr.bf16.mxu0 0
    %380 = vmatpush2.bf16.msra.mxu0 0
    %381 = vmatprep.subr.bf16.mxu0 0
    %382 = vmatpush2.bf16.msra.mxu0 0
    %383 = vmatprep.subr.bf16.mxu0 0
    %384 = vmatpush2.bf16.msra.mxu0 0
    %385 = vmatprep.subr.bf16.mxu0 0
    %386 = vmatpush2.bf16.msra.mxu0 0
    %387 = vmatprep.subr.bf16.mxu0 0
    %388 = vmatpush2.bf16.msra.mxu0 0
    %389 = vmatprep.subr.bf16.mxu0 0
    %390 = vmatpush2.bf16.msra.mxu0 0
    %391 = vmatprep.mubr.bf16.mxu0 0
    %392 = vmatmul.mubr.bf16.gmra.mxu0 %v166
    %v393 = vpop.f32.mrf.mxu0
    %v394 = vadd.f32 0.0, %v393
    %v395 = vpop.f32.mrf.mxu0
    %v396 = vadd.f32 0.0, %v395
    %v397 = vpop.f32.mrf.mxu0
    %v398 = vpop.f32.mrf.mxu0
    %399 = vdwg.mxu0
    %400 = vmatprep.subr.bf16.mxu0 %v326
    %401 = vmatpush1.bf16.msra.mxu0 %v325
    %402 = vmatprep.subr.bf16.mxu0 %v322
    %403 = vmatpush1.bf16.msra.mxu0 %v321
    %404 = vmatprep.subr.bf16.mxu0 %v318
    %405 = vmatpush1.bf16.msra.mxu0 %v317
    %406 = vmatprep.subr.bf16.mxu0 %v314
    %407 = vmatpush1.bf16.msra.mxu0 %v313
    %408 = vmatprep.subr.bf16.mxu0 %v310
    %409 = vmatpush1.bf16.msra.mxu0 %v309
    %410 = vmatprep.subr.bf16.mxu0 %v306
    %411 = vmatpush1.bf16.msra.mxu0 %v305
    %412 = vmatprep.subr.bf16.mxu0 %v302
    %413 = vmatpush1.bf16.msra.mxu0 %v301
    %414 = vmatprep.subr.bf16.mxu0 %v298
    %415 = vmatpush1.bf16.msra.mxu0 %v297
    %416 = vmatprep.subr.bf16.mxu0 0
    %417 = vmatpush2.bf16.msra.mxu0 0
    %418 = vmatprep.subr.bf16.mxu0 0
    %419 = vmatpush2.bf16.msra.mxu0 0
    %420 = vmatprep.subr.bf16.mxu0 0
    %421 = vmatpush2.bf16.msra.mxu0 0
    %422 = vmatprep.subr.bf16.mxu0 0
    %423 = vmatpush2.bf16.msra.mxu0 0
    %424 = vmatprep.subr.bf16.mxu0 0
    %425 = vmatpush2.bf16.msra.mxu0 0
    %426 = vmatprep.subr.bf16.mxu0 0
    %427 = vmatpush2.bf16.msra.mxu0 0
    %428 = vmatprep.subr.bf16.mxu0 0
    %429 = vmatpush2.bf16.msra.mxu0 0
    %430 = vmatprep.subr.bf16.mxu0 0
    %431 = vmatpush2.bf16.msra.mxu0 0
    %432 = vmatprep.mubr.bf16.mxu0 0
    %433 = vmatmul.mubr.bf16.gmra.mxu0 %v166
    %v434 = vpop.f32.mrf.mxu0
    %v435 = vadd.f32 0.0, %v434
    %v436 = vpop.f32.mrf.mxu0
    %v437 = vadd.f32 0.0, %v436
    %v438 = vpop.f32.mrf.mxu0
    %v439 = vpop.f32.mrf.mxu0
    %440 = vdwg.mxu0
    %v445 = vunpack.c.l.b16 %v162
    %v446 = vunpack.c.h.b16 %v162
    %v447 = vunpack.c.l.b16 %v163
    %v448 = vunpack.c.h.b16 %v163
    %v449 = vunpack.c.l.b16 %v164
    %v450 = vunpack.c.h.b16 %v164
    %v451 = vunpack.c.l.b16 %v165
    %v452 = vunpack.c.h.b16 %v165
    %v453 = vpack.c.b16 %v449, %v445
    %v454 = vpack.c.b16 %v450, %v446
    %v455 = vpack.c.b16 %v451, %v447
    %v456 = vpack.c.b16 %v452, %v448
    %vm461 = vcmask 130048
    %v463 = vsel %vm461, %v161, 0
    %465 = vmatprep.subr.bf16.mxu0 0
    %466 = vmatpush1.bf16.msra.mxu0 0
    %467 = vmatprep.subr.bf16.mxu0 0
    %468 = vmatpush1.bf16.msra.mxu0 0
    %469 = vmatprep.subr.bf16.mxu0 0
    %470 = vmatpush1.bf16.msra.mxu0 0
    %471 = vmatprep.subr.bf16.mxu0 0
    %472 = vmatpush1.bf16.msra.mxu0 0
    %473 = vmatprep.subr.bf16.mxu0 0
    %474 = vmatpush1.bf16.msra.mxu0 0
    %475 = vmatprep.subr.bf16.mxu0 0
    %476 = vmatpush1.bf16.msra.mxu0 0
    %477 = vmatprep.subr.bf16.mxu0 0
    %478 = vmatpush1.bf16.msra.mxu0 0
    %479 = vmatprep.subr.bf16.mxu0 %v454
    %480 = vmatpush1.bf16.msra.mxu0 %v453
    %481 = vmatprep.subr.bf16.mxu0 0
    %482 = vmatpush2.bf16.msra.mxu0 0
    %483 = vmatprep.subr.bf16.mxu0 0
    %484 = vmatpush2.bf16.msra.mxu0 0
    %485 = vmatprep.subr.bf16.mxu0 0
    %486 = vmatpush2.bf16.msra.mxu0 0
    %487 = vmatprep.subr.bf16.mxu0 0
    %488 = vmatpush2.bf16.msra.mxu0 0
    %489 = vmatprep.subr.bf16.mxu0 0
    %490 = vmatpush2.bf16.msra.mxu0 0
    %491 = vmatprep.subr.bf16.mxu0 0
    %492 = vmatpush2.bf16.msra.mxu0 0
    %493 = vmatprep.subr.bf16.mxu0 0
    %494 = vmatpush2.bf16.msra.mxu0 0
    %495 = vmatprep.subr.bf16.mxu0 0
    %496 = vmatpush2.bf16.msra.mxu0 0
    %497 = vmatprep.mubr.bf16.mxu0 0
    %498 = vmatmul.mubr.bf16.gmra.mxu0 %v463
    %v499 = vpop.f32.mrf.mxu0
    %v500 = vadd.f32 %v394, %v499
    %v501 = vpop.f32.mrf.mxu0
    %v502 = vadd.f32 %v396, %v501
    %v503 = vpop.f32.mrf.mxu0
    %v504 = vpop.f32.mrf.mxu0
    %505 = vdwg.mxu0
    %506 = vmatprep.subr.bf16.mxu0 0
    %507 = vmatpush1.bf16.msra.mxu0 0
    %508 = vmatprep.subr.bf16.mxu0 0
    %509 = vmatpush1.bf16.msra.mxu0 0
    %510 = vmatprep.subr.bf16.mxu0 0
    %511 = vmatpush1.bf16.msra.mxu0 0
    %512 = vmatprep.subr.bf16.mxu0 0
    %513 = vmatpush1.bf16.msra.mxu0 0
    %514 = vmatprep.subr.bf16.mxu0 0
    %515 = vmatpush1.bf16.msra.mxu0 0
    %516 = vmatprep.subr.bf16.mxu0 0
    %517 = vmatpush1.bf16.msra.mxu0 0
    %518 = vmatprep.subr.bf16.mxu0 0
    %519 = vmatpush1.bf16.msra.mxu0 0
    %520 = vmatprep.subr.bf16.mxu0 %v456
    %521 = vmatpush1.bf16.msra.mxu0 %v455
    %522 = vmatprep.subr.bf16.mxu0 0
    %523 = vmatpush2.bf16.msra.mxu0 0
    %524 = vmatprep.subr.bf16.mxu0 0
    %525 = vmatpush2.bf16.msra.mxu0 0
    %526 = vmatprep.subr.bf16.mxu0 0
    %527 = vmatpush2.bf16.msra.mxu0 0
    %528 = vmatprep.subr.bf16.mxu0 0
    %529 = vmatpush2.bf16.msra.mxu0 0
    %530 = vmatprep.subr.bf16.mxu0 0
    %531 = vmatpush2.bf16.msra.mxu0 0
    %532 = vmatprep.subr.bf16.mxu0 0
    %533 = vmatpush2.bf16.msra.mxu0 0
    %534 = vmatprep.subr.bf16.mxu0 0
    %535 = vmatpush2.bf16.msra.mxu0 0
    %536 = vmatprep.subr.bf16.mxu0 0
    %537 = vmatpush2.bf16.msra.mxu0 0
    %538 = vmatprep.mubr.bf16.mxu0 0
    %539 = vmatmul.mubr.bf16.gmra.mxu0 %v463
    %v540 = vpop.f32.mrf.mxu0
    %v541 = vadd.f32 %v435, %v540
    %v542 = vpop.f32.mrf.mxu0
    %v543 = vadd.f32 %v437, %v542
    %v544 = vpop.f32.mrf.mxu0
    %v545 = vpop.f32.mrf.mxu0
    %546 = vdwg.mxu0
    %v547 = vadd.f32 %v500, %v120
    %v548 = vadd.f32 %v502, %v124
    %v549 = vadd.f32 %v541, %v128
    %v550 = vadd.f32 %v543, %v132
    %v551 = vxor.u32 %v547, 2147483648
    %v552 = vxor.u32 %v548, 2147483648
    %v553 = vxor.u32 %v549, 2147483648
    %v554 = vmul.f32 %v551, 1.442695
    %v555 = vpow.pop %v554
    %v556 = vmul.f32 %v552, 1.442695
    %v557 = vpow.pop %v556
    %v558 = vmul.f32 %v553, 1.442695
    %v559 = vpow.pop %v558
    %v560 = vadd.f32 %v555, 1.0
    %v561 = vadd.f32 %v557, 1.0
    %v562 = vadd.f32 %v559, 1.0
    %v563 = vrcp.pop %v560
    %v564 = vmul.f32 1.0, %v563
    %v565 = vrcp.pop %v561
    %v566 = vmul.f32 1.0, %v565
    %v567 = vrcp.pop %v562
    %v568 = vmul.f32 1.0, %v567
    %v569 = vtanh.pop %v550
    %v570 = vmul.f32 %v566, %v112
    %v571 = vmul.f32 %v564, %v569
    %v572 = vadd.f32 %v570, %v571
    %v573 = vtanh.pop %v572
    %v574 = vmul.f32 %v568, %v573
    %v575 = vsel %vm160, 1, 0
    %576 = vset.pattern.permute.xlu0 0
    %577 = vperm.xlu0 %576, %v575
    %v578 = vpop.permute.xlu0 %577
    %vm579 = vcmp.eq.s32.totalorder %v578, 1
    %v580 = vsel %vm579, %v574, %v109
    %v581 = vsel %vm579, %v572, %v112
    %v582 = vpack.c.bf16 %v580, %v580
    %v583 = vld [vmem:[#allocation10] sm:$0xff]
    %v584 = vld [vmem:[#allocation10 + $0x8] sm:$0xff]
    %v585 = vld [vmem:[#allocation10 + $0x10] sm:$0xff]
    %v586 = vld [vmem:[#allocation10 + $0x18] sm:$0xff]
    %v587 = vld [vmem:[#allocation10 + $0x20] sm:$0xff]
    %v588 = vld [vmem:[#allocation10 + $0x28] sm:$0xff]
    %v589 = vld [vmem:[#allocation10 + $0x30] sm:$0xff]
    %v590 = vld [vmem:[#allocation10 + $0x38] sm:$0xff]
    %v591 = vld [vmem:[#allocation10 + $0x40] sm:$0xff]
    %v592 = vld [vmem:[#allocation10 + $0x48] sm:$0xff]
    %v593 = vld [vmem:[#allocation10 + $0x50] sm:$0xff]
    %v594 = vld [vmem:[#allocation10 + $0x58] sm:$0xff]
    %v595 = vld [vmem:[#allocation10 + $0x60] sm:$0xff]
    %v596 = vld [vmem:[#allocation10 + $0x68] sm:$0xff]
    %v597 = vld [vmem:[#allocation10 + $0x70] sm:$0xff]
    %v598 = vld [vmem:[#allocation10 + $0x78] sm:$0xff]
    %v599 = vld [vmem:[#allocation10 + $0x80] sm:$0xff]
    %v600 = vld [vmem:[#allocation10 + $0x88] sm:$0xff]
    %v601 = vld [vmem:[#allocation10 + $0x90] sm:$0xff]
    %v602 = vld [vmem:[#allocation10 + $0x98] sm:$0xff]
    %v603 = vld [vmem:[#allocation10 + $0xa0] sm:$0xff]
    %v604 = vld [vmem:[#allocation10 + $0xa8] sm:$0xff]
    %v605 = vld [vmem:[#allocation10 + $0xb0] sm:$0xff]
    %v606 = vld [vmem:[#allocation10 + $0xb8] sm:$0xff]
    %v607 = vld [vmem:[#allocation10 + $0xc0] sm:$0xff]
    %v608 = vld [vmem:[#allocation10 + $0xc8] sm:$0xff]
    %v609 = vld [vmem:[#allocation10 + $0xd0] sm:$0xff]
    %v610 = vld [vmem:[#allocation10 + $0xd8] sm:$0xff]
    %v611 = vld [vmem:[#allocation10 + $0xe0] sm:$0xff]
    %v612 = vld [vmem:[#allocation10 + $0xe8] sm:$0xff]
    %v613 = vld [vmem:[#allocation10 + $0xf0] sm:$0xff]
    %v614 = vld [vmem:[#allocation10 + $0xf8] sm:$0xff]
    %v615 = vpack.c.bf16 %v111, %v111
    %v616 = vld [vmem:[#allocation12] sm:$0xff]
    %v617 = vld [vmem:[#allocation12 + $0x8] sm:$0xff]
    %v618 = vld [vmem:[#allocation12 + $0x10] sm:$0xff]
    %v619 = vld [vmem:[#allocation12 + $0x18] sm:$0xff]
    %v620 = vld [vmem:[#allocation12 + $0x20] sm:$0xff]
    %v621 = vld [vmem:[#allocation12 + $0x28] sm:$0xff]
    %v622 = vld [vmem:[#allocation12 + $0x30] sm:$0xff]
    %v623 = vld [vmem:[#allocation12 + $0x38] sm:$0xff]
    %v624 = vld [vmem:[#allocation12 + $0x40] sm:$0xff]
    %v625 = vld [vmem:[#allocation12 + $0x48] sm:$0xff]
    %v626 = vld [vmem:[#allocation12 + $0x50] sm:$0xff]
    %v627 = vld [vmem:[#allocation12 + $0x58] sm:$0xff]
    %v628 = vld [vmem:[#allocation12 + $0x60] sm:$0xff]
    %v629 = vld [vmem:[#allocation12 + $0x68] sm:$0xff]
    %v630 = vld [vmem:[#allocation12 + $0x70] sm:$0xff]
    %v631 = vld [vmem:[#allocation12 + $0x78] sm:$0xff]
    %v632 = vld [vmem:[#allocation12 + $0x80] sm:$0xff]
    %v633 = vld [vmem:[#allocation12 + $0x88] sm:$0xff]
    %v634 = vld [vmem:[#allocation12 + $0x90] sm:$0xff]
    %v635 = vld [vmem:[#allocation12 + $0x98] sm:$0xff]
    %v636 = vld [vmem:[#allocation12 + $0xa0] sm:$0xff]
    %v637 = vld [vmem:[#allocation12 + $0xa8] sm:$0xff]
    %v638 = vld [vmem:[#allocation12 + $0xb0] sm:$0xff]
    %v639 = vld [vmem:[#allocation12 + $0xb8] sm:$0xff]
    %v640 = vld [vmem:[#allocation12 + $0xc0] sm:$0xff]
    %v641 = vld [vmem:[#allocation12 + $0xc8] sm:$0xff]
    %v642 = vld [vmem:[#allocation12 + $0xd0] sm:$0xff]
    %v643 = vld [vmem:[#allocation12 + $0xd8] sm:$0xff]
    %v644 = vld [vmem:[#allocation12 + $0xe0] sm:$0xff]
    %v645 = vld [vmem:[#allocation12 + $0xe8] sm:$0xff]
    %v646 = vld [vmem:[#allocation12 + $0xf0] sm:$0xff]
    %v647 = vld [vmem:[#allocation12 + $0xf8] sm:$0xff]
    %v680 = vunpack.c.l.b16 %v616
    %v681 = vunpack.c.h.b16 %v616
    %v682 = vunpack.c.l.b16 %v617
    %v683 = vunpack.c.h.b16 %v617
    %v684 = vunpack.c.l.b16 %v618
    %v685 = vunpack.c.h.b16 %v618
    %v686 = vunpack.c.l.b16 %v619
    %v687 = vunpack.c.h.b16 %v619
    %v688 = vunpack.c.l.b16 %v620
    %v689 = vunpack.c.h.b16 %v620
    %v690 = vunpack.c.l.b16 %v621
    %v691 = vunpack.c.h.b16 %v621
    %v692 = vunpack.c.l.b16 %v622
    %v693 = vunpack.c.h.b16 %v622
    %v694 = vunpack.c.l.b16 %v623
    %v695 = vunpack.c.h.b16 %v623
    %v696 = vunpack.c.l.b16 %v624
    %v697 = vunpack.c.h.b16 %v624
    %v698 = vunpack.c.l.b16 %v625
    %v699 = vunpack.c.h.b16 %v625
    %v700 = vunpack.c.l.b16 %v626
    %v701 = vunpack.c.h.b16 %v626
    %v702 = vunpack.c.l.b16 %v627
    %v703 = vunpack.c.h.b16 %v627
    %v704 = vunpack.c.l.b16 %v628
    %v705 = vunpack.c.h.b16 %v628
    %v706 = vunpack.c.l.b16 %v629
    %v707 = vunpack.c.h.b16 %v629
    %v708 = vunpack.c.l.b16 %v630
    %v709 = vunpack.c.h.b16 %v630
    %v710 = vunpack.c.l.b16 %v631
    %v711 = vunpack.c.h.b16 %v631
    %v712 = vunpack.c.l.b16 %v632
    %v713 = vunpack.c.h.b16 %v632
    %v714 = vunpack.c.l.b16 %v633
    %v715 = vunpack.c.h.b16 %v633
    %v716 = vunpack.c.l.b16 %v634
    %v717 = vunpack.c.h.b16 %v634
    %v718 = vunpack.c.l.b16 %v635
    %v719 = vunpack.c.h.b16 %v635
    %v720 = vunpack.c.l.b16 %v636
    %v721 = vunpack.c.h.b16 %v636
    %v722 = vunpack.c.l.b16 %v637
    %v723 = vunpack.c.h.b16 %v637
    %v724 = vunpack.c.l.b16 %v638
    %v725 = vunpack.c.h.b16 %v638
    %v726 = vunpack.c.l.b16 %v639
    %v727 = vunpack.c.h.b16 %v639
    %v728 = vunpack.c.l.b16 %v640
    %v729 = vunpack.c.h.b16 %v640
    %v730 = vunpack.c.l.b16 %v641
    %v731 = vunpack.c.h.b16 %v641
    %v732 = vunpack.c.l.b16 %v642
    %v733 = vunpack.c.h.b16 %v642
    %v734 = vunpack.c.l.b16 %v643
    %v735 = vunpack.c.h.b16 %v643
    %v736 = vunpack.c.l.b16 %v644
    %v737 = vunpack.c.h.b16 %v644
    %v738 = vunpack.c.l.b16 %v645
    %v739 = vunpack.c.h.b16 %v645
    %v740 = vunpack.c.l.b16 %v646
    %v741 = vunpack.c.h.b16 %v646
    %v742 = vunpack.c.l.b16 %v647
    %v743 = vunpack.c.h.b16 %v647
    %v744 = vpack.c.b16 %v684, %v680
    %v745 = vpack.c.b16 %v685, %v681
    %v746 = vpack.c.b16 %v686, %v682
    %v747 = vpack.c.b16 %v687, %v683
    %v748 = vpack.c.b16 %v692, %v688
    %v749 = vpack.c.b16 %v693, %v689
    %v750 = vpack.c.b16 %v694, %v690
    %v751 = vpack.c.b16 %v695, %v691
    %v752 = vpack.c.b16 %v700, %v696
    %v753 = vpack.c.b16 %v701, %v697
    %v754 = vpack.c.b16 %v702, %v698
    %v755 = vpack.c.b16 %v703, %v699
    %v756 = vpack.c.b16 %v708, %v704
    %v757 = vpack.c.b16 %v709, %v705
    %v758 = vpack.c.b16 %v710, %v706
    %v759 = vpack.c.b16 %v711, %v707
    %v760 = vpack.c.b16 %v716, %v712
    %v761 = vpack.c.b16 %v717, %v713
    %v762 = vpack.c.b16 %v718, %v714
    %v763 = vpack.c.b16 %v719, %v715
    %v764 = vpack.c.b16 %v724, %v720
    %v765 = vpack.c.b16 %v725, %v721
    %v766 = vpack.c.b16 %v726, %v722
    %v767 = vpack.c.b16 %v727, %v723
    %v768 = vpack.c.b16 %v732, %v728
    %v769 = vpack.c.b16 %v733, %v729
    %v770 = vpack.c.b16 %v734, %v730
    %v771 = vpack.c.b16 %v735, %v731
    %v772 = vpack.c.b16 %v740, %v736
    %v773 = vpack.c.b16 %v741, %v737
    %v774 = vpack.c.b16 %v742, %v738
    %v775 = vpack.c.b16 %v743, %v739
    %808 = vmatprep.subr.bf16.mxu0 %v773
    %809 = vmatpush1.bf16.msra.mxu0 %v772
    %810 = vmatprep.subr.bf16.mxu0 %v769
    %811 = vmatpush1.bf16.msra.mxu0 %v768
    %812 = vmatprep.subr.bf16.mxu0 %v765
    %813 = vmatpush1.bf16.msra.mxu0 %v764
    %814 = vmatprep.subr.bf16.mxu0 %v761
    %815 = vmatpush1.bf16.msra.mxu0 %v760
    %816 = vmatprep.subr.bf16.mxu0 %v757
    %817 = vmatpush1.bf16.msra.mxu0 %v756
    %818 = vmatprep.subr.bf16.mxu0 %v753
    %819 = vmatpush1.bf16.msra.mxu0 %v752
    %820 = vmatprep.subr.bf16.mxu0 %v749
    %821 = vmatpush1.bf16.msra.mxu0 %v748
    %822 = vmatprep.subr.bf16.mxu0 %v745
    %823 = vmatpush1.bf16.msra.mxu0 %v744
    %824 = vmatprep.subr.bf16.mxu0 0
    %825 = vmatpush2.bf16.msra.mxu0 0
    %826 = vmatprep.subr.bf16.mxu0 0
    %827 = vmatpush2.bf16.msra.mxu0 0
    %828 = vmatprep.subr.bf16.mxu0 0
    %829 = vmatpush2.bf16.msra.mxu0 0
    %830 = vmatprep.subr.bf16.mxu0 0
    %831 = vmatpush2.bf16.msra.mxu0 0
    %832 = vmatprep.subr.bf16.mxu0 0
    %833 = vmatpush2.bf16.msra.mxu0 0
    %834 = vmatprep.subr.bf16.mxu0 0
    %835 = vmatpush2.bf16.msra.mxu0 0
    %836 = vmatprep.subr.bf16.mxu0 0
    %837 = vmatpush2.bf16.msra.mxu0 0
    %838 = vmatprep.subr.bf16.mxu0 0
    %839 = vmatpush2.bf16.msra.mxu0 0
    %840 = vmatprep.mubr.bf16.mxu0 0
    %841 = vmatmul.mubr.bf16.gmra.mxu0 %v615
    %v842 = vpop.f32.mrf.mxu0
    %v843 = vadd.f32 0.0, %v842
    %v844 = vpop.f32.mrf.mxu0
    %v845 = vadd.f32 0.0, %v844
    %v846 = vpop.f32.mrf.mxu0
    %v847 = vpop.f32.mrf.mxu0
    %848 = vdwg.mxu0
    %849 = vmatprep.subr.bf16.mxu0 %v775
    %850 = vmatpush1.bf16.msra.mxu0 %v774
    %851 = vmatprep.subr.bf16.mxu0 %v771
    %852 = vmatpush1.bf16.msra.mxu0 %v770
    %853 = vmatprep.subr.bf16.mxu0 %v767
    %854 = vmatpush1.bf16.msra.mxu0 %v766
    %855 = vmatprep.subr.bf16.mxu0 %v763
    %856 = vmatpush1.bf16.msra.mxu0 %v762
    %857 = vmatprep.subr.bf16.mxu0 %v759
    %858 = vmatpush1.bf16.msra.mxu0 %v758
    %859 = vmatprep.subr.bf16.mxu0 %v755
    %860 = vmatpush1.bf16.msra.mxu0 %v754
    %861 = vmatprep.subr.bf16.mxu0 %v751
    %862 = vmatpush1.bf16.msra.mxu0 %v750
    %863 = vmatprep.subr.bf16.mxu0 %v747
    %864 = vmatpush1.bf16.msra.mxu0 %v746
    %865 = vmatprep.subr.bf16.mxu0 0
    %866 = vmatpush2.bf16.msra.mxu0 0
    %867 = vmatprep.subr.bf16.mxu0 0
    %868 = vmatpush2.bf16.msra.mxu0 0
    %869 = vmatprep.subr.bf16.mxu0 0
    %870 = vmatpush2.bf16.msra.mxu0 0
    %871 = vmatprep.subr.bf16.mxu0 0
    %872 = vmatpush2.bf16.msra.mxu0 0
    %873 = vmatprep.subr.bf16.mxu0 0
    %874 = vmatpush2.bf16.msra.mxu0 0
    %875 = vmatprep.subr.bf16.mxu0 0
    %876 = vmatpush2.bf16.msra.mxu0 0
    %877 = vmatprep.subr.bf16.mxu0 0
    %878 = vmatpush2.bf16.msra.mxu0 0
    %879 = vmatprep.subr.bf16.mxu0 0
    %880 = vmatpush2.bf16.msra.mxu0 0
    %881 = vmatprep.mubr.bf16.mxu0 0
    %882 = vmatmul.mubr.bf16.gmra.mxu0 %v615
    %v883 = vpop.f32.mrf.mxu0
    %v884 = vadd.f32 0.0, %v883
    %v885 = vpop.f32.mrf.mxu0
    %v886 = vadd.f32 0.0, %v885
    %v887 = vpop.f32.mrf.mxu0
    %v888 = vpop.f32.mrf.mxu0
    %889 = vdwg.mxu0
    %v922 = vunpack.c.l.b16 %v583
    %v923 = vunpack.c.h.b16 %v583
    %v924 = vunpack.c.l.b16 %v584
    %v925 = vunpack.c.h.b16 %v584
    %v926 = vunpack.c.l.b16 %v585
    %v927 = vunpack.c.h.b16 %v585
    %v928 = vunpack.c.l.b16 %v586
    %v929 = vunpack.c.h.b16 %v586
    %v930 = vunpack.c.l.b16 %v587
    %v931 = vunpack.c.h.b16 %v587
    %v932 = vunpack.c.l.b16 %v588
    %v933 = vunpack.c.h.b16 %v588
    %v934 = vunpack.c.l.b16 %v589
    %v935 = vunpack.c.h.b16 %v589
    %v936 = vunpack.c.l.b16 %v590
    %v937 = vunpack.c.h.b16 %v590
    %v938 = vunpack.c.l.b16 %v591
    %v939 = vunpack.c.h.b16 %v591
    %v940 = vunpack.c.l.b16 %v592
    %v941 = vunpack.c.h.b16 %v592
    %v942 = vunpack.c.l.b16 %v593
    %v943 = vunpack.c.h.b16 %v593
    %v944 = vunpack.c.l.b16 %v594
    %v945 = vunpack.c.h.b16 %v594
    %v946 = vunpack.c.l.b16 %v595
    %v947 = vunpack.c.h.b16 %v595
    %v948 = vunpack.c.l.b16 %v596
    %v949 = vunpack.c.h.b16 %v596
    %v950 = vunpack.c.l.b16 %v597
    %v951 = vunpack.c.h.b16 %v597
    %v952 = vunpack.c.l.b16 %v598
    %v953 = vunpack.c.h.b16 %v598
    %v954 = vunpack.c.l.b16 %v599
    %v955 = vunpack.c.h.b16 %v599
    %v956 = vunpack.c.l.b16 %v600
    %v957 = vunpack.c.h.b16 %v600
    %v958 = vunpack.c.l.b16 %v601
    %v959 = vunpack.c.h.b16 %v601
    %v960 = vunpack.c.l.b16 %v602
    %v961 = vunpack.c.h.b16 %v602
    %v962 = vunpack.c.l.b16 %v603
    %v963 = vunpack.c.h.b16 %v603
    %v964 = vunpack.c.l.b16 %v604
    %v965 = vunpack.c.h.b16 %v604
    %v966 = vunpack.c.l.b16 %v605
    %v967 = vunpack.c.h.b16 %v605
    %v968 = vunpack.c.l.b16 %v606
    %v969 = vunpack.c.h.b16 %v606
    %v970 = vunpack.c.l.b16 %v607
    %v971 = vunpack.c.h.b16 %v607
    %v972 = vunpack.c.l.b16 %v608
    %v973 = vunpack.c.h.b16 %v608
    %v974 = vunpack.c.l.b16 %v609
    %v975 = vunpack.c.h.b16 %v609
    %v976 = vunpack.c.l.b16 %v610
    %v977 = vunpack.c.h.b16 %v610
    %v978 = vunpack.c.l.b16 %v611
    %v979 = vunpack.c.h.b16 %v611
    %v980 = vunpack.c.l.b16 %v612
    %v981 = vunpack.c.h.b16 %v612
    %v982 = vunpack.c.l.b16 %v613
    %v983 = vunpack.c.h.b16 %v613
    %v984 = vunpack.c.l.b16 %v614
    %v985 = vunpack.c.h.b16 %v614
    %v986 = vpack.c.b16 %v926, %v922
    %v987 = vpack.c.b16 %v927, %v923
    %v988 = vpack.c.b16 %v928, %v924
    %v989 = vpack.c.b16 %v929, %v925
    %v990 = vpack.c.b16 %v934, %v930
    %v991 = vpack.c.b16 %v935, %v931
    %v992 = vpack.c.b16 %v936, %v932
    %v993 = vpack.c.b16 %v937, %v933
    %v994 = vpack.c.b16 %v942, %v938
    %v995 = vpack.c.b16 %v943, %v939
    %v996 = vpack.c.b16 %v944, %v940
    %v997 = vpack.c.b16 %v945, %v941
    %v998 = vpack.c.b16 %v950, %v946
    %v999 = vpack.c.b16 %v951, %v947
    %v1000 = vpack.c.b16 %v952, %v948
    %v1001 = vpack.c.b16 %v953, %v949
    %v1002 = vpack.c.b16 %v958, %v954
    %v1003 = vpack.c.b16 %v959, %v955
    %v1004 = vpack.c.b16 %v960, %v956
    %v1005 = vpack.c.b16 %v961, %v957
    %v1006 = vpack.c.b16 %v966, %v962
    %v1007 = vpack.c.b16 %v967, %v963
    %v1008 = vpack.c.b16 %v968, %v964
    %v1009 = vpack.c.b16 %v969, %v965
    %v1010 = vpack.c.b16 %v974, %v970
    %v1011 = vpack.c.b16 %v975, %v971
    %v1012 = vpack.c.b16 %v976, %v972
    %v1013 = vpack.c.b16 %v977, %v973
    %v1014 = vpack.c.b16 %v982, %v978
    %v1015 = vpack.c.b16 %v983, %v979
    %v1016 = vpack.c.b16 %v984, %v980
    %v1017 = vpack.c.b16 %v985, %v981
    %1050 = vmatprep.subr.bf16.mxu0 %v1015
    %1051 = vmatpush1.bf16.msra.mxu0 %v1014
    %1052 = vmatprep.subr.bf16.mxu0 %v1011
    %1053 = vmatpush1.bf16.msra.mxu0 %v1010
    %1054 = vmatprep.subr.bf16.mxu0 %v1007
    %1055 = vmatpush1.bf16.msra.mxu0 %v1006
    %1056 = vmatprep.subr.bf16.mxu0 %v1003
    %1057 = vmatpush1.bf16.msra.mxu0 %v1002
    %1058 = vmatprep.subr.bf16.mxu0 %v999
    %1059 = vmatpush1.bf16.msra.mxu0 %v998
    %1060 = vmatprep.subr.bf16.mxu0 %v995
    %1061 = vmatpush1.bf16.msra.mxu0 %v994
    %1062 = vmatprep.subr.bf16.mxu0 %v991
    %1063 = vmatpush1.bf16.msra.mxu0 %v990
    %1064 = vmatprep.subr.bf16.mxu0 %v987
    %1065 = vmatpush1.bf16.msra.mxu0 %v986
    %1066 = vmatprep.subr.bf16.mxu0 0
    %1067 = vmatpush2.bf16.msra.mxu0 0
    %1068 = vmatprep.subr.bf16.mxu0 0
    %1069 = vmatpush2.bf16.msra.mxu0 0
    %1070 = vmatprep.subr.bf16.mxu0 0
    %1071 = vmatpush2.bf16.msra.mxu0 0
    %1072 = vmatprep.subr.bf16.mxu0 0
    %1073 = vmatpush2.bf16.msra.mxu0 0
    %1074 = vmatprep.subr.bf16.mxu0 0
    %1075 = vmatpush2.bf16.msra.mxu0 0
    %1076 = vmatprep.subr.bf16.mxu0 0
    %1077 = vmatpush2.bf16.msra.mxu0 0
    %1078 = vmatprep.subr.bf16.mxu0 0
    %1079 = vmatpush2.bf16.msra.mxu0 0
    %1080 = vmatprep.subr.bf16.mxu0 0
    %1081 = vmatpush2.bf16.msra.mxu0 0
    %1082 = vmatprep.mubr.bf16.mxu0 0
    %1083 = vmatmul.mubr.bf16.gmra.mxu0 %v582
    %v1084 = vpop.f32.mrf.mxu0
    %v1085 = vadd.f32 %v843, %v1084
    %v1086 = vpop.f32.mrf.mxu0
    %v1087 = vadd.f32 %v845, %v1086
    %v1088 = vpop.f32.mrf.mxu0
    %v1089 = vpop.f32.mrf.mxu0
    %1090 = vdwg.mxu0
    %1091 = vmatprep.subr.bf16.mxu0 %v1017
    %1092 = vmatpush1.bf16.msra.mxu0 %v1016
    %1093 = vmatprep.subr.bf16.mxu0 %v1013
    %1094 = vmatpush1.bf16.msra.mxu0 %v1012
    %1095 = vmatprep.subr.bf16.mxu0 %v1009
    %1096 = vmatpush1.bf16.msra.mxu0 %v1008
    %1097 = vmatprep.subr.bf16.mxu0 %v1005
    %1098 = vmatpush1.bf16.msra.mxu0 %v1004
    %1099 = vmatprep.subr.bf16.mxu0 %v1001
    %1100 = vmatpush1.bf16.msra.mxu0 %v1000
    %1101 = vmatprep.subr.bf16.mxu0 %v997
    %1102 = vmatpush1.bf16.msra.mxu0 %v996
    %1103 = vmatprep.subr.bf16.mxu0 %v993
    %1104 = vmatpush1.bf16.msra.mxu0 %v992
    %1105 = vmatprep.subr.bf16.mxu0 %v989
    %1106 = vmatpush1.bf16.msra.mxu0 %v988
    %1107 = vmatprep.subr.bf16.mxu0 0
    %1108 = vmatpush2.bf16.msra.mxu0 0
    %1109 = vmatprep.subr.bf16.mxu0 0
    %1110 = vmatpush2.bf16.msra.mxu0 0
    %1111 = vmatprep.subr.bf16.mxu0 0
    %1112 = vmatpush2.bf16.msra.mxu0 0
    %1113 = vmatprep.subr.bf16.mxu0 0
    %1114 = vmatpush2.bf16.msra.mxu0 0
    %1115 = vmatprep.subr.bf16.mxu0 0
    %1116 = vmatpush2.bf16.msra.mxu0 0
    %1117 = vmatprep.subr.bf16.mxu0 0
    %1118 = vmatpush2.bf16.msra.mxu0 0
    %1119 = vmatprep.subr.bf16.mxu0 0
    %1120 = vmatpush2.bf16.msra.mxu0 0
    %1121 = vmatprep.subr.bf16.mxu0 0
    %1122 = vmatpush2.bf16.msra.mxu0 0
    %1123 = vmatprep.mubr.bf16.mxu0 0
    %1124 = vmatmul.mubr.bf16.gmra.mxu0 %v582
    %v1125 = vpop.f32.mrf.mxu0
    %v1126 = vadd.f32 %v884, %v1125
    %v1127 = vpop.f32.mrf.mxu0
    %v1128 = vadd.f32 %v886, %v1127
    %v1129 = vpop.f32.mrf.mxu0
    %v1130 = vpop.f32.mrf.mxu0
    %1131 = vdwg.mxu0
    %v1132 = vadd.f32 %v1085, %v142
    %v1133 = vadd.f32 %v1087, %v146
    %v1134 = vadd.f32 %v1126, %v150
    %v1135 = vadd.f32 %v1128, %v154
    %v1136 = vxor.u32 %v1132, 2147483648
    %v1137 = vxor.u32 %v1133, 2147483648
    %v1138 = vxor.u32 %v1134, 2147483648
    %v1139 = vmul.f32 %v1136, 1.442695
    %v1140 = vpow.pop %v1139
    %v1141 = vmul.f32 %v1137, 1.442695
    %v1142 = vpow.pop %v1141
    %v1143 = vmul.f32 %v1138, 1.442695
    %v1144 = vpow.pop %v1143
    %v1145 = vadd.f32 %v1140, 1.0
    %v1146 = vadd.f32 %v1142, 1.0
    %v1147 = vadd.f32 %v1144, 1.0
    %v1148 = vrcp.pop %v1145
    %v1149 = vmul.f32 1.0, %v1148
    %v1150 = vrcp.pop %v1146
    %v1151 = vmul.f32 1.0, %v1150
    %v1152 = vrcp.pop %v1147
    %v1153 = vmul.f32 1.0, %v1152
    %v1154 = vtanh.pop %v1135
    %v1155 = vmul.f32 %v1151, %v114
    %v1156 = vmul.f32 %v1149, %v1154
    %v1157 = vadd.f32 %v1155, %v1156
    %v1158 = vtanh.pop %v1157
    %v1159 = vmul.f32 %v1153, %v1158
    %v1160 = vsel %vm579, %v1159, %v111
    %v1161 = vsel %vm579, %v1157, %v114
    %v1162 = vsel %vm579, %v1159, 0.0
    %v1163 = vpack.c.bf16 %v1162, %v1162
    %1164 = vst [vmem:[#allocation13] sm:$0xf] %v1163
    %s1165 = sadd.s32 %s107, 1
    %v1166 = vstv %s1165
    %vm1167 = vcmp.lt.s32.totalorder %v1166, %v108
    %s1168 = scalar_lea.vmem [#allocation4], 4
    %v1169 = vld [vmem:[%s1168] sm:$0xf]
    %v1170 = vld [vmem:[#allocation7] sm:$0xff]
    %v1171 = vld [vmem:[#allocation7 + $0x8] sm:$0xff]
    %v1172 = vld [vmem:[#allocation7 + $0x10] sm:$0xff]
    %v1173 = vld [vmem:[#allocation7 + $0x18] sm:$0xff]
    %v1174 = vld [vmem:[#allocation9] sm:$0xff]
    %v1175 = vld [vmem:[#allocation9 + $0x8] sm:$0xff]
    %v1176 = vld [vmem:[#allocation9 + $0x10] sm:$0xff]
    %v1177 = vld [vmem:[#allocation9 + $0x18] sm:$0xff]
    %v1178 = vld [vmem:[#allocation9 + $0x20] sm:$0xff]
    %v1179 = vld [vmem:[#allocation9 + $0x28] sm:$0xff]
    %v1180 = vld [vmem:[#allocation9 + $0x30] sm:$0xff]
    %v1181 = vld [vmem:[#allocation9 + $0x38] sm:$0xff]
    %v1182 = vld [vmem:[#allocation9 + $0x40] sm:$0xff]
    %v1183 = vld [vmem:[#allocation9 + $0x48] sm:$0xff]
    %v1184 = vld [vmem:[#allocation9 + $0x50] sm:$0xff]
    %v1185 = vld [vmem:[#allocation9 + $0x58] sm:$0xff]
    %v1186 = vld [vmem:[#allocation9 + $0x60] sm:$0xff]
    %v1187 = vld [vmem:[#allocation9 + $0x68] sm:$0xff]
    %v1188 = vld [vmem:[#allocation9 + $0x70] sm:$0xff]
    %v1189 = vld [vmem:[#allocation9 + $0x78] sm:$0xff]
    %v1190 = vld [vmem:[#allocation9 + $0x80] sm:$0xff]
    %v1191 = vld [vmem:[#allocation9 + $0x88] sm:$0xff]
    %v1192 = vld [vmem:[#allocation9 + $0x90] sm:$0xff]
    %v1193 = vld [vmem:[#allocation9 + $0x98] sm:$0xff]
    %v1194 = vld [vmem:[#allocation9 + $0xa0] sm:$0xff]
    %v1195 = vld [vmem:[#allocation9 + $0xa8] sm:$0xff]
    %v1196 = vld [vmem:[#allocation9 + $0xb0] sm:$0xff]
    %v1197 = vld [vmem:[#allocation9 + $0xb8] sm:$0xff]
    %v1198 = vld [vmem:[#allocation9 + $0xc0] sm:$0xff]
    %v1199 = vld [vmem:[#allocation9 + $0xc8] sm:$0xff]
    %v1200 = vld [vmem:[#allocation9 + $0xd0] sm:$0xff]
    %v1201 = vld [vmem:[#allocation9 + $0xd8] sm:$0xff]
    %v1202 = vld [vmem:[#allocation9 + $0xe0] sm:$0xff]
    %v1203 = vld [vmem:[#allocation9 + $0xe8] sm:$0xff]
    %v1204 = vld [vmem:[#allocation9 + $0xf0] sm:$0xff]
    %v1205 = vld [vmem:[#allocation9 + $0xf8] sm:$0xff]
    %v1238 = vunpack.c.l.b16 %v1174
    %v1239 = vunpack.c.h.b16 %v1174
    %v1240 = vunpack.c.l.b16 %v1175
    %v1241 = vunpack.c.h.b16 %v1175
    %v1242 = vunpack.c.l.b16 %v1176
    %v1243 = vunpack.c.h.b16 %v1176
    %v1244 = vunpack.c.l.b16 %v1177
    %v1245 = vunpack.c.h.b16 %v1177
    %v1246 = vunpack.c.l.b16 %v1178
    %v1247 = vunpack.c.h.b16 %v1178
    %v1248 = vunpack.c.l.b16 %v1179
    %v1249 = vunpack.c.h.b16 %v1179
    %v1250 = vunpack.c.l.b16 %v1180
    %v1251 = vunpack.c.h.b16 %v1180
    %v1252 = vunpack.c.l.b16 %v1181
    %v1253 = vunpack.c.h.b16 %v1181
    %v1254 = vunpack.c.l.b16 %v1182
    %v1255 = vunpack.c.h.b16 %v1182
    %v1256 = vunpack.c.l.b16 %v1183
    %v1257 = vunpack.c.h.b16 %v1183
    %v1258 = vunpack.c.l.b16 %v1184
    %v1259 = vunpack.c.h.b16 %v1184
    %v1260 = vunpack.c.l.b16 %v1185
    %v1261 = vunpack.c.h.b16 %v1185
    %v1262 = vunpack.c.l.b16 %v1186
    %v1263 = vunpack.c.h.b16 %v1186
    %v1264 = vunpack.c.l.b16 %v1187
    %v1265 = vunpack.c.h.b16 %v1187
    %v1266 = vunpack.c.l.b16 %v1188
    %v1267 = vunpack.c.h.b16 %v1188
    %v1268 = vunpack.c.l.b16 %v1189
    %v1269 = vunpack.c.h.b16 %v1189
    %v1270 = vunpack.c.l.b16 %v1190
    %v1271 = vunpack.c.h.b16 %v1190
    %v1272 = vunpack.c.l.b16 %v1191
    %v1273 = vunpack.c.h.b16 %v1191
    %v1274 = vunpack.c.l.b16 %v1192
    %v1275 = vunpack.c.h.b16 %v1192
    %v1276 = vunpack.c.l.b16 %v1193
    %v1277 = vunpack.c.h.b16 %v1193
    %v1278 = vunpack.c.l.b16 %v1194
    %v1279 = vunpack.c.h.b16 %v1194
    %v1280 = vunpack.c.l.b16 %v1195
    %v1281 = vunpack.c.h.b16 %v1195
    %v1282 = vunpack.c.l.b16 %v1196
    %v1283 = vunpack.c.h.b16 %v1196
    %v1284 = vunpack.c.l.b16 %v1197
    %v1285 = vunpack.c.h.b16 %v1197
    %v1286 = vunpack.c.l.b16 %v1198
    %v1287 = vunpack.c.h.b16 %v1198
    %v1288 = vunpack.c.l.b16 %v1199
    %v1289 = vunpack.c.h.b16 %v1199
    %v1290 = vunpack.c.l.b16 %v1200
    %v1291 = vunpack.c.h.b16 %v1200
    %v1292 = vunpack.c.l.b16 %v1201
    %v1293 = vunpack.c.h.b16 %v1201
    %v1294 = vunpack.c.l.b16 %v1202
    %v1295 = vunpack.c.h.b16 %v1202
    %v1296 = vunpack.c.l.b16 %v1203
    %v1297 = vunpack.c.h.b16 %v1203
    %v1298 = vunpack.c.l.b16 %v1204
    %v1299 = vunpack.c.h.b16 %v1204
    %v1300 = vunpack.c.l.b16 %v1205
    %v1301 = vunpack.c.h.b16 %v1205
    %v1302 = vpack.c.b16 %v1242, %v1238
    %v1303 = vpack.c.b16 %v1243, %v1239
    %v1304 = vpack.c.b16 %v1244, %v1240
    %v1305 = vpack.c.b16 %v1245, %v1241
    %v1306 = vpack.c.b16 %v1250, %v1246
    %v1307 = vpack.c.b16 %v1251, %v1247
    %v1308 = vpack.c.b16 %v1252, %v1248
    %v1309 = vpack.c.b16 %v1253, %v1249
    %v1310 = vpack.c.b16 %v1258, %v1254
    %v1311 = vpack.c.b16 %v1259, %v1255
    %v1312 = vpack.c.b16 %v1260, %v1256
    %v1313 = vpack.c.b16 %v1261, %v1257
    %v1314 = vpack.c.b16 %v1266, %v1262
    %v1315 = vpack.c.b16 %v1267, %v1263
    %v1316 = vpack.c.b16 %v1268, %v1264
    %v1317 = vpack.c.b16 %v1269, %v1265
    %v1318 = vpack.c.b16 %v1274, %v1270
    %v1319 = vpack.c.b16 %v1275, %v1271
    %v1320 = vpack.c.b16 %v1276, %v1272
    %v1321 = vpack.c.b16 %v1277, %v1273
    %v1322 = vpack.c.b16 %v1282, %v1278
    %v1323 = vpack.c.b16 %v1283, %v1279
    %v1324 = vpack.c.b16 %v1284, %v1280
    %v1325 = vpack.c.b16 %v1285, %v1281
    %v1326 = vpack.c.b16 %v1290, %v1286
    %v1327 = vpack.c.b16 %v1291, %v1287
    %v1328 = vpack.c.b16 %v1292, %v1288
    %v1329 = vpack.c.b16 %v1293, %v1289
    %v1330 = vpack.c.b16 %v1298, %v1294
    %v1331 = vpack.c.b16 %v1299, %v1295
    %v1332 = vpack.c.b16 %v1300, %v1296
    %v1333 = vpack.c.b16 %v1301, %v1297
    %1366 = vmatprep.subr.bf16.mxu0 %v1331
    %1367 = vmatpush1.bf16.msra.mxu0 %v1330
    %1368 = vmatprep.subr.bf16.mxu0 %v1327
    %1369 = vmatpush1.bf16.msra.mxu0 %v1326
    %1370 = vmatprep.subr.bf16.mxu0 %v1323
    %1371 = vmatpush1.bf16.msra.mxu0 %v1322
    %1372 = vmatprep.subr.bf16.mxu0 %v1319
    %1373 = vmatpush1.bf16.msra.mxu0 %v1318
    %1374 = vmatprep.subr.bf16.mxu0 %v1315
    %1375 = vmatpush1.bf16.msra.mxu0 %v1314
    %1376 = vmatprep.subr.bf16.mxu0 %v1311
    %1377 = vmatpush1.bf16.msra.mxu0 %v1310
    %1378 = vmatprep.subr.bf16.mxu0 %v1307
    %1379 = vmatpush1.bf16.msra.mxu0 %v1306
    %1380 = vmatprep.subr.bf16.mxu0 %v1303
    %1381 = vmatpush1.bf16.msra.mxu0 %v1302
    %1382 = vmatprep.subr.bf16.mxu0 0
    %1383 = vmatpush2.bf16.msra.mxu0 0
    %1384 = vmatprep.subr.bf16.mxu0 0
    %1385 = vmatpush2.bf16.msra.mxu0 0
    %1386 = vmatprep.subr.bf16.mxu0 0
    %1387 = vmatpush2.bf16.msra.mxu0 0
    %1388 = vmatprep.subr.bf16.mxu0 0
    %1389 = vmatpush2.bf16.msra.mxu0 0
    %1390 = vmatprep.subr.bf16.mxu0 0
    %1391 = vmatpush2.bf16.msra.mxu0 0
    %1392 = vmatprep.subr.bf16.mxu0 0
    %1393 = vmatpush2.bf16.msra.mxu0 0
    %1394 = vmatprep.subr.bf16.mxu0 0
    %1395 = vmatpush2.bf16.msra.mxu0 0
    %1396 = vmatprep.subr.bf16.mxu0 0
    %1397 = vmatpush2.bf16.msra.mxu0 0
    %1398 = vmatprep.mubr.bf16.mxu0 0
    %1399 = vmatmul.mubr.bf16.gmra.mxu0 %v582
    %v1400 = vpop.f32.mrf.mxu0
    %v1401 = vadd.f32 0.0, %v1400
    %v1402 = vpop.f32.mrf.mxu0
    %v1403 = vadd.f32 0.0, %v1402
    %v1404 = vpop.f32.mrf.mxu0
    %v1405 = vpop.f32.mrf.mxu0
    %1406 = vdwg.mxu0
    %1407 = vmatprep.subr.bf16.mxu0 %v1333
    %1408 = vmatpush1.bf16.msra.mxu0 %v1332
    %1409 = vmatprep.subr.bf16.mxu0 %v1329
    %1410 = vmatpush1.bf16.msra.mxu0 %v1328
    %1411 = vmatprep.subr.bf16.mxu0 %v1325
    %1412 = vmatpush1.bf16.msra.mxu0 %v1324
    %1413 = vmatprep.subr.bf16.mxu0 %v1321
    %1414 = vmatpush1.bf16.msra.mxu0 %v1320
    %1415 = vmatprep.subr.bf16.mxu0 %v1317
    %1416 = vmatpush1.bf16.msra.mxu0 %v1316
    %1417 = vmatprep.subr.bf16.mxu0 %v1313
    %1418 = vmatpush1.bf16.msra.mxu0 %v1312
    %1419 = vmatprep.subr.bf16.mxu0 %v1309
    %1420 = vmatpush1.bf16.msra.mxu0 %v1308
    %1421 = vmatprep.subr.bf16.mxu0 %v1305
    %1422 = vmatpush1.bf16.msra.mxu0 %v1304
    %1423 = vmatprep.subr.bf16.mxu0 0
    %1424 = vmatpush2.bf16.msra.mxu0 0
    %1425 = vmatprep.subr.bf16.mxu0 0
    %1426 = vmatpush2.bf16.msra.mxu0 0
    %1427 = vmatprep.subr.bf16.mxu0 0
    %1428 = vmatpush2.bf16.msra.mxu0 0
    %1429 = vmatprep.subr.bf16.mxu0 0
    %1430 = vmatpush2.bf16.msra.mxu0 0
    %1431 = vmatprep.subr.bf16.mxu0 0
    %1432 = vmatpush2.bf16.msra.mxu0 0
    %1433 = vmatprep.subr.bf16.mxu0 0
    %1434 = vmatpush2.bf16.msra.mxu0 0
    %1435 = vmatprep.subr.bf16.mxu0 0
    %1436 = vmatpush2.bf16.msra.mxu0 0
    %1437 = vmatprep.subr.bf16.mxu0 0
    %1438 = vmatpush2.bf16.msra.mxu0 0
    %1439 = vmatprep.mubr.bf16.mxu0 0
    %1440 = vmatmul.mubr.bf16.gmra.mxu0 %v582
    %v1441 = vpop.f32.mrf.mxu0
    %v1442 = vadd.f32 0.0, %v1441
    %v1443 = vpop.f32.mrf.mxu0
    %v1444 = vadd.f32 0.0, %v1443
    %v1445 = vpop.f32.mrf.mxu0
    %v1446 = vpop.f32.mrf.mxu0
    %1447 = vdwg.mxu0
    %v1452 = vunpack.c.l.b16 %v1170
    %v1453 = vunpack.c.h.b16 %v1170
    %v1454 = vunpack.c.l.b16 %v1171
    %v1455 = vunpack.c.h.b16 %v1171
    %v1456 = vunpack.c.l.b16 %v1172
    %v1457 = vunpack.c.h.b16 %v1172
    %v1458 = vunpack.c.l.b16 %v1173
    %v1459 = vunpack.c.h.b16 %v1173
    %v1460 = vpack.c.b16 %v1456, %v1452
    %v1461 = vpack.c.b16 %v1457, %v1453
    %v1462 = vpack.c.b16 %v1458, %v1454
    %v1463 = vpack.c.b16 %v1459, %v1455
    %v1469 = vsel %vm461, %v1169, 0
    %1471 = vmatprep.subr.bf16.mxu0 0
    %1472 = vmatpush1.bf16.msra.mxu0 0
    %1473 = vmatprep.subr.bf16.mxu0 0
    %1474 = vmatpush1.bf16.msra.mxu0 0
    %1475 = vmatprep.subr.bf16.mxu0 0
    %1476 = vmatpush1.bf16.msra.mxu0 0
    %1477 = vmatprep.subr.bf16.mxu0 0
    %1478 = vmatpush1.bf16.msra.mxu0 0
    %1479 = vmatprep.subr.bf16.mxu0 0
    %1480 = vmatpush1.bf16.msra.mxu0 0
    %1481 = vmatprep.subr.bf16.mxu0 0
    %1482 = vmatpush1.bf16.msra.mxu0 0
    %1483 = vmatprep.subr.bf16.mxu0 0
    %1484 = vmatpush1.bf16.msra.mxu0 0
    %1485 = vmatprep.subr.bf16.mxu0 %v1461
    %1486 = vmatpush1.bf16.msra.mxu0 %v1460
    %1487 = vmatprep.subr.bf16.mxu0 0
    %1488 = vmatpush2.bf16.msra.mxu0 0
    %1489 = vmatprep.subr.bf16.mxu0 0
    %1490 = vmatpush2.bf16.msra.mxu0 0
    %1491 = vmatprep.subr.bf16.mxu0 0
    %1492 = vmatpush2.bf16.msra.mxu0 0
    %1493 = vmatprep.subr.bf16.mxu0 0
    %1494 = vmatpush2.bf16.msra.mxu0 0
    %1495 = vmatprep.subr.bf16.mxu0 0
    %1496 = vmatpush2.bf16.msra.mxu0 0
    %1497 = vmatprep.subr.bf16.mxu0 0
    %1498 = vmatpush2.bf16.msra.mxu0 0
    %1499 = vmatprep.subr.bf16.mxu0 0
    %1500 = vmatpush2.bf16.msra.mxu0 0
    %1501 = vmatprep.subr.bf16.mxu0 0
    %1502 = vmatpush2.bf16.msra.mxu0 0
    %1503 = vmatprep.mubr.bf16.mxu0 0
    %1504 = vmatmul.mubr.bf16.gmra.mxu0 %v1469
    %v1505 = vpop.f32.mrf.mxu0
    %v1506 = vadd.f32 %v1401, %v1505
    %v1507 = vpop.f32.mrf.mxu0
    %v1508 = vadd.f32 %v1403, %v1507
    %v1509 = vpop.f32.mrf.mxu0
    %v1510 = vpop.f32.mrf.mxu0
    %1511 = vdwg.mxu0
    %1512 = vmatprep.subr.bf16.mxu0 0
    %1513 = vmatpush1.bf16.msra.mxu0 0
    %1514 = vmatprep.subr.bf16.mxu0 0
    %1515 = vmatpush1.bf16.msra.mxu0 0
    %1516 = vmatprep.subr.bf16.mxu0 0
    %1517 = vmatpush1.bf16.msra.mxu0 0
    %1518 = vmatprep.subr.bf16.mxu0 0
    %1519 = vmatpush1.bf16.msra.mxu0 0
    %1520 = vmatprep.subr.bf16.mxu0 0
    %1521 = vmatpush1.bf16.msra.mxu0 0
    %1522 = vmatprep.subr.bf16.mxu0 0
    %1523 = vmatpush1.bf16.msra.mxu0 0
    %1524 = vmatprep.subr.bf16.mxu0 0
    %1525 = vmatpush1.bf16.msra.mxu0 0
    %1526 = vmatprep.subr.bf16.mxu0 %v1463
    %1527 = vmatpush1.bf16.msra.mxu0 %v1462
    %1528 = vmatprep.subr.bf16.mxu0 0
    %1529 = vmatpush2.bf16.msra.mxu0 0
    %1530 = vmatprep.subr.bf16.mxu0 0
    %1531 = vmatpush2.bf16.msra.mxu0 0
    %1532 = vmatprep.subr.bf16.mxu0 0
    %1533 = vmatpush2.bf16.msra.mxu0 0
    %1534 = vmatprep.subr.bf16.mxu0 0
    %1535 = vmatpush2.bf16.msra.mxu0 0
    %1536 = vmatprep.subr.bf16.mxu0 0
    %1537 = vmatpush2.bf16.msra.mxu0 0
    %1538 = vmatprep.subr.bf16.mxu0 0
    %1539 = vmatpush2.bf16.msra.mxu0 0
    %1540 = vmatprep.subr.bf16.mxu0 0
    %1541 = vmatpush2.bf16.msra.mxu0 0
    %1542 = vmatprep.subr.bf16.mxu0 0
    %1543 = vmatpush2.bf16.msra.mxu0 0
    %1544 = vmatprep.mubr.bf16.mxu0 0
    %1545 = vmatmul.mubr.bf16.gmra.mxu0 %v1469
    %v1546 = vpop.f32.mrf.mxu0
    %v1547 = vadd.f32 %v1442, %v1546
    %v1548 = vpop.f32.mrf.mxu0
    %v1549 = vadd.f32 %v1444, %v1548
    %v1550 = vpop.f32.mrf.mxu0
    %v1551 = vpop.f32.mrf.mxu0
    %1552 = vdwg.mxu0
    %v1553 = vadd.f32 %v1506, %v120
    %v1554 = vadd.f32 %v1508, %v124
    %v1555 = vadd.f32 %v1547, %v128
    %v1556 = vadd.f32 %v1549, %v132
    %v1557 = vxor.u32 %v1553, 2147483648
    %v1558 = vxor.u32 %v1554, 2147483648
    %v1559 = vxor.u32 %v1555, 2147483648
    %v1560 = vmul.f32 %v1557, 1.442695
    %v1561 = vpow.pop %v1560
    %v1562 = vmul.f32 %v1558, 1.442695
    %v1563 = vpow.pop %v1562
    %v1564 = vmul.f32 %v1559, 1.442695
    %v1565 = vpow.pop %v1564
    %v1566 = vadd.f32 %v1561, 1.0
    %v1567 = vadd.f32 %v1563, 1.0
    %v1568 = vadd.f32 %v1565, 1.0
    %v1569 = vrcp.pop %v1566
    %v1570 = vmul.f32 1.0, %v1569
    %v1571 = vrcp.pop %v1567
    %v1572 = vmul.f32 1.0, %v1571
    %v1573 = vrcp.pop %v1568
    %v1574 = vmul.f32 1.0, %v1573
    %v1575 = vtanh.pop %v1556
    %v1576 = vmul.f32 %v1572, %v581
    %v1577 = vmul.f32 %v1570, %v1575
    %v1578 = vadd.f32 %v1576, %v1577
    %v1579 = vtanh.pop %v1578
    %v1580 = vmul.f32 %v1574, %v1579
    %v1581 = vsel %vm1167, 1, 0
    %1582 = vset.pattern.permute.xlu0 0
    %1583 = vperm.xlu0 %1582, %v1581
    %v1584 = vpop.permute.xlu0 %1583
    %vm1585 = vcmp.eq.s32.totalorder %v1584, 1
    %v1586 = vsel %vm1585, %v1580, %v580
    %v1587 = vsel %vm1585, %v1578, %v581
    %v1588 = vpack.c.bf16 %v1586, %v1586
    %v1589 = vld [vmem:[#allocation10] sm:$0xff]
    %v1590 = vld [vmem:[#allocation10 + $0x8] sm:$0xff]
    %v1591 = vld [vmem:[#allocation10 + $0x10] sm:$0xff]
    %v1592 = vld [vmem:[#allocation10 + $0x18] sm:$0xff]
    %v1593 = vld [vmem:[#allocation10 + $0x20] sm:$0xff]
    %v1594 = vld [vmem:[#allocation10 + $0x28] sm:$0xff]
    %v1595 = vld [vmem:[#allocation10 + $0x30] sm:$0xff]
    %v1596 = vld [vmem:[#allocation10 + $0x38] sm:$0xff]
    %v1597 = vld [vmem:[#allocation10 + $0x40] sm:$0xff]
    %v1598 = vld [vmem:[#allocation10 + $0x48] sm:$0xff]
    %v1599 = vld [vmem:[#allocation10 + $0x50] sm:$0xff]
    %v1600 = vld [vmem:[#allocation10 + $0x58] sm:$0xff]
    %v1601 = vld [vmem:[#allocation10 + $0x60] sm:$0xff]
    %v1602 = vld [vmem:[#allocation10 + $0x68] sm:$0xff]
    %v1603 = vld [vmem:[#allocation10 + $0x70] sm:$0xff]
    %v1604 = vld [vmem:[#allocation10 + $0x78] sm:$0xff]
    %v1605 = vld [vmem:[#allocation10 + $0x80] sm:$0xff]
    %v1606 = vld [vmem:[#allocation10 + $0x88] sm:$0xff]
    %v1607 = vld [vmem:[#allocation10 + $0x90] sm:$0xff]
    %v1608 = vld [vmem:[#allocation10 + $0x98] sm:$0xff]
    %v1609 = vld [vmem:[#allocation10 + $0xa0] sm:$0xff]
    %v1610 = vld [vmem:[#allocation10 + $0xa8] sm:$0xff]
    %v1611 = vld [vmem:[#allocation10 + $0xb0] sm:$0xff]
    %v1612 = vld [vmem:[#allocation10 + $0xb8] sm:$0xff]
    %v1613 = vld [vmem:[#allocation10 + $0xc0] sm:$0xff]
    %v1614 = vld [vmem:[#allocation10 + $0xc8] sm:$0xff]
    %v1615 = vld [vmem:[#allocation10 + $0xd0] sm:$0xff]
    %v1616 = vld [vmem:[#allocation10 + $0xd8] sm:$0xff]
    %v1617 = vld [vmem:[#allocation10 + $0xe0] sm:$0xff]
    %v1618 = vld [vmem:[#allocation10 + $0xe8] sm:$0xff]
    %v1619 = vld [vmem:[#allocation10 + $0xf0] sm:$0xff]
    %v1620 = vld [vmem:[#allocation10 + $0xf8] sm:$0xff]
    %v1621 = vpack.c.bf16 %v1160, %v1160
    %v1622 = vld [vmem:[#allocation12] sm:$0xff]
    %v1623 = vld [vmem:[#allocation12 + $0x8] sm:$0xff]
    %v1624 = vld [vmem:[#allocation12 + $0x10] sm:$0xff]
    %v1625 = vld [vmem:[#allocation12 + $0x18] sm:$0xff]
    %v1626 = vld [vmem:[#allocation12 + $0x20] sm:$0xff]
    %v1627 = vld [vmem:[#allocation12 + $0x28] sm:$0xff]
    %v1628 = vld [vmem:[#allocation12 + $0x30] sm:$0xff]
    %v1629 = vld [vmem:[#allocation12 + $0x38] sm:$0xff]
    %v1630 = vld [vmem:[#allocation12 + $0x40] sm:$0xff]
    %v1631 = vld [vmem:[#allocation12 + $0x48] sm:$0xff]
    %v1632 = vld [vmem:[#allocation12 + $0x50] sm:$0xff]
    %v1633 = vld [vmem:[#allocation12 + $0x58] sm:$0xff]
    %v1634 = vld [vmem:[#allocation12 + $0x60] sm:$0xff]
    %v1635 = vld [vmem:[#allocation12 + $0x68] sm:$0xff]
    %v1636 = vld [vmem:[#allocation12 + $0x70] sm:$0xff]
    %v1637 = vld [vmem:[#allocation12 + $0x78] sm:$0xff]
    %v1638 = vld [vmem:[#allocation12 + $0x80] sm:$0xff]
    %v1639 = vld [vmem:[#allocation12 + $0x88] sm:$0xff]
    %v1640 = vld [vmem:[#allocation12 + $0x90] sm:$0xff]
    %v1641 = vld [vmem:[#allocation12 + $0x98] sm:$0xff]
    %v1642 = vld [vmem:[#allocation12 + $0xa0] sm:$0xff]
    %v1643 = vld [vmem:[#allocation12 + $0xa8] sm:$0xff]
    %v1644 = vld [vmem:[#allocation12 + $0xb0] sm:$0xff]
    %v1645 = vld [vmem:[#allocation12 + $0xb8] sm:$0xff]
    %v1646 = vld [vmem:[#allocation12 + $0xc0] sm:$0xff]
    %v1647 = vld [vmem:[#allocation12 + $0xc8] sm:$0xff]
    %v1648 = vld [vmem:[#allocation12 + $0xd0] sm:$0xff]
    %v1649 = vld [vmem:[#allocation12 + $0xd8] sm:$0xff]
    %v1650 = vld [vmem:[#allocation12 + $0xe0] sm:$0xff]
    %v1651 = vld [vmem:[#allocation12 + $0xe8] sm:$0xff]
    %v1652 = vld [vmem:[#allocation12 + $0xf0] sm:$0xff]
    %v1653 = vld [vmem:[#allocation12 + $0xf8] sm:$0xff]
    %v1686 = vunpack.c.l.b16 %v1622
    %v1687 = vunpack.c.h.b16 %v1622
    %v1688 = vunpack.c.l.b16 %v1623
    %v1689 = vunpack.c.h.b16 %v1623
    %v1690 = vunpack.c.l.b16 %v1624
    %v1691 = vunpack.c.h.b16 %v1624
    %v1692 = vunpack.c.l.b16 %v1625
    %v1693 = vunpack.c.h.b16 %v1625
    %v1694 = vunpack.c.l.b16 %v1626
    %v1695 = vunpack.c.h.b16 %v1626
    %v1696 = vunpack.c.l.b16 %v1627
    %v1697 = vunpack.c.h.b16 %v1627
    %v1698 = vunpack.c.l.b16 %v1628
    %v1699 = vunpack.c.h.b16 %v1628
    %v1700 = vunpack.c.l.b16 %v1629
    %v1701 = vunpack.c.h.b16 %v1629
    %v1702 = vunpack.c.l.b16 %v1630
    %v1703 = vunpack.c.h.b16 %v1630
    %v1704 = vunpack.c.l.b16 %v1631
    %v1705 = vunpack.c.h.b16 %v1631
    %v1706 = vunpack.c.l.b16 %v1632
    %v1707 = vunpack.c.h.b16 %v1632
    %v1708 = vunpack.c.l.b16 %v1633
    %v1709 = vunpack.c.h.b16 %v1633
    %v1710 = vunpack.c.l.b16 %v1634
    %v1711 = vunpack.c.h.b16 %v1634
    %v1712 = vunpack.c.l.b16 %v1635
    %v1713 = vunpack.c.h.b16 %v1635
    %v1714 = vunpack.c.l.b16 %v1636
    %v1715 = vunpack.c.h.b16 %v1636
    %v1716 = vunpack.c.l.b16 %v1637
    %v1717 = vunpack.c.h.b16 %v1637
    %v1718 = vunpack.c.l.b16 %v1638
    %v1719 = vunpack.c.h.b16 %v1638
    %v1720 = vunpack.c.l.b16 %v1639
    %v1721 = vunpack.c.h.b16 %v1639
    %v1722 = vunpack.c.l.b16 %v1640
    %v1723 = vunpack.c.h.b16 %v1640
    %v1724 = vunpack.c.l.b16 %v1641
    %v1725 = vunpack.c.h.b16 %v1641
    %v1726 = vunpack.c.l.b16 %v1642
    %v1727 = vunpack.c.h.b16 %v1642
    %v1728 = vunpack.c.l.b16 %v1643
    %v1729 = vunpack.c.h.b16 %v1643
    %v1730 = vunpack.c.l.b16 %v1644
    %v1731 = vunpack.c.h.b16 %v1644
    %v1732 = vunpack.c.l.b16 %v1645
    %v1733 = vunpack.c.h.b16 %v1645
    %v1734 = vunpack.c.l.b16 %v1646
    %v1735 = vunpack.c.h.b16 %v1646
    %v1736 = vunpack.c.l.b16 %v1647
    %v1737 = vunpack.c.h.b16 %v1647
    %v1738 = vunpack.c.l.b16 %v1648
    %v1739 = vunpack.c.h.b16 %v1648
    %v1740 = vunpack.c.l.b16 %v1649
    %v1741 = vunpack.c.h.b16 %v1649
    %v1742 = vunpack.c.l.b16 %v1650
    %v1743 = vunpack.c.h.b16 %v1650
    %v1744 = vunpack.c.l.b16 %v1651
    %v1745 = vunpack.c.h.b16 %v1651
    %v1746 = vunpack.c.l.b16 %v1652
    %v1747 = vunpack.c.h.b16 %v1652
    %v1748 = vunpack.c.l.b16 %v1653
    %v1749 = vunpack.c.h.b16 %v1653
    %v1750 = vpack.c.b16 %v1690, %v1686
    %v1751 = vpack.c.b16 %v1691, %v1687
    %v1752 = vpack.c.b16 %v1692, %v1688
    %v1753 = vpack.c.b16 %v1693, %v1689
    %v1754 = vpack.c.b16 %v1698, %v1694
    %v1755 = vpack.c.b16 %v1699, %v1695
    %v1756 = vpack.c.b16 %v1700, %v1696
    %v1757 = vpack.c.b16 %v1701, %v1697
    %v1758 = vpack.c.b16 %v1706, %v1702
    %v1759 = vpack.c.b16 %v1707, %v1703
    %v1760 = vpack.c.b16 %v1708, %v1704
    %v1761 = vpack.c.b16 %v1709, %v1705
    %v1762 = vpack.c.b16 %v1714, %v1710
    %v1763 = vpack.c.b16 %v1715, %v1711
    %v1764 = vpack.c.b16 %v1716, %v1712
    %v1765 = vpack.c.b16 %v1717, %v1713
    %v1766 = vpack.c.b16 %v1722, %v1718
    %v1767 = vpack.c.b16 %v1723, %v1719
    %v1768 = vpack.c.b16 %v1724, %v1720
    %v1769 = vpack.c.b16 %v1725, %v1721
    %v1770 = vpack.c.b16 %v1730, %v1726
    %v1771 = vpack.c.b16 %v1731, %v1727
    %v1772 = vpack.c.b16 %v1732, %v1728
    %v1773 = vpack.c.b16 %v1733, %v1729
    %v1774 = vpack.c.b16 %v1738, %v1734
    %v1775 = vpack.c.b16 %v1739, %v1735
    %v1776 = vpack.c.b16 %v1740, %v1736
    %v1777 = vpack.c.b16 %v1741, %v1737
    %v1778 = vpack.c.b16 %v1746, %v1742
    %v1779 = vpack.c.b16 %v1747, %v1743
    %v1780 = vpack.c.b16 %v1748, %v1744
    %v1781 = vpack.c.b16 %v1749, %v1745
    %1814 = vmatprep.subr.bf16.mxu0 %v1779
    %1815 = vmatpush1.bf16.msra.mxu0 %v1778
    %1816 = vmatprep.subr.bf16.mxu0 %v1775
    %1817 = vmatpush1.bf16.msra.mxu0 %v1774
    %1818 = vmatprep.subr.bf16.mxu0 %v1771
    %1819 = vmatpush1.bf16.msra.mxu0 %v1770
    %1820 = vmatprep.subr.bf16.mxu0 %v1767
    %1821 = vmatpush1.bf16.msra.mxu0 %v1766
    %1822 = vmatprep.subr.bf16.mxu0 %v1763
    %1823 = vmatpush1.bf16.msra.mxu0 %v1762
    %1824 = vmatprep.subr.bf16.mxu0 %v1759
    %1825 = vmatpush1.bf16.msra.mxu0 %v1758
    %1826 = vmatprep.subr.bf16.mxu0 %v1755
    %1827 = vmatpush1.bf16.msra.mxu0 %v1754
    %1828 = vmatprep.subr.bf16.mxu0 %v1751
    %1829 = vmatpush1.bf16.msra.mxu0 %v1750
    %1830 = vmatprep.subr.bf16.mxu0 0
    %1831 = vmatpush2.bf16.msra.mxu0 0
    %1832 = vmatprep.subr.bf16.mxu0 0
    %1833 = vmatpush2.bf16.msra.mxu0 0
    %1834 = vmatprep.subr.bf16.mxu0 0
    %1835 = vmatpush2.bf16.msra.mxu0 0
    %1836 = vmatprep.subr.bf16.mxu0 0
    %1837 = vmatpush2.bf16.msra.mxu0 0
    %1838 = vmatprep.subr.bf16.mxu0 0
    %1839 = vmatpush2.bf16.msra.mxu0 0
    %1840 = vmatprep.subr.bf16.mxu0 0
    %1841 = vmatpush2.bf16.msra.mxu0 0
    %1842 = vmatprep.subr.bf16.mxu0 0
    %1843 = vmatpush2.bf16.msra.mxu0 0
    %1844 = vmatprep.subr.bf16.mxu0 0
    %1845 = vmatpush2.bf16.msra.mxu0 0
    %1846 = vmatprep.mubr.bf16.mxu0 0
    %1847 = vmatmul.mubr.bf16.gmra.mxu0 %v1621
    %v1848 = vpop.f32.mrf.mxu0
    %v1849 = vadd.f32 0.0, %v1848
    %v1850 = vpop.f32.mrf.mxu0
    %v1851 = vadd.f32 0.0, %v1850
    %v1852 = vpop.f32.mrf.mxu0
    %v1853 = vpop.f32.mrf.mxu0
    %1854 = vdwg.mxu0
    %1855 = vmatprep.subr.bf16.mxu0 %v1781
    %1856 = vmatpush1.bf16.msra.mxu0 %v1780
    %1857 = vmatprep.subr.bf16.mxu0 %v1777
    %1858 = vmatpush1.bf16.msra.mxu0 %v1776
    %1859 = vmatprep.subr.bf16.mxu0 %v1773
    %1860 = vmatpush1.bf16.msra.mxu0 %v1772
    %1861 = vmatprep.subr.bf16.mxu0 %v1769
    %1862 = vmatpush1.bf16.msra.mxu0 %v1768
    %1863 = vmatprep.subr.bf16.mxu0 %v1765
    %1864 = vmatpush1.bf16.msra.mxu0 %v1764
    %1865 = vmatprep.subr.bf16.mxu0 %v1761
    %1866 = vmatpush1.bf16.msra.mxu0 %v1760
    %1867 = vmatprep.subr.bf16.mxu0 %v1757
    %1868 = vmatpush1.bf16.msra.mxu0 %v1756
    %1869 = vmatprep.subr.bf16.mxu0 %v1753
    %1870 = vmatpush1.bf16.msra.mxu0 %v1752
    %1871 = vmatprep.subr.bf16.mxu0 0
    %1872 = vmatpush2.bf16.msra.mxu0 0
    %1873 = vmatprep.subr.bf16.mxu0 0
    %1874 = vmatpush2.bf16.msra.mxu0 0
    %1875 = vmatprep.subr.bf16.mxu0 0
    %1876 = vmatpush2.bf16.msra.mxu0 0
    %1877 = vmatprep.subr.bf16.mxu0 0
    %1878 = vmatpush2.bf16.msra.mxu0 0
    %1879 = vmatprep.subr.bf16.mxu0 0
    %1880 = vmatpush2.bf16.msra.mxu0 0
    %1881 = vmatprep.subr.bf16.mxu0 0
    %1882 = vmatpush2.bf16.msra.mxu0 0
    %1883 = vmatprep.subr.bf16.mxu0 0
    %1884 = vmatpush2.bf16.msra.mxu0 0
    %1885 = vmatprep.subr.bf16.mxu0 0
    %1886 = vmatpush2.bf16.msra.mxu0 0
    %1887 = vmatprep.mubr.bf16.mxu0 0
    %1888 = vmatmul.mubr.bf16.gmra.mxu0 %v1621
    %v1889 = vpop.f32.mrf.mxu0
    %v1890 = vadd.f32 0.0, %v1889
    %v1891 = vpop.f32.mrf.mxu0
    %v1892 = vadd.f32 0.0, %v1891
    %v1893 = vpop.f32.mrf.mxu0
    %v1894 = vpop.f32.mrf.mxu0
    %1895 = vdwg.mxu0
    %v1928 = vunpack.c.l.b16 %v1589
    %v1929 = vunpack.c.h.b16 %v1589
    %v1930 = vunpack.c.l.b16 %v1590
    %v1931 = vunpack.c.h.b16 %v1590
    %v1932 = vunpack.c.l.b16 %v1591
    %v1933 = vunpack.c.h.b16 %v1591
    %v1934 = vunpack.c.l.b16 %v1592
    %v1935 = vunpack.c.h.b16 %v1592
    %v1936 = vunpack.c.l.b16 %v1593
    %v1937 = vunpack.c.h.b16 %v1593
    %v1938 = vunpack.c.l.b16 %v1594
    %v1939 = vunpack.c.h.b16 %v1594
    %v1940 = vunpack.c.l.b16 %v1595
    %v1941 = vunpack.c.h.b16 %v1595
    %v1942 = vunpack.c.l.b16 %v1596
    %v1943 = vunpack.c.h.b16 %v1596
    %v1944 = vunpack.c.l.b16 %v1597
    %v1945 = vunpack.c.h.b16 %v1597
    %v1946 = vunpack.c.l.b16 %v1598
    %v1947 = vunpack.c.h.b16 %v1598
    %v1948 = vunpack.c.l.b16 %v1599
    %v1949 = vunpack.c.h.b16 %v1599
    %v1950 = vunpack.c.l.b16 %v1600
    %v1951 = vunpack.c.h.b16 %v1600
    %v1952 = vunpack.c.l.b16 %v1601
    %v1953 = vunpack.c.h.b16 %v1601
    %v1954 = vunpack.c.l.b16 %v1602
    %v1955 = vunpack.c.h.b16 %v1602
    %v1956 = vunpack.c.l.b16 %v1603
    %v1957 = vunpack.c.h.b16 %v1603
    %v1958 = vunpack.c.l.b16 %v1604
    %v1959 = vunpack.c.h.b16 %v1604
    %v1960 = vunpack.c.l.b16 %v1605
    %v1961 = vunpack.c.h.b16 %v1605
    %v1962 = vunpack.c.l.b16 %v1606
    %v1963 = vunpack.c.h.b16 %v1606
    %v1964 = vunpack.c.l.b16 %v1607
    %v1965 = vunpack.c.h.b16 %v1607
    %v1966 = vunpack.c.l.b16 %v1608
    %v1967 = vunpack.c.h.b16 %v1608
    %v1968 = vunpack.c.l.b16 %v1609
    %v1969 = vunpack.c.h.b16 %v1609
    %v1970 = vunpack.c.l.b16 %v1610
    %v1971 = vunpack.c.h.b16 %v1610
    %v1972 = vunpack.c.l.b16 %v1611
    %v1973 = vunpack.c.h.b16 %v1611
    %v1974 = vunpack.c.l.b16 %v1612
    %v1975 = vunpack.c.h.b16 %v1612
    %v1976 = vunpack.c.l.b16 %v1613
    %v1977 = vunpack.c.h.b16 %v1613
    %v1978 = vunpack.c.l.b16 %v1614
    %v1979 = vunpack.c.h.b16 %v1614
    %v1980 = vunpack.c.l.b16 %v1615
    %v1981 = vunpack.c.h.b16 %v1615
    %v1982 = vunpack.c.l.b16 %v1616
    %v1983 = vunpack.c.h.b16 %v1616
    %v1984 = vunpack.c.l.b16 %v1617
    %v1985 = vunpack.c.h.b16 %v1617
    %v1986 = vunpack.c.l.b16 %v1618
    %v1987 = vunpack.c.h.b16 %v1618
    %v1988 = vunpack.c.l.b16 %v1619
    %v1989 = vunpack.c.h.b16 %v1619
    %v1990 = vunpack.c.l.b16 %v1620
    %v1991 = vunpack.c.h.b16 %v1620
    %v1992 = vpack.c.b16 %v1932, %v1928
    %v1993 = vpack.c.b16 %v1933, %v1929
    %v1994 = vpack.c.b16 %v1934, %v1930
    %v1995 = vpack.c.b16 %v1935, %v1931
    %v1996 = vpack.c.b16 %v1940, %v1936
    %v1997 = vpack.c.b16 %v1941, %v1937
    %v1998 = vpack.c.b16 %v1942, %v1938
    %v1999 = vpack.c.b16 %v1943, %v1939
    %v2000 = vpack.c.b16 %v1948, %v1944
    %v2001 = vpack.c.b16 %v1949, %v1945
    %v2002 = vpack.c.b16 %v1950, %v1946
    %v2003 = vpack.c.b16 %v1951, %v1947
    %v2004 = vpack.c.b16 %v1956, %v1952
    %v2005 = vpack.c.b16 %v1957, %v1953
    %v2006 = vpack.c.b16 %v1958, %v1954
    %v2007 = vpack.c.b16 %v1959, %v1955
    %v2008 = vpack.c.b16 %v1964, %v1960
    %v2009 = vpack.c.b16 %v1965, %v1961
    %v2010 = vpack.c.b16 %v1966, %v1962
    %v2011 = vpack.c.b16 %v1967, %v1963
    %v2012 = vpack.c.b16 %v1972, %v1968
    %v2013 = vpack.c.b16 %v1973, %v1969
    %v2014 = vpack.c.b16 %v1974, %v1970
    %v2015 = vpack.c.b16 %v1975, %v1971
    %v2016 = vpack.c.b16 %v1980, %v1976
    %v2017 = vpack.c.b16 %v1981, %v1977
    %v2018 = vpack.c.b16 %v1982, %v1978
    %v2019 = vpack.c.b16 %v1983, %v1979
    %v2020 = vpack.c.b16 %v1988, %v1984
    %v2021 = vpack.c.b16 %v1989, %v1985
    %v2022 = vpack.c.b16 %v1990, %v1986
    %v2023 = vpack.c.b16 %v1991, %v1987
    %2056 = vmatprep.subr.bf16.mxu0 %v2021
    %2057 = vmatpush1.bf16.msra.mxu0 %v2020
    %2058 = vmatprep.subr.bf16.mxu0 %v2017
    %2059 = vmatpush1.bf16.msra.mxu0 %v2016
    %2060 = vmatprep.subr.bf16.mxu0 %v2013
    %2061 = vmatpush1.bf16.msra.mxu0 %v2012
    %2062 = vmatprep.subr.bf16.mxu0 %v2009
    %2063 = vmatpush1.bf16.msra.mxu0 %v2008
    %2064 = vmatprep.subr.bf16.mxu0 %v2005
    %2065 = vmatpush1.bf16.msra.mxu0 %v2004
    %2066 = vmatprep.subr.bf16.mxu0 %v2001
    %2067 = vmatpush1.bf16.msra.mxu0 %v2000
    %2068 = vmatprep.subr.bf16.mxu0 %v1997
    %2069 = vmatpush1.bf16.msra.mxu0 %v1996
    %2070 = vmatprep.subr.bf16.mxu0 %v1993
    %2071 = vmatpush1.bf16.msra.mxu0 %v1992
    %2072 = vmatprep.subr.bf16.mxu0 0
    %2073 = vmatpush2.bf16.msra.mxu0 0
    %2074 = vmatprep.subr.bf16.mxu0 0
    %2075 = vmatpush2.bf16.msra.mxu0 0
    %2076 = vmatprep.subr.bf16.mxu0 0
    %2077 = vmatpush2.bf16.msra.mxu0 0
    %2078 = vmatprep.subr.bf16.mxu0 0
    %2079 = vmatpush2.bf16.msra.mxu0 0
    %2080 = vmatprep.subr.bf16.mxu0 0
    %2081 = vmatpush2.bf16.msra.mxu0 0
    %2082 = vmatprep.subr.bf16.mxu0 0
    %2083 = vmatpush2.bf16.msra.mxu0 0
    %2084 = vmatprep.subr.bf16.mxu0 0
    %2085 = vmatpush2.bf16.msra.mxu0 0
    %2086 = vmatprep.subr.bf16.mxu0 0
    %2087 = vmatpush2.bf16.msra.mxu0 0
    %2088 = vmatprep.mubr.bf16.mxu0 0
    %2089 = vmatmul.mubr.bf16.gmra.mxu0 %v1588
    %v2090 = vpop.f32.mrf.mxu0
    %v2091 = vadd.f32 %v1849, %v2090
    %v2092 = vpop.f32.mrf.mxu0
    %v2093 = vadd.f32 %v1851, %v2092
    %v2094 = vpop.f32.mrf.mxu0
    %v2095 = vpop.f32.mrf.mxu0
    %2096 = vdwg.mxu0
    %2097 = vmatprep.subr.bf16.mxu0 %v2023
    %2098 = vmatpush1.bf16.msra.mxu0 %v2022
    %2099 = vmatprep.subr.bf16.mxu0 %v2019
    %2100 = vmatpush1.bf16.msra.mxu0 %v2018
    %2101 = vmatprep.subr.bf16.mxu0 %v2015
    %2102 = vmatpush1.bf16.msra.mxu0 %v2014
    %2103 = vmatprep.subr.bf16.mxu0 %v2011
    %2104 = vmatpush1.bf16.msra.mxu0 %v2010
    %2105 = vmatprep.subr.bf16.mxu0 %v2007
    %2106 = vmatpush1.bf16.msra.mxu0 %v2006
    %2107 = vmatprep.subr.bf16.mxu0 %v2003
    %2108 = vmatpush1.bf16.msra.mxu0 %v2002
    %2109 = vmatprep.subr.bf16.mxu0 %v1999
    %2110 = vmatpush1.bf16.msra.mxu0 %v1998
    %2111 = vmatprep.subr.bf16.mxu0 %v1995
    %2112 = vmatpush1.bf16.msra.mxu0 %v1994
    %2113 = vmatprep.subr.bf16.mxu0 0
    %2114 = vmatpush2.bf16.msra.mxu0 0
    %2115 = vmatprep.subr.bf16.mxu0 0
    %2116 = vmatpush2.bf16.msra.mxu0 0
    %2117 = vmatprep.subr.bf16.mxu0 0
    %2118 = vmatpush2.bf16.msra.mxu0 0
    %2119 = vmatprep.subr.bf16.mxu0 0
    %2120 = vmatpush2.bf16.msra.mxu0 0
    %2121 = vmatprep.subr.bf16.mxu0 0
    %2122 = vmatpush2.bf16.msra.mxu0 0
    %2123 = vmatprep.subr.bf16.mxu0 0
    %2124 = vmatpush2.bf16.msra.mxu0 0
    %2125 = vmatprep.subr.bf16.mxu0 0
    %2126 = vmatpush2.bf16.msra.mxu0 0
    %2127 = vmatprep.subr.bf16.mxu0 0
    %2128 = vmatpush2.bf16.msra.mxu0 0
    %2129 = vmatprep.mubr.bf16.mxu0 0
    %2130 = vmatmul.mubr.bf16.gmra.mxu0 %v1588
    %v2131 = vpop.f32.mrf.mxu0
    %v2132 = vadd.f32 %v1890, %v2131
    %v2133 = vpop.f32.mrf.mxu0
    %v2134 = vadd.f32 %v1892, %v2133
    %v2135 = vpop.f32.mrf.mxu0
    %v2136 = vpop.f32.mrf.mxu0
    %2137 = vdwg.mxu0
    %v2138 = vadd.f32 %v2091, %v142
    %v2139 = vadd.f32 %v2093, %v146
    %v2140 = vadd.f32 %v2132, %v150
    %v2141 = vadd.f32 %v2134, %v154
    %v2142 = vxor.u32 %v2138, 2147483648
    %v2143 = vxor.u32 %v2139, 2147483648
    %v2144 = vxor.u32 %v2140, 2147483648
    %v2145 = vmul.f32 %v2142, 1.442695
    %v2146 = vpow.pop %v2145
    %v2147 = vmul.f32 %v2143, 1.442695
    %v2148 = vpow.pop %v2147
    %v2149 = vmul.f32 %v2144, 1.442695
    %v2150 = vpow.pop %v2149
    %v2151 = vadd.f32 %v2146, 1.0
    %v2152 = vadd.f32 %v2148, 1.0
    %v2153 = vadd.f32 %v2150, 1.0
    %v2154 = vrcp.pop %v2151
    %v2155 = vmul.f32 1.0, %v2154
    %v2156 = vrcp.pop %v2152
    %v2157 = vmul.f32 1.0, %v2156
    %v2158 = vrcp.pop %v2153
    %v2159 = vmul.f32 1.0, %v2158
    %v2160 = vtanh.pop %v2141
    %v2161 = vmul.f32 %v2157, %v1161
    %v2162 = vmul.f32 %v2155, %v2160
    %v2163 = vadd.f32 %v2161, %v2162
    %v2164 = vtanh.pop %v2163
    %v2165 = vmul.f32 %v2159, %v2164
    %v2166 = vsel %vm1585, %v2165, %v1160
    %v2167 = vsel %vm1585, %v2163, %v1161
    %v2168 = vsel %vm1585, %v2165, 0.0
    %v2169 = vpack.c.bf16 %v2168, %v2168
    %s2170 = scalar_lea.vmem [#allocation13], 4
    %2171 = vst [vmem:[%s2170] sm:$0xf] %v2169
    %s2172 = sadd.s32 %s107, 2
    %v2173 = vstv %s2172
    %vm2174 = vcmp.lt.s32.totalorder %v2173, %v108
    %s2175 = scalar_lea.vmem [#allocation4], 8
    %v2176 = vld [vmem:[%s2175] sm:$0xf]
    %v2177 = vld [vmem:[#allocation7] sm:$0xff]
    %v2178 = vld [vmem:[#allocation7 + $0x8] sm:$0xff]
    %v2179 = vld [vmem:[#allocation7 + $0x10] sm:$0xff]
    %v2180 = vld [vmem:[#allocation7 + $0x18] sm:$0xff]
    %v2181 = vld [vmem:[#allocation9] sm:$0xff]
    %v2182 = vld [vmem:[#allocation9 + $0x8] sm:$0xff]
    %v2183 = vld [vmem:[#allocation9 + $0x10] sm:$0xff]
    %v2184 = vld [vmem:[#allocation9 + $0x18] sm:$0xff]
    %v2185 = vld [vmem:[#allocation9 + $0x20] sm:$0xff]
    %v2186 = vld [vmem:[#allocation9 + $0x28] sm:$0xff]
    %v2187 = vld [vmem:[#allocation9 + $0x30] sm:$0xff]
    %v2188 = vld [vmem:[#allocation9 + $0x38] sm:$0xff]
    %v2189 = vld [vmem:[#allocation9 + $0x40] sm:$0xff]
    %v2190 = vld [vmem:[#allocation9 + $0x48] sm:$0xff]
    %v2191 = vld [vmem:[#allocation9 + $0x50] sm:$0xff]
    %v2192 = vld [vmem:[#allocation9 + $0x58] sm:$0xff]
    %v2193 = vld [vmem:[#allocation9 + $0x60] sm:$0xff]
    %v2194 = vld [vmem:[#allocation9 + $0x68] sm:$0xff]
    %v2195 = vld [vmem:[#allocation9 + $0x70] sm:$0xff]
    %v2196 = vld [vmem:[#allocation9 + $0x78] sm:$0xff]
    %v2197 = vld [vmem:[#allocation9 + $0x80] sm:$0xff]
    %v2198 = vld [vmem:[#allocation9 + $0x88] sm:$0xff]
    %v2199 = vld [vmem:[#allocation9 + $0x90] sm:$0xff]
    %v2200 = vld [vmem:[#allocation9 + $0x98] sm:$0xff]
    %v2201 = vld [vmem:[#allocation9 + $0xa0] sm:$0xff]
    %v2202 = vld [vmem:[#allocation9 + $0xa8] sm:$0xff]
    %v2203 = vld [vmem:[#allocation9 + $0xb0] sm:$0xff]
    %v2204 = vld [vmem:[#allocation9 + $0xb8] sm:$0xff]
    %v2205 = vld [vmem:[#allocation9 + $0xc0] sm:$0xff]
    %v2206 = vld [vmem:[#allocation9 + $0xc8] sm:$0xff]
    %v2207 = vld [vmem:[#allocation9 + $0xd0] sm:$0xff]
    %v2208 = vld [vmem:[#allocation9 + $0xd8] sm:$0xff]
    %v2209 = vld [vmem:[#allocation9 + $0xe0] sm:$0xff]
    %v2210 = vld [vmem:[#allocation9 + $0xe8] sm:$0xff]
    %v2211 = vld [vmem:[#allocation9 + $0xf0] sm:$0xff]
    %v2212 = vld [vmem:[#allocation9 + $0xf8] sm:$0xff]
    %v2245 = vunpack.c.l.b16 %v2181
    %v2246 = vunpack.c.h.b16 %v2181
    %v2247 = vunpack.c.l.b16 %v2182
    %v2248 = vunpack.c.h.b16 %v2182
    %v2249 = vunpack.c.l.b16 %v2183
    %v2250 = vunpack.c.h.b16 %v2183
    %v2251 = vunpack.c.l.b16 %v2184
    %v2252 = vunpack.c.h.b16 %v2184
    %v2253 = vunpack.c.l.b16 %v2185
    %v2254 = vunpack.c.h.b16 %v2185
    %v2255 = vunpack.c.l.b16 %v2186
    %v2256 = vunpack.c.h.b16 %v2186
    %v2257 = vunpack.c.l.b16 %v2187
    %v2258 = vunpack.c.h.b16 %v2187
    %v2259 = vunpack.c.l.b16 %v2188
    %v2260 = vunpack.c.h.b16 %v2188
    %v2261 = vunpack.c.l.b16 %v2189
    %v2262 = vunpack.c.h.b16 %v2189
    %v2263 = vunpack.c.l.b16 %v2190
    %v2264 = vunpack.c.h.b16 %v2190
    %v2265 = vunpack.c.l.b16 %v2191
    %v2266 = vunpack.c.h.b16 %v2191
    %v2267 = vunpack.c.l.b16 %v2192
    %v2268 = vunpack.c.h.b16 %v2192
    %v2269 = vunpack.c.l.b16 %v2193
    %v2270 = vunpack.c.h.b16 %v2193
    %v2271 = vunpack.c.l.b16 %v2194
    %v2272 = vunpack.c.h.b16 %v2194
    %v2273 = vunpack.c.l.b16 %v2195
    %v2274 = vunpack.c.h.b16 %v2195
    %v2275 = vunpack.c.l.b16 %v2196
    %v2276 = vunpack.c.h.b16 %v2196
    %v2277 = vunpack.c.l.b16 %v2197
    %v2278 = vunpack.c.h.b16 %v2197
    %v2279 = vunpack.c.l.b16 %v2198
    %v2280 = vunpack.c.h.b16 %v2198
    %v2281 = vunpack.c.l.b16 %v2199
    %v2282 = vunpack.c.h.b16 %v2199
    %v2283 = vunpack.c.l.b16 %v2200
    %v2284 = vunpack.c.h.b16 %v2200
    %v2285 = vunpack.c.l.b16 %v2201
    %v2286 = vunpack.c.h.b16 %v2201
    %v2287 = vunpack.c.l.b16 %v2202
    %v2288 = vunpack.c.h.b16 %v2202
    %v2289 = vunpack.c.l.b16 %v2203
    %v2290 = vunpack.c.h.b16 %v2203
    %v2291 = vunpack.c.l.b16 %v2204
    %v2292 = vunpack.c.h.b16 %v2204
    %v2293 = vunpack.c.l.b16 %v2205
    %v2294 = vunpack.c.h.b16 %v2205
    %v2295 = vunpack.c.l.b16 %v2206
    %v2296 = vunpack.c.h.b16 %v2206
    %v2297 = vunpack.c.l.b16 %v2207
    %v2298 = vunpack.c.h.b16 %v2207
    %v2299 = vunpack.c.l.b16 %v2208
    %v2300 = vunpack.c.h.b16 %v2208
    %v2301 = vunpack.c.l.b16 %v2209
    %v2302 = vunpack.c.h.b16 %v2209
    %v2303 = vunpack.c.l.b16 %v2210
    %v2304 = vunpack.c.h.b16 %v2210
    %v2305 = vunpack.c.l.b16 %v2211
    %v2306 = vunpack.c.h.b16 %v2211
    %v2307 = vunpack.c.l.b16 %v2212
    %v2308 = vunpack.c.h.b16 %v2212
    %v2309 = vpack.c.b16 %v2249, %v2245
    %v2310 = vpack.c.b16 %v2250, %v2246
    %v2311 = vpack.c.b16 %v2251, %v2247
    %v2312 = vpack.c.b16 %v2252, %v2248
    %v2313 = vpack.c.b16 %v2257, %v2253
    %v2314 = vpack.c.b16 %v2258, %v2254
    %v2315 = vpack.c.b16 %v2259, %v2255
    %v2316 = vpack.c.b16 %v2260, %v2256
    %v2317 = vpack.c.b16 %v2265, %v2261
    %v2318 = vpack.c.b16 %v2266, %v2262
    %v2319 = vpack.c.b16 %v2267, %v2263
    %v2320 = vpack.c.b16 %v2268, %v2264
    %v2321 = vpack.c.b16 %v2273, %v2269
    %v2322 = vpack.c.b16 %v2274, %v2270
    %v2323 = vpack.c.b16 %v2275, %v2271
    %v2324 = vpack.c.b16 %v2276, %v2272
    %v2325 = vpack.c.b16 %v2281, %v2277
    %v2326 = vpack.c.b16 %v2282, %v2278
    %v2327 = vpack.c.b16 %v2283, %v2279
    %v2328 = vpack.c.b16 %v2284, %v2280
    %v2329 = vpack.c.b16 %v2289, %v2285
    %v2330 = vpack.c.b16 %v2290, %v2286
    %v2331 = vpack.c.b16 %v2291, %v2287
    %v2332 = vpack.c.b16 %v2292, %v2288
    %v2333 = vpack.c.b16 %v2297, %v2293
    %v2334 = vpack.c.b16 %v2298, %v2294
    %v2335 = vpack.c.b16 %v2299, %v2295
    %v2336 = vpack.c.b16 %v2300, %v2296
    %v2337 = vpack.c.b16 %v2305, %v2301
    %v2338 = vpack.c.b16 %v2306, %v2302
    %v2339 = vpack.c.b16 %v2307, %v2303
    %v2340 = vpack.c.b16 %v2308, %v2304
    %2373 = vmatprep.subr.bf16.mxu0 %v2338
    %2374 = vmatpush1.bf16.msra.mxu0 %v2337
    %2375 = vmatprep.subr.bf16.mxu0 %v2334
    %2376 = vmatpush1.bf16.msra.mxu0 %v2333
    %2377 = vmatprep.subr.bf16.mxu0 %v2330
    %2378 = vmatpush1.bf16.msra.mxu0 %v2329
    %2379 = vmatprep.subr.bf16.mxu0 %v2326
    %2380 = vmatpush1.bf16.msra.mxu0 %v2325
    %2381 = vmatprep.subr.bf16.mxu0 %v2322
    %2382 = vmatpush1.bf16.msra.mxu0 %v2321
    %2383 = vmatprep.subr.bf16.mxu0 %v2318
    %2384 = vmatpush1.bf16.msra.mxu0 %v2317
    %2385 = vmatprep.subr.bf16.mxu0 %v2314
    %2386 = vmatpush1.bf16.msra.mxu0 %v2313
    %2387 = vmatprep.subr.bf16.mxu0 %v2310
    %2388 = vmatpush1.bf16.msra.mxu0 %v2309
    %2389 = vmatprep.subr.bf16.mxu0 0
    %2390 = vmatpush2.bf16.msra.mxu0 0
    %2391 = vmatprep.subr.bf16.mxu0 0
    %2392 = vmatpush2.bf16.msra.mxu0 0
    %2393 = vmatprep.subr.bf16.mxu0 0
    %2394 = vmatpush2.bf16.msra.mxu0 0
    %2395 = vmatprep.subr.bf16.mxu0 0
    %2396 = vmatpush2.bf16.msra.mxu0 0
    %2397 = vmatprep.subr.bf16.mxu0 0
    %2398 = vmatpush2.bf16.msra.mxu0 0
    %2399 = vmatprep.subr.bf16.mxu0 0
    %2400 = vmatpush2.bf16.msra.mxu0 0
    %2401 = vmatprep.subr.bf16.mxu0 0
    %2402 = vmatpush2.bf16.msra.mxu0 0
    %2403 = vmatprep.subr.bf16.mxu0 0
    %2404 = vmatpush2.bf16.msra.mxu0 0
    %2405 = vmatprep.mubr.bf16.mxu0 0
    %2406 = vmatmul.mubr.bf16.gmra.mxu0 %v1588
    %v2407 = vpop.f32.mrf.mxu0
    %v2408 = vadd.f32 0.0, %v2407
    %v2409 = vpop.f32.mrf.mxu0
    %v2410 = vadd.f32 0.0, %v2409
    %v2411 = vpop.f32.mrf.mxu0
    %v2412 = vpop.f32.mrf.mxu0
    %2413 = vdwg.mxu0
    %2414 = vmatprep.subr.bf16.mxu0 %v2340
    %2415 = vmatpush1.bf16.msra.mxu0 %v2339
    %2416 = vmatprep.subr.bf16.mxu0 %v2336
    %2417 = vmatpush1.bf16.msra.mxu0 %v2335
    %2418 = vmatprep.subr.bf16.mxu0 %v2332
    %2419 = vmatpush1.bf16.msra.mxu0 %v2331
    %2420 = vmatprep.subr.bf16.mxu0 %v2328
    %2421 = vmatpush1.bf16.msra.mxu0 %v2327
    %2422 = vmatprep.subr.bf16.mxu0 %v2324
    %2423 = vmatpush1.bf16.msra.mxu0 %v2323
    %2424 = vmatprep.subr.bf16.mxu0 %v2320
    %2425 = vmatpush1.bf16.msra.mxu0 %v2319
    %2426 = vmatprep.subr.bf16.mxu0 %v2316
    %2427 = vmatpush1.bf16.msra.mxu0 %v2315
    %2428 = vmatprep.subr.bf16.mxu0 %v2312
    %2429 = vmatpush1.bf16.msra.mxu0 %v2311
    %2430 = vmatprep.subr.bf16.mxu0 0
    %2431 = vmatpush2.bf16.msra.mxu0 0
    %2432 = vmatprep.subr.bf16.mxu0 0
    %2433 = vmatpush2.bf16.msra.mxu0 0
    %2434 = vmatprep.subr.bf16.mxu0 0
    %2435 = vmatpush2.bf16.msra.mxu0 0
    %2436 = vmatprep.subr.bf16.mxu0 0
    %2437 = vmatpush2.bf16.msra.mxu0 0
    %2438 = vmatprep.subr.bf16.mxu0 0
    %2439 = vmatpush2.bf16.msra.mxu0 0
    %2440 = vmatprep.subr.bf16.mxu0 0
    %2441 = vmatpush2.bf16.msra.mxu0 0
    %2442 = vmatprep.subr.bf16.mxu0 0
    %2443 = vmatpush2.bf16.msra.mxu0 0
    %2444 = vmatprep.subr.bf16.mxu0 0
    %2445 = vmatpush2.bf16.msra.mxu0 0
    %2446 = vmatprep.mubr.bf16.mxu0 0
    %2447 = vmatmul.mubr.bf16.gmra.mxu0 %v1588
    %v2448 = vpop.f32.mrf.mxu0
    %v2449 = vadd.f32 0.0, %v2448
    %v2450 = vpop.f32.mrf.mxu0
    %v2451 = vadd.f32 0.0, %v2450
    %v2452 = vpop.f32.mrf.mxu0
    %v2453 = vpop.f32.mrf.mxu0
    %2454 = vdwg.mxu0
    %v2459 = vunpack.c.l.b16 %v2177
    %v2460 = vunpack.c.h.b16 %v2177
    %v2461 = vunpack.c.l.b16 %v2178
    %v2462 = vunpack.c.h.b16 %v2178
    %v2463 = vunpack.c.l.b16 %v2179
    %v2464 = vunpack.c.h.b16 %v2179
    %v2465 = vunpack.c.l.b16 %v2180
    %v2466 = vunpack.c.h.b16 %v2180
    %v2467 = vpack.c.b16 %v2463, %v2459
    %v2468 = vpack.c.b16 %v2464, %v2460
    %v2469 = vpack.c.b16 %v2465, %v2461
    %v2470 = vpack.c.b16 %v2466, %v2462
    %v2476 = vsel %vm461, %v2176, 0
    %2478 = vmatprep.subr.bf16.mxu0 0
    %2479 = vmatpush1.bf16.msra.mxu0 0
    %2480 = vmatprep.subr.bf16.mxu0 0
    %2481 = vmatpush1.bf16.msra.mxu0 0
    %2482 = vmatprep.subr.bf16.mxu0 0
    %2483 = vmatpush1.bf16.msra.mxu0 0
    %2484 = vmatprep.subr.bf16.mxu0 0
    %2485 = vmatpush1.bf16.msra.mxu0 0
    %2486 = vmatprep.subr.bf16.mxu0 0
    %2487 = vmatpush1.bf16.msra.mxu0 0
    %2488 = vmatprep.subr.bf16.mxu0 0
    %2489 = vmatpush1.bf16.msra.mxu0 0
    %2490 = vmatprep.subr.bf16.mxu0 0
    %2491 = vmatpush1.bf16.msra.mxu0 0
    %2492 = vmatprep.subr.bf16.mxu0 %v2468
    %2493 = vmatpush1.bf16.msra.mxu0 %v2467
    %2494 = vmatprep.subr.bf16.mxu0 0
    %2495 = vmatpush2.bf16.msra.mxu0 0
    %2496 = vmatprep.subr.bf16.mxu0 0
    %2497 = vmatpush2.bf16.msra.mxu0 0
    %2498 = vmatprep.subr.bf16.mxu0 0
    %2499 = vmatpush2.bf16.msra.mxu0 0
    %2500 = vmatprep.subr.bf16.mxu0 0
    %2501 = vmatpush2.bf16.msra.mxu0 0
    %2502 = vmatprep.subr.bf16.mxu0 0
    %2503 = vmatpush2.bf16.msra.mxu0 0
    %2504 = vmatprep.subr.bf16.mxu0 0
    %2505 = vmatpush2.bf16.msra.mxu0 0
    %2506 = vmatprep.subr.bf16.mxu0 0
    %2507 = vmatpush2.bf16.msra.mxu0 0
    %2508 = vmatprep.subr.bf16.mxu0 0
    %2509 = vmatpush2.bf16.msra.mxu0 0
    %2510 = vmatprep.mubr.bf16.mxu0 0
    %2511 = vmatmul.mubr.bf16.gmra.mxu0 %v2476
    %v2512 = vpop.f32.mrf.mxu0
    %v2513 = vadd.f32 %v2408, %v2512
    %v2514 = vpop.f32.mrf.mxu0
    %v2515 = vadd.f32 %v2410, %v2514
    %v2516 = vpop.f32.mrf.mxu0
    %v2517 = vpop.f32.mrf.mxu0
    %2518 = vdwg.mxu0
    %2519 = vmatprep.subr.bf16.mxu0 0
    %2520 = vmatpush1.bf16.msra.mxu0 0
    %2521 = vmatprep.subr.bf16.mxu0 0
    %2522 = vmatpush1.bf16.msra.mxu0 0
    %2523 = vmatprep.subr.bf16.mxu0 0
    %2524 = vmatpush1.bf16.msra.mxu0 0
    %2525 = vmatprep.subr.bf16.mxu0 0
    %2526 = vmatpush1.bf16.msra.mxu0 0
    %2527 = vmatprep.subr.bf16.mxu0 0
    %2528 = vmatpush1.bf16.msra.mxu0 0
    %2529 = vmatprep.subr.bf16.mxu0 0
    %2530 = vmatpush1.bf16.msra.mxu0 0
    %2531 = vmatprep.subr.bf16.mxu0 0
    %2532 = vmatpush1.bf16.msra.mxu0 0
    %2533 = vmatprep.subr.bf16.mxu0 %v2470
    %2534 = vmatpush1.bf16.msra.mxu0 %v2469
    %2535 = vmatprep.subr.bf16.mxu0 0
    %2536 = vmatpush2.bf16.msra.mxu0 0
    %2537 = vmatprep.subr.bf16.mxu0 0
    %2538 = vmatpush2.bf16.msra.mxu0 0
    %2539 = vmatprep.subr.bf16.mxu0 0
    %2540 = vmatpush2.bf16.msra.mxu0 0
    %2541 = vmatprep.subr.bf16.mxu0 0
    %2542 = vmatpush2.bf16.msra.mxu0 0
    %2543 = vmatprep.subr.bf16.mxu0 0
    %2544 = vmatpush2.bf16.msra.mxu0 0
    %2545 = vmatprep.subr.bf16.mxu0 0
    %2546 = vmatpush2.bf16.msra.mxu0 0
    %2547 = vmatprep.subr.bf16.mxu0 0
    %2548 = vmatpush2.bf16.msra.mxu0 0
    %2549 = vmatprep.subr.bf16.mxu0 0
    %2550 = vmatpush2.bf16.msra.mxu0 0
    %2551 = vmatprep.mubr.bf16.mxu0 0
    %2552 = vmatmul.mubr.bf16.gmra.mxu0 %v2476
    %v2553 = vpop.f32.mrf.mxu0
    %v2554 = vadd.f32 %v2449, %v2553
    %v2555 = vpop.f32.mrf.mxu0
    %v2556 = vadd.f32 %v2451, %v2555
    %v2557 = vpop.f32.mrf.mxu0
    %v2558 = vpop.f32.mrf.mxu0
    %2559 = vdwg.mxu0
    %v2560 = vadd.f32 %v2513, %v120
    %v2561 = vadd.f32 %v2515, %v124
    %v2562 = vadd.f32 %v2554, %v128
    %v2563 = vadd.f32 %v2556, %v132
    %v2564 = vxor.u32 %v2560, 2147483648
    %v2565 = vxor.u32 %v2561, 2147483648
    %v2566 = vxor.u32 %v2562, 2147483648
    %v2567 = vmul.f32 %v2564, 1.442695
    %v2568 = vpow.pop %v2567
    %v2569 = vmul.f32 %v2565, 1.442695
    %v2570 = vpow.pop %v2569
    %v2571 = vmul.f32 %v2566, 1.442695
    %v2572 = vpow.pop %v2571
    %v2573 = vadd.f32 %v2568, 1.0
    %v2574 = vadd.f32 %v2570, 1.0
    %v2575 = vadd.f32 %v2572, 1.0
    %v2576 = vrcp.pop %v2573
    %v2577 = vmul.f32 1.0, %v2576
    %v2578 = vrcp.pop %v2574
    %v2579 = vmul.f32 1.0, %v2578
    %v2580 = vrcp.pop %v2575
    %v2581 = vmul.f32 1.0, %v2580
    %v2582 = vtanh.pop %v2563
    %v2583 = vmul.f32 %v2579, %v1587
    %v2584 = vmul.f32 %v2577, %v2582
    %v2585 = vadd.f32 %v2583, %v2584
    %v2586 = vtanh.pop %v2585
    %v2587 = vmul.f32 %v2581, %v2586
    %v2588 = vsel %vm2174, 1, 0
    %2589 = vset.pattern.permute.xlu0 0
    %2590 = vperm.xlu0 %2589, %v2588
    %v2591 = vpop.permute.xlu0 %2590
    %vm2592 = vcmp.eq.s32.totalorder %v2591, 1
    %v2593 = vsel %vm2592, %v2587, %v1586
    %v2594 = vsel %vm2592, %v2585, %v1587
    %v2595 = vpack.c.bf16 %v2593, %v2593
    %v2596 = vld [vmem:[#allocation10] sm:$0xff]
    %v2597 = vld [vmem:[#allocation10 + $0x8] sm:$0xff]
    %v2598 = vld [vmem:[#allocation10 + $0x10] sm:$0xff]
    %v2599 = vld [vmem:[#allocation10 + $0x18] sm:$0xff]
    %v2600 = vld [vmem:[#allocation10 + $0x20] sm:$0xff]
    %v2601 = vld [vmem:[#allocation10 + $0x28] sm:$0xff]
    %v2602 = vld [vmem:[#allocation10 + $0x30] sm:$0xff]
    %v2603 = vld [vmem:[#allocation10 + $0x38] sm:$0xff]
    %v2604 = vld [vmem:[#allocation10 + $0x40] sm:$0xff]
    %v2605 = vld [vmem:[#allocation10 + $0x48] sm:$0xff]
    %v2606 = vld [vmem:[#allocation10 + $0x50] sm:$0xff]
    %v2607 = vld [vmem:[#allocation10 + $0x58] sm:$0xff]
    %v2608 = vld [vmem:[#allocation10 + $0x60] sm:$0xff]
    %v2609 = vld [vmem:[#allocation10 + $0x68] sm:$0xff]
    %v2610 = vld [vmem:[#allocation10 + $0x70] sm:$0xff]
    %v2611 = vld [vmem:[#allocation10 + $0x78] sm:$0xff]
    %v2612 = vld [vmem:[#allocation10 + $0x80] sm:$0xff]
    %v2613 = vld [vmem:[#allocation10 + $0x88] sm:$0xff]
    %v2614 = vld [vmem:[#allocation10 + $0x90] sm:$0xff]
    %v2615 = vld [vmem:[#allocation10 + $0x98] sm:$0xff]
    %v2616 = vld [vmem:[#allocation10 + $0xa0] sm:$0xff]
    %v2617 = vld [vmem:[#allocation10 + $0xa8] sm:$0xff]
    %v2618 = vld [vmem:[#allocation10 + $0xb0] sm:$0xff]
    %v2619 = vld [vmem:[#allocation10 + $0xb8] sm:$0xff]
    %v2620 = vld [vmem:[#allocation10 + $0xc0] sm:$0xff]
    %v2621 = vld [vmem:[#allocation10 + $0xc8] sm:$0xff]
    %v2622 = vld [vmem:[#allocation10 + $0xd0] sm:$0xff]
    %v2623 = vld [vmem:[#allocation10 + $0xd8] sm:$0xff]
    %v2624 = vld [vmem:[#allocation10 + $0xe0] sm:$0xff]
    %v2625 = vld [vmem:[#allocation10 + $0xe8] sm:$0xff]
    %v2626 = vld [vmem:[#allocation10 + $0xf0] sm:$0xff]
    %v2627 = vld [vmem:[#allocation10 + $0xf8] sm:$0xff]
    %v2628 = vpack.c.bf16 %v2166, %v2166
    %v2629 = vld [vmem:[#allocation12] sm:$0xff]
    %v2630 = vld [vmem:[#allocation12 + $0x8] sm:$0xff]
    %v2631 = vld [vmem:[#allocation12 + $0x10] sm:$0xff]
    %v2632 = vld [vmem:[#allocation12 + $0x18] sm:$0xff]
    %v2633 = vld [vmem:[#allocation12 + $0x20] sm:$0xff]
    %v2634 = vld [vmem:[#allocation12 + $0x28] sm:$0xff]
    %v2635 = vld [vmem:[#allocation12 + $0x30] sm:$0xff]
    %v2636 = vld [vmem:[#allocation12 + $0x38] sm:$0xff]
    %v2637 = vld [vmem:[#allocation12 + $0x40] sm:$0xff]
    %v2638 = vld [vmem:[#allocation12 + $0x48] sm:$0xff]
    %v2639 = vld [vmem:[#allocation12 + $0x50] sm:$0xff]
    %v2640 = vld [vmem:[#allocation12 + $0x58] sm:$0xff]
    %v2641 = vld [vmem:[#allocation12 + $0x60] sm:$0xff]
    %v2642 = vld [vmem:[#allocation12 + $0x68] sm:$0xff]
    %v2643 = vld [vmem:[#allocation12 + $0x70] sm:$0xff]
    %v2644 = vld [vmem:[#allocation12 + $0x78] sm:$0xff]
    %v2645 = vld [vmem:[#allocation12 + $0x80] sm:$0xff]
    %v2646 = vld [vmem:[#allocation12 + $0x88] sm:$0xff]
    %v2647 = vld [vmem:[#allocation12 + $0x90] sm:$0xff]
    %v2648 = vld [vmem:[#allocation12 + $0x98] sm:$0xff]
    %v2649 = vld [vmem:[#allocation12 + $0xa0] sm:$0xff]
    %v2650 = vld [vmem:[#allocation12 + $0xa8] sm:$0xff]
    %v2651 = vld [vmem:[#allocation12 + $0xb0] sm:$0xff]
    %v2652 = vld [vmem:[#allocation12 + $0xb8] sm:$0xff]
    %v2653 = vld [vmem:[#allocation12 + $0xc0] sm:$0xff]
    %v2654 = vld [vmem:[#allocation12 + $0xc8] sm:$0xff]
    %v2655 = vld [vmem:[#allocation12 + $0xd0] sm:$0xff]
    %v2656 = vld [vmem:[#allocation12 + $0xd8] sm:$0xff]
    %v2657 = vld [vmem:[#allocation12 + $0xe0] sm:$0xff]
    %v2658 = vld [vmem:[#allocation12 + $0xe8] sm:$0xff]
    %v2659 = vld [vmem:[#allocation12 + $0xf0] sm:$0xff]
    %v2660 = vld [vmem:[#allocation12 + $0xf8] sm:$0xff]
    %v2693 = vunpack.c.l.b16 %v2629
    %v2694 = vunpack.c.h.b16 %v2629
    %v2695 = vunpack.c.l.b16 %v2630
    %v2696 = vunpack.c.h.b16 %v2630
    %v2697 = vunpack.c.l.b16 %v2631
    %v2698 = vunpack.c.h.b16 %v2631
    %v2699 = vunpack.c.l.b16 %v2632
    %v2700 = vunpack.c.h.b16 %v2632
    %v2701 = vunpack.c.l.b16 %v2633
    %v2702 = vunpack.c.h.b16 %v2633
    %v2703 = vunpack.c.l.b16 %v2634
    %v2704 = vunpack.c.h.b16 %v2634
    %v2705 = vunpack.c.l.b16 %v2635
    %v2706 = vunpack.c.h.b16 %v2635
    %v2707 = vunpack.c.l.b16 %v2636
    %v2708 = vunpack.c.h.b16 %v2636
    %v2709 = vunpack.c.l.b16 %v2637
    %v2710 = vunpack.c.h.b16 %v2637
    %v2711 = vunpack.c.l.b16 %v2638
    %v2712 = vunpack.c.h.b16 %v2638
    %v2713 = vunpack.c.l.b16 %v2639
    %v2714 = vunpack.c.h.b16 %v2639
    %v2715 = vunpack.c.l.b16 %v2640
    %v2716 = vunpack.c.h.b16 %v2640
    %v2717 = vunpack.c.l.b16 %v2641
    %v2718 = vunpack.c.h.b16 %v2641
    %v2719 = vunpack.c.l.b16 %v2642
    %v2720 = vunpack.c.h.b16 %v2642
    %v2721 = vunpack.c.l.b16 %v2643
    %v2722 = vunpack.c.h.b16 %v2643
    %v2723 = vunpack.c.l.b16 %v2644
    %v2724 = vunpack.c.h.b16 %v2644
    %v2725 = vunpack.c.l.b16 %v2645
    %v2726 = vunpack.c.h.b16 %v2645
    %v2727 = vunpack.c.l.b16 %v2646
    %v2728 = vunpack.c.h.b16 %v2646
    %v2729 = vunpack.c.l.b16 %v2647
    %v2730 = vunpack.c.h.b16 %v2647
    %v2731 = vunpack.c.l.b16 %v2648
    %v2732 = vunpack.c.h.b16 %v2648
    %v2733 = vunpack.c.l.b16 %v2649
    %v2734 = vunpack.c.h.b16 %v2649
    %v2735 = vunpack.c.l.b16 %v2650
    %v2736 = vunpack.c.h.b16 %v2650
    %v2737 = vunpack.c.l.b16 %v2651
    %v2738 = vunpack.c.h.b16 %v2651
    %v2739 = vunpack.c.l.b16 %v2652
    %v2740 = vunpack.c.h.b16 %v2652
    %v2741 = vunpack.c.l.b16 %v2653
    %v2742 = vunpack.c.h.b16 %v2653
    %v2743 = vunpack.c.l.b16 %v2654
    %v2744 = vunpack.c.h.b16 %v2654
    %v2745 = vunpack.c.l.b16 %v2655
    %v2746 = vunpack.c.h.b16 %v2655
    %v2747 = vunpack.c.l.b16 %v2656
    %v2748 = vunpack.c.h.b16 %v2656
    %v2749 = vunpack.c.l.b16 %v2657
    %v2750 = vunpack.c.h.b16 %v2657
    %v2751 = vunpack.c.l.b16 %v2658
    %v2752 = vunpack.c.h.b16 %v2658
    %v2753 = vunpack.c.l.b16 %v2659
    %v2754 = vunpack.c.h.b16 %v2659
    %v2755 = vunpack.c.l.b16 %v2660
    %v2756 = vunpack.c.h.b16 %v2660
    %v2757 = vpack.c.b16 %v2697, %v2693
    %v2758 = vpack.c.b16 %v2698, %v2694
    %v2759 = vpack.c.b16 %v2699, %v2695
    %v2760 = vpack.c.b16 %v2700, %v2696
    %v2761 = vpack.c.b16 %v2705, %v2701
    %v2762 = vpack.c.b16 %v2706, %v2702
    %v2763 = vpack.c.b16 %v2707, %v2703
    %v2764 = vpack.c.b16 %v2708, %v2704
    %v2765 = vpack.c.b16 %v2713, %v2709
    %v2766 = vpack.c.b16 %v2714, %v2710
    %v2767 = vpack.c.b16 %v2715, %v2711
    %v2768 = vpack.c.b16 %v2716, %v2712
    %v2769 = vpack.c.b16 %v2721, %v2717
    %v2770 = vpack.c.b16 %v2722, %v2718
    %v2771 = vpack.c.b16 %v2723, %v2719
    %v2772 = vpack.c.b16 %v2724, %v2720
    %v2773 = vpack.c.b16 %v2729, %v2725
    %v2774 = vpack.c.b16 %v2730, %v2726
    %v2775 = vpack.c.b16 %v2731, %v2727
    %v2776 = vpack.c.b16 %v2732, %v2728
    %v2777 = vpack.c.b16 %v2737, %v2733
    %v2778 = vpack.c.b16 %v2738, %v2734
    %v2779 = vpack.c.b16 %v2739, %v2735
    %v2780 = vpack.c.b16 %v2740, %v2736
    %v2781 = vpack.c.b16 %v2745, %v2741
    %v2782 = vpack.c.b16 %v2746, %v2742
    %v2783 = vpack.c.b16 %v2747, %v2743
    %v2784 = vpack.c.b16 %v2748, %v2744
    %v2785 = vpack.c.b16 %v2753, %v2749
    %v2786 = vpack.c.b16 %v2754, %v2750
    %v2787 = vpack.c.b16 %v2755, %v2751
    %v2788 = vpack.c.b16 %v2756, %v2752
    %2821 = vmatprep.subr.bf16.mxu0 %v2786
    %2822 = vmatpush1.bf16.msra.mxu0 %v2785
    %2823 = vmatprep.subr.bf16.mxu0 %v2782
    %2824 = vmatpush1.bf16.msra.mxu0 %v2781
    %2825 = vmatprep.subr.bf16.mxu0 %v2778
    %2826 = vmatpush1.bf16.msra.mxu0 %v2777
    %2827 = vmatprep.subr.bf16.mxu0 %v2774
    %2828 = vmatpush1.bf16.msra.mxu0 %v2773
    %2829 = vmatprep.subr.bf16.mxu0 %v2770
    %2830 = vmatpush1.bf16.msra.mxu0 %v2769
    %2831 = vmatprep.subr.bf16.mxu0 %v2766
    %2832 = vmatpush1.bf16.msra.mxu0 %v2765
    %2833 = vmatprep.subr.bf16.mxu0 %v2762
    %2834 = vmatpush1.bf16.msra.mxu0 %v2761
    %2835 = vmatprep.subr.bf16.mxu0 %v2758
    %2836 = vmatpush1.bf16.msra.mxu0 %v2757
    %2837 = vmatprep.subr.bf16.mxu0 0
    %2838 = vmatpush2.bf16.msra.mxu0 0
    %2839 = vmatprep.subr.bf16.mxu0 0
    %2840 = vmatpush2.bf16.msra.mxu0 0
    %2841 = vmatprep.subr.bf16.mxu0 0
    %2842 = vmatpush2.bf16.msra.mxu0 0
    %2843 = vmatprep.subr.bf16.mxu0 0
    %2844 = vmatpush2.bf16.msra.mxu0 0
    %2845 = vmatprep.subr.bf16.mxu0 0
    %2846 = vmatpush2.bf16.msra.mxu0 0
    %2847 = vmatprep.subr.bf16.mxu0 0
    %2848 = vmatpush2.bf16.msra.mxu0 0
    %2849 = vmatprep.subr.bf16.mxu0 0
    %2850 = vmatpush2.bf16.msra.mxu0 0
    %2851 = vmatprep.subr.bf16.mxu0 0
    %2852 = vmatpush2.bf16.msra.mxu0 0
    %2853 = vmatprep.mubr.bf16.mxu0 0
    %2854 = vmatmul.mubr.bf16.gmra.mxu0 %v2628
    %v2855 = vpop.f32.mrf.mxu0
    %v2856 = vadd.f32 0.0, %v2855
    %v2857 = vpop.f32.mrf.mxu0
    %v2858 = vadd.f32 0.0, %v2857
    %v2859 = vpop.f32.mrf.mxu0
    %v2860 = vpop.f32.mrf.mxu0
    %2861 = vdwg.mxu0
    %2862 = vmatprep.subr.bf16.mxu0 %v2788
    %2863 = vmatpush1.bf16.msra.mxu0 %v2787
    %2864 = vmatprep.subr.bf16.mxu0 %v2784
    %2865 = vmatpush1.bf16.msra.mxu0 %v2783
    %2866 = vmatprep.subr.bf16.mxu0 %v2780
    %2867 = vmatpush1.bf16.msra.mxu0 %v2779
    %2868 = vmatprep.subr.bf16.mxu0 %v2776
    %2869 = vmatpush1.bf16.msra.mxu0 %v2775
    %2870 = vmatprep.subr.bf16.mxu0 %v2772
    %2871 = vmatpush1.bf16.msra.mxu0 %v2771
    %2872 = vmatprep.subr.bf16.mxu0 %v2768
    %2873 = vmatpush1.bf16.msra.mxu0 %v2767
    %2874 = vmatprep.subr.bf16.mxu0 %v2764
    %2875 = vmatpush1.bf16.msra.mxu0 %v2763
    %2876 = vmatprep.subr.bf16.mxu0 %v2760
    %2877 = vmatpush1.bf16.msra.mxu0 %v2759
    %2878 = vmatprep.subr.bf16.mxu0 0
    %2879 = vmatpush2.bf16.msra.mxu0 0
    %2880 = vmatprep.subr.bf16.mxu0 0
    %2881 = vmatpush2.bf16.msra.mxu0 0
    %2882 = vmatprep.subr.bf16.mxu0 0
    %2883 = vmatpush2.bf16.msra.mxu0 0
    %2884 = vmatprep.subr.bf16.mxu0 0
    %2885 = vmatpush2.bf16.msra.mxu0 0
    %2886 = vmatprep.subr.bf16.mxu0 0
    %2887 = vmatpush2.bf16.msra.mxu0 0
    %2888 = vmatprep.subr.bf16.mxu0 0
    %2889 = vmatpush2.bf16.msra.mxu0 0
    %2890 = vmatprep.subr.bf16.mxu0 0
    %2891 = vmatpush2.bf16.msra.mxu0 0
    %2892 = vmatprep.subr.bf16.mxu0 0
    %2893 = vmatpush2.bf16.msra.mxu0 0
    %2894 = vmatprep.mubr.bf16.mxu0 0
    %2895 = vmatmul.mubr.bf16.gmra.mxu0 %v2628
    %v2896 = vpop.f32.mrf.mxu0
    %v2897 = vadd.f32 0.0, %v2896
    %v2898 = vpop.f32.mrf.mxu0
    %v2899 = vadd.f32 0.0, %v2898
    %v2900 = vpop.f32.mrf.mxu0
    %v2901 = vpop.f32.mrf.mxu0
    %2902 = vdwg.mxu0
    %v2935 = vunpack.c.l.b16 %v2596
    %v2936 = vunpack.c.h.b16 %v2596
    %v2937 = vunpack.c.l.b16 %v2597
    %v2938 = vunpack.c.h.b16 %v2597
    %v2939 = vunpack.c.l.b16 %v2598
    %v2940 = vunpack.c.h.b16 %v2598
    %v2941 = vunpack.c.l.b16 %v2599
    %v2942 = vunpack.c.h.b16 %v2599
    %v2943 = vunpack.c.l.b16 %v2600
    %v2944 = vunpack.c.h.b16 %v2600
    %v2945 = vunpack.c.l.b16 %v2601
    %v2946 = vunpack.c.h.b16 %v2601
    %v2947 = vunpack.c.l.b16 %v2602
    %v2948 = vunpack.c.h.b16 %v2602
    %v2949 = vunpack.c.l.b16 %v2603
    %v2950 = vunpack.c.h.b16 %v2603
    %v2951 = vunpack.c.l.b16 %v2604
    %v2952 = vunpack.c.h.b16 %v2604
    %v2953 = vunpack.c.l.b16 %v2605
    %v2954 = vunpack.c.h.b16 %v2605
    %v2955 = vunpack.c.l.b16 %v2606
    %v2956 = vunpack.c.h.b16 %v2606
    %v2957 = vunpack.c.l.b16 %v2607
    %v2958 = vunpack.c.h.b16 %v2607
    %v2959 = vunpack.c.l.b16 %v2608
    %v2960 = vunpack.c.h.b16 %v2608
    %v2961 = vunpack.c.l.b16 %v2609
    %v2962 = vunpack.c.h.b16 %v2609
    %v2963 = vunpack.c.l.b16 %v2610
    %v2964 = vunpack.c.h.b16 %v2610
    %v2965 = vunpack.c.l.b16 %v2611
    %v2966 = vunpack.c.h.b16 %v2611
    %v2967 = vunpack.c.l.b16 %v2612
    %v2968 = vunpack.c.h.b16 %v2612
    %v2969 = vunpack.c.l.b16 %v2613
    %v2970 = vunpack.c.h.b16 %v2613
    %v2971 = vunpack.c.l.b16 %v2614
    %v2972 = vunpack.c.h.b16 %v2614
    %v2973 = vunpack.c.l.b16 %v2615
    %v2974 = vunpack.c.h.b16 %v2615
    %v2975 = vunpack.c.l.b16 %v2616
    %v2976 = vunpack.c.h.b16 %v2616
    %v2977 = vunpack.c.l.b16 %v2617
    %v2978 = vunpack.c.h.b16 %v2617
    %v2979 = vunpack.c.l.b16 %v2618
    %v2980 = vunpack.c.h.b16 %v2618
    %v2981 = vunpack.c.l.b16 %v2619
    %v2982 = vunpack.c.h.b16 %v2619
    %v2983 = vunpack.c.l.b16 %v2620
    %v2984 = vunpack.c.h.b16 %v2620
    %v2985 = vunpack.c.l.b16 %v2621
    %v2986 = vunpack.c.h.b16 %v2621
    %v2987 = vunpack.c.l.b16 %v2622
    %v2988 = vunpack.c.h.b16 %v2622
    %v2989 = vunpack.c.l.b16 %v2623
    %v2990 = vunpack.c.h.b16 %v2623
    %v2991 = vunpack.c.l.b16 %v2624
    %v2992 = vunpack.c.h.b16 %v2624
    %v2993 = vunpack.c.l.b16 %v2625
    %v2994 = vunpack.c.h.b16 %v2625
    %v2995 = vunpack.c.l.b16 %v2626
    %v2996 = vunpack.c.h.b16 %v2626
    %v2997 = vunpack.c.l.b16 %v2627
    %v2998 = vunpack.c.h.b16 %v2627
    %v2999 = vpack.c.b16 %v2939, %v2935
    %v3000 = vpack.c.b16 %v2940, %v2936
    %v3001 = vpack.c.b16 %v2941, %v2937
    %v3002 = vpack.c.b16 %v2942, %v2938
    %v3003 = vpack.c.b16 %v2947, %v2943
    %v3004 = vpack.c.b16 %v2948, %v2944
    %v3005 = vpack.c.b16 %v2949, %v2945
    %v3006 = vpack.c.b16 %v2950, %v2946
    %v3007 = vpack.c.b16 %v2955, %v2951
    %v3008 = vpack.c.b16 %v2956, %v2952
    %v3009 = vpack.c.b16 %v2957, %v2953
    %v3010 = vpack.c.b16 %v2958, %v2954
    %v3011 = vpack.c.b16 %v2963, %v2959
    %v3012 = vpack.c.b16 %v2964, %v2960
    %v3013 = vpack.c.b16 %v2965, %v2961
    %v3014 = vpack.c.b16 %v2966, %v2962
    %v3015 = vpack.c.b16 %v2971, %v2967
    %v3016 = vpack.c.b16 %v2972, %v2968
    %v3017 = vpack.c.b16 %v2973, %v2969
    %v3018 = vpack.c.b16 %v2974, %v2970
    %v3019 = vpack.c.b16 %v2979, %v2975
    %v3020 = vpack.c.b16 %v2980, %v2976
    %v3021 = vpack.c.b16 %v2981, %v2977
    %v3022 = vpack.c.b16 %v2982, %v2978
    %v3023 = vpack.c.b16 %v2987, %v2983
    %v3024 = vpack.c.b16 %v2988, %v2984
    %v3025 = vpack.c.b16 %v2989, %v2985
    %v3026 = vpack.c.b16 %v2990, %v2986
    %v3027 = vpack.c.b16 %v2995, %v2991
    %v3028 = vpack.c.b16 %v2996, %v2992
    %v3029 = vpack.c.b16 %v2997, %v2993
    %v3030 = vpack.c.b16 %v2998, %v2994
    %3063 = vmatprep.subr.bf16.mxu0 %v3028
    %3064 = vmatpush1.bf16.msra.mxu0 %v3027
    %3065 = vmatprep.subr.bf16.mxu0 %v3024
    %3066 = vmatpush1.bf16.msra.mxu0 %v3023
    %3067 = vmatprep.subr.bf16.mxu0 %v3020
    %3068 = vmatpush1.bf16.msra.mxu0 %v3019
    %3069 = vmatprep.subr.bf16.mxu0 %v3016
    %3070 = vmatpush1.bf16.msra.mxu0 %v3015
    %3071 = vmatprep.subr.bf16.mxu0 %v3012
    %3072 = vmatpush1.bf16.msra.mxu0 %v3011
    %3073 = vmatprep.subr.bf16.mxu0 %v3008
    %3074 = vmatpush1.bf16.msra.mxu0 %v3007
    %3075 = vmatprep.subr.bf16.mxu0 %v3004
    %3076 = vmatpush1.bf16.msra.mxu0 %v3003
    %3077 = vmatprep.subr.bf16.mxu0 %v3000
    %3078 = vmatpush1.bf16.msra.mxu0 %v2999
    %3079 = vmatprep.subr.bf16.mxu0 0
    %3080 = vmatpush2.bf16.msra.mxu0 0
    %3081 = vmatprep.subr.bf16.mxu0 0
    %3082 = vmatpush2.bf16.msra.mxu0 0
    %3083 = vmatprep.subr.bf16.mxu0 0
    %3084 = vmatpush2.bf16.msra.mxu0 0
    %3085 = vmatprep.subr.bf16.mxu0 0
    %3086 = vmatpush2.bf16.msra.mxu0 0
    %3087 = vmatprep.subr.bf16.mxu0 0
    %3088 = vmatpush2.bf16.msra.mxu0 0
    %3089 = vmatprep.subr.bf16.mxu0 0
    %3090 = vmatpush2.bf16.msra.mxu0 0
    %3091 = vmatprep.subr.bf16.mxu0 0
    %3092 = vmatpush2.bf16.msra.mxu0 0
    %3093 = vmatprep.subr.bf16.mxu0 0
    %3094 = vmatpush2.bf16.msra.mxu0 0
    %3095 = vmatprep.mubr.bf16.mxu0 0
    %3096 = vmatmul.mubr.bf16.gmra.mxu0 %v2595
    %v3097 = vpop.f32.mrf.mxu0
    %v3098 = vadd.f32 %v2856, %v3097
    %v3099 = vpop.f32.mrf.mxu0
    %v3100 = vadd.f32 %v2858, %v3099
    %v3101 = vpop.f32.mrf.mxu0
    %v3102 = vpop.f32.mrf.mxu0
    %3103 = vdwg.mxu0
    %3104 = vmatprep.subr.bf16.mxu0 %v3030
    %3105 = vmatpush1.bf16.msra.mxu0 %v3029
    %3106 = vmatprep.subr.bf16.mxu0 %v3026
    %3107 = vmatpush1.bf16.msra.mxu0 %v3025
    %3108 = vmatprep.subr.bf16.mxu0 %v3022
    %3109 = vmatpush1.bf16.msra.mxu0 %v3021
    %3110 = vmatprep.subr.bf16.mxu0 %v3018
    %3111 = vmatpush1.bf16.msra.mxu0 %v3017
    %3112 = vmatprep.subr.bf16.mxu0 %v3014
    %3113 = vmatpush1.bf16.msra.mxu0 %v3013
    %3114 = vmatprep.subr.bf16.mxu0 %v3010
    %3115 = vmatpush1.bf16.msra.mxu0 %v3009
    %3116 = vmatprep.subr.bf16.mxu0 %v3006
    %3117 = vmatpush1.bf16.msra.mxu0 %v3005
    %3118 = vmatprep.subr.bf16.mxu0 %v3002
    %3119 = vmatpush1.bf16.msra.mxu0 %v3001
    %3120 = vmatprep.subr.bf16.mxu0 0
    %3121 = vmatpush2.bf16.msra.mxu0 0
    %3122 = vmatprep.subr.bf16.mxu0 0
    %3123 = vmatpush2.bf16.msra.mxu0 0
    %3124 = vmatprep.subr.bf16.mxu0 0
    %3125 = vmatpush2.bf16.msra.mxu0 0
    %3126 = vmatprep.subr.bf16.mxu0 0
    %3127 = vmatpush2.bf16.msra.mxu0 0
    %3128 = vmatprep.subr.bf16.mxu0 0
    %3129 = vmatpush2.bf16.msra.mxu0 0
    %3130 = vmatprep.subr.bf16.mxu0 0
    %3131 = vmatpush2.bf16.msra.mxu0 0
    %3132 = vmatprep.subr.bf16.mxu0 0
    %3133 = vmatpush2.bf16.msra.mxu0 0
    %3134 = vmatprep.subr.bf16.mxu0 0
    %3135 = vmatpush2.bf16.msra.mxu0 0
    %3136 = vmatprep.mubr.bf16.mxu0 0
    %3137 = vmatmul.mubr.bf16.gmra.mxu0 %v2595
    %v3138 = vpop.f32.mrf.mxu0
    %v3139 = vadd.f32 %v2897, %v3138
    %v3140 = vpop.f32.mrf.mxu0
    %v3141 = vadd.f32 %v2899, %v3140
    %v3142 = vpop.f32.mrf.mxu0
    %v3143 = vpop.f32.mrf.mxu0
    %3144 = vdwg.mxu0
    %v3145 = vadd.f32 %v3098, %v142
    %v3146 = vadd.f32 %v3100, %v146
    %v3147 = vadd.f32 %v3139, %v150
    %v3148 = vadd.f32 %v3141, %v154
    %v3149 = vxor.u32 %v3145, 2147483648
    %v3150 = vxor.u32 %v3146, 2147483648
    %v3151 = vxor.u32 %v3147, 2147483648
    %v3152 = vmul.f32 %v3149, 1.442695
    %v3153 = vpow.pop %v3152
    %v3154 = vmul.f32 %v3150, 1.442695
    %v3155 = vpow.pop %v3154
    %v3156 = vmul.f32 %v3151, 1.442695
    %v3157 = vpow.pop %v3156
    %v3158 = vadd.f32 %v3153, 1.0
    %v3159 = vadd.f32 %v3155, 1.0
    %v3160 = vadd.f32 %v3157, 1.0
    %v3161 = vrcp.pop %v3158
    %v3162 = vmul.f32 1.0, %v3161
    %v3163 = vrcp.pop %v3159
    %v3164 = vmul.f32 1.0, %v3163
    %v3165 = vrcp.pop %v3160
    %v3166 = vmul.f32 1.0, %v3165
    %v3167 = vtanh.pop %v3148
    %v3168 = vmul.f32 %v3164, %v2167
    %v3169 = vmul.f32 %v3162, %v3167
    %v3170 = vadd.f32 %v3168, %v3169
    %v3171 = vtanh.pop %v3170
    %v3172 = vmul.f32 %v3166, %v3171
    %v3173 = vsel %vm2592, %v3172, %v2166
    %v3174 = vsel %vm2592, %v3170, %v2167
    %v3175 = vsel %vm2592, %v3172, 0.0
    %v3176 = vpack.c.bf16 %v3175, %v3175
    %s3177 = scalar_lea.vmem [#allocation13], 8
    %3178 = vst [vmem:[%s3177] sm:$0xf] %v3176
    %s3179 = sadd.s32 %s107, 3
    %v3180 = vstv %s3179
    %vm3181 = vcmp.lt.s32.totalorder %v3180, %v108
    %s3182 = scalar_lea.vmem [#allocation4], 12
    %v3183 = vld [vmem:[%s3182] sm:$0xf]
    %v3184 = vld [vmem:[#allocation7] sm:$0xff]
    %v3185 = vld [vmem:[#allocation7 + $0x8] sm:$0xff]
    %v3186 = vld [vmem:[#allocation7 + $0x10] sm:$0xff]
    %v3187 = vld [vmem:[#allocation7 + $0x18] sm:$0xff]
    %v3188 = vld [vmem:[#allocation9] sm:$0xff]
    %v3189 = vld [vmem:[#allocation9 + $0x8] sm:$0xff]
    %v3190 = vld [vmem:[#allocation9 + $0x10] sm:$0xff]
    %v3191 = vld [vmem:[#allocation9 + $0x18] sm:$0xff]
    %v3192 = vld [vmem:[#allocation9 + $0x20] sm:$0xff]
    %v3193 = vld [vmem:[#allocation9 + $0x28] sm:$0xff]
    %v3194 = vld [vmem:[#allocation9 + $0x30] sm:$0xff]
    %v3195 = vld [vmem:[#allocation9 + $0x38] sm:$0xff]
    %v3196 = vld [vmem:[#allocation9 + $0x40] sm:$0xff]
    %v3197 = vld [vmem:[#allocation9 + $0x48] sm:$0xff]
    %v3198 = vld [vmem:[#allocation9 + $0x50] sm:$0xff]
    %v3199 = vld [vmem:[#allocation9 + $0x58] sm:$0xff]
    %v3200 = vld [vmem:[#allocation9 + $0x60] sm:$0xff]
    %v3201 = vld [vmem:[#allocation9 + $0x68] sm:$0xff]
    %v3202 = vld [vmem:[#allocation9 + $0x70] sm:$0xff]
    %v3203 = vld [vmem:[#allocation9 + $0x78] sm:$0xff]
    %v3204 = vld [vmem:[#allocation9 + $0x80] sm:$0xff]
    %v3205 = vld [vmem:[#allocation9 + $0x88] sm:$0xff]
    %v3206 = vld [vmem:[#allocation9 + $0x90] sm:$0xff]
    %v3207 = vld [vmem:[#allocation9 + $0x98] sm:$0xff]
    %v3208 = vld [vmem:[#allocation9 + $0xa0] sm:$0xff]
    %v3209 = vld [vmem:[#allocation9 + $0xa8] sm:$0xff]
    %v3210 = vld [vmem:[#allocation9 + $0xb0] sm:$0xff]
    %v3211 = vld [vmem:[#allocation9 + $0xb8] sm:$0xff]
    %v3212 = vld [vmem:[#allocation9 + $0xc0] sm:$0xff]
    %v3213 = vld [vmem:[#allocation9 + $0xc8] sm:$0xff]
    %v3214 = vld [vmem:[#allocation9 + $0xd0] sm:$0xff]
    %v3215 = vld [vmem:[#allocation9 + $0xd8] sm:$0xff]
    %v3216 = vld [vmem:[#allocation9 + $0xe0] sm:$0xff]
    %v3217 = vld [vmem:[#allocation9 + $0xe8] sm:$0xff]
    %v3218 = vld [vmem:[#allocation9 + $0xf0] sm:$0xff]
    %v3219 = vld [vmem:[#allocation9 + $0xf8] sm:$0xff]
    %v3252 = vunpack.c.l.b16 %v3188
    %v3253 = vunpack.c.h.b16 %v3188
    %v3254 = vunpack.c.l.b16 %v3189
    %v3255 = vunpack.c.h.b16 %v3189
    %v3256 = vunpack.c.l.b16 %v3190
    %v3257 = vunpack.c.h.b16 %v3190
    %v3258 = vunpack.c.l.b16 %v3191
    %v3259 = vunpack.c.h.b16 %v3191
    %v3260 = vunpack.c.l.b16 %v3192
    %v3261 = vunpack.c.h.b16 %v3192
    %v3262 = vunpack.c.l.b16 %v3193
    %v3263 = vunpack.c.h.b16 %v3193
    %v3264 = vunpack.c.l.b16 %v3194
    %v3265 = vunpack.c.h.b16 %v3194
    %v3266 = vunpack.c.l.b16 %v3195
    %v3267 = vunpack.c.h.b16 %v3195
    %v3268 = vunpack.c.l.b16 %v3196
    %v3269 = vunpack.c.h.b16 %v3196
    %v3270 = vunpack.c.l.b16 %v3197
    %v3271 = vunpack.c.h.b16 %v3197
    %v3272 = vunpack.c.l.b16 %v3198
    %v3273 = vunpack.c.h.b16 %v3198
    %v3274 = vunpack.c.l.b16 %v3199
    %v3275 = vunpack.c.h.b16 %v3199
    %v3276 = vunpack.c.l.b16 %v3200
    %v3277 = vunpack.c.h.b16 %v3200
    %v3278 = vunpack.c.l.b16 %v3201
    %v3279 = vunpack.c.h.b16 %v3201
    %v3280 = vunpack.c.l.b16 %v3202
    %v3281 = vunpack.c.h.b16 %v3202
    %v3282 = vunpack.c.l.b16 %v3203
    %v3283 = vunpack.c.h.b16 %v3203
    %v3284 = vunpack.c.l.b16 %v3204
    %v3285 = vunpack.c.h.b16 %v3204
    %v3286 = vunpack.c.l.b16 %v3205
    %v3287 = vunpack.c.h.b16 %v3205
    %v3288 = vunpack.c.l.b16 %v3206
    %v3289 = vunpack.c.h.b16 %v3206
    %v3290 = vunpack.c.l.b16 %v3207
    %v3291 = vunpack.c.h.b16 %v3207
    %v3292 = vunpack.c.l.b16 %v3208
    %v3293 = vunpack.c.h.b16 %v3208
    %v3294 = vunpack.c.l.b16 %v3209
    %v3295 = vunpack.c.h.b16 %v3209
    %v3296 = vunpack.c.l.b16 %v3210
    %v3297 = vunpack.c.h.b16 %v3210
    %v3298 = vunpack.c.l.b16 %v3211
    %v3299 = vunpack.c.h.b16 %v3211
    %v3300 = vunpack.c.l.b16 %v3212
    %v3301 = vunpack.c.h.b16 %v3212
    %v3302 = vunpack.c.l.b16 %v3213
    %v3303 = vunpack.c.h.b16 %v3213
    %v3304 = vunpack.c.l.b16 %v3214
    %v3305 = vunpack.c.h.b16 %v3214
    %v3306 = vunpack.c.l.b16 %v3215
    %v3307 = vunpack.c.h.b16 %v3215
    %v3308 = vunpack.c.l.b16 %v3216
    %v3309 = vunpack.c.h.b16 %v3216
    %v3310 = vunpack.c.l.b16 %v3217
    %v3311 = vunpack.c.h.b16 %v3217
    %v3312 = vunpack.c.l.b16 %v3218
    %v3313 = vunpack.c.h.b16 %v3218
    %v3314 = vunpack.c.l.b16 %v3219
    %v3315 = vunpack.c.h.b16 %v3219
    %v3316 = vpack.c.b16 %v3256, %v3252
    %v3317 = vpack.c.b16 %v3257, %v3253
    %v3318 = vpack.c.b16 %v3258, %v3254
    %v3319 = vpack.c.b16 %v3259, %v3255
    %v3320 = vpack.c.b16 %v3264, %v3260
    %v3321 = vpack.c.b16 %v3265, %v3261
    %v3322 = vpack.c.b16 %v3266, %v3262
    %v3323 = vpack.c.b16 %v3267, %v3263
    %v3324 = vpack.c.b16 %v3272, %v3268
    %v3325 = vpack.c.b16 %v3273, %v3269
    %v3326 = vpack.c.b16 %v3274, %v3270
    %v3327 = vpack.c.b16 %v3275, %v3271
    %v3328 = vpack.c.b16 %v3280, %v3276
    %v3329 = vpack.c.b16 %v3281, %v3277
    %v3330 = vpack.c.b16 %v3282, %v3278
    %v3331 = vpack.c.b16 %v3283, %v3279
    %v3332 = vpack.c.b16 %v3288, %v3284
    %v3333 = vpack.c.b16 %v3289, %v3285
    %v3334 = vpack.c.b16 %v3290, %v3286
    %v3335 = vpack.c.b16 %v3291, %v3287
    %v3336 = vpack.c.b16 %v3296, %v3292
    %v3337 = vpack.c.b16 %v3297, %v3293
    %v3338 = vpack.c.b16 %v3298, %v3294
    %v3339 = vpack.c.b16 %v3299, %v3295
    %v3340 = vpack.c.b16 %v3304, %v3300
    %v3341 = vpack.c.b16 %v3305, %v3301
    %v3342 = vpack.c.b16 %v3306, %v3302
    %v3343 = vpack.c.b16 %v3307, %v3303
    %v3344 = vpack.c.b16 %v3312, %v3308
    %v3345 = vpack.c.b16 %v3313, %v3309
    %v3346 = vpack.c.b16 %v3314, %v3310
    %v3347 = vpack.c.b16 %v3315, %v3311
    %3380 = vmatprep.subr.bf16.mxu0 %v3345
    %3381 = vmatpush1.bf16.msra.mxu0 %v3344
    %3382 = vmatprep.subr.bf16.mxu0 %v3341
    %3383 = vmatpush1.bf16.msra.mxu0 %v3340
    %3384 = vmatprep.subr.bf16.mxu0 %v3337
    %3385 = vmatpush1.bf16.msra.mxu0 %v3336
    %3386 = vmatprep.subr.bf16.mxu0 %v3333
    %3387 = vmatpush1.bf16.msra.mxu0 %v3332
    %3388 = vmatprep.subr.bf16.mxu0 %v3329
    %3389 = vmatpush1.bf16.msra.mxu0 %v3328
    %3390 = vmatprep.subr.bf16.mxu0 %v3325
    %3391 = vmatpush1.bf16.msra.mxu0 %v3324
    %3392 = vmatprep.subr.bf16.mxu0 %v3321
    %3393 = vmatpush1.bf16.msra.mxu0 %v3320
    %3394 = vmatprep.subr.bf16.mxu0 %v3317
    %3395 = vmatpush1.bf16.msra.mxu0 %v3316
    %3396 = vmatprep.subr.bf16.mxu0 0
    %3397 = vmatpush2.bf16.msra.mxu0 0
    %3398 = vmatprep.subr.bf16.mxu0 0
    %3399 = vmatpush2.bf16.msra.mxu0 0
    %3400 = vmatprep.subr.bf16.mxu0 0
    %3401 = vmatpush2.bf16.msra.mxu0 0
    %3402 = vmatprep.subr.bf16.mxu0 0
    %3403 = vmatpush2.bf16.msra.mxu0 0
    %3404 = vmatprep.subr.bf16.mxu0 0
    %3405 = vmatpush2.bf16.msra.mxu0 0
    %3406 = vmatprep.subr.bf16.mxu0 0
    %3407 = vmatpush2.bf16.msra.mxu0 0
    %3408 = vmatprep.subr.bf16.mxu0 0
    %3409 = vmatpush2.bf16.msra.mxu0 0
    %3410 = vmatprep.subr.bf16.mxu0 0
    %3411 = vmatpush2.bf16.msra.mxu0 0
    %3412 = vmatprep.mubr.bf16.mxu0 0
    %3413 = vmatmul.mubr.bf16.gmra.mxu0 %v2595
    %v3414 = vpop.f32.mrf.mxu0
    %v3415 = vadd.f32 0.0, %v3414
    %v3416 = vpop.f32.mrf.mxu0
    %v3417 = vadd.f32 0.0, %v3416
    %v3418 = vpop.f32.mrf.mxu0
    %v3419 = vpop.f32.mrf.mxu0
    %3420 = vdwg.mxu0
    %3421 = vmatprep.subr.bf16.mxu0 %v3347
    %3422 = vmatpush1.bf16.msra.mxu0 %v3346
    %3423 = vmatprep.subr.bf16.mxu0 %v3343
    %3424 = vmatpush1.bf16.msra.mxu0 %v3342
    %3425 = vmatprep.subr.bf16.mxu0 %v3339
    %3426 = vmatpush1.bf16.msra.mxu0 %v3338
    %3427 = vmatprep.subr.bf16.mxu0 %v3335
    %3428 = vmatpush1.bf16.msra.mxu0 %v3334
    %3429 = vmatprep.subr.bf16.mxu0 %v3331
    %3430 = vmatpush1.bf16.msra.mxu0 %v3330
    %3431 = vmatprep.subr.bf16.mxu0 %v3327
    %3432 = vmatpush1.bf16.msra.mxu0 %v3326
    %3433 = vmatprep.subr.bf16.mxu0 %v3323
    %3434 = vmatpush1.bf16.msra.mxu0 %v3322
    %3435 = vmatprep.subr.bf16.mxu0 %v3319
    %3436 = vmatpush1.bf16.msra.mxu0 %v3318
    %3437 = vmatprep.subr.bf16.mxu0 0
    %3438 = vmatpush2.bf16.msra.mxu0 0
    %3439 = vmatprep.subr.bf16.mxu0 0
    %3440 = vmatpush2.bf16.msra.mxu0 0
    %3441 = vmatprep.subr.bf16.mxu0 0
    %3442 = vmatpush2.bf16.msra.mxu0 0
    %3443 = vmatprep.subr.bf16.mxu0 0
    %3444 = vmatpush2.bf16.msra.mxu0 0
    %3445 = vmatprep.subr.bf16.mxu0 0
    %3446 = vmatpush2.bf16.msra.mxu0 0
    %3447 = vmatprep.subr.bf16.mxu0 0
    %3448 = vmatpush2.bf16.msra.mxu0 0
    %3449 = vmatprep.subr.bf16.mxu0 0
    %3450 = vmatpush2.bf16.msra.mxu0 0
    %3451 = vmatprep.subr.bf16.mxu0 0
    %3452 = vmatpush2.bf16.msra.mxu0 0
    %3453 = vmatprep.mubr.bf16.mxu0 0
    %3454 = vmatmul.mubr.bf16.gmra.mxu0 %v2595
    %v3455 = vpop.f32.mrf.mxu0
    %v3456 = vadd.f32 0.0, %v3455
    %v3457 = vpop.f32.mrf.mxu0
    %v3458 = vadd.f32 0.0, %v3457
    %v3459 = vpop.f32.mrf.mxu0
    %v3460 = vpop.f32.mrf.mxu0
    %3461 = vdwg.mxu0
    %v3466 = vunpack.c.l.b16 %v3184
    %v3467 = vunpack.c.h.b16 %v3184
    %v3468 = vunpack.c.l.b16 %v3185
    %v3469 = vunpack.c.h.b16 %v3185
    %v3470 = vunpack.c.l.b16 %v3186
    %v3471 = vunpack.c.h.b16 %v3186
    %v3472 = vunpack.c.l.b16 %v3187
    %v3473 = vunpack.c.h.b16 %v3187
    %v3474 = vpack.c.b16 %v3470, %v3466
    %v3475 = vpack.c.b16 %v3471, %v3467
    %v3476 = vpack.c.b16 %v3472, %v3468
    %v3477 = vpack.c.b16 %v3473, %v3469
    %v3483 = vsel %vm461, %v3183, 0
    %3485 = vmatprep.subr.bf16.mxu0 0
    %3486 = vmatpush1.bf16.msra.mxu0 0
    %3487 = vmatprep.subr.bf16.mxu0 0
    %3488 = vmatpush1.bf16.msra.mxu0 0
    %3489 = vmatprep.subr.bf16.mxu0 0
    %3490 = vmatpush1.bf16.msra.mxu0 0
    %3491 = vmatprep.subr.bf16.mxu0 0
    %3492 = vmatpush1.bf16.msra.mxu0 0
    %3493 = vmatprep.subr.bf16.mxu0 0
    %3494 = vmatpush1.bf16.msra.mxu0 0
    %3495 = vmatprep.subr.bf16.mxu0 0
    %3496 = vmatpush1.bf16.msra.mxu0 0
    %3497 = vmatprep.subr.bf16.mxu0 0
    %3498 = vmatpush1.bf16.msra.mxu0 0
    %3499 = vmatprep.subr.bf16.mxu0 %v3475
    %3500 = vmatpush1.bf16.msra.mxu0 %v3474
    %3501 = vmatprep.subr.bf16.mxu0 0
    %3502 = vmatpush2.bf16.msra.mxu0 0
    %3503 = vmatprep.subr.bf16.mxu0 0
    %3504 = vmatpush2.bf16.msra.mxu0 0
    %3505 = vmatprep.subr.bf16.mxu0 0
    %3506 = vmatpush2.bf16.msra.mxu0 0
    %3507 = vmatprep.subr.bf16.mxu0 0
    %3508 = vmatpush2.bf16.msra.mxu0 0
    %3509 = vmatprep.subr.bf16.mxu0 0
    %3510 = vmatpush2.bf16.msra.mxu0 0
    %3511 = vmatprep.subr.bf16.mxu0 0
    %3512 = vmatpush2.bf16.msra.mxu0 0
    %3513 = vmatprep.subr.bf16.mxu0 0
    %3514 = vmatpush2.bf16.msra.mxu0 0
    %3515 = vmatprep.subr.bf16.mxu0 0
    %3516 = vmatpush2.bf16.msra.mxu0 0
    %3517 = vmatprep.mubr.bf16.mxu0 0
    %3518 = vmatmul.mubr.bf16.gmra.mxu0 %v3483
    %v3519 = vpop.f32.mrf.mxu0
    %v3520 = vadd.f32 %v3415, %v3519
    %v3521 = vpop.f32.mrf.mxu0
    %v3522 = vadd.f32 %v3417, %v3521
    %v3523 = vpop.f32.mrf.mxu0
    %v3524 = vpop.f32.mrf.mxu0
    %3525 = vdwg.mxu0
    %3526 = vmatprep.subr.bf16.mxu0 0
    %3527 = vmatpush1.bf16.msra.mxu0 0
    %3528 = vmatprep.subr.bf16.mxu0 0
    %3529 = vmatpush1.bf16.msra.mxu0 0
    %3530 = vmatprep.subr.bf16.mxu0 0
    %3531 = vmatpush1.bf16.msra.mxu0 0
    %3532 = vmatprep.subr.bf16.mxu0 0
    %3533 = vmatpush1.bf16.msra.mxu0 0
    %3534 = vmatprep.subr.bf16.mxu0 0
    %3535 = vmatpush1.bf16.msra.mxu0 0
    %3536 = vmatprep.subr.bf16.mxu0 0
    %3537 = vmatpush1.bf16.msra.mxu0 0
    %3538 = vmatprep.subr.bf16.mxu0 0
    %3539 = vmatpush1.bf16.msra.mxu0 0
    %3540 = vmatprep.subr.bf16.mxu0 %v3477
    %3541 = vmatpush1.bf16.msra.mxu0 %v3476
    %3542 = vmatprep.subr.bf16.mxu0 0
    %3543 = vmatpush2.bf16.msra.mxu0 0
    %3544 = vmatprep.subr.bf16.mxu0 0
    %3545 = vmatpush2.bf16.msra.mxu0 0
    %3546 = vmatprep.subr.bf16.mxu0 0
    %3547 = vmatpush2.bf16.msra.mxu0 0
    %3548 = vmatprep.subr.bf16.mxu0 0
    %3549 = vmatpush2.bf16.msra.mxu0 0
    %3550 = vmatprep.subr.bf16.mxu0 0
    %3551 = vmatpush2.bf16.msra.mxu0 0
    %3552 = vmatprep.subr.bf16.mxu0 0
    %3553 = vmatpush2.bf16.msra.mxu0 0
    %3554 = vmatprep.subr.bf16.mxu0 0
    %3555 = vmatpush2.bf16.msra.mxu0 0
    %3556 = vmatprep.subr.bf16.mxu0 0
    %3557 = vmatpush2.bf16.msra.mxu0 0
    %3558 = vmatprep.mubr.bf16.mxu0 0
    %3559 = vmatmul.mubr.bf16.gmra.mxu0 %v3483
    %v3560 = vpop.f32.mrf.mxu0
    %v3561 = vadd.f32 %v3456, %v3560
    %v3562 = vpop.f32.mrf.mxu0
    %v3563 = vadd.f32 %v3458, %v3562
    %v3564 = vpop.f32.mrf.mxu0
    %v3565 = vpop.f32.mrf.mxu0
    %3566 = vdwg.mxu0
    %v3567 = vadd.f32 %v3520, %v120
    %v3568 = vadd.f32 %v3522, %v124
    %v3569 = vadd.f32 %v3561, %v128
    %v3570 = vadd.f32 %v3563, %v132
    %v3571 = vxor.u32 %v3567, 2147483648
    %v3572 = vxor.u32 %v3568, 2147483648
    %v3573 = vxor.u32 %v3569, 2147483648
    %v3574 = vmul.f32 %v3571, 1.442695
    %v3575 = vpow.pop %v3574
    %v3576 = vmul.f32 %v3572, 1.442695
    %v3577 = vpow.pop %v3576
    %v3578 = vmul.f32 %v3573, 1.442695
    %v3579 = vpow.pop %v3578
    %v3580 = vadd.f32 %v3575, 1.0
    %v3581 = vadd.f32 %v3577, 1.0
    %v3582 = vadd.f32 %v3579, 1.0
    %v3583 = vrcp.pop %v3580
    %v3584 = vmul.f32 1.0, %v3583
    %v3585 = vrcp.pop %v3581
    %v3586 = vmul.f32 1.0, %v3585
    %v3587 = vrcp.pop %v3582
    %v3588 = vmul.f32 1.0, %v3587
    %v3589 = vtanh.pop %v3570
    %v3590 = vmul.f32 %v3586, %v2594
    %v3591 = vmul.f32 %v3584, %v3589
    %v3592 = vadd.f32 %v3590, %v3591
    %v3593 = vtanh.pop %v3592
    %v3594 = vmul.f32 %v3588, %v3593
    %v3595 = vsel %vm3181, 1, 0
    %3596 = vset.pattern.permute.xlu0 0
    %3597 = vperm.xlu0 %3596, %v3595
    %v3598 = vpop.permute.xlu0 %3597
    %vm3599 = vcmp.eq.s32.totalorder %v3598, 1
    %v3600 = vsel %vm3599, %v3594, %v2593
    %v3601 = vsel %vm3599, %v3592, %v2594
    %v3602 = vpack.c.bf16 %v3600, %v3600
    %v3603 = vld [vmem:[#allocation10] sm:$0xff]
    %v3604 = vld [vmem:[#allocation10 + $0x8] sm:$0xff]
    %v3605 = vld [vmem:[#allocation10 + $0x10] sm:$0xff]
    %v3606 = vld [vmem:[#allocation10 + $0x18] sm:$0xff]
    %v3607 = vld [vmem:[#allocation10 + $0x20] sm:$0xff]
    %v3608 = vld [vmem:[#allocation10 + $0x28] sm:$0xff]
    %v3609 = vld [vmem:[#allocation10 + $0x30] sm:$0xff]
    %v3610 = vld [vmem:[#allocation10 + $0x38] sm:$0xff]
    %v3611 = vld [vmem:[#allocation10 + $0x40] sm:$0xff]
    %v3612 = vld [vmem:[#allocation10 + $0x48] sm:$0xff]
    %v3613 = vld [vmem:[#allocation10 + $0x50] sm:$0xff]
    %v3614 = vld [vmem:[#allocation10 + $0x58] sm:$0xff]
    %v3615 = vld [vmem:[#allocation10 + $0x60] sm:$0xff]
    %v3616 = vld [vmem:[#allocation10 + $0x68] sm:$0xff]
    %v3617 = vld [vmem:[#allocation10 + $0x70] sm:$0xff]
    %v3618 = vld [vmem:[#allocation10 + $0x78] sm:$0xff]
    %v3619 = vld [vmem:[#allocation10 + $0x80] sm:$0xff]
    %v3620 = vld [vmem:[#allocation10 + $0x88] sm:$0xff]
    %v3621 = vld [vmem:[#allocation10 + $0x90] sm:$0xff]
    %v3622 = vld [vmem:[#allocation10 + $0x98] sm:$0xff]
    %v3623 = vld [vmem:[#allocation10 + $0xa0] sm:$0xff]
    %v3624 = vld [vmem:[#allocation10 + $0xa8] sm:$0xff]
    %v3625 = vld [vmem:[#allocation10 + $0xb0] sm:$0xff]
    %v3626 = vld [vmem:[#allocation10 + $0xb8] sm:$0xff]
    %v3627 = vld [vmem:[#allocation10 + $0xc0] sm:$0xff]
    %v3628 = vld [vmem:[#allocation10 + $0xc8] sm:$0xff]
    %v3629 = vld [vmem:[#allocation10 + $0xd0] sm:$0xff]
    %v3630 = vld [vmem:[#allocation10 + $0xd8] sm:$0xff]
    %v3631 = vld [vmem:[#allocation10 + $0xe0] sm:$0xff]
    %v3632 = vld [vmem:[#allocation10 + $0xe8] sm:$0xff]
    %v3633 = vld [vmem:[#allocation10 + $0xf0] sm:$0xff]
    %v3634 = vld [vmem:[#allocation10 + $0xf8] sm:$0xff]
    %v3635 = vpack.c.bf16 %v3173, %v3173
    %v3636 = vld [vmem:[#allocation12] sm:$0xff]
    %v3637 = vld [vmem:[#allocation12 + $0x8] sm:$0xff]
    %v3638 = vld [vmem:[#allocation12 + $0x10] sm:$0xff]
    %v3639 = vld [vmem:[#allocation12 + $0x18] sm:$0xff]
    %v3640 = vld [vmem:[#allocation12 + $0x20] sm:$0xff]
    %v3641 = vld [vmem:[#allocation12 + $0x28] sm:$0xff]
    %v3642 = vld [vmem:[#allocation12 + $0x30] sm:$0xff]
    %v3643 = vld [vmem:[#allocation12 + $0x38] sm:$0xff]
    %v3644 = vld [vmem:[#allocation12 + $0x40] sm:$0xff]
    %v3645 = vld [vmem:[#allocation12 + $0x48] sm:$0xff]
    %v3646 = vld [vmem:[#allocation12 + $0x50] sm:$0xff]
    %v3647 = vld [vmem:[#allocation12 + $0x58] sm:$0xff]
    %v3648 = vld [vmem:[#allocation12 + $0x60] sm:$0xff]
    %v3649 = vld [vmem:[#allocation12 + $0x68] sm:$0xff]
    %v3650 = vld [vmem:[#allocation12 + $0x70] sm:$0xff]
    %v3651 = vld [vmem:[#allocation12 + $0x78] sm:$0xff]
    %v3652 = vld [vmem:[#allocation12 + $0x80] sm:$0xff]
    %v3653 = vld [vmem:[#allocation12 + $0x88] sm:$0xff]
    %v3654 = vld [vmem:[#allocation12 + $0x90] sm:$0xff]
    %v3655 = vld [vmem:[#allocation12 + $0x98] sm:$0xff]
    %v3656 = vld [vmem:[#allocation12 + $0xa0] sm:$0xff]
    %v3657 = vld [vmem:[#allocation12 + $0xa8] sm:$0xff]
    %v3658 = vld [vmem:[#allocation12 + $0xb0] sm:$0xff]
    %v3659 = vld [vmem:[#allocation12 + $0xb8] sm:$0xff]
    %v3660 = vld [vmem:[#allocation12 + $0xc0] sm:$0xff]
    %v3661 = vld [vmem:[#allocation12 + $0xc8] sm:$0xff]
    %v3662 = vld [vmem:[#allocation12 + $0xd0] sm:$0xff]
    %v3663 = vld [vmem:[#allocation12 + $0xd8] sm:$0xff]
    %v3664 = vld [vmem:[#allocation12 + $0xe0] sm:$0xff]
    %v3665 = vld [vmem:[#allocation12 + $0xe8] sm:$0xff]
    %v3666 = vld [vmem:[#allocation12 + $0xf0] sm:$0xff]
    %v3667 = vld [vmem:[#allocation12 + $0xf8] sm:$0xff]
    %v3700 = vunpack.c.l.b16 %v3636
    %v3701 = vunpack.c.h.b16 %v3636
    %v3702 = vunpack.c.l.b16 %v3637
    %v3703 = vunpack.c.h.b16 %v3637
    %v3704 = vunpack.c.l.b16 %v3638
    %v3705 = vunpack.c.h.b16 %v3638
    %v3706 = vunpack.c.l.b16 %v3639
    %v3707 = vunpack.c.h.b16 %v3639
    %v3708 = vunpack.c.l.b16 %v3640
    %v3709 = vunpack.c.h.b16 %v3640
    %v3710 = vunpack.c.l.b16 %v3641
    %v3711 = vunpack.c.h.b16 %v3641
    %v3712 = vunpack.c.l.b16 %v3642
    %v3713 = vunpack.c.h.b16 %v3642
    %v3714 = vunpack.c.l.b16 %v3643
    %v3715 = vunpack.c.h.b16 %v3643
    %v3716 = vunpack.c.l.b16 %v3644
    %v3717 = vunpack.c.h.b16 %v3644
    %v3718 = vunpack.c.l.b16 %v3645
    %v3719 = vunpack.c.h.b16 %v3645
    %v3720 = vunpack.c.l.b16 %v3646
    %v3721 = vunpack.c.h.b16 %v3646
    %v3722 = vunpack.c.l.b16 %v3647
    %v3723 = vunpack.c.h.b16 %v3647
    %v3724 = vunpack.c.l.b16 %v3648
    %v3725 = vunpack.c.h.b16 %v3648
    %v3726 = vunpack.c.l.b16 %v3649
    %v3727 = vunpack.c.h.b16 %v3649
    %v3728 = vunpack.c.l.b16 %v3650
    %v3729 = vunpack.c.h.b16 %v3650
    %v3730 = vunpack.c.l.b16 %v3651
    %v3731 = vunpack.c.h.b16 %v3651
    %v3732 = vunpack.c.l.b16 %v3652
    %v3733 = vunpack.c.h.b16 %v3652
    %v3734 = vunpack.c.l.b16 %v3653
    %v3735 = vunpack.c.h.b16 %v3653
    %v3736 = vunpack.c.l.b16 %v3654
    %v3737 = vunpack.c.h.b16 %v3654
    %v3738 = vunpack.c.l.b16 %v3655
    %v3739 = vunpack.c.h.b16 %v3655
    %v3740 = vunpack.c.l.b16 %v3656
    %v3741 = vunpack.c.h.b16 %v3656
    %v3742 = vunpack.c.l.b16 %v3657
    %v3743 = vunpack.c.h.b16 %v3657
    %v3744 = vunpack.c.l.b16 %v3658
    %v3745 = vunpack.c.h.b16 %v3658
    %v3746 = vunpack.c.l.b16 %v3659
    %v3747 = vunpack.c.h.b16 %v3659
    %v3748 = vunpack.c.l.b16 %v3660
    %v3749 = vunpack.c.h.b16 %v3660
    %v3750 = vunpack.c.l.b16 %v3661
    %v3751 = vunpack.c.h.b16 %v3661
    %v3752 = vunpack.c.l.b16 %v3662
    %v3753 = vunpack.c.h.b16 %v3662
    %v3754 = vunpack.c.l.b16 %v3663
    %v3755 = vunpack.c.h.b16 %v3663
    %v3756 = vunpack.c.l.b16 %v3664
    %v3757 = vunpack.c.h.b16 %v3664
    %v3758 = vunpack.c.l.b16 %v3665
    %v3759 = vunpack.c.h.b16 %v3665
    %v3760 = vunpack.c.l.b16 %v3666
    %v3761 = vunpack.c.h.b16 %v3666
    %v3762 = vunpack.c.l.b16 %v3667
    %v3763 = vunpack.c.h.b16 %v3667
    %v3764 = vpack.c.b16 %v3704, %v3700
    %v3765 = vpack.c.b16 %v3705, %v3701
    %v3766 = vpack.c.b16 %v3706, %v3702
    %v3767 = vpack.c.b16 %v3707, %v3703
    %v3768 = vpack.c.b16 %v3712, %v3708
    %v3769 = vpack.c.b16 %v3713, %v3709
    %v3770 = vpack.c.b16 %v3714, %v3710
    %v3771 = vpack.c.b16 %v3715, %v3711
    %v3772 = vpack.c.b16 %v3720, %v3716
    %v3773 = vpack.c.b16 %v3721, %v3717
    %v3774 = vpack.c.b16 %v3722, %v3718
    %v3775 = vpack.c.b16 %v3723, %v3719
    %v3776 = vpack.c.b16 %v3728, %v3724
    %v3777 = vpack.c.b16 %v3729, %v3725
    %v3778 = vpack.c.b16 %v3730, %v3726
    %v3779 = vpack.c.b16 %v3731, %v3727
    %v3780 = vpack.c.b16 %v3736, %v3732
    %v3781 = vpack.c.b16 %v3737, %v3733
    %v3782 = vpack.c.b16 %v3738, %v3734
    %v3783 = vpack.c.b16 %v3739, %v3735
    %v3784 = vpack.c.b16 %v3744, %v3740
    %v3785 = vpack.c.b16 %v3745, %v3741
    %v3786 = vpack.c.b16 %v3746, %v3742
    %v3787 = vpack.c.b16 %v3747, %v3743
    %v3788 = vpack.c.b16 %v3752, %v3748
    %v3789 = vpack.c.b16 %v3753, %v3749
    %v3790 = vpack.c.b16 %v3754, %v3750
    %v3791 = vpack.c.b16 %v3755, %v3751
    %v3792 = vpack.c.b16 %v3760, %v3756
    %v3793 = vpack.c.b16 %v3761, %v3757
    %v3794 = vpack.c.b16 %v3762, %v3758
    %v3795 = vpack.c.b16 %v3763, %v3759
    %3828 = vmatprep.subr.bf16.mxu0 %v3793
    %3829 = vmatpush1.bf16.msra.mxu0 %v3792
    %3830 = vmatprep.subr.bf16.mxu0 %v3789
    %3831 = vmatpush1.bf16.msra.mxu0 %v3788
    %3832 = vmatprep.subr.bf16.mxu0 %v3785
    %3833 = vmatpush1.bf16.msra.mxu0 %v3784
    %3834 = vmatprep.subr.bf16.mxu0 %v3781
    %3835 = vmatpush1.bf16.msra.mxu0 %v3780
    %3836 = vmatprep.subr.bf16.mxu0 %v3777
    %3837 = vmatpush1.bf16.msra.mxu0 %v3776
    %3838 = vmatprep.subr.bf16.mxu0 %v3773
    %3839 = vmatpush1.bf16.msra.mxu0 %v3772
    %3840 = vmatprep.subr.bf16.mxu0 %v3769
    %3841 = vmatpush1.bf16.msra.mxu0 %v3768
    %3842 = vmatprep.subr.bf16.mxu0 %v3765
    %3843 = vmatpush1.bf16.msra.mxu0 %v3764
    %3844 = vmatprep.subr.bf16.mxu0 0
    %3845 = vmatpush2.bf16.msra.mxu0 0
    %3846 = vmatprep.subr.bf16.mxu0 0
    %3847 = vmatpush2.bf16.msra.mxu0 0
    %3848 = vmatprep.subr.bf16.mxu0 0
    %3849 = vmatpush2.bf16.msra.mxu0 0
    %3850 = vmatprep.subr.bf16.mxu0 0
    %3851 = vmatpush2.bf16.msra.mxu0 0
    %3852 = vmatprep.subr.bf16.mxu0 0
    %3853 = vmatpush2.bf16.msra.mxu0 0
    %3854 = vmatprep.subr.bf16.mxu0 0
    %3855 = vmatpush2.bf16.msra.mxu0 0
    %3856 = vmatprep.subr.bf16.mxu0 0
    %3857 = vmatpush2.bf16.msra.mxu0 0
    %3858 = vmatprep.subr.bf16.mxu0 0
    %3859 = vmatpush2.bf16.msra.mxu0 0
    %3860 = vmatprep.mubr.bf16.mxu0 0
    %3861 = vmatmul.mubr.bf16.gmra.mxu0 %v3635
    %v3862 = vpop.f32.mrf.mxu0
    %v3863 = vadd.f32 0.0, %v3862
    %v3864 = vpop.f32.mrf.mxu0
    %v3865 = vadd.f32 0.0, %v3864
    %v3866 = vpop.f32.mrf.mxu0
    %v3867 = vpop.f32.mrf.mxu0
    %3868 = vdwg.mxu0
    %3869 = vmatprep.subr.bf16.mxu0 %v3795
    %3870 = vmatpush1.bf16.msra.mxu0 %v3794
    %3871 = vmatprep.subr.bf16.mxu0 %v3791
    %3872 = vmatpush1.bf16.msra.mxu0 %v3790
    %3873 = vmatprep.subr.bf16.mxu0 %v3787
    %3874 = vmatpush1.bf16.msra.mxu0 %v3786
    %3875 = vmatprep.subr.bf16.mxu0 %v3783
    %3876 = vmatpush1.bf16.msra.mxu0 %v3782
    %3877 = vmatprep.subr.bf16.mxu0 %v3779
    %3878 = vmatpush1.bf16.msra.mxu0 %v3778
    %3879 = vmatprep.subr.bf16.mxu0 %v3775
    %3880 = vmatpush1.bf16.msra.mxu0 %v3774
    %3881 = vmatprep.subr.bf16.mxu0 %v3771
    %3882 = vmatpush1.bf16.msra.mxu0 %v3770
    %3883 = vmatprep.subr.bf16.mxu0 %v3767
    %3884 = vmatpush1.bf16.msra.mxu0 %v3766
    %3885 = vmatprep.subr.bf16.mxu0 0
    %3886 = vmatpush2.bf16.msra.mxu0 0
    %3887 = vmatprep.subr.bf16.mxu0 0
    %3888 = vmatpush2.bf16.msra.mxu0 0
    %3889 = vmatprep.subr.bf16.mxu0 0
    %3890 = vmatpush2.bf16.msra.mxu0 0
    %3891 = vmatprep.subr.bf16.mxu0 0
    %3892 = vmatpush2.bf16.msra.mxu0 0
    %3893 = vmatprep.subr.bf16.mxu0 0
    %3894 = vmatpush2.bf16.msra.mxu0 0
    %3895 = vmatprep.subr.bf16.mxu0 0
    %3896 = vmatpush2.bf16.msra.mxu0 0
    %3897 = vmatprep.subr.bf16.mxu0 0
    %3898 = vmatpush2.bf16.msra.mxu0 0
    %3899 = vmatprep.subr.bf16.mxu0 0
    %3900 = vmatpush2.bf16.msra.mxu0 0
    %3901 = vmatprep.mubr.bf16.mxu0 0
    %3902 = vmatmul.mubr.bf16.gmra.mxu0 %v3635
    %v3903 = vpop.f32.mrf.mxu0
    %v3904 = vadd.f32 0.0, %v3903
    %v3905 = vpop.f32.mrf.mxu0
    %v3906 = vadd.f32 0.0, %v3905
    %v3907 = vpop.f32.mrf.mxu0
    %v3908 = vpop.f32.mrf.mxu0
    %3909 = vdwg.mxu0
    %v3942 = vunpack.c.l.b16 %v3603
    %v3943 = vunpack.c.h.b16 %v3603
    %v3944 = vunpack.c.l.b16 %v3604
    %v3945 = vunpack.c.h.b16 %v3604
    %v3946 = vunpack.c.l.b16 %v3605
    %v3947 = vunpack.c.h.b16 %v3605
    %v3948 = vunpack.c.l.b16 %v3606
    %v3949 = vunpack.c.h.b16 %v3606
    %v3950 = vunpack.c.l.b16 %v3607
    %v3951 = vunpack.c.h.b16 %v3607
    %v3952 = vunpack.c.l.b16 %v3608
    %v3953 = vunpack.c.h.b16 %v3608
    %v3954 = vunpack.c.l.b16 %v3609
    %v3955 = vunpack.c.h.b16 %v3609
    %v3956 = vunpack.c.l.b16 %v3610
    %v3957 = vunpack.c.h.b16 %v3610
    %v3958 = vunpack.c.l.b16 %v3611
    %v3959 = vunpack.c.h.b16 %v3611
    %v3960 = vunpack.c.l.b16 %v3612
    %v3961 = vunpack.c.h.b16 %v3612
    %v3962 = vunpack.c.l.b16 %v3613
    %v3963 = vunpack.c.h.b16 %v3613
    %v3964 = vunpack.c.l.b16 %v3614
    %v3965 = vunpack.c.h.b16 %v3614
    %v3966 = vunpack.c.l.b16 %v3615
    %v3967 = vunpack.c.h.b16 %v3615
    %v3968 = vunpack.c.l.b16 %v3616
    %v3969 = vunpack.c.h.b16 %v3616
    %v3970 = vunpack.c.l.b16 %v3617
    %v3971 = vunpack.c.h.b16 %v3617
    %v3972 = vunpack.c.l.b16 %v3618
    %v3973 = vunpack.c.h.b16 %v3618
    %v3974 = vunpack.c.l.b16 %v3619
    %v3975 = vunpack.c.h.b16 %v3619
    %v3976 = vunpack.c.l.b16 %v3620
    %v3977 = vunpack.c.h.b16 %v3620
    %v3978 = vunpack.c.l.b16 %v3621
    %v3979 = vunpack.c.h.b16 %v3621
    %v3980 = vunpack.c.l.b16 %v3622
    %v3981 = vunpack.c.h.b16 %v3622
    %v3982 = vunpack.c.l.b16 %v3623
    %v3983 = vunpack.c.h.b16 %v3623
    %v3984 = vunpack.c.l.b16 %v3624
    %v3985 = vunpack.c.h.b16 %v3624
    %v3986 = vunpack.c.l.b16 %v3625
    %v3987 = vunpack.c.h.b16 %v3625
    %v3988 = vunpack.c.l.b16 %v3626
    %v3989 = vunpack.c.h.b16 %v3626
    %v3990 = vunpack.c.l.b16 %v3627
    %v3991 = vunpack.c.h.b16 %v3627
    %v3992 = vunpack.c.l.b16 %v3628
    %v3993 = vunpack.c.h.b16 %v3628
    %v3994 = vunpack.c.l.b16 %v3629
    %v3995 = vunpack.c.h.b16 %v3629
    %v3996 = vunpack.c.l.b16 %v3630
    %v3997 = vunpack.c.h.b16 %v3630
    %v3998 = vunpack.c.l.b16 %v3631
    %v3999 = vunpack.c.h.b16 %v3631
    %v4000 = vunpack.c.l.b16 %v3632
    %v4001 = vunpack.c.h.b16 %v3632
    %v4002 = vunpack.c.l.b16 %v3633
    %v4003 = vunpack.c.h.b16 %v3633
    %v4004 = vunpack.c.l.b16 %v3634
    %v4005 = vunpack.c.h.b16 %v3634
    %v4006 = vpack.c.b16 %v3946, %v3942
    %v4007 = vpack.c.b16 %v3947, %v3943
    %v4008 = vpack.c.b16 %v3948, %v3944
    %v4009 = vpack.c.b16 %v3949, %v3945
    %v4010 = vpack.c.b16 %v3954, %v3950
    %v4011 = vpack.c.b16 %v3955, %v3951
    %v4012 = vpack.c.b16 %v3956, %v3952
    %v4013 = vpack.c.b16 %v3957, %v3953
    %v4014 = vpack.c.b16 %v3962, %v3958
    %v4015 = vpack.c.b16 %v3963, %v3959
    %v4016 = vpack.c.b16 %v3964, %v3960
    %v4017 = vpack.c.b16 %v3965, %v3961
    %v4018 = vpack.c.b16 %v3970, %v3966
    %v4019 = vpack.c.b16 %v3971, %v3967
    %v4020 = vpack.c.b16 %v3972, %v3968
    %v4021 = vpack.c.b16 %v3973, %v3969
    %v4022 = vpack.c.b16 %v3978, %v3974
    %v4023 = vpack.c.b16 %v3979, %v3975
    %v4024 = vpack.c.b16 %v3980, %v3976
    %v4025 = vpack.c.b16 %v3981, %v3977
    %v4026 = vpack.c.b16 %v3986, %v3982
    %v4027 = vpack.c.b16 %v3987, %v3983
    %v4028 = vpack.c.b16 %v3988, %v3984
    %v4029 = vpack.c.b16 %v3989, %v3985
    %v4030 = vpack.c.b16 %v3994, %v3990
    %v4031 = vpack.c.b16 %v3995, %v3991
    %v4032 = vpack.c.b16 %v3996, %v3992
    %v4033 = vpack.c.b16 %v3997, %v3993
    %v4034 = vpack.c.b16 %v4002, %v3998
    %v4035 = vpack.c.b16 %v4003, %v3999
    %v4036 = vpack.c.b16 %v4004, %v4000
    %v4037 = vpack.c.b16 %v4005, %v4001
    %4070 = vmatprep.subr.bf16.mxu0 %v4035
    %4071 = vmatpush1.bf16.msra.mxu0 %v4034
    %4072 = vmatprep.subr.bf16.mxu0 %v4031
    %4073 = vmatpush1.bf16.msra.mxu0 %v4030
    %4074 = vmatprep.subr.bf16.mxu0 %v4027
    %4075 = vmatpush1.bf16.msra.mxu0 %v4026
    %4076 = vmatprep.subr.bf16.mxu0 %v4023
    %4077 = vmatpush1.bf16.msra.mxu0 %v4022
    %4078 = vmatprep.subr.bf16.mxu0 %v4019
    %4079 = vmatpush1.bf16.msra.mxu0 %v4018
    %4080 = vmatprep.subr.bf16.mxu0 %v4015
    %4081 = vmatpush1.bf16.msra.mxu0 %v4014
    %4082 = vmatprep.subr.bf16.mxu0 %v4011
    %4083 = vmatpush1.bf16.msra.mxu0 %v4010
    %4084 = vmatprep.subr.bf16.mxu0 %v4007
    %4085 = vmatpush1.bf16.msra.mxu0 %v4006
    %4086 = vmatprep.subr.bf16.mxu0 0
    %4087 = vmatpush2.bf16.msra.mxu0 0
    %4088 = vmatprep.subr.bf16.mxu0 0
    %4089 = vmatpush2.bf16.msra.mxu0 0
    %4090 = vmatprep.subr.bf16.mxu0 0
    %4091 = vmatpush2.bf16.msra.mxu0 0
    %4092 = vmatprep.subr.bf16.mxu0 0
    %4093 = vmatpush2.bf16.msra.mxu0 0
    %4094 = vmatprep.subr.bf16.mxu0 0
    %4095 = vmatpush2.bf16.msra.mxu0 0
    %4096 = vmatprep.subr.bf16.mxu0 0
    %4097 = vmatpush2.bf16.msra.mxu0 0
    %4098 = vmatprep.subr.bf16.mxu0 0
    %4099 = vmatpush2.bf16.msra.mxu0 0
    %4100 = vmatprep.subr.bf16.mxu0 0
    %4101 = vmatpush2.bf16.msra.mxu0 0
    %4102 = vmatprep.mubr.bf16.mxu0 0
    %4103 = vmatmul.mubr.bf16.gmra.mxu0 %v3602
    %v4104 = vpop.f32.mrf.mxu0
    %v4105 = vadd.f32 %v3863, %v4104
    %v4106 = vpop.f32.mrf.mxu0
    %v4107 = vadd.f32 %v3865, %v4106
    %v4108 = vpop.f32.mrf.mxu0
    %v4109 = vpop.f32.mrf.mxu0
    %4110 = vdwg.mxu0
    %4111 = vmatprep.subr.bf16.mxu0 %v4037
    %4112 = vmatpush1.bf16.msra.mxu0 %v4036
    %4113 = vmatprep.subr.bf16.mxu0 %v4033
    %4114 = vmatpush1.bf16.msra.mxu0 %v4032
    %4115 = vmatprep.subr.bf16.mxu0 %v4029
    %4116 = vmatpush1.bf16.msra.mxu0 %v4028
    %4117 = vmatprep.subr.bf16.mxu0 %v4025
    %4118 = vmatpush1.bf16.msra.mxu0 %v4024
    %4119 = vmatprep.subr.bf16.mxu0 %v4021
    %4120 = vmatpush1.bf16.msra.mxu0 %v4020
    %4121 = vmatprep.subr.bf16.mxu0 %v4017
    %4122 = vmatpush1.bf16.msra.mxu0 %v4016
    %4123 = vmatprep.subr.bf16.mxu0 %v4013
    %4124 = vmatpush1.bf16.msra.mxu0 %v4012
    %4125 = vmatprep.subr.bf16.mxu0 %v4009
    %4126 = vmatpush1.bf16.msra.mxu0 %v4008
    %4127 = vmatprep.subr.bf16.mxu0 0
    %4128 = vmatpush2.bf16.msra.mxu0 0
    %4129 = vmatprep.subr.bf16.mxu0 0
    %4130 = vmatpush2.bf16.msra.mxu0 0
    %4131 = vmatprep.subr.bf16.mxu0 0
    %4132 = vmatpush2.bf16.msra.mxu0 0
    %4133 = vmatprep.subr.bf16.mxu0 0
    %4134 = vmatpush2.bf16.msra.mxu0 0
    %4135 = vmatprep.subr.bf16.mxu0 0
    %4136 = vmatpush2.bf16.msra.mxu0 0
    %4137 = vmatprep.subr.bf16.mxu0 0
    %4138 = vmatpush2.bf16.msra.mxu0 0
    %4139 = vmatprep.subr.bf16.mxu0 0
    %4140 = vmatpush2.bf16.msra.mxu0 0
    %4141 = vmatprep.subr.bf16.mxu0 0
    %4142 = vmatpush2.bf16.msra.mxu0 0
    %4143 = vmatprep.mubr.bf16.mxu0 0
    %4144 = vmatmul.mubr.bf16.gmra.mxu0 %v3602
    %v4145 = vpop.f32.mrf.mxu0
    %v4146 = vadd.f32 %v3904, %v4145
    %v4147 = vpop.f32.mrf.mxu0
    %v4148 = vadd.f32 %v3906, %v4147
    %v4149 = vpop.f32.mrf.mxu0
    %v4150 = vpop.f32.mrf.mxu0
    %4151 = vdwg.mxu0
    %v4152 = vadd.f32 %v4105, %v142
    %v4153 = vadd.f32 %v4107, %v146
    %v4154 = vadd.f32 %v4146, %v150
    %v4155 = vadd.f32 %v4148, %v154
    %v4156 = vxor.u32 %v4152, 2147483648
    %v4157 = vxor.u32 %v4153, 2147483648
    %v4158 = vxor.u32 %v4154, 2147483648
    %v4159 = vmul.f32 %v4156, 1.442695
    %v4160 = vpow.pop %v4159
    %v4161 = vmul.f32 %v4157, 1.442695
    %v4162 = vpow.pop %v4161
    %v4163 = vmul.f32 %v4158, 1.442695
    %v4164 = vpow.pop %v4163
    %v4165 = vadd.f32 %v4160, 1.0
    %v4166 = vadd.f32 %v4162, 1.0
    %v4167 = vadd.f32 %v4164, 1.0
    %v4168 = vrcp.pop %v4165
    %v4169 = vmul.f32 1.0, %v4168
    %v4170 = vrcp.pop %v4166
    %v4171 = vmul.f32 1.0, %v4170
    %v4172 = vrcp.pop %v4167
    %v4173 = vmul.f32 1.0, %v4172
    %v4174 = vtanh.pop %v4155
    %v4175 = vmul.f32 %v4171, %v3174
    %v4176 = vmul.f32 %v4169, %v4174
    %v4177 = vadd.f32 %v4175, %v4176
    %v4178 = vtanh.pop %v4177
    %v4179 = vmul.f32 %v4173, %v4178
    %v4180 = vsel %vm3599, %v4179, %v3173
    %v4181 = vsel %vm3599, %v4177, %v3174
    %v4182 = vsel %vm3599, %v4179, 0.0
    %v4183 = vpack.c.bf16 %v4182, %v4182
    %s4184 = scalar_lea.vmem [#allocation13], 12
    %4185 = vst [vmem:[%s4184] sm:$0xf] %v4183
    %s4186 = sadd.s32 %s107, 4
    %v4187 = vstv %s4186
    %vm4188 = vcmp.lt.s32.totalorder %v4187, %v108
    %s4189 = scalar_lea.vmem [#allocation4], 16
    %v4190 = vld [vmem:[%s4189] sm:$0xf]
    %v4191 = vld [vmem:[#allocation7] sm:$0xff]
    %v4192 = vld [vmem:[#allocation7 + $0x8] sm:$0xff]
    %v4193 = vld [vmem:[#allocation7 + $0x10] sm:$0xff]
    %v4194 = vld [vmem:[#allocation7 + $0x18] sm:$0xff]
    %v4195 = vld [vmem:[#allocation9] sm:$0xff]
    %v4196 = vld [vmem:[#allocation9 + $0x8] sm:$0xff]
    %v4197 = vld [vmem:[#allocation9 + $0x10] sm:$0xff]
    %v4198 = vld [vmem:[#allocation9 + $0x18] sm:$0xff]
    %v4199 = vld [vmem:[#allocation9 + $0x20] sm:$0xff]
    %v4200 = vld [vmem:[#allocation9 + $0x28] sm:$0xff]
    %v4201 = vld [vmem:[#allocation9 + $0x30] sm:$0xff]
    %v4202 = vld [vmem:[#allocation9 + $0x38] sm:$0xff]
    %v4203 = vld [vmem:[#allocation9 + $0x40] sm:$0xff]
    %v4204 = vld [vmem:[#allocation9 + $0x48] sm:$0xff]
    %v4205 = vld [vmem:[#allocation9 + $0x50] sm:$0xff]
    %v4206 = vld [vmem:[#allocation9 + $0x58] sm:$0xff]
    %v4207 = vld [vmem:[#allocation9 + $0x60] sm:$0xff]
    %v4208 = vld [vmem:[#allocation9 + $0x68] sm:$0xff]
    %v4209 = vld [vmem:[#allocation9 + $0x70] sm:$0xff]
    %v4210 = vld [vmem:[#allocation9 + $0x78] sm:$0xff]
    %v4211 = vld [vmem:[#allocation9 + $0x80] sm:$0xff]
    %v4212 = vld [vmem:[#allocation9 + $0x88] sm:$0xff]
    %v4213 = vld [vmem:[#allocation9 + $0x90] sm:$0xff]
    %v4214 = vld [vmem:[#allocation9 + $0x98] sm:$0xff]
    %v4215 = vld [vmem:[#allocation9 + $0xa0] sm:$0xff]
    %v4216 = vld [vmem:[#allocation9 + $0xa8] sm:$0xff]
    %v4217 = vld [vmem:[#allocation9 + $0xb0] sm:$0xff]
    %v4218 = vld [vmem:[#allocation9 + $0xb8] sm:$0xff]
    %v4219 = vld [vmem:[#allocation9 + $0xc0] sm:$0xff]
    %v4220 = vld [vmem:[#allocation9 + $0xc8] sm:$0xff]
    %v4221 = vld [vmem:[#allocation9 + $0xd0] sm:$0xff]
    %v4222 = vld [vmem:[#allocation9 + $0xd8] sm:$0xff]
    %v4223 = vld [vmem:[#allocation9 + $0xe0] sm:$0xff]
    %v4224 = vld [vmem:[#allocation9 + $0xe8] sm:$0xff]
    %v4225 = vld [vmem:[#allocation9 + $0xf0] sm:$0xff]
    %v4226 = vld [vmem:[#allocation9 + $0xf8] sm:$0xff]
    %v4259 = vunpack.c.l.b16 %v4195
    %v4260 = vunpack.c.h.b16 %v4195
    %v4261 = vunpack.c.l.b16 %v4196
    %v4262 = vunpack.c.h.b16 %v4196
    %v4263 = vunpack.c.l.b16 %v4197
    %v4264 = vunpack.c.h.b16 %v4197
    %v4265 = vunpack.c.l.b16 %v4198
    %v4266 = vunpack.c.h.b16 %v4198
    %v4267 = vunpack.c.l.b16 %v4199
    %v4268 = vunpack.c.h.b16 %v4199
    %v4269 = vunpack.c.l.b16 %v4200
    %v4270 = vunpack.c.h.b16 %v4200
    %v4271 = vunpack.c.l.b16 %v4201
    %v4272 = vunpack.c.h.b16 %v4201
    %v4273 = vunpack.c.l.b16 %v4202
    %v4274 = vunpack.c.h.b16 %v4202
    %v4275 = vunpack.c.l.b16 %v4203
    %v4276 = vunpack.c.h.b16 %v4203
    %v4277 = vunpack.c.l.b16 %v4204
    %v4278 = vunpack.c.h.b16 %v4204
    %v4279 = vunpack.c.l.b16 %v4205
    %v4280 = vunpack.c.h.b16 %v4205
    %v4281 = vunpack.c.l.b16 %v4206
    %v4282 = vunpack.c.h.b16 %v4206
    %v4283 = vunpack.c.l.b16 %v4207
    %v4284 = vunpack.c.h.b16 %v4207
    %v4285 = vunpack.c.l.b16 %v4208
    %v4286 = vunpack.c.h.b16 %v4208
    %v4287 = vunpack.c.l.b16 %v4209
    %v4288 = vunpack.c.h.b16 %v4209
    %v4289 = vunpack.c.l.b16 %v4210
    %v4290 = vunpack.c.h.b16 %v4210
    %v4291 = vunpack.c.l.b16 %v4211
    %v4292 = vunpack.c.h.b16 %v4211
    %v4293 = vunpack.c.l.b16 %v4212
    %v4294 = vunpack.c.h.b16 %v4212
    %v4295 = vunpack.c.l.b16 %v4213
    %v4296 = vunpack.c.h.b16 %v4213
    %v4297 = vunpack.c.l.b16 %v4214
    %v4298 = vunpack.c.h.b16 %v4214
    %v4299 = vunpack.c.l.b16 %v4215
    %v4300 = vunpack.c.h.b16 %v4215
    %v4301 = vunpack.c.l.b16 %v4216
    %v4302 = vunpack.c.h.b16 %v4216
    %v4303 = vunpack.c.l.b16 %v4217
    %v4304 = vunpack.c.h.b16 %v4217
    %v4305 = vunpack.c.l.b16 %v4218
    %v4306 = vunpack.c.h.b16 %v4218
    %v4307 = vunpack.c.l.b16 %v4219
    %v4308 = vunpack.c.h.b16 %v4219
    %v4309 = vunpack.c.l.b16 %v4220
    %v4310 = vunpack.c.h.b16 %v4220
    %v4311 = vunpack.c.l.b16 %v4221
    %v4312 = vunpack.c.h.b16 %v4221
    %v4313 = vunpack.c.l.b16 %v4222
    %v4314 = vunpack.c.h.b16 %v4222
    %v4315 = vunpack.c.l.b16 %v4223
    %v4316 = vunpack.c.h.b16 %v4223
    %v4317 = vunpack.c.l.b16 %v4224
    %v4318 = vunpack.c.h.b16 %v4224
    %v4319 = vunpack.c.l.b16 %v4225
    %v4320 = vunpack.c.h.b16 %v4225
    %v4321 = vunpack.c.l.b16 %v4226
    %v4322 = vunpack.c.h.b16 %v4226
    %v4323 = vpack.c.b16 %v4263, %v4259
    %v4324 = vpack.c.b16 %v4264, %v4260
    %v4325 = vpack.c.b16 %v4265, %v4261
    %v4326 = vpack.c.b16 %v4266, %v4262
    %v4327 = vpack.c.b16 %v4271, %v4267
    %v4328 = vpack.c.b16 %v4272, %v4268
    %v4329 = vpack.c.b16 %v4273, %v4269
    %v4330 = vpack.c.b16 %v4274, %v4270
    %v4331 = vpack.c.b16 %v4279, %v4275
    %v4332 = vpack.c.b16 %v4280, %v4276
    %v4333 = vpack.c.b16 %v4281, %v4277
    %v4334 = vpack.c.b16 %v4282, %v4278
    %v4335 = vpack.c.b16 %v4287, %v4283
    %v4336 = vpack.c.b16 %v4288, %v4284
    %v4337 = vpack.c.b16 %v4289, %v4285
    %v4338 = vpack.c.b16 %v4290, %v4286
    %v4339 = vpack.c.b16 %v4295, %v4291
    %v4340 = vpack.c.b16 %v4296, %v4292
    %v4341 = vpack.c.b16 %v4297, %v4293
    %v4342 = vpack.c.b16 %v4298, %v4294
    %v4343 = vpack.c.b16 %v4303, %v4299
    %v4344 = vpack.c.b16 %v4304, %v4300
    %v4345 = vpack.c.b16 %v4305, %v4301
    %v4346 = vpack.c.b16 %v4306, %v4302
    %v4347 = vpack.c.b16 %v4311, %v4307
    %v4348 = vpack.c.b16 %v4312, %v4308
    %v4349 = vpack.c.b16 %v4313, %v4309
    %v4350 = vpack.c.b16 %v4314, %v4310
    %v4351 = vpack.c.b16 %v4319, %v4315
    %v4352 = vpack.c.b16 %v4320, %v4316
    %v4353 = vpack.c.b16 %v4321, %v4317
    %v4354 = vpack.c.b16 %v4322, %v4318
    %4387 = vmatprep.subr.bf16.mxu0 %v4352
    %4388 = vmatpush1.bf16.msra.mxu0 %v4351
    %4389 = vmatprep.subr.bf16.mxu0 %v4348
    %4390 = vmatpush1.bf16.msra.mxu0 %v4347
    %4391 = vmatprep.subr.bf16.mxu0 %v4344
    %4392 = vmatpush1.bf16.msra.mxu0 %v4343
    %4393 = vmatprep.subr.bf16.mxu0 %v4340
    %4394 = vmatpush1.bf16.msra.mxu0 %v4339
    %4395 = vmatprep.subr.bf16.mxu0 %v4336
    %4396 = vmatpush1.bf16.msra.mxu0 %v4335
    %4397 = vmatprep.subr.bf16.mxu0 %v4332
    %4398 = vmatpush1.bf16.msra.mxu0 %v4331
    %4399 = vmatprep.subr.bf16.mxu0 %v4328
    %4400 = vmatpush1.bf16.msra.mxu0 %v4327
    %4401 = vmatprep.subr.bf16.mxu0 %v4324
    %4402 = vmatpush1.bf16.msra.mxu0 %v4323
    %4403 = vmatprep.subr.bf16.mxu0 0
    %4404 = vmatpush2.bf16.msra.mxu0 0
    %4405 = vmatprep.subr.bf16.mxu0 0
    %4406 = vmatpush2.bf16.msra.mxu0 0
    %4407 = vmatprep.subr.bf16.mxu0 0
    %4408 = vmatpush2.bf16.msra.mxu0 0
    %4409 = vmatprep.subr.bf16.mxu0 0
    %4410 = vmatpush2.bf16.msra.mxu0 0
    %4411 = vmatprep.subr.bf16.mxu0 0
    %4412 = vmatpush2.bf16.msra.mxu0 0
    %4413 = vmatprep.subr.bf16.mxu0 0
    %4414 = vmatpush2.bf16.msra.mxu0 0
    %4415 = vmatprep.subr.bf16.mxu0 0
    %4416 = vmatpush2.bf16.msra.mxu0 0
    %4417 = vmatprep.subr.bf16.mxu0 0
    %4418 = vmatpush2.bf16.msra.mxu0 0
    %4419 = vmatprep.mubr.bf16.mxu0 0
    %4420 = vmatmul.mubr.bf16.gmra.mxu0 %v3602
    %v4421 = vpop.f32.mrf.mxu0
    %v4422 = vadd.f32 0.0, %v4421
    %v4423 = vpop.f32.mrf.mxu0
    %v4424 = vadd.f32 0.0, %v4423
    %v4425 = vpop.f32.mrf.mxu0
    %v4426 = vpop.f32.mrf.mxu0
    %4427 = vdwg.mxu0
    %4428 = vmatprep.subr.bf16.mxu0 %v4354
    %4429 = vmatpush1.bf16.msra.mxu0 %v4353
    %4430 = vmatprep.subr.bf16.mxu0 %v4350
    %4431 = vmatpush1.bf16.msra.mxu0 %v4349
    %4432 = vmatprep.subr.bf16.mxu0 %v4346
    %4433 = vmatpush1.bf16.msra.mxu0 %v4345
    %4434 = vmatprep.subr.bf16.mxu0 %v4342
    %4435 = vmatpush1.bf16.msra.mxu0 %v4341
    %4436 = vmatprep.subr.bf16.mxu0 %v4338
    %4437 = vmatpush1.bf16.msra.mxu0 %v4337
    %4438 = vmatprep.subr.bf16.mxu0 %v4334
    %4439 = vmatpush1.bf16.msra.mxu0 %v4333
    %4440 = vmatprep.subr.bf16.mxu0 %v4330
    %4441 = vmatpush1.bf16.msra.mxu0 %v4329
    %4442 = vmatprep.subr.bf16.mxu0 %v4326
    %4443 = vmatpush1.bf16.msra.mxu0 %v4325
    %4444 = vmatprep.subr.bf16.mxu0 0
    %4445 = vmatpush2.bf16.msra.mxu0 0
    %4446 = vmatprep.subr.bf16.mxu0 0
    %4447 = vmatpush2.bf16.msra.mxu0 0
    %4448 = vmatprep.subr.bf16.mxu0 0
    %4449 = vmatpush2.bf16.msra.mxu0 0
    %4450 = vmatprep.subr.bf16.mxu0 0
    %4451 = vmatpush2.bf16.msra.mxu0 0
    %4452 = vmatprep.subr.bf16.mxu0 0
    %4453 = vmatpush2.bf16.msra.mxu0 0
    %4454 = vmatprep.subr.bf16.mxu0 0
    %4455 = vmatpush2.bf16.msra.mxu0 0
    %4456 = vmatprep.subr.bf16.mxu0 0
    %4457 = vmatpush2.bf16.msra.mxu0 0
    %4458 = vmatprep.subr.bf16.mxu0 0
    %4459 = vmatpush2.bf16.msra.mxu0 0
    %4460 = vmatprep.mubr.bf16.mxu0 0
    %4461 = vmatmul.mubr.bf16.gmra.mxu0 %v3602
    %v4462 = vpop.f32.mrf.mxu0
    %v4463 = vadd.f32 0.0, %v4462
    %v4464 = vpop.f32.mrf.mxu0
    %v4465 = vadd.f32 0.0, %v4464
    %v4466 = vpop.f32.mrf.mxu0
    %v4467 = vpop.f32.mrf.mxu0
    %4468 = vdwg.mxu0
    %v4473 = vunpack.c.l.b16 %v4191
    %v4474 = vunpack.c.h.b16 %v4191
    %v4475 = vunpack.c.l.b16 %v4192
    %v4476 = vunpack.c.h.b16 %v4192
    %v4477 = vunpack.c.l.b16 %v4193
    %v4478 = vunpack.c.h.b16 %v4193
    %v4479 = vunpack.c.l.b16 %v4194
    %v4480 = vunpack.c.h.b16 %v4194
    %v4481 = vpack.c.b16 %v4477, %v4473
    %v4482 = vpack.c.b16 %v4478, %v4474
    %v4483 = vpack.c.b16 %v4479, %v4475
    %v4484 = vpack.c.b16 %v4480, %v4476
    %v4490 = vsel %vm461, %v4190, 0
    %4492 = vmatprep.subr.bf16.mxu0 0
    %4493 = vmatpush1.bf16.msra.mxu0 0
    %4494 = vmatprep.subr.bf16.mxu0 0
    %4495 = vmatpush1.bf16.msra.mxu0 0
    %4496 = vmatprep.subr.bf16.mxu0 0
    %4497 = vmatpush1.bf16.msra.mxu0 0
    %4498 = vmatprep.subr.bf16.mxu0 0
    %4499 = vmatpush1.bf16.msra.mxu0 0
    %4500 = vmatprep.subr.bf16.mxu0 0
    %4501 = vmatpush1.bf16.msra.mxu0 0
    %4502 = vmatprep.subr.bf16.mxu0 0
    %4503 = vmatpush1.bf16.msra.mxu0 0
    %4504 = vmatprep.subr.bf16.mxu0 0
    %4505 = vmatpush1.bf16.msra.mxu0 0
    %4506 = vmatprep.subr.bf16.mxu0 %v4482
    %4507 = vmatpush1.bf16.msra.mxu0 %v4481
    %4508 = vmatprep.subr.bf16.mxu0 0
    %4509 = vmatpush2.bf16.msra.mxu0 0
    %4510 = vmatprep.subr.bf16.mxu0 0
    %4511 = vmatpush2.bf16.msra.mxu0 0
    %4512 = vmatprep.subr.bf16.mxu0 0
    %4513 = vmatpush2.bf16.msra.mxu0 0
    %4514 = vmatprep.subr.bf16.mxu0 0
    %4515 = vmatpush2.bf16.msra.mxu0 0
    %4516 = vmatprep.subr.bf16.mxu0 0
    %4517 = vmatpush2.bf16.msra.mxu0 0
    %4518 = vmatprep.subr.bf16.mxu0 0
    %4519 = vmatpush2.bf16.msra.mxu0 0
    %4520 = vmatprep.subr.bf16.mxu0 0
    %4521 = vmatpush2.bf16.msra.mxu0 0
    %4522 = vmatprep.subr.bf16.mxu0 0
    %4523 = vmatpush2.bf16.msra.mxu0 0
    %4524 = vmatprep.mubr.bf16.mxu0 0
    %4525 = vmatmul.mubr.bf16.gmra.mxu0 %v4490
    %v4526 = vpop.f32.mrf.mxu0
    %v4527 = vadd.f32 %v4422, %v4526
    %v4528 = vpop.f32.mrf.mxu0
    %v4529 = vadd.f32 %v4424, %v4528
    %v4530 = vpop.f32.mrf.mxu0
    %v4531 = vpop.f32.mrf.mxu0
    %4532 = vdwg.mxu0
    %4533 = vmatprep.subr.bf16.mxu0 0
    %4534 = vmatpush1.bf16.msra.mxu0 0
    %4535 = vmatprep.subr.bf16.mxu0 0
    %4536 = vmatpush1.bf16.msra.mxu0 0
    %4537 = vmatprep.subr.bf16.mxu0 0
    %4538 = vmatpush1.bf16.msra.mxu0 0
    %4539 = vmatprep.subr.bf16.mxu0 0
    %4540 = vmatpush1.bf16.msra.mxu0 0
    %4541 = vmatprep.subr.bf16.mxu0 0
    %4542 = vmatpush1.bf16.msra.mxu0 0
    %4543 = vmatprep.subr.bf16.mxu0 0
    %4544 = vmatpush1.bf16.msra.mxu0 0
    %4545 = vmatprep.subr.bf16.mxu0 0
    %4546 = vmatpush1.bf16.msra.mxu0 0
    %4547 = vmatprep.subr.bf16.mxu0 %v4484
    %4548 = vmatpush1.bf16.msra.mxu0 %v4483
    %4549 = vmatprep.subr.bf16.mxu0 0
    %4550 = vmatpush2.bf16.msra.mxu0 0
    %4551 = vmatprep.subr.bf16.mxu0 0
    %4552 = vmatpush2.bf16.msra.mxu0 0
    %4553 = vmatprep.subr.bf16.mxu0 0
    %4554 = vmatpush2.bf16.msra.mxu0 0
    %4555 = vmatprep.subr.bf16.mxu0 0
    %4556 = vmatpush2.bf16.msra.mxu0 0
    %4557 = vmatprep.subr.bf16.mxu0 0
    %4558 = vmatpush2.bf16.msra.mxu0 0
    %4559 = vmatprep.subr.bf16.mxu0 0
    %4560 = vmatpush2.bf16.msra.mxu0 0
    %4561 = vmatprep.subr.bf16.mxu0 0
    %4562 = vmatpush2.bf16.msra.mxu0 0
    %4563 = vmatprep.subr.bf16.mxu0 0
    %4564 = vmatpush2.bf16.msra.mxu0 0
    %4565 = vmatprep.mubr.bf16.mxu0 0
    %4566 = vmatmul.mubr.bf16.gmra.mxu0 %v4490
    %v4567 = vpop.f32.mrf.mxu0
    %v4568 = vadd.f32 %v4463, %v4567
    %v4569 = vpop.f32.mrf.mxu0
    %v4570 = vadd.f32 %v4465, %v4569
    %v4571 = vpop.f32.mrf.mxu0
    %v4572 = vpop.f32.mrf.mxu0
    %4573 = vdwg.mxu0
    %v4574 = vadd.f32 %v4527, %v120
    %v4575 = vadd.f32 %v4529, %v124
    %v4576 = vadd.f32 %v4568, %v128
    %v4577 = vadd.f32 %v4570, %v132
    %v4578 = vxor.u32 %v4574, 2147483648
    %v4579 = vxor.u32 %v4575, 2147483648
    %v4580 = vxor.u32 %v4576, 2147483648
    %v4581 = vmul.f32 %v4578, 1.442695
    %v4582 = vpow.pop %v4581
    %v4583 = vmul.f32 %v4579, 1.442695
    %v4584 = vpow.pop %v4583
    %v4585 = vmul.f32 %v4580, 1.442695
    %v4586 = vpow.pop %v4585
    %v4587 = vadd.f32 %v4582, 1.0
    %v4588 = vadd.f32 %v4584, 1.0
    %v4589 = vadd.f32 %v4586, 1.0
    %v4590 = vrcp.pop %v4587
    %v4591 = vmul.f32 1.0, %v4590
    %v4592 = vrcp.pop %v4588
    %v4593 = vmul.f32 1.0, %v4592
    %v4594 = vrcp.pop %v4589
    %v4595 = vmul.f32 1.0, %v4594
    %v4596 = vtanh.pop %v4577
    %v4597 = vmul.f32 %v4593, %v3601
    %v4598 = vmul.f32 %v4591, %v4596
    %v4599 = vadd.f32 %v4597, %v4598
    %v4600 = vtanh.pop %v4599
    %v4601 = vmul.f32 %v4595, %v4600
    %v4602 = vsel %vm4188, 1, 0
    %4603 = vset.pattern.permute.xlu0 0
    %4604 = vperm.xlu0 %4603, %v4602
    %v4605 = vpop.permute.xlu0 %4604
    %vm4606 = vcmp.eq.s32.totalorder %v4605, 1
    %v4607 = vsel %vm4606, %v4601, %v3600
    %v4608 = vsel %vm4606, %v4599, %v3601
    %v4609 = vpack.c.bf16 %v4607, %v4607
    %v4610 = vld [vmem:[#allocation10] sm:$0xff]
    %v4611 = vld [vmem:[#allocation10 + $0x8] sm:$0xff]
    %v4612 = vld [vmem:[#allocation10 + $0x10] sm:$0xff]
    %v4613 = vld [vmem:[#allocation10 + $0x18] sm:$0xff]
    %v4614 = vld [vmem:[#allocation10 + $0x20] sm:$0xff]
    %v4615 = vld [vmem:[#allocation10 + $0x28] sm:$0xff]
    %v4616 = vld [vmem:[#allocation10 + $0x30] sm:$0xff]
    %v4617 = vld [vmem:[#allocation10 + $0x38] sm:$0xff]
    %v4618 = vld [vmem:[#allocation10 + $0x40] sm:$0xff]
    %v4619 = vld [vmem:[#allocation10 + $0x48] sm:$0xff]
    %v4620 = vld [vmem:[#allocation10 + $0x50] sm:$0xff]
    %v4621 = vld [vmem:[#allocation10 + $0x58] sm:$0xff]
    %v4622 = vld [vmem:[#allocation10 + $0x60] sm:$0xff]
    %v4623 = vld [vmem:[#allocation10 + $0x68] sm:$0xff]
    %v4624 = vld [vmem:[#allocation10 + $0x70] sm:$0xff]
    %v4625 = vld [vmem:[#allocation10 + $0x78] sm:$0xff]
    %v4626 = vld [vmem:[#allocation10 + $0x80] sm:$0xff]
    %v4627 = vld [vmem:[#allocation10 + $0x88] sm:$0xff]
    %v4628 = vld [vmem:[#allocation10 + $0x90] sm:$0xff]
    %v4629 = vld [vmem:[#allocation10 + $0x98] sm:$0xff]
    %v4630 = vld [vmem:[#allocation10 + $0xa0] sm:$0xff]
    %v4631 = vld [vmem:[#allocation10 + $0xa8] sm:$0xff]
    %v4632 = vld [vmem:[#allocation10 + $0xb0] sm:$0xff]
    %v4633 = vld [vmem:[#allocation10 + $0xb8] sm:$0xff]
    %v4634 = vld [vmem:[#allocation10 + $0xc0] sm:$0xff]
    %v4635 = vld [vmem:[#allocation10 + $0xc8] sm:$0xff]
    %v4636 = vld [vmem:[#allocation10 + $0xd0] sm:$0xff]
    %v4637 = vld [vmem:[#allocation10 + $0xd8] sm:$0xff]
    %v4638 = vld [vmem:[#allocation10 + $0xe0] sm:$0xff]
    %v4639 = vld [vmem:[#allocation10 + $0xe8] sm:$0xff]
    %v4640 = vld [vmem:[#allocation10 + $0xf0] sm:$0xff]
    %v4641 = vld [vmem:[#allocation10 + $0xf8] sm:$0xff]
    %v4642 = vpack.c.bf16 %v4180, %v4180
    %v4643 = vld [vmem:[#allocation12] sm:$0xff]
    %v4644 = vld [vmem:[#allocation12 + $0x8] sm:$0xff]
    %v4645 = vld [vmem:[#allocation12 + $0x10] sm:$0xff]
    %v4646 = vld [vmem:[#allocation12 + $0x18] sm:$0xff]
    %v4647 = vld [vmem:[#allocation12 + $0x20] sm:$0xff]
    %v4648 = vld [vmem:[#allocation12 + $0x28] sm:$0xff]
    %v4649 = vld [vmem:[#allocation12 + $0x30] sm:$0xff]
    %v4650 = vld [vmem:[#allocation12 + $0x38] sm:$0xff]
    %v4651 = vld [vmem:[#allocation12 + $0x40] sm:$0xff]
    %v4652 = vld [vmem:[#allocation12 + $0x48] sm:$0xff]
    %v4653 = vld [vmem:[#allocation12 + $0x50] sm:$0xff]
    %v4654 = vld [vmem:[#allocation12 + $0x58] sm:$0xff]
    %v4655 = vld [vmem:[#allocation12 + $0x60] sm:$0xff]
    %v4656 = vld [vmem:[#allocation12 + $0x68] sm:$0xff]
    %v4657 = vld [vmem:[#allocation12 + $0x70] sm:$0xff]
    %v4658 = vld [vmem:[#allocation12 + $0x78] sm:$0xff]
    %v4659 = vld [vmem:[#allocation12 + $0x80] sm:$0xff]
    %v4660 = vld [vmem:[#allocation12 + $0x88] sm:$0xff]
    %v4661 = vld [vmem:[#allocation12 + $0x90] sm:$0xff]
    %v4662 = vld [vmem:[#allocation12 + $0x98] sm:$0xff]
    %v4663 = vld [vmem:[#allocation12 + $0xa0] sm:$0xff]
    %v4664 = vld [vmem:[#allocation12 + $0xa8] sm:$0xff]
    %v4665 = vld [vmem:[#allocation12 + $0xb0] sm:$0xff]
    %v4666 = vld [vmem:[#allocation12 + $0xb8] sm:$0xff]
    %v4667 = vld [vmem:[#allocation12 + $0xc0] sm:$0xff]
    %v4668 = vld [vmem:[#allocation12 + $0xc8] sm:$0xff]
    %v4669 = vld [vmem:[#allocation12 + $0xd0] sm:$0xff]
    %v4670 = vld [vmem:[#allocation12 + $0xd8] sm:$0xff]
    %v4671 = vld [vmem:[#allocation12 + $0xe0] sm:$0xff]
    %v4672 = vld [vmem:[#allocation12 + $0xe8] sm:$0xff]
    %v4673 = vld [vmem:[#allocation12 + $0xf0] sm:$0xff]
    %v4674 = vld [vmem:[#allocation12 + $0xf8] sm:$0xff]
    %v4707 = vunpack.c.l.b16 %v4643
    %v4708 = vunpack.c.h.b16 %v4643
    %v4709 = vunpack.c.l.b16 %v4644
    %v4710 = vunpack.c.h.b16 %v4644
    %v4711 = vunpack.c.l.b16 %v4645
    %v4712 = vunpack.c.h.b16 %v4645
    %v4713 = vunpack.c.l.b16 %v4646
    %v4714 = vunpack.c.h.b16 %v4646
    %v4715 = vunpack.c.l.b16 %v4647
    %v4716 = vunpack.c.h.b16 %v4647
    %v4717 = vunpack.c.l.b16 %v4648
    %v4718 = vunpack.c.h.b16 %v4648
    %v4719 = vunpack.c.l.b16 %v4649
    %v4720 = vunpack.c.h.b16 %v4649
    %v4721 = vunpack.c.l.b16 %v4650
    %v4722 = vunpack.c.h.b16 %v4650
    %v4723 = vunpack.c.l.b16 %v4651
    %v4724 = vunpack.c.h.b16 %v4651
    %v4725 = vunpack.c.l.b16 %v4652
    %v4726 = vunpack.c.h.b16 %v4652
    %v4727 = vunpack.c.l.b16 %v4653
    %v4728 = vunpack.c.h.b16 %v4653
    %v4729 = vunpack.c.l.b16 %v4654
    %v4730 = vunpack.c.h.b16 %v4654
    %v4731 = vunpack.c.l.b16 %v4655
    %v4732 = vunpack.c.h.b16 %v4655
    %v4733 = vunpack.c.l.b16 %v4656
    %v4734 = vunpack.c.h.b16 %v4656
    %v4735 = vunpack.c.l.b16 %v4657
    %v4736 = vunpack.c.h.b16 %v4657
    %v4737 = vunpack.c.l.b16 %v4658
    %v4738 = vunpack.c.h.b16 %v4658
    %v4739 = vunpack.c.l.b16 %v4659
    %v4740 = vunpack.c.h.b16 %v4659
    %v4741 = vunpack.c.l.b16 %v4660
    %v4742 = vunpack.c.h.b16 %v4660
    %v4743 = vunpack.c.l.b16 %v4661
    %v4744 = vunpack.c.h.b16 %v4661
    %v4745 = vunpack.c.l.b16 %v4662
    %v4746 = vunpack.c.h.b16 %v4662
    %v4747 = vunpack.c.l.b16 %v4663
    %v4748 = vunpack.c.h.b16 %v4663
    %v4749 = vunpack.c.l.b16 %v4664
    %v4750 = vunpack.c.h.b16 %v4664
    %v4751 = vunpack.c.l.b16 %v4665
    %v4752 = vunpack.c.h.b16 %v4665
    %v4753 = vunpack.c.l.b16 %v4666
    %v4754 = vunpack.c.h.b16 %v4666
    %v4755 = vunpack.c.l.b16 %v4667
    %v4756 = vunpack.c.h.b16 %v4667
    %v4757 = vunpack.c.l.b16 %v4668
    %v4758 = vunpack.c.h.b16 %v4668
    %v4759 = vunpack.c.l.b16 %v4669
    %v4760 = vunpack.c.h.b16 %v4669
    %v4761 = vunpack.c.l.b16 %v4670
    %v4762 = vunpack.c.h.b16 %v4670
    %v4763 = vunpack.c.l.b16 %v4671
    %v4764 = vunpack.c.h.b16 %v4671
    %v4765 = vunpack.c.l.b16 %v4672
    %v4766 = vunpack.c.h.b16 %v4672
    %v4767 = vunpack.c.l.b16 %v4673
    %v4768 = vunpack.c.h.b16 %v4673
    %v4769 = vunpack.c.l.b16 %v4674
    %v4770 = vunpack.c.h.b16 %v4674
    %v4771 = vpack.c.b16 %v4711, %v4707
    %v4772 = vpack.c.b16 %v4712, %v4708
    %v4773 = vpack.c.b16 %v4713, %v4709
    %v4774 = vpack.c.b16 %v4714, %v4710
    %v4775 = vpack.c.b16 %v4719, %v4715
    %v4776 = vpack.c.b16 %v4720, %v4716
    %v4777 = vpack.c.b16 %v4721, %v4717
    %v4778 = vpack.c.b16 %v4722, %v4718
    %v4779 = vpack.c.b16 %v4727, %v4723
    %v4780 = vpack.c.b16 %v4728, %v4724
    %v4781 = vpack.c.b16 %v4729, %v4725
    %v4782 = vpack.c.b16 %v4730, %v4726
    %v4783 = vpack.c.b16 %v4735, %v4731
    %v4784 = vpack.c.b16 %v4736, %v4732
    %v4785 = vpack.c.b16 %v4737, %v4733
    %v4786 = vpack.c.b16 %v4738, %v4734
    %v4787 = vpack.c.b16 %v4743, %v4739
    %v4788 = vpack.c.b16 %v4744, %v4740
    %v4789 = vpack.c.b16 %v4745, %v4741
    %v4790 = vpack.c.b16 %v4746, %v4742
    %v4791 = vpack.c.b16 %v4751, %v4747
    %v4792 = vpack.c.b16 %v4752, %v4748
    %v4793 = vpack.c.b16 %v4753, %v4749
    %v4794 = vpack.c.b16 %v4754, %v4750
    %v4795 = vpack.c.b16 %v4759, %v4755
    %v4796 = vpack.c.b16 %v4760, %v4756
    %v4797 = vpack.c.b16 %v4761, %v4757
    %v4798 = vpack.c.b16 %v4762, %v4758
    %v4799 = vpack.c.b16 %v4767, %v4763
    %v4800 = vpack.c.b16 %v4768, %v4764
    %v4801 = vpack.c.b16 %v4769, %v4765
    %v4802 = vpack.c.b16 %v4770, %v4766
    %4835 = vmatprep.subr.bf16.mxu0 %v4800
    %4836 = vmatpush1.bf16.msra.mxu0 %v4799
    %4837 = vmatprep.subr.bf16.mxu0 %v4796
    %4838 = vmatpush1.bf16.msra.mxu0 %v4795
    %4839 = vmatprep.subr.bf16.mxu0 %v4792
    %4840 = vmatpush1.bf16.msra.mxu0 %v4791
    %4841 = vmatprep.subr.bf16.mxu0 %v4788
    %4842 = vmatpush1.bf16.msra.mxu0 %v4787
    %4843 = vmatprep.subr.bf16.mxu0 %v4784
    %4844 = vmatpush1.bf16.msra.mxu0 %v4783
    %4845 = vmatprep.subr.bf16.mxu0 %v4780
    %4846 = vmatpush1.bf16.msra.mxu0 %v4779
    %4847 = vmatprep.subr.bf16.mxu0 %v4776
    %4848 = vmatpush1.bf16.msra.mxu0 %v4775
    %4849 = vmatprep.subr.bf16.mxu0 %v4772
    %4850 = vmatpush1.bf16.msra.mxu0 %v4771
    %4851 = vmatprep.subr.bf16.mxu0 0
    %4852 = vmatpush2.bf16.msra.mxu0 0
    %4853 = vmatprep.subr.bf16.mxu0 0
    %4854 = vmatpush2.bf16.msra.mxu0 0
    %4855 = vmatprep.subr.bf16.mxu0 0
    %4856 = vmatpush2.bf16.msra.mxu0 0
    %4857 = vmatprep.subr.bf16.mxu0 0
    %4858 = vmatpush2.bf16.msra.mxu0 0
    %4859 = vmatprep.subr.bf16.mxu0 0
    %4860 = vmatpush2.bf16.msra.mxu0 0
    %4861 = vmatprep.subr.bf16.mxu0 0
    %4862 = vmatpush2.bf16.msra.mxu0 0
    %4863 = vmatprep.subr.bf16.mxu0 0
    %4864 = vmatpush2.bf16.msra.mxu0 0
    %4865 = vmatprep.subr.bf16.mxu0 0
    %4866 = vmatpush2.bf16.msra.mxu0 0
    %4867 = vmatprep.mubr.bf16.mxu0 0
    %4868 = vmatmul.mubr.bf16.gmra.mxu0 %v4642
    %v4869 = vpop.f32.mrf.mxu0
    %v4870 = vadd.f32 0.0, %v4869
    %v4871 = vpop.f32.mrf.mxu0
    %v4872 = vadd.f32 0.0, %v4871
    %v4873 = vpop.f32.mrf.mxu0
    %v4874 = vpop.f32.mrf.mxu0
    %4875 = vdwg.mxu0
    %4876 = vmatprep.subr.bf16.mxu0 %v4802
    %4877 = vmatpush1.bf16.msra.mxu0 %v4801
    %4878 = vmatprep.subr.bf16.mxu0 %v4798
    %4879 = vmatpush1.bf16.msra.mxu0 %v4797
    %4880 = vmatprep.subr.bf16.mxu0 %v4794
    %4881 = vmatpush1.bf16.msra.mxu0 %v4793
    %4882 = vmatprep.subr.bf16.mxu0 %v4790
    %4883 = vmatpush1.bf16.msra.mxu0 %v4789
    %4884 = vmatprep.subr.bf16.mxu0 %v4786
    %4885 = vmatpush1.bf16.msra.mxu0 %v4785
    %4886 = vmatprep.subr.bf16.mxu0 %v4782
    %4887 = vmatpush1.bf16.msra.mxu0 %v4781
    %4888 = vmatprep.subr.bf16.mxu0 %v4778
    %4889 = vmatpush1.bf16.msra.mxu0 %v4777
    %4890 = vmatprep.subr.bf16.mxu0 %v4774
    %4891 = vmatpush1.bf16.msra.mxu0 %v4773
    %4892 = vmatprep.subr.bf16.mxu0 0
    %4893 = vmatpush2.bf16.msra.mxu0 0
    %4894 = vmatprep.subr.bf16.mxu0 0
    %4895 = vmatpush2.bf16.msra.mxu0 0
    %4896 = vmatprep.subr.bf16.mxu0 0
    %4897 = vmatpush2.bf16.msra.mxu0 0
    %4898 = vmatprep.subr.bf16.mxu0 0
    %4899 = vmatpush2.bf16.msra.mxu0 0
    %4900 = vmatprep.subr.bf16.mxu0 0
    %4901 = vmatpush2.bf16.msra.mxu0 0
    %4902 = vmatprep.subr.bf16.mxu0 0
    %4903 = vmatpush2.bf16.msra.mxu0 0
    %4904 = vmatprep.subr.bf16.mxu0 0
    %4905 = vmatpush2.bf16.msra.mxu0 0
    %4906 = vmatprep.subr.bf16.mxu0 0
    %4907 = vmatpush2.bf16.msra.mxu0 0
    %4908 = vmatprep.mubr.bf16.mxu0 0
    %4909 = vmatmul.mubr.bf16.gmra.mxu0 %v4642
    %v4910 = vpop.f32.mrf.mxu0
    %v4911 = vadd.f32 0.0, %v4910
    %v4912 = vpop.f32.mrf.mxu0
    %v4913 = vadd.f32 0.0, %v4912
    %v4914 = vpop.f32.mrf.mxu0
    %v4915 = vpop.f32.mrf.mxu0
    %4916 = vdwg.mxu0
    %v4949 = vunpack.c.l.b16 %v4610
    %v4950 = vunpack.c.h.b16 %v4610
    %v4951 = vunpack.c.l.b16 %v4611
    %v4952 = vunpack.c.h.b16 %v4611
    %v4953 = vunpack.c.l.b16 %v4612
    %v4954 = vunpack.c.h.b16 %v4612
    %v4955 = vunpack.c.l.b16 %v4613
    %v4956 = vunpack.c.h.b16 %v4613
    %v4957 = vunpack.c.l.b16 %v4614
    %v4958 = vunpack.c.h.b16 %v4614
    %v4959 = vunpack.c.l.b16 %v4615
    %v4960 = vunpack.c.h.b16 %v4615
    %v4961 = vunpack.c.l.b16 %v4616
    %v4962 = vunpack.c.h.b16 %v4616
    %v4963 = vunpack.c.l.b16 %v4617
    %v4964 = vunpack.c.h.b16 %v4617
    %v4965 = vunpack.c.l.b16 %v4618
    %v4966 = vunpack.c.h.b16 %v4618
    %v4967 = vunpack.c.l.b16 %v4619
    %v4968 = vunpack.c.h.b16 %v4619
    %v4969 = vunpack.c.l.b16 %v4620
    %v4970 = vunpack.c.h.b16 %v4620
    %v4971 = vunpack.c.l.b16 %v4621
    %v4972 = vunpack.c.h.b16 %v4621
    %v4973 = vunpack.c.l.b16 %v4622
    %v4974 = vunpack.c.h.b16 %v4622
    %v4975 = vunpack.c.l.b16 %v4623
    %v4976 = vunpack.c.h.b16 %v4623
    %v4977 = vunpack.c.l.b16 %v4624
    %v4978 = vunpack.c.h.b16 %v4624
    %v4979 = vunpack.c.l.b16 %v4625
    %v4980 = vunpack.c.h.b16 %v4625
    %v4981 = vunpack.c.l.b16 %v4626
    %v4982 = vunpack.c.h.b16 %v4626
    %v4983 = vunpack.c.l.b16 %v4627
    %v4984 = vunpack.c.h.b16 %v4627
    %v4985 = vunpack.c.l.b16 %v4628
    %v4986 = vunpack.c.h.b16 %v4628
    %v4987 = vunpack.c.l.b16 %v4629
    %v4988 = vunpack.c.h.b16 %v4629
    %v4989 = vunpack.c.l.b16 %v4630
    %v4990 = vunpack.c.h.b16 %v4630
    %v4991 = vunpack.c.l.b16 %v4631
    %v4992 = vunpack.c.h.b16 %v4631
    %v4993 = vunpack.c.l.b16 %v4632
    %v4994 = vunpack.c.h.b16 %v4632
    %v4995 = vunpack.c.l.b16 %v4633
    %v4996 = vunpack.c.h.b16 %v4633
    %v4997 = vunpack.c.l.b16 %v4634
    %v4998 = vunpack.c.h.b16 %v4634
    %v4999 = vunpack.c.l.b16 %v4635
    %v5000 = vunpack.c.h.b16 %v4635
    %v5001 = vunpack.c.l.b16 %v4636
    %v5002 = vunpack.c.h.b16 %v4636
    %v5003 = vunpack.c.l.b16 %v4637
    %v5004 = vunpack.c.h.b16 %v4637
    %v5005 = vunpack.c.l.b16 %v4638
    %v5006 = vunpack.c.h.b16 %v4638
    %v5007 = vunpack.c.l.b16 %v4639
    %v5008 = vunpack.c.h.b16 %v4639
    %v5009 = vunpack.c.l.b16 %v4640
    %v5010 = vunpack.c.h.b16 %v4640
    %v5011 = vunpack.c.l.b16 %v4641
    %v5012 = vunpack.c.h.b16 %v4641
    %v5013 = vpack.c.b16 %v4953, %v4949
    %v5014 = vpack.c.b16 %v4954, %v4950
    %v5015 = vpack.c.b16 %v4955, %v4951
    %v5016 = vpack.c.b16 %v4956, %v4952
    %v5017 = vpack.c.b16 %v4961, %v4957
    %v5018 = vpack.c.b16 %v4962, %v4958
    %v5019 = vpack.c.b16 %v4963, %v4959
    %v5020 = vpack.c.b16 %v4964, %v4960
    %v5021 = vpack.c.b16 %v4969, %v4965
    %v5022 = vpack.c.b16 %v4970, %v4966
    %v5023 = vpack.c.b16 %v4971, %v4967
    %v5024 = vpack.c.b16 %v4972, %v4968
    %v5025 = vpack.c.b16 %v4977, %v4973
    %v5026 = vpack.c.b16 %v4978, %v4974
    %v5027 = vpack.c.b16 %v4979, %v4975
    %v5028 = vpack.c.b16 %v4980, %v4976
    %v5029 = vpack.c.b16 %v4985, %v4981
    %v5030 = vpack.c.b16 %v4986, %v4982
    %v5031 = vpack.c.b16 %v4987, %v4983
    %v5032 = vpack.c.b16 %v4988, %v4984
    %v5033 = vpack.c.b16 %v4993, %v4989
    %v5034 = vpack.c.b16 %v4994, %v4990
    %v5035 = vpack.c.b16 %v4995, %v4991
    %v5036 = vpack.c.b16 %v4996, %v4992
    %v5037 = vpack.c.b16 %v5001, %v4997
    %v5038 = vpack.c.b16 %v5002, %v4998
    %v5039 = vpack.c.b16 %v5003, %v4999
    %v5040 = vpack.c.b16 %v5004, %v5000
    %v5041 = vpack.c.b16 %v5009, %v5005
    %v5042 = vpack.c.b16 %v5010, %v5006
    %v5043 = vpack.c.b16 %v5011, %v5007
    %v5044 = vpack.c.b16 %v5012, %v5008
    %5077 = vmatprep.subr.bf16.mxu0 %v5042
    %5078 = vmatpush1.bf16.msra.mxu0 %v5041
    %5079 = vmatprep.subr.bf16.mxu0 %v5038
    %5080 = vmatpush1.bf16.msra.mxu0 %v5037
    %5081 = vmatprep.subr.bf16.mxu0 %v5034
    %5082 = vmatpush1.bf16.msra.mxu0 %v5033
    %5083 = vmatprep.subr.bf16.mxu0 %v5030
    %5084 = vmatpush1.bf16.msra.mxu0 %v5029
    %5085 = vmatprep.subr.bf16.mxu0 %v5026
    %5086 = vmatpush1.bf16.msra.mxu0 %v5025
    %5087 = vmatprep.subr.bf16.mxu0 %v5022
    %5088 = vmatpush1.bf16.msra.mxu0 %v5021
    %5089 = vmatprep.subr.bf16.mxu0 %v5018
    %5090 = vmatpush1.bf16.msra.mxu0 %v5017
    %5091 = vmatprep.subr.bf16.mxu0 %v5014
    %5092 = vmatpush1.bf16.msra.mxu0 %v5013
    %5093 = vmatprep.subr.bf16.mxu0 0
    %5094 = vmatpush2.bf16.msra.mxu0 0
    %5095 = vmatprep.subr.bf16.mxu0 0
    %5096 = vmatpush2.bf16.msra.mxu0 0
    %5097 = vmatprep.subr.bf16.mxu0 0
    %5098 = vmatpush2.bf16.msra.mxu0 0
    %5099 = vmatprep.subr.bf16.mxu0 0
    %5100 = vmatpush2.bf16.msra.mxu0 0
    %5101 = vmatprep.subr.bf16.mxu0 0
    %5102 = vmatpush2.bf16.msra.mxu0 0
    %5103 = vmatprep.subr.bf16.mxu0 0
    %5104 = vmatpush2.bf16.msra.mxu0 0
    %5105 = vmatprep.subr.bf16.mxu0 0
    %5106 = vmatpush2.bf16.msra.mxu0 0
    %5107 = vmatprep.subr.bf16.mxu0 0
    %5108 = vmatpush2.bf16.msra.mxu0 0
    %5109 = vmatprep.mubr.bf16.mxu0 0
    %5110 = vmatmul.mubr.bf16.gmra.mxu0 %v4609
    %v5111 = vpop.f32.mrf.mxu0
    %v5112 = vadd.f32 %v4870, %v5111
    %v5113 = vpop.f32.mrf.mxu0
    %v5114 = vadd.f32 %v4872, %v5113
    %v5115 = vpop.f32.mrf.mxu0
    %v5116 = vpop.f32.mrf.mxu0
    %5117 = vdwg.mxu0
    %5118 = vmatprep.subr.bf16.mxu0 %v5044
    %5119 = vmatpush1.bf16.msra.mxu0 %v5043
    %5120 = vmatprep.subr.bf16.mxu0 %v5040
    %5121 = vmatpush1.bf16.msra.mxu0 %v5039
    %5122 = vmatprep.subr.bf16.mxu0 %v5036
    %5123 = vmatpush1.bf16.msra.mxu0 %v5035
    %5124 = vmatprep.subr.bf16.mxu0 %v5032
    %5125 = vmatpush1.bf16.msra.mxu0 %v5031
    %5126 = vmatprep.subr.bf16.mxu0 %v5028
    %5127 = vmatpush1.bf16.msra.mxu0 %v5027
    %5128 = vmatprep.subr.bf16.mxu0 %v5024
    %5129 = vmatpush1.bf16.msra.mxu0 %v5023
    %5130 = vmatprep.subr.bf16.mxu0 %v5020
    %5131 = vmatpush1.bf16.msra.mxu0 %v5019
    %5132 = vmatprep.subr.bf16.mxu0 %v5016
    %5133 = vmatpush1.bf16.msra.mxu0 %v5015
    %5134 = vmatprep.subr.bf16.mxu0 0
    %5135 = vmatpush2.bf16.msra.mxu0 0
    %5136 = vmatprep.subr.bf16.mxu0 0
    %5137 = vmatpush2.bf16.msra.mxu0 0
    %5138 = vmatprep.subr.bf16.mxu0 0
    %5139 = vmatpush2.bf16.msra.mxu0 0
    %5140 = vmatprep.subr.bf16.mxu0 0
    %5141 = vmatpush2.bf16.msra.mxu0 0
    %5142 = vmatprep.subr.bf16.mxu0 0
    %5143 = vmatpush2.bf16.msra.mxu0 0
    %5144 = vmatprep.subr.bf16.mxu0 0
    %5145 = vmatpush2.bf16.msra.mxu0 0
    %5146 = vmatprep.subr.bf16.mxu0 0
    %5147 = vmatpush2.bf16.msra.mxu0 0
    %5148 = vmatprep.subr.bf16.mxu0 0
    %5149 = vmatpush2.bf16.msra.mxu0 0
    %5150 = vmatprep.mubr.bf16.mxu0 0
    %5151 = vmatmul.mubr.bf16.gmra.mxu0 %v4609
    %v5152 = vpop.f32.mrf.mxu0
    %v5153 = vadd.f32 %v4911, %v5152
    %v5154 = vpop.f32.mrf.mxu0
    %v5155 = vadd.f32 %v4913, %v5154
    %v5156 = vpop.f32.mrf.mxu0
    %v5157 = vpop.f32.mrf.mxu0
    %5158 = vdwg.mxu0
    %v5159 = vadd.f32 %v5112, %v142
    %v5160 = vadd.f32 %v5114, %v146
    %v5161 = vadd.f32 %v5153, %v150
    %v5162 = vadd.f32 %v5155, %v154
    %v5163 = vxor.u32 %v5159, 2147483648
    %v5164 = vxor.u32 %v5160, 2147483648
    %v5165 = vxor.u32 %v5161, 2147483648
    %v5166 = vmul.f32 %v5163, 1.442695
    %v5167 = vpow.pop %v5166
    %v5168 = vmul.f32 %v5164, 1.442695
    %v5169 = vpow.pop %v5168
    %v5170 = vmul.f32 %v5165, 1.442695
    %v5171 = vpow.pop %v5170
    %v5172 = vadd.f32 %v5167, 1.0
    %v5173 = vadd.f32 %v5169, 1.0
    %v5174 = vadd.f32 %v5171, 1.0
    %v5175 = vrcp.pop %v5172
    %v5176 = vmul.f32 1.0, %v5175
    %v5177 = vrcp.pop %v5173
    %v5178 = vmul.f32 1.0, %v5177
    %v5179 = vrcp.pop %v5174
    %v5180 = vmul.f32 1.0, %v5179
    %v5181 = vtanh.pop %v5162
    %v5182 = vmul.f32 %v5178, %v4181
    %v5183 = vmul.f32 %v5176, %v5181
    %v5184 = vadd.f32 %v5182, %v5183
    %v5185 = vtanh.pop %v5184
    %v5186 = vmul.f32 %v5180, %v5185
    %v5187 = vsel %vm4606, %v5186, %v4180
    %v5188 = vsel %vm4606, %v5184, %v4181
    %v5189 = vsel %vm4606, %v5186, 0.0
    %v5190 = vpack.c.bf16 %v5189, %v5189
    %s5191 = scalar_lea.vmem [#allocation13], 16
    %5192 = vst [vmem:[%s5191] sm:$0xf] %v5190
    %s5193 = sadd.s32 %s107, 5
    %v5194 = vstv %s5193
    %vm5195 = vcmp.lt.s32.totalorder %v5194, %v108
    %s5196 = scalar_lea.vmem [#allocation4], 20
    %v5197 = vld [vmem:[%s5196] sm:$0xf]
    %v5198 = vld [vmem:[#allocation7] sm:$0xff]
    %v5199 = vld [vmem:[#allocation7 + $0x8] sm:$0xff]
    %v5200 = vld [vmem:[#allocation7 + $0x10] sm:$0xff]
    %v5201 = vld [vmem:[#allocation7 + $0x18] sm:$0xff]
    %v5202 = vld [vmem:[#allocation9] sm:$0xff]
    %v5203 = vld [vmem:[#allocation9 + $0x8] sm:$0xff]
    %v5204 = vld [vmem:[#allocation9 + $0x10] sm:$0xff]
    %v5205 = vld [vmem:[#allocation9 + $0x18] sm:$0xff]
    %v5206 = vld [vmem:[#allocation9 + $0x20] sm:$0xff]
    %v5207 = vld [vmem:[#allocation9 + $0x28] sm:$0xff]
    %v5208 = vld [vmem:[#allocation9 + $0x30] sm:$0xff]
    %v5209 = vld [vmem:[#allocation9 + $0x38] sm:$0xff]
    %v5210 = vld [vmem:[#allocation9 + $0x40] sm:$0xff]
    %v5211 = vld [vmem:[#allocation9 + $0x48] sm:$0xff]
    %v5212 = vld [vmem:[#allocation9 + $0x50] sm:$0xff]
    %v5213 = vld [vmem:[#allocation9 + $0x58] sm:$0xff]
    %v5214 = vld [vmem:[#allocation9 + $0x60] sm:$0xff]
    %v5215 = vld [vmem:[#allocation9 + $0x68] sm:$0xff]
    %v5216 = vld [vmem:[#allocation9 + $0x70] sm:$0xff]
    %v5217 = vld [vmem:[#allocation9 + $0x78] sm:$0xff]
    %v5218 = vld [vmem:[#allocation9 + $0x80] sm:$0xff]
    %v5219 = vld [vmem:[#allocation9 + $0x88] sm:$0xff]
    %v5220 = vld [vmem:[#allocation9 + $0x90] sm:$0xff]
    %v5221 = vld [vmem:[#allocation9 + $0x98] sm:$0xff]
    %v5222 = vld [vmem:[#allocation9 + $0xa0] sm:$0xff]
    %v5223 = vld [vmem:[#allocation9 + $0xa8] sm:$0xff]
    %v5224 = vld [vmem:[#allocation9 + $0xb0] sm:$0xff]
    %v5225 = vld [vmem:[#allocation9 + $0xb8] sm:$0xff]
    %v5226 = vld [vmem:[#allocation9 + $0xc0] sm:$0xff]
    %v5227 = vld [vmem:[#allocation9 + $0xc8] sm:$0xff]
    %v5228 = vld [vmem:[#allocation9 + $0xd0] sm:$0xff]
    %v5229 = vld [vmem:[#allocation9 + $0xd8] sm:$0xff]
    %v5230 = vld [vmem:[#allocation9 + $0xe0] sm:$0xff]
    %v5231 = vld [vmem:[#allocation9 + $0xe8] sm:$0xff]
    %v5232 = vld [vmem:[#allocation9 + $0xf0] sm:$0xff]
    %v5233 = vld [vmem:[#allocation9 + $0xf8] sm:$0xff]
    %v5266 = vunpack.c.l.b16 %v5202
    %v5267 = vunpack.c.h.b16 %v5202
    %v5268 = vunpack.c.l.b16 %v5203
    %v5269 = vunpack.c.h.b16 %v5203
    %v5270 = vunpack.c.l.b16 %v5204
    %v5271 = vunpack.c.h.b16 %v5204
    %v5272 = vunpack.c.l.b16 %v5205
    %v5273 = vunpack.c.h.b16 %v5205
    %v5274 = vunpack.c.l.b16 %v5206
    %v5275 = vunpack.c.h.b16 %v5206
    %v5276 = vunpack.c.l.b16 %v5207
    %v5277 = vunpack.c.h.b16 %v5207
    %v5278 = vunpack.c.l.b16 %v5208
    %v5279 = vunpack.c.h.b16 %v5208
    %v5280 = vunpack.c.l.b16 %v5209
    %v5281 = vunpack.c.h.b16 %v5209
    %v5282 = vunpack.c.l.b16 %v5210
    %v5283 = vunpack.c.h.b16 %v5210
    %v5284 = vunpack.c.l.b16 %v5211
    %v5285 = vunpack.c.h.b16 %v5211
    %v5286 = vunpack.c.l.b16 %v5212
    %v5287 = vunpack.c.h.b16 %v5212
    %v5288 = vunpack.c.l.b16 %v5213
    %v5289 = vunpack.c.h.b16 %v5213
    %v5290 = vunpack.c.l.b16 %v5214
    %v5291 = vunpack.c.h.b16 %v5214
    %v5292 = vunpack.c.l.b16 %v5215
    %v5293 = vunpack.c.h.b16 %v5215
    %v5294 = vunpack.c.l.b16 %v5216
    %v5295 = vunpack.c.h.b16 %v5216
    %v5296 = vunpack.c.l.b16 %v5217
    %v5297 = vunpack.c.h.b16 %v5217
    %v5298 = vunpack.c.l.b16 %v5218
    %v5299 = vunpack.c.h.b16 %v5218
    %v5300 = vunpack.c.l.b16 %v5219
    %v5301 = vunpack.c.h.b16 %v5219
    %v5302 = vunpack.c.l.b16 %v5220
    %v5303 = vunpack.c.h.b16 %v5220
    %v5304 = vunpack.c.l.b16 %v5221
    %v5305 = vunpack.c.h.b16 %v5221
    %v5306 = vunpack.c.l.b16 %v5222
    %v5307 = vunpack.c.h.b16 %v5222
    %v5308 = vunpack.c.l.b16 %v5223
    %v5309 = vunpack.c.h.b16 %v5223
    %v5310 = vunpack.c.l.b16 %v5224
    %v5311 = vunpack.c.h.b16 %v5224
    %v5312 = vunpack.c.l.b16 %v5225
    %v5313 = vunpack.c.h.b16 %v5225
    %v5314 = vunpack.c.l.b16 %v5226
    %v5315 = vunpack.c.h.b16 %v5226
    %v5316 = vunpack.c.l.b16 %v5227
    %v5317 = vunpack.c.h.b16 %v5227
    %v5318 = vunpack.c.l.b16 %v5228
    %v5319 = vunpack.c.h.b16 %v5228
    %v5320 = vunpack.c.l.b16 %v5229
    %v5321 = vunpack.c.h.b16 %v5229
    %v5322 = vunpack.c.l.b16 %v5230
    %v5323 = vunpack.c.h.b16 %v5230
    %v5324 = vunpack.c.l.b16 %v5231
    %v5325 = vunpack.c.h.b16 %v5231
    %v5326 = vunpack.c.l.b16 %v5232
    %v5327 = vunpack.c.h.b16 %v5232
    %v5328 = vunpack.c.l.b16 %v5233
    %v5329 = vunpack.c.h.b16 %v5233
    %v5330 = vpack.c.b16 %v5270, %v5266
    %v5331 = vpack.c.b16 %v5271, %v5267
    %v5332 = vpack.c.b16 %v5272, %v5268
    %v5333 = vpack.c.b16 %v5273, %v5269
    %v5334 = vpack.c.b16 %v5278, %v5274
    %v5335 = vpack.c.b16 %v5279, %v5275
    %v5336 = vpack.c.b16 %v5280, %v5276
    %v5337 = vpack.c.b16 %v5281, %v5277
    %v5338 = vpack.c.b16 %v5286, %v5282
    %v5339 = vpack.c.b16 %v5287, %v5283
    %v5340 = vpack.c.b16 %v5288, %v5284
    %v5341 = vpack.c.b16 %v5289, %v5285
    %v5342 = vpack.c.b16 %v5294, %v5290
    %v5343 = vpack.c.b16 %v5295, %v5291
    %v5344 = vpack.c.b16 %v5296, %v5292
    %v5345 = vpack.c.b16 %v5297, %v5293
    %v5346 = vpack.c.b16 %v5302, %v5298
    %v5347 = vpack.c.b16 %v5303, %v5299
    %v5348 = vpack.c.b16 %v5304, %v5300
    %v5349 = vpack.c.b16 %v5305, %v5301
    %v5350 = vpack.c.b16 %v5310, %v5306
    %v5351 = vpack.c.b16 %v5311, %v5307
    %v5352 = vpack.c.b16 %v5312, %v5308
    %v5353 = vpack.c.b16 %v5313, %v5309
    %v5354 = vpack.c.b16 %v5318, %v5314
    %v5355 = vpack.c.b16 %v5319, %v5315
    %v5356 = vpack.c.b16 %v5320, %v5316
    %v5357 = vpack.c.b16 %v5321, %v5317
    %v5358 = vpack.c.b16 %v5326, %v5322
    %v5359 = vpack.c.b16 %v5327, %v5323
    %v5360 = vpack.c.b16 %v5328, %v5324
    %v5361 = vpack.c.b16 %v5329, %v5325
    %5394 = vmatprep.subr.bf16.mxu0 %v5359
    %5395 = vmatpush1.bf16.msra.mxu0 %v5358
    %5396 = vmatprep.subr.bf16.mxu0 %v5355
    %5397 = vmatpush1.bf16.msra.mxu0 %v5354
    %5398 = vmatprep.subr.bf16.mxu0 %v5351
    %5399 = vmatpush1.bf16.msra.mxu0 %v5350
    %5400 = vmatprep.subr.bf16.mxu0 %v5347
    %5401 = vmatpush1.bf16.msra.mxu0 %v5346
    %5402 = vmatprep.subr.bf16.mxu0 %v5343
    %5403 = vmatpush1.bf16.msra.mxu0 %v5342
    %5404 = vmatprep.subr.bf16.mxu0 %v5339
    %5405 = vmatpush1.bf16.msra.mxu0 %v5338
    %5406 = vmatprep.subr.bf16.mxu0 %v5335
    %5407 = vmatpush1.bf16.msra.mxu0 %v5334
    %5408 = vmatprep.subr.bf16.mxu0 %v5331
    %5409 = vmatpush1.bf16.msra.mxu0 %v5330
    %5410 = vmatprep.subr.bf16.mxu0 0
    %5411 = vmatpush2.bf16.msra.mxu0 0
    %5412 = vmatprep.subr.bf16.mxu0 0
    %5413 = vmatpush2.bf16.msra.mxu0 0
    %5414 = vmatprep.subr.bf16.mxu0 0
    %5415 = vmatpush2.bf16.msra.mxu0 0
    %5416 = vmatprep.subr.bf16.mxu0 0
    %5417 = vmatpush2.bf16.msra.mxu0 0
    %5418 = vmatprep.subr.bf16.mxu0 0
    %5419 = vmatpush2.bf16.msra.mxu0 0
    %5420 = vmatprep.subr.bf16.mxu0 0
    %5421 = vmatpush2.bf16.msra.mxu0 0
    %5422 = vmatprep.subr.bf16.mxu0 0
    %5423 = vmatpush2.bf16.msra.mxu0 0
    %5424 = vmatprep.subr.bf16.mxu0 0
    %5425 = vmatpush2.bf16.msra.mxu0 0
    %5426 = vmatprep.mubr.bf16.mxu0 0
    %5427 = vmatmul.mubr.bf16.gmra.mxu0 %v4609
    %v5428 = vpop.f32.mrf.mxu0
    %v5429 = vadd.f32 0.0, %v5428
    %v5430 = vpop.f32.mrf.mxu0
    %v5431 = vadd.f32 0.0, %v5430
    %v5432 = vpop.f32.mrf.mxu0
    %v5433 = vpop.f32.mrf.mxu0
    %5434 = vdwg.mxu0
    %5435 = vmatprep.subr.bf16.mxu0 %v5361
    %5436 = vmatpush1.bf16.msra.mxu0 %v5360
    %5437 = vmatprep.subr.bf16.mxu0 %v5357
    %5438 = vmatpush1.bf16.msra.mxu0 %v5356
    %5439 = vmatprep.subr.bf16.mxu0 %v5353
    %5440 = vmatpush1.bf16.msra.mxu0 %v5352
    %5441 = vmatprep.subr.bf16.mxu0 %v5349
    %5442 = vmatpush1.bf16.msra.mxu0 %v5348
    %5443 = vmatprep.subr.bf16.mxu0 %v5345
    %5444 = vmatpush1.bf16.msra.mxu0 %v5344
    %5445 = vmatprep.subr.bf16.mxu0 %v5341
    %5446 = vmatpush1.bf16.msra.mxu0 %v5340
    %5447 = vmatprep.subr.bf16.mxu0 %v5337
    %5448 = vmatpush1.bf16.msra.mxu0 %v5336
    %5449 = vmatprep.subr.bf16.mxu0 %v5333
    %5450 = vmatpush1.bf16.msra.mxu0 %v5332
    %5451 = vmatprep.subr.bf16.mxu0 0
    %5452 = vmatpush2.bf16.msra.mxu0 0
    %5453 = vmatprep.subr.bf16.mxu0 0
    %5454 = vmatpush2.bf16.msra.mxu0 0
    %5455 = vmatprep.subr.bf16.mxu0 0
    %5456 = vmatpush2.bf16.msra.mxu0 0
    %5457 = vmatprep.subr.bf16.mxu0 0
    %5458 = vmatpush2.bf16.msra.mxu0 0
    %5459 = vmatprep.subr.bf16.mxu0 0
    %5460 = vmatpush2.bf16.msra.mxu0 0
    %5461 = vmatprep.subr.bf16.mxu0 0
    %5462 = vmatpush2.bf16.msra.mxu0 0
    %5463 = vmatprep.subr.bf16.mxu0 0
    %5464 = vmatpush2.bf16.msra.mxu0 0
    %5465 = vmatprep.subr.bf16.mxu0 0
    %5466 = vmatpush2.bf16.msra.mxu0 0
    %5467 = vmatprep.mubr.bf16.mxu0 0
    %5468 = vmatmul.mubr.bf16.gmra.mxu0 %v4609
    %v5469 = vpop.f32.mrf.mxu0
    %v5470 = vadd.f32 0.0, %v5469
    %v5471 = vpop.f32.mrf.mxu0
    %v5472 = vadd.f32 0.0, %v5471
    %v5473 = vpop.f32.mrf.mxu0
    %v5474 = vpop.f32.mrf.mxu0
    %5475 = vdwg.mxu0
    %v5480 = vunpack.c.l.b16 %v5198
    %v5481 = vunpack.c.h.b16 %v5198
    %v5482 = vunpack.c.l.b16 %v5199
    %v5483 = vunpack.c.h.b16 %v5199
    %v5484 = vunpack.c.l.b16 %v5200
    %v5485 = vunpack.c.h.b16 %v5200
    %v5486 = vunpack.c.l.b16 %v5201
    %v5487 = vunpack.c.h.b16 %v5201
    %v5488 = vpack.c.b16 %v5484, %v5480
    %v5489 = vpack.c.b16 %v5485, %v5481
    %v5490 = vpack.c.b16 %v5486, %v5482
    %v5491 = vpack.c.b16 %v5487, %v5483
    %v5497 = vsel %vm461, %v5197, 0
    %5499 = vmatprep.subr.bf16.mxu0 0
    %5500 = vmatpush1.bf16.msra.mxu0 0
    %5501 = vmatprep.subr.bf16.mxu0 0
    %5502 = vmatpush1.bf16.msra.mxu0 0
    %5503 = vmatprep.subr.bf16.mxu0 0
    %5504 = vmatpush1.bf16.msra.mxu0 0
    %5505 = vmatprep.subr.bf16.mxu0 0
    %5506 = vmatpush1.bf16.msra.mxu0 0
    %5507 = vmatprep.subr.bf16.mxu0 0
    %5508 = vmatpush1.bf16.msra.mxu0 0
    %5509 = vmatprep.subr.bf16.mxu0 0
    %5510 = vmatpush1.bf16.msra.mxu0 0
    %5511 = vmatprep.subr.bf16.mxu0 0
    %5512 = vmatpush1.bf16.msra.mxu0 0
    %5513 = vmatprep.subr.bf16.mxu0 %v5489
    %5514 = vmatpush1.bf16.msra.mxu0 %v5488
    %5515 = vmatprep.subr.bf16.mxu0 0
    %5516 = vmatpush2.bf16.msra.mxu0 0
    %5517 = vmatprep.subr.bf16.mxu0 0
    %5518 = vmatpush2.bf16.msra.mxu0 0
    %5519 = vmatprep.subr.bf16.mxu0 0
    %5520 = vmatpush2.bf16.msra.mxu0 0
    %5521 = vmatprep.subr.bf16.mxu0 0
    %5522 = vmatpush2.bf16.msra.mxu0 0
    %5523 = vmatprep.subr.bf16.mxu0 0
    %5524 = vmatpush2.bf16.msra.mxu0 0
    %5525 = vmatprep.subr.bf16.mxu0 0
    %5526 = vmatpush2.bf16.msra.mxu0 0
    %5527 = vmatprep.subr.bf16.mxu0 0
    %5528 = vmatpush2.bf16.msra.mxu0 0
    %5529 = vmatprep.subr.bf16.mxu0 0
    %5530 = vmatpush2.bf16.msra.mxu0 0
    %5531 = vmatprep.mubr.bf16.mxu0 0
    %5532 = vmatmul.mubr.bf16.gmra.mxu0 %v5497
    %v5533 = vpop.f32.mrf.mxu0
    %v5534 = vadd.f32 %v5429, %v5533
    %v5535 = vpop.f32.mrf.mxu0
    %v5536 = vadd.f32 %v5431, %v5535
    %v5537 = vpop.f32.mrf.mxu0
    %v5538 = vpop.f32.mrf.mxu0
    %5539 = vdwg.mxu0
    %5540 = vmatprep.subr.bf16.mxu0 0
    %5541 = vmatpush1.bf16.msra.mxu0 0
    %5542 = vmatprep.subr.bf16.mxu0 0
    %5543 = vmatpush1.bf16.msra.mxu0 0
    %5544 = vmatprep.subr.bf16.mxu0 0
    %5545 = vmatpush1.bf16.msra.mxu0 0
    %5546 = vmatprep.subr.bf16.mxu0 0
    %5547 = vmatpush1.bf16.msra.mxu0 0
    %5548 = vmatprep.subr.bf16.mxu0 0
    %5549 = vmatpush1.bf16.msra.mxu0 0
    %5550 = vmatprep.subr.bf16.mxu0 0
    %5551 = vmatpush1.bf16.msra.mxu0 0
    %5552 = vmatprep.subr.bf16.mxu0 0
    %5553 = vmatpush1.bf16.msra.mxu0 0
    %5554 = vmatprep.subr.bf16.mxu0 %v5491
    %5555 = vmatpush1.bf16.msra.mxu0 %v5490
    %5556 = vmatprep.subr.bf16.mxu0 0
    %5557 = vmatpush2.bf16.msra.mxu0 0
    %5558 = vmatprep.subr.bf16.mxu0 0
    %5559 = vmatpush2.bf16.msra.mxu0 0
    %5560 = vmatprep.subr.bf16.mxu0 0
    %5561 = vmatpush2.bf16.msra.mxu0 0
    %5562 = vmatprep.subr.bf16.mxu0 0
    %5563 = vmatpush2.bf16.msra.mxu0 0
    %5564 = vmatprep.subr.bf16.mxu0 0
    %5565 = vmatpush2.bf16.msra.mxu0 0
    %5566 = vmatprep.subr.bf16.mxu0 0
    %5567 = vmatpush2.bf16.msra.mxu0 0
    %5568 = vmatprep.subr.bf16.mxu0 0
    %5569 = vmatpush2.bf16.msra.mxu0 0
    %5570 = vmatprep.subr.bf16.mxu0 0
    %5571 = vmatpush2.bf16.msra.mxu0 0
    %5572 = vmatprep.mubr.bf16.mxu0 0
    %5573 = vmatmul.mubr.bf16.gmra.mxu0 %v5497
    %v5574 = vpop.f32.mrf.mxu0
    %v5575 = vadd.f32 %v5470, %v5574
    %v5576 = vpop.f32.mrf.mxu0
    %v5577 = vadd.f32 %v5472, %v5576
    %v5578 = vpop.f32.mrf.mxu0
    %v5579 = vpop.f32.mrf.mxu0
    %5580 = vdwg.mxu0
    %v5581 = vadd.f32 %v5534, %v120
    %v5582 = vadd.f32 %v5536, %v124
    %v5583 = vadd.f32 %v5575, %v128
    %v5584 = vadd.f32 %v5577, %v132
    %v5585 = vxor.u32 %v5581, 2147483648
    %v5586 = vxor.u32 %v5582, 2147483648
    %v5587 = vxor.u32 %v5583, 2147483648
    %v5588 = vmul.f32 %v5585, 1.442695
    %v5589 = vpow.pop %v5588
    %v5590 = vmul.f32 %v5586, 1.442695
    %v5591 = vpow.pop %v5590
    %v5592 = vmul.f32 %v5587, 1.442695
    %v5593 = vpow.pop %v5592
    %v5594 = vadd.f32 %v5589, 1.0
    %v5595 = vadd.f32 %v5591, 1.0
    %v5596 = vadd.f32 %v5593, 1.0
    %v5597 = vrcp.pop %v5594
    %v5598 = vmul.f32 1.0, %v5597
    %v5599 = vrcp.pop %v5595
    %v5600 = vmul.f32 1.0, %v5599
    %v5601 = vrcp.pop %v5596
    %v5602 = vmul.f32 1.0, %v5601
    %v5603 = vtanh.pop %v5584
    %v5604 = vmul.f32 %v5600, %v4608
    %v5605 = vmul.f32 %v5598, %v5603
    %v5606 = vadd.f32 %v5604, %v5605
    %v5607 = vtanh.pop %v5606
    %v5608 = vmul.f32 %v5602, %v5607
    %v5609 = vsel %vm5195, 1, 0
    %5610 = vset.pattern.permute.xlu0 0
    %5611 = vperm.xlu0 %5610, %v5609
    %v5612 = vpop.permute.xlu0 %5611
    %vm5613 = vcmp.eq.s32.totalorder %v5612, 1
    %v5614 = vsel %vm5613, %v5608, %v4607
    %v5615 = vsel %vm5613, %v5606, %v4608
    %v5616 = vpack.c.bf16 %v5614, %v5614
    %v5617 = vld [vmem:[#allocation10] sm:$0xff]
    %v5618 = vld [vmem:[#allocation10 + $0x8] sm:$0xff]
    %v5619 = vld [vmem:[#allocation10 + $0x10] sm:$0xff]
    %v5620 = vld [vmem:[#allocation10 + $0x18] sm:$0xff]
    %v5621 = vld [vmem:[#allocation10 + $0x20] sm:$0xff]
    %v5622 = vld [vmem:[#allocation10 + $0x28] sm:$0xff]
    %v5623 = vld [vmem:[#allocation10 + $0x30] sm:$0xff]
    %v5624 = vld [vmem:[#allocation10 + $0x38] sm:$0xff]
    %v5625 = vld [vmem:[#allocation10 + $0x40] sm:$0xff]
    %v5626 = vld [vmem:[#allocation10 + $0x48] sm:$0xff]
    %v5627 = vld [vmem:[#allocation10 + $0x50] sm:$0xff]
    %v5628 = vld [vmem:[#allocation10 + $0x58] sm:$0xff]
    %v5629 = vld [vmem:[#allocation10 + $0x60] sm:$0xff]
    %v5630 = vld [vmem:[#allocation10 + $0x68] sm:$0xff]
    %v5631 = vld [vmem:[#allocation10 + $0x70] sm:$0xff]
    %v5632 = vld [vmem:[#allocation10 + $0x78] sm:$0xff]
    %v5633 = vld [vmem:[#allocation10 + $0x80] sm:$0xff]
    %v5634 = vld [vmem:[#allocation10 + $0x88] sm:$0xff]
    %v5635 = vld [vmem:[#allocation10 + $0x90] sm:$0xff]
    %v5636 = vld [vmem:[#allocation10 + $0x98] sm:$0xff]
    %v5637 = vld [vmem:[#allocation10 + $0xa0] sm:$0xff]
    %v5638 = vld [vmem:[#allocation10 + $0xa8] sm:$0xff]
    %v5639 = vld [vmem:[#allocation10 + $0xb0] sm:$0xff]
    %v5640 = vld [vmem:[#allocation10 + $0xb8] sm:$0xff]
    %v5641 = vld [vmem:[#allocation10 + $0xc0] sm:$0xff]
    %v5642 = vld [vmem:[#allocation10 + $0xc8] sm:$0xff]
    %v5643 = vld [vmem:[#allocation10 + $0xd0] sm:$0xff]
    %v5644 = vld [vmem:[#allocation10 + $0xd8] sm:$0xff]
    %v5645 = vld [vmem:[#allocation10 + $0xe0] sm:$0xff]
    %v5646 = vld [vmem:[#allocation10 + $0xe8] sm:$0xff]
    %v5647 = vld [vmem:[#allocation10 + $0xf0] sm:$0xff]
    %v5648 = vld [vmem:[#allocation10 + $0xf8] sm:$0xff]
    %v5649 = vpack.c.bf16 %v5187, %v5187
    %v5650 = vld [vmem:[#allocation12] sm:$0xff]
    %v5651 = vld [vmem:[#allocation12 + $0x8] sm:$0xff]
    %v5652 = vld [vmem:[#allocation12 + $0x10] sm:$0xff]
    %v5653 = vld [vmem:[#allocation12 + $0x18] sm:$0xff]
    %v5654 = vld [vmem:[#allocation12 + $0x20] sm:$0xff]
    %v5655 = vld [vmem:[#allocation12 + $0x28] sm:$0xff]
    %v5656 = vld [vmem:[#allocation12 + $0x30] sm:$0xff]
    %v5657 = vld [vmem:[#allocation12 + $0x38] sm:$0xff]
    %v5658 = vld [vmem:[#allocation12 + $0x40] sm:$0xff]
    %v5659 = vld [vmem:[#allocation12 + $0x48] sm:$0xff]
    %v5660 = vld [vmem:[#allocation12 + $0x50] sm:$0xff]
    %v5661 = vld [vmem:[#allocation12 + $0x58] sm:$0xff]
    %v5662 = vld [vmem:[#allocation12 + $0x60] sm:$0xff]
    %v5663 = vld [vmem:[#allocation12 + $0x68] sm:$0xff]
    %v5664 = vld [vmem:[#allocation12 + $0x70] sm:$0xff]
    %v5665 = vld [vmem:[#allocation12 + $0x78] sm:$0xff]
    %v5666 = vld [vmem:[#allocation12 + $0x80] sm:$0xff]
    %v5667 = vld [vmem:[#allocation12 + $0x88] sm:$0xff]
    %v5668 = vld [vmem:[#allocation12 + $0x90] sm:$0xff]
    %v5669 = vld [vmem:[#allocation12 + $0x98] sm:$0xff]
    %v5670 = vld [vmem:[#allocation12 + $0xa0] sm:$0xff]
    %v5671 = vld [vmem:[#allocation12 + $0xa8] sm:$0xff]
    %v5672 = vld [vmem:[#allocation12 + $0xb0] sm:$0xff]
    %v5673 = vld [vmem:[#allocation12 + $0xb8] sm:$0xff]
    %v5674 = vld [vmem:[#allocation12 + $0xc0] sm:$0xff]
    %v5675 = vld [vmem:[#allocation12 + $0xc8] sm:$0xff]
    %v5676 = vld [vmem:[#allocation12 + $0xd0] sm:$0xff]
    %v5677 = vld [vmem:[#allocation12 + $0xd8] sm:$0xff]
    %v5678 = vld [vmem:[#allocation12 + $0xe0] sm:$0xff]
    %v5679 = vld [vmem:[#allocation12 + $0xe8] sm:$0xff]
    %v5680 = vld [vmem:[#allocation12 + $0xf0] sm:$0xff]
    %v5681 = vld [vmem:[#allocation12 + $0xf8] sm:$0xff]
    %v5714 = vunpack.c.l.b16 %v5650
    %v5715 = vunpack.c.h.b16 %v5650
    %v5716 = vunpack.c.l.b16 %v5651
    %v5717 = vunpack.c.h.b16 %v5651
    %v5718 = vunpack.c.l.b16 %v5652
    %v5719 = vunpack.c.h.b16 %v5652
    %v5720 = vunpack.c.l.b16 %v5653
    %v5721 = vunpack.c.h.b16 %v5653
    %v5722 = vunpack.c.l.b16 %v5654
    %v5723 = vunpack.c.h.b16 %v5654
    %v5724 = vunpack.c.l.b16 %v5655
    %v5725 = vunpack.c.h.b16 %v5655
    %v5726 = vunpack.c.l.b16 %v5656
    %v5727 = vunpack.c.h.b16 %v5656
    %v5728 = vunpack.c.l.b16 %v5657
    %v5729 = vunpack.c.h.b16 %v5657
    %v5730 = vunpack.c.l.b16 %v5658
    %v5731 = vunpack.c.h.b16 %v5658
    %v5732 = vunpack.c.l.b16 %v5659
    %v5733 = vunpack.c.h.b16 %v5659
    %v5734 = vunpack.c.l.b16 %v5660
    %v5735 = vunpack.c.h.b16 %v5660
    %v5736 = vunpack.c.l.b16 %v5661
    %v5737 = vunpack.c.h.b16 %v5661
    %v5738 = vunpack.c.l.b16 %v5662
    %v5739 = vunpack.c.h.b16 %v5662
    %v5740 = vunpack.c.l.b16 %v5663
    %v5741 = vunpack.c.h.b16 %v5663
    %v5742 = vunpack.c.l.b16 %v5664
    %v5743 = vunpack.c.h.b16 %v5664
    %v5744 = vunpack.c.l.b16 %v5665
    %v5745 = vunpack.c.h.b16 %v5665
    %v5746 = vunpack.c.l.b16 %v5666
    %v5747 = vunpack.c.h.b16 %v5666
    %v5748 = vunpack.c.l.b16 %v5667
    %v5749 = vunpack.c.h.b16 %v5667
    %v5750 = vunpack.c.l.b16 %v5668
    %v5751 = vunpack.c.h.b16 %v5668
    %v5752 = vunpack.c.l.b16 %v5669
    %v5753 = vunpack.c.h.b16 %v5669
    %v5754 = vunpack.c.l.b16 %v5670
    %v5755 = vunpack.c.h.b16 %v5670
    %v5756 = vunpack.c.l.b16 %v5671
    %v5757 = vunpack.c.h.b16 %v5671
    %v5758 = vunpack.c.l.b16 %v5672
    %v5759 = vunpack.c.h.b16 %v5672
    %v5760 = vunpack.c.l.b16 %v5673
    %v5761 = vunpack.c.h.b16 %v5673
    %v5762 = vunpack.c.l.b16 %v5674
    %v5763 = vunpack.c.h.b16 %v5674
    %v5764 = vunpack.c.l.b16 %v5675
    %v5765 = vunpack.c.h.b16 %v5675
    %v5766 = vunpack.c.l.b16 %v5676
    %v5767 = vunpack.c.h.b16 %v5676
    %v5768 = vunpack.c.l.b16 %v5677
    %v5769 = vunpack.c.h.b16 %v5677
    %v5770 = vunpack.c.l.b16 %v5678
    %v5771 = vunpack.c.h.b16 %v5678
    %v5772 = vunpack.c.l.b16 %v5679
    %v5773 = vunpack.c.h.b16 %v5679
    %v5774 = vunpack.c.l.b16 %v5680
    %v5775 = vunpack.c.h.b16 %v5680
    %v5776 = vunpack.c.l.b16 %v5681
    %v5777 = vunpack.c.h.b16 %v5681
    %v5778 = vpack.c.b16 %v5718, %v5714
    %v5779 = vpack.c.b16 %v5719, %v5715
    %v5780 = vpack.c.b16 %v5720, %v5716
    %v5781 = vpack.c.b16 %v5721, %v5717
    %v5782 = vpack.c.b16 %v5726, %v5722
    %v5783 = vpack.c.b16 %v5727, %v5723
    %v5784 = vpack.c.b16 %v5728, %v5724
    %v5785 = vpack.c.b16 %v5729, %v5725
    %v5786 = vpack.c.b16 %v5734, %v5730
    %v5787 = vpack.c.b16 %v5735, %v5731
    %v5788 = vpack.c.b16 %v5736, %v5732
    %v5789 = vpack.c.b16 %v5737, %v5733
    %v5790 = vpack.c.b16 %v5742, %v5738
    %v5791 = vpack.c.b16 %v5743, %v5739
    %v5792 = vpack.c.b16 %v5744, %v5740
    %v5793 = vpack.c.b16 %v5745, %v5741
    %v5794 = vpack.c.b16 %v5750, %v5746
    %v5795 = vpack.c.b16 %v5751, %v5747
    %v5796 = vpack.c.b16 %v5752, %v5748
    %v5797 = vpack.c.b16 %v5753, %v5749
    %v5798 = vpack.c.b16 %v5758, %v5754
    %v5799 = vpack.c.b16 %v5759, %v5755
    %v5800 = vpack.c.b16 %v5760, %v5756
    %v5801 = vpack.c.b16 %v5761, %v5757
    %v5802 = vpack.c.b16 %v5766, %v5762
    %v5803 = vpack.c.b16 %v5767, %v5763
    %v5804 = vpack.c.b16 %v5768, %v5764
    %v5805 = vpack.c.b16 %v5769, %v5765
    %v5806 = vpack.c.b16 %v5774, %v5770
    %v5807 = vpack.c.b16 %v5775, %v5771
    %v5808 = vpack.c.b16 %v5776, %v5772
    %v5809 = vpack.c.b16 %v5777, %v5773
    %5842 = vmatprep.subr.bf16.mxu0 %v5807
    %5843 = vmatpush1.bf16.msra.mxu0 %v5806
    %5844 = vmatprep.subr.bf16.mxu0 %v5803
    %5845 = vmatpush1.bf16.msra.mxu0 %v5802
    %5846 = vmatprep.subr.bf16.mxu0 %v5799
    %5847 = vmatpush1.bf16.msra.mxu0 %v5798
    %5848 = vmatprep.subr.bf16.mxu0 %v5795
    %5849 = vmatpush1.bf16.msra.mxu0 %v5794
    %5850 = vmatprep.subr.bf16.mxu0 %v5791
    %5851 = vmatpush1.bf16.msra.mxu0 %v5790
    %5852 = vmatprep.subr.bf16.mxu0 %v5787
    %5853 = vmatpush1.bf16.msra.mxu0 %v5786
    %5854 = vmatprep.subr.bf16.mxu0 %v5783
    %5855 = vmatpush1.bf16.msra.mxu0 %v5782
    %5856 = vmatprep.subr.bf16.mxu0 %v5779
    %5857 = vmatpush1.bf16.msra.mxu0 %v5778
    %5858 = vmatprep.subr.bf16.mxu0 0
    %5859 = vmatpush2.bf16.msra.mxu0 0
    %5860 = vmatprep.subr.bf16.mxu0 0
    %5861 = vmatpush2.bf16.msra.mxu0 0
    %5862 = vmatprep.subr.bf16.mxu0 0
    %5863 = vmatpush2.bf16.msra.mxu0 0
    %5864 = vmatprep.subr.bf16.mxu0 0
    %5865 = vmatpush2.bf16.msra.mxu0 0
    %5866 = vmatprep.subr.bf16.mxu0 0
    %5867 = vmatpush2.bf16.msra.mxu0 0
    %5868 = vmatprep.subr.bf16.mxu0 0
    %5869 = vmatpush2.bf16.msra.mxu0 0
    %5870 = vmatprep.subr.bf16.mxu0 0
    %5871 = vmatpush2.bf16.msra.mxu0 0
    %5872 = vmatprep.subr.bf16.mxu0 0
    %5873 = vmatpush2.bf16.msra.mxu0 0
    %5874 = vmatprep.mubr.bf16.mxu0 0
    %5875 = vmatmul.mubr.bf16.gmra.mxu0 %v5649
    %v5876 = vpop.f32.mrf.mxu0
    %v5877 = vadd.f32 0.0, %v5876
    %v5878 = vpop.f32.mrf.mxu0
    %v5879 = vadd.f32 0.0, %v5878
    %v5880 = vpop.f32.mrf.mxu0
    %v5881 = vpop.f32.mrf.mxu0
    %5882 = vdwg.mxu0
    %5883 = vmatprep.subr.bf16.mxu0 %v5809
    %5884 = vmatpush1.bf16.msra.mxu0 %v5808
    %5885 = vmatprep.subr.bf16.mxu0 %v5805
    %5886 = vmatpush1.bf16.msra.mxu0 %v5804
    %5887 = vmatprep.subr.bf16.mxu0 %v5801
    %5888 = vmatpush1.bf16.msra.mxu0 %v5800
    %5889 = vmatprep.subr.bf16.mxu0 %v5797
    %5890 = vmatpush1.bf16.msra.mxu0 %v5796
    %5891 = vmatprep.subr.bf16.mxu0 %v5793
    %5892 = vmatpush1.bf16.msra.mxu0 %v5792
    %5893 = vmatprep.subr.bf16.mxu0 %v5789
    %5894 = vmatpush1.bf16.msra.mxu0 %v5788
    %5895 = vmatprep.subr.bf16.mxu0 %v5785
    %5896 = vmatpush1.bf16.msra.mxu0 %v5784
    %5897 = vmatprep.subr.bf16.mxu0 %v5781
    %5898 = vmatpush1.bf16.msra.mxu0 %v5780
    %5899 = vmatprep.subr.bf16.mxu0 0
    %5900 = vmatpush2.bf16.msra.mxu0 0
    %5901 = vmatprep.subr.bf16.mxu0 0
    %5902 = vmatpush2.bf16.msra.mxu0 0
    %5903 = vmatprep.subr.bf16.mxu0 0
    %5904 = vmatpush2.bf16.msra.mxu0 0
    %5905 = vmatprep.subr.bf16.mxu0 0
    %5906 = vmatpush2.bf16.msra.mxu0 0
    %5907 = vmatprep.subr.bf16.mxu0 0
    %5908 = vmatpush2.bf16.msra.mxu0 0
    %5909 = vmatprep.subr.bf16.mxu0 0
    %5910 = vmatpush2.bf16.msra.mxu0 0
    %5911 = vmatprep.subr.bf16.mxu0 0
    %5912 = vmatpush2.bf16.msra.mxu0 0
    %5913 = vmatprep.subr.bf16.mxu0 0
    %5914 = vmatpush2.bf16.msra.mxu0 0
    %5915 = vmatprep.mubr.bf16.mxu0 0
    %5916 = vmatmul.mubr.bf16.gmra.mxu0 %v5649
    %v5917 = vpop.f32.mrf.mxu0
    %v5918 = vadd.f32 0.0, %v5917
    %v5919 = vpop.f32.mrf.mxu0
    %v5920 = vadd.f32 0.0, %v5919
    %v5921 = vpop.f32.mrf.mxu0
    %v5922 = vpop.f32.mrf.mxu0
    %5923 = vdwg.mxu0
    %v5956 = vunpack.c.l.b16 %v5617
    %v5957 = vunpack.c.h.b16 %v5617
    %v5958 = vunpack.c.l.b16 %v5618
    %v5959 = vunpack.c.h.b16 %v5618
    %v5960 = vunpack.c.l.b16 %v5619
    %v5961 = vunpack.c.h.b16 %v5619
    %v5962 = vunpack.c.l.b16 %v5620
    %v5963 = vunpack.c.h.b16 %v5620
    %v5964 = vunpack.c.l.b16 %v5621
    %v5965 = vunpack.c.h.b16 %v5621
    %v5966 = vunpack.c.l.b16 %v5622
    %v5967 = vunpack.c.h.b16 %v5622
    %v5968 = vunpack.c.l.b16 %v5623
    %v5969 = vunpack.c.h.b16 %v5623
    %v5970 = vunpack.c.l.b16 %v5624
    %v5971 = vunpack.c.h.b16 %v5624
    %v5972 = vunpack.c.l.b16 %v5625
    %v5973 = vunpack.c.h.b16 %v5625
    %v5974 = vunpack.c.l.b16 %v5626
    %v5975 = vunpack.c.h.b16 %v5626
    %v5976 = vunpack.c.l.b16 %v5627
    %v5977 = vunpack.c.h.b16 %v5627
    %v5978 = vunpack.c.l.b16 %v5628
    %v5979 = vunpack.c.h.b16 %v5628
    %v5980 = vunpack.c.l.b16 %v5629
    %v5981 = vunpack.c.h.b16 %v5629
    %v5982 = vunpack.c.l.b16 %v5630
    %v5983 = vunpack.c.h.b16 %v5630
    %v5984 = vunpack.c.l.b16 %v5631
    %v5985 = vunpack.c.h.b16 %v5631
    %v5986 = vunpack.c.l.b16 %v5632
    %v5987 = vunpack.c.h.b16 %v5632
    %v5988 = vunpack.c.l.b16 %v5633
    %v5989 = vunpack.c.h.b16 %v5633
    %v5990 = vunpack.c.l.b16 %v5634
    %v5991 = vunpack.c.h.b16 %v5634
    %v5992 = vunpack.c.l.b16 %v5635
    %v5993 = vunpack.c.h.b16 %v5635
    %v5994 = vunpack.c.l.b16 %v5636
    %v5995 = vunpack.c.h.b16 %v5636
    %v5996 = vunpack.c.l.b16 %v5637
    %v5997 = vunpack.c.h.b16 %v5637
    %v5998 = vunpack.c.l.b16 %v5638
    %v5999 = vunpack.c.h.b16 %v5638
    %v6000 = vunpack.c.l.b16 %v5639
    %v6001 = vunpack.c.h.b16 %v5639
    %v6002 = vunpack.c.l.b16 %v5640
    %v6003 = vunpack.c.h.b16 %v5640
    %v6004 = vunpack.c.l.b16 %v5641
    %v6005 = vunpack.c.h.b16 %v5641
    %v6006 = vunpack.c.l.b16 %v5642
    %v6007 = vunpack.c.h.b16 %v5642
    %v6008 = vunpack.c.l.b16 %v5643
    %v6009 = vunpack.c.h.b16 %v5643
    %v6010 = vunpack.c.l.b16 %v5644
    %v6011 = vunpack.c.h.b16 %v5644
    %v6012 = vunpack.c.l.b16 %v5645
    %v6013 = vunpack.c.h.b16 %v5645
    %v6014 = vunpack.c.l.b16 %v5646
    %v6015 = vunpack.c.h.b16 %v5646
    %v6016 = vunpack.c.l.b16 %v5647
    %v6017 = vunpack.c.h.b16 %v5647
    %v6018 = vunpack.c.l.b16 %v5648
    %v6019 = vunpack.c.h.b16 %v5648
    %v6020 = vpack.c.b16 %v5960, %v5956
    %v6021 = vpack.c.b16 %v5961, %v5957
    %v6022 = vpack.c.b16 %v5962, %v5958
    %v6023 = vpack.c.b16 %v5963, %v5959
    %v6024 = vpack.c.b16 %v5968, %v5964
    %v6025 = vpack.c.b16 %v5969, %v5965
    %v6026 = vpack.c.b16 %v5970, %v5966
    %v6027 = vpack.c.b16 %v5971, %v5967
    %v6028 = vpack.c.b16 %v5976, %v5972
    %v6029 = vpack.c.b16 %v5977, %v5973
    %v6030 = vpack.c.b16 %v5978, %v5974
    %v6031 = vpack.c.b16 %v5979, %v5975
    %v6032 = vpack.c.b16 %v5984, %v5980
    %v6033 = vpack.c.b16 %v5985, %v5981
    %v6034 = vpack.c.b16 %v5986, %v5982
    %v6035 = vpack.c.b16 %v5987, %v5983
    %v6036 = vpack.c.b16 %v5992, %v5988
    %v6037 = vpack.c.b16 %v5993, %v5989
    %v6038 = vpack.c.b16 %v5994, %v5990
    %v6039 = vpack.c.b16 %v5995, %v5991
    %v6040 = vpack.c.b16 %v6000, %v5996
    %v6041 = vpack.c.b16 %v6001, %v5997
    %v6042 = vpack.c.b16 %v6002, %v5998
    %v6043 = vpack.c.b16 %v6003, %v5999
    %v6044 = vpack.c.b16 %v6008, %v6004
    %v6045 = vpack.c.b16 %v6009, %v6005
    %v6046 = vpack.c.b16 %v6010, %v6006
    %v6047 = vpack.c.b16 %v6011, %v6007
    %v6048 = vpack.c.b16 %v6016, %v6012
    %v6049 = vpack.c.b16 %v6017, %v6013
    %v6050 = vpack.c.b16 %v6018, %v6014
    %v6051 = vpack.c.b16 %v6019, %v6015
    %6084 = vmatprep.subr.bf16.mxu0 %v6049
    %6085 = vmatpush1.bf16.msra.mxu0 %v6048
    %6086 = vmatprep.subr.bf16.mxu0 %v6045
    %6087 = vmatpush1.bf16.msra.mxu0 %v6044
    %6088 = vmatprep.subr.bf16.mxu0 %v6041
    %6089 = vmatpush1.bf16.msra.mxu0 %v6040
    %6090 = vmatprep.subr.bf16.mxu0 %v6037
    %6091 = vmatpush1.bf16.msra.mxu0 %v6036
    %6092 = vmatprep.subr.bf16.mxu0 %v6033
    %6093 = vmatpush1.bf16.msra.mxu0 %v6032
    %6094 = vmatprep.subr.bf16.mxu0 %v6029
    %6095 = vmatpush1.bf16.msra.mxu0 %v6028
    %6096 = vmatprep.subr.bf16.mxu0 %v6025
    %6097 = vmatpush1.bf16.msra.mxu0 %v6024
    %6098 = vmatprep.subr.bf16.mxu0 %v6021
    %6099 = vmatpush1.bf16.msra.mxu0 %v6020
    %6100 = vmatprep.subr.bf16.mxu0 0
    %6101 = vmatpush2.bf16.msra.mxu0 0
    %6102 = vmatprep.subr.bf16.mxu0 0
    %6103 = vmatpush2.bf16.msra.mxu0 0
    %6104 = vmatprep.subr.bf16.mxu0 0
    %6105 = vmatpush2.bf16.msra.mxu0 0
    %6106 = vmatprep.subr.bf16.mxu0 0
    %6107 = vmatpush2.bf16.msra.mxu0 0
    %6108 = vmatprep.subr.bf16.mxu0 0
    %6109 = vmatpush2.bf16.msra.mxu0 0
    %6110 = vmatprep.subr.bf16.mxu0 0
    %6111 = vmatpush2.bf16.msra.mxu0 0
    %6112 = vmatprep.subr.bf16.mxu0 0
    %6113 = vmatpush2.bf16.msra.mxu0 0
    %6114 = vmatprep.subr.bf16.mxu0 0
    %6115 = vmatpush2.bf16.msra.mxu0 0
    %6116 = vmatprep.mubr.bf16.mxu0 0
    %6117 = vmatmul.mubr.bf16.gmra.mxu0 %v5616
    %v6118 = vpop.f32.mrf.mxu0
    %v6119 = vadd.f32 %v5877, %v6118
    %v6120 = vpop.f32.mrf.mxu0
    %v6121 = vadd.f32 %v5879, %v6120
    %v6122 = vpop.f32.mrf.mxu0
    %v6123 = vpop.f32.mrf.mxu0
    %6124 = vdwg.mxu0
    %6125 = vmatprep.subr.bf16.mxu0 %v6051
    %6126 = vmatpush1.bf16.msra.mxu0 %v6050
    %6127 = vmatprep.subr.bf16.mxu0 %v6047
    %6128 = vmatpush1.bf16.msra.mxu0 %v6046
    %6129 = vmatprep.subr.bf16.mxu0 %v6043
    %6130 = vmatpush1.bf16.msra.mxu0 %v6042
    %6131 = vmatprep.subr.bf16.mxu0 %v6039
    %6132 = vmatpush1.bf16.msra.mxu0 %v6038
    %6133 = vmatprep.subr.bf16.mxu0 %v6035
    %6134 = vmatpush1.bf16.msra.mxu0 %v6034
    %6135 = vmatprep.subr.bf16.mxu0 %v6031
    %6136 = vmatpush1.bf16.msra.mxu0 %v6030
    %6137 = vmatprep.subr.bf16.mxu0 %v6027
    %6138 = vmatpush1.bf16.msra.mxu0 %v6026
    %6139 = vmatprep.subr.bf16.mxu0 %v6023
    %6140 = vmatpush1.bf16.msra.mxu0 %v6022
    %6141 = vmatprep.subr.bf16.mxu0 0
    %6142 = vmatpush2.bf16.msra.mxu0 0
    %6143 = vmatprep.subr.bf16.mxu0 0
    %6144 = vmatpush2.bf16.msra.mxu0 0
    %6145 = vmatprep.subr.bf16.mxu0 0
    %6146 = vmatpush2.bf16.msra.mxu0 0
    %6147 = vmatprep.subr.bf16.mxu0 0
    %6148 = vmatpush2.bf16.msra.mxu0 0
    %6149 = vmatprep.subr.bf16.mxu0 0
    %6150 = vmatpush2.bf16.msra.mxu0 0
    %6151 = vmatprep.subr.bf16.mxu0 0
    %6152 = vmatpush2.bf16.msra.mxu0 0
    %6153 = vmatprep.subr.bf16.mxu0 0
    %6154 = vmatpush2.bf16.msra.mxu0 0
    %6155 = vmatprep.subr.bf16.mxu0 0
    %6156 = vmatpush2.bf16.msra.mxu0 0
    %6157 = vmatprep.mubr.bf16.mxu0 0
    %6158 = vmatmul.mubr.bf16.gmra.mxu0 %v5616
    %v6159 = vpop.f32.mrf.mxu0
    %v6160 = vadd.f32 %v5918, %v6159
    %v6161 = vpop.f32.mrf.mxu0
    %v6162 = vadd.f32 %v5920, %v6161
    %v6163 = vpop.f32.mrf.mxu0
    %v6164 = vpop.f32.mrf.mxu0
    %6165 = vdwg.mxu0
    %v6166 = vadd.f32 %v6119, %v142
    %v6167 = vadd.f32 %v6121, %v146
    %v6168 = vadd.f32 %v6160, %v150
    %v6169 = vadd.f32 %v6162, %v154
    %v6170 = vxor.u32 %v6166, 2147483648
    %v6171 = vxor.u32 %v6167, 2147483648
    %v6172 = vxor.u32 %v6168, 2147483648
    %v6173 = vmul.f32 %v6170, 1.442695
    %v6174 = vpow.pop %v6173
    %v6175 = vmul.f32 %v6171, 1.442695
    %v6176 = vpow.pop %v6175
    %v6177 = vmul.f32 %v6172, 1.442695
    %v6178 = vpow.pop %v6177
    %v6179 = vadd.f32 %v6174, 1.0
    %v6180 = vadd.f32 %v6176, 1.0
    %v6181 = vadd.f32 %v6178, 1.0
    %v6182 = vrcp.pop %v6179
    %v6183 = vmul.f32 1.0, %v6182
    %v6184 = vrcp.pop %v6180
    %v6185 = vmul.f32 1.0, %v6184
    %v6186 = vrcp.pop %v6181
    %v6187 = vmul.f32 1.0, %v6186
    %v6188 = vtanh.pop %v6169
    %v6189 = vmul.f32 %v6185, %v5188
    %v6190 = vmul.f32 %v6183, %v6188
    %v6191 = vadd.f32 %v6189, %v6190
    %v6192 = vtanh.pop %v6191
    %v6193 = vmul.f32 %v6187, %v6192
    %v6194 = vsel %vm5613, %v6193, %v5187
    %v6195 = vsel %vm5613, %v6191, %v5188
    %v6196 = vsel %vm5613, %v6193, 0.0
    %v6197 = vpack.c.bf16 %v6196, %v6196
    %s6198 = scalar_lea.vmem [#allocation13], 20
    %6199 = vst [vmem:[%s6198] sm:$0xf] %v6197
    %s6200 = sadd.s32 %s107, 6
    %v6201 = vstv %s6200
    %vm6202 = vcmp.lt.s32.totalorder %v6201, %v108
    %s6203 = scalar_lea.vmem [#allocation4], 24
    %v6204 = vld [vmem:[%s6203] sm:$0xf]
    %v6205 = vld [vmem:[#allocation7] sm:$0xff]
    %v6206 = vld [vmem:[#allocation7 + $0x8] sm:$0xff]
    %v6207 = vld [vmem:[#allocation7 + $0x10] sm:$0xff]
    %v6208 = vld [vmem:[#allocation7 + $0x18] sm:$0xff]
    %v6209 = vld [vmem:[#allocation9] sm:$0xff]
    %v6210 = vld [vmem:[#allocation9 + $0x8] sm:$0xff]
    %v6211 = vld [vmem:[#allocation9 + $0x10] sm:$0xff]
    %v6212 = vld [vmem:[#allocation9 + $0x18] sm:$0xff]
    %v6213 = vld [vmem:[#allocation9 + $0x20] sm:$0xff]
    %v6214 = vld [vmem:[#allocation9 + $0x28] sm:$0xff]
    %v6215 = vld [vmem:[#allocation9 + $0x30] sm:$0xff]
    %v6216 = vld [vmem:[#allocation9 + $0x38] sm:$0xff]
    %v6217 = vld [vmem:[#allocation9 + $0x40] sm:$0xff]
    %v6218 = vld [vmem:[#allocation9 + $0x48] sm:$0xff]
    %v6219 = vld [vmem:[#allocation9 + $0x50] sm:$0xff]
    %v6220 = vld [vmem:[#allocation9 + $0x58] sm:$0xff]
    %v6221 = vld [vmem:[#allocation9 + $0x60] sm:$0xff]
    %v6222 = vld [vmem:[#allocation9 + $0x68] sm:$0xff]
    %v6223 = vld [vmem:[#allocation9 + $0x70] sm:$0xff]
    %v6224 = vld [vmem:[#allocation9 + $0x78] sm:$0xff]
    %v6225 = vld [vmem:[#allocation9 + $0x80] sm:$0xff]
    %v6226 = vld [vmem:[#allocation9 + $0x88] sm:$0xff]
    %v6227 = vld [vmem:[#allocation9 + $0x90] sm:$0xff]
    %v6228 = vld [vmem:[#allocation9 + $0x98] sm:$0xff]
    %v6229 = vld [vmem:[#allocation9 + $0xa0] sm:$0xff]
    %v6230 = vld [vmem:[#allocation9 + $0xa8] sm:$0xff]
    %v6231 = vld [vmem:[#allocation9 + $0xb0] sm:$0xff]
    %v6232 = vld [vmem:[#allocation9 + $0xb8] sm:$0xff]
    %v6233 = vld [vmem:[#allocation9 + $0xc0] sm:$0xff]
    %v6234 = vld [vmem:[#allocation9 + $0xc8] sm:$0xff]
    %v6235 = vld [vmem:[#allocation9 + $0xd0] sm:$0xff]
    %v6236 = vld [vmem:[#allocation9 + $0xd8] sm:$0xff]
    %v6237 = vld [vmem:[#allocation9 + $0xe0] sm:$0xff]
    %v6238 = vld [vmem:[#allocation9 + $0xe8] sm:$0xff]
    %v6239 = vld [vmem:[#allocation9 + $0xf0] sm:$0xff]
    %v6240 = vld [vmem:[#allocation9 + $0xf8] sm:$0xff]
    %v6273 = vunpack.c.l.b16 %v6209
    %v6274 = vunpack.c.h.b16 %v6209
    %v6275 = vunpack.c.l.b16 %v6210
    %v6276 = vunpack.c.h.b16 %v6210
    %v6277 = vunpack.c.l.b16 %v6211
    %v6278 = vunpack.c.h.b16 %v6211
    %v6279 = vunpack.c.l.b16 %v6212
    %v6280 = vunpack.c.h.b16 %v6212
    %v6281 = vunpack.c.l.b16 %v6213
    %v6282 = vunpack.c.h.b16 %v6213
    %v6283 = vunpack.c.l.b16 %v6214
    %v6284 = vunpack.c.h.b16 %v6214
    %v6285 = vunpack.c.l.b16 %v6215
    %v6286 = vunpack.c.h.b16 %v6215
    %v6287 = vunpack.c.l.b16 %v6216
    %v6288 = vunpack.c.h.b16 %v6216
    %v6289 = vunpack.c.l.b16 %v6217
    %v6290 = vunpack.c.h.b16 %v6217
    %v6291 = vunpack.c.l.b16 %v6218
    %v6292 = vunpack.c.h.b16 %v6218
    %v6293 = vunpack.c.l.b16 %v6219
    %v6294 = vunpack.c.h.b16 %v6219
    %v6295 = vunpack.c.l.b16 %v6220
    %v6296 = vunpack.c.h.b16 %v6220
    %v6297 = vunpack.c.l.b16 %v6221
    %v6298 = vunpack.c.h.b16 %v6221
    %v6299 = vunpack.c.l.b16 %v6222
    %v6300 = vunpack.c.h.b16 %v6222
    %v6301 = vunpack.c.l.b16 %v6223
    %v6302 = vunpack.c.h.b16 %v6223
    %v6303 = vunpack.c.l.b16 %v6224
    %v6304 = vunpack.c.h.b16 %v6224
    %v6305 = vunpack.c.l.b16 %v6225
    %v6306 = vunpack.c.h.b16 %v6225
    %v6307 = vunpack.c.l.b16 %v6226
    %v6308 = vunpack.c.h.b16 %v6226
    %v6309 = vunpack.c.l.b16 %v6227
    %v6310 = vunpack.c.h.b16 %v6227
    %v6311 = vunpack.c.l.b16 %v6228
    %v6312 = vunpack.c.h.b16 %v6228
    %v6313 = vunpack.c.l.b16 %v6229
    %v6314 = vunpack.c.h.b16 %v6229
    %v6315 = vunpack.c.l.b16 %v6230
    %v6316 = vunpack.c.h.b16 %v6230
    %v6317 = vunpack.c.l.b16 %v6231
    %v6318 = vunpack.c.h.b16 %v6231
    %v6319 = vunpack.c.l.b16 %v6232
    %v6320 = vunpack.c.h.b16 %v6232
    %v6321 = vunpack.c.l.b16 %v6233
    %v6322 = vunpack.c.h.b16 %v6233
    %v6323 = vunpack.c.l.b16 %v6234
    %v6324 = vunpack.c.h.b16 %v6234
    %v6325 = vunpack.c.l.b16 %v6235
    %v6326 = vunpack.c.h.b16 %v6235
    %v6327 = vunpack.c.l.b16 %v6236
    %v6328 = vunpack.c.h.b16 %v6236
    %v6329 = vunpack.c.l.b16 %v6237
    %v6330 = vunpack.c.h.b16 %v6237
    %v6331 = vunpack.c.l.b16 %v6238
    %v6332 = vunpack.c.h.b16 %v6238
    %v6333 = vunpack.c.l.b16 %v6239
    %v6334 = vunpack.c.h.b16 %v6239
    %v6335 = vunpack.c.l.b16 %v6240
    %v6336 = vunpack.c.h.b16 %v6240
    %v6337 = vpack.c.b16 %v6277, %v6273
    %v6338 = vpack.c.b16 %v6278, %v6274
    %v6339 = vpack.c.b16 %v6279, %v6275
    %v6340 = vpack.c.b16 %v6280, %v6276
    %v6341 = vpack.c.b16 %v6285, %v6281
    %v6342 = vpack.c.b16 %v6286, %v6282
    %v6343 = vpack.c.b16 %v6287, %v6283
    %v6344 = vpack.c.b16 %v6288, %v6284
    %v6345 = vpack.c.b16 %v6293, %v6289
    %v6346 = vpack.c.b16 %v6294, %v6290
    %v6347 = vpack.c.b16 %v6295, %v6291
    %v6348 = vpack.c.b16 %v6296, %v6292
    %v6349 = vpack.c.b16 %v6301, %v6297
    %v6350 = vpack.c.b16 %v6302, %v6298
    %v6351 = vpack.c.b16 %v6303, %v6299
    %v6352 = vpack.c.b16 %v6304, %v6300
    %v6353 = vpack.c.b16 %v6309, %v6305
    %v6354 = vpack.c.b16 %v6310, %v6306
    %v6355 = vpack.c.b16 %v6311, %v6307
    %v6356 = vpack.c.b16 %v6312, %v6308
    %v6357 = vpack.c.b16 %v6317, %v6313
    %v6358 = vpack.c.b16 %v6318, %v6314
    %v6359 = vpack.c.b16 %v6319, %v6315
    %v6360 = vpack.c.b16 %v6320, %v6316
    %v6361 = vpack.c.b16 %v6325, %v6321
    %v6362 = vpack.c.b16 %v6326, %v6322
    %v6363 = vpack.c.b16 %v6327, %v6323
    %v6364 = vpack.c.b16 %v6328, %v6324
    %v6365 = vpack.c.b16 %v6333, %v6329
    %v6366 = vpack.c.b16 %v6334, %v6330
    %v6367 = vpack.c.b16 %v6335, %v6331
    %v6368 = vpack.c.b16 %v6336, %v6332
    %6401 = vmatprep.subr.bf16.mxu0 %v6366
    %6402 = vmatpush1.bf16.msra.mxu0 %v6365
    %6403 = vmatprep.subr.bf16.mxu0 %v6362
    %6404 = vmatpush1.bf16.msra.mxu0 %v6361
    %6405 = vmatprep.subr.bf16.mxu0 %v6358
    %6406 = vmatpush1.bf16.msra.mxu0 %v6357
    %6407 = vmatprep.subr.bf16.mxu0 %v6354
    %6408 = vmatpush1.bf16.msra.mxu0 %v6353
    %6409 = vmatprep.subr.bf16.mxu0 %v6350
    %6410 = vmatpush1.bf16.msra.mxu0 %v6349
    %6411 = vmatprep.subr.bf16.mxu0 %v6346
    %6412 = vmatpush1.bf16.msra.mxu0 %v6345
    %6413 = vmatprep.subr.bf16.mxu0 %v6342
    %6414 = vmatpush1.bf16.msra.mxu0 %v6341
    %6415 = vmatprep.subr.bf16.mxu0 %v6338
    %6416 = vmatpush1.bf16.msra.mxu0 %v6337
    %6417 = vmatprep.subr.bf16.mxu0 0
    %6418 = vmatpush2.bf16.msra.mxu0 0
    %6419 = vmatprep.subr.bf16.mxu0 0
    %6420 = vmatpush2.bf16.msra.mxu0 0
    %6421 = vmatprep.subr.bf16.mxu0 0
    %6422 = vmatpush2.bf16.msra.mxu0 0
    %6423 = vmatprep.subr.bf16.mxu0 0
    %6424 = vmatpush2.bf16.msra.mxu0 0
    %6425 = vmatprep.subr.bf16.mxu0 0
    %6426 = vmatpush2.bf16.msra.mxu0 0
    %6427 = vmatprep.subr.bf16.mxu0 0
    %6428 = vmatpush2.bf16.msra.mxu0 0
    %6429 = vmatprep.subr.bf16.mxu0 0
    %6430 = vmatpush2.bf16.msra.mxu0 0
    %6431 = vmatprep.subr.bf16.mxu0 0
    %6432 = vmatpush2.bf16.msra.mxu0 0
    %6433 = vmatprep.mubr.bf16.mxu0 0
    %6434 = vmatmul.mubr.bf16.gmra.mxu0 %v5616
    %v6435 = vpop.f32.mrf.mxu0
    %v6436 = vadd.f32 0.0, %v6435
    %v6437 = vpop.f32.mrf.mxu0
    %v6438 = vadd.f32 0.0, %v6437
    %v6439 = vpop.f32.mrf.mxu0
    %v6440 = vpop.f32.mrf.mxu0
    %6441 = vdwg.mxu0
    %6442 = vmatprep.subr.bf16.mxu0 %v6368
    %6443 = vmatpush1.bf16.msra.mxu0 %v6367
    %6444 = vmatprep.subr.bf16.mxu0 %v6364
    %6445 = vmatpush1.bf16.msra.mxu0 %v6363
    %6446 = vmatprep.subr.bf16.mxu0 %v6360
    %6447 = vmatpush1.bf16.msra.mxu0 %v6359
    %6448 = vmatprep.subr.bf16.mxu0 %v6356
    %6449 = vmatpush1.bf16.msra.mxu0 %v6355
    %6450 = vmatprep.subr.bf16.mxu0 %v6352
    %6451 = vmatpush1.bf16.msra.mxu0 %v6351
    %6452 = vmatprep.subr.bf16.mxu0 %v6348
    %6453 = vmatpush1.bf16.msra.mxu0 %v6347
    %6454 = vmatprep.subr.bf16.mxu0 %v6344
    %6455 = vmatpush1.bf16.msra.mxu0 %v6343
    %6456 = vmatprep.subr.bf16.mxu0 %v6340
    %6457 = vmatpush1.bf16.msra.mxu0 %v6339
    %6458 = vmatprep.subr.bf16.mxu0 0
    %6459 = vmatpush2.bf16.msra.mxu0 0
    %6460 = vmatprep.subr.bf16.mxu0 0
    %6461 = vmatpush2.bf16.msra.mxu0 0
    %6462 = vmatprep.subr.bf16.mxu0 0
    %6463 = vmatpush2.bf16.msra.mxu0 0
    %6464 = vmatprep.subr.bf16.mxu0 0
    %6465 = vmatpush2.bf16.msra.mxu0 0
    %6466 = vmatprep.subr.bf16.mxu0 0
    %6467 = vmatpush2.bf16.msra.mxu0 0
    %6468 = vmatprep.subr.bf16.mxu0 0
    %6469 = vmatpush2.bf16.msra.mxu0 0
    %6470 = vmatprep.subr.bf16.mxu0 0
    %6471 = vmatpush2.bf16.msra.mxu0 0
    %6472 = vmatprep.subr.bf16.mxu0 0
    %6473 = vmatpush2.bf16.msra.mxu0 0
    %6474 = vmatprep.mubr.bf16.mxu0 0
    %6475 = vmatmul.mubr.bf16.gmra.mxu0 %v5616
    %v6476 = vpop.f32.mrf.mxu0
    %v6477 = vadd.f32 0.0, %v6476
    %v6478 = vpop.f32.mrf.mxu0
    %v6479 = vadd.f32 0.0, %v6478
    %v6480 = vpop.f32.mrf.mxu0
    %v6481 = vpop.f32.mrf.mxu0
    %6482 = vdwg.mxu0
    %v6487 = vunpack.c.l.b16 %v6205
    %v6488 = vunpack.c.h.b16 %v6205
    %v6489 = vunpack.c.l.b16 %v6206
    %v6490 = vunpack.c.h.b16 %v6206
    %v6491 = vunpack.c.l.b16 %v6207
    %v6492 = vunpack.c.h.b16 %v6207
    %v6493 = vunpack.c.l.b16 %v6208
    %v6494 = vunpack.c.h.b16 %v6208
    %v6495 = vpack.c.b16 %v6491, %v6487
    %v6496 = vpack.c.b16 %v6492, %v6488
    %v6497 = vpack.c.b16 %v6493, %v6489
    %v6498 = vpack.c.b16 %v6494, %v6490
    %v6504 = vsel %vm461, %v6204, 0
    %6506 = vmatprep.subr.bf16.mxu0 0
    %6507 = vmatpush1.bf16.msra.mxu0 0
    %6508 = vmatprep.subr.bf16.mxu0 0
    %6509 = vmatpush1.bf16.msra.mxu0 0
    %6510 = vmatprep.subr.bf16.mxu0 0
    %6511 = vmatpush1.bf16.msra.mxu0 0
    %6512 = vmatprep.subr.bf16.mxu0 0
    %6513 = vmatpush1.bf16.msra.mxu0 0
    %6514 = vmatprep.subr.bf16.mxu0 0
    %6515 = vmatpush1.bf16.msra.mxu0 0
    %6516 = vmatprep.subr.bf16.mxu0 0
    %6517 = vmatpush1.bf16.msra.mxu0 0
    %6518 = vmatprep.subr.bf16.mxu0 0
    %6519 = vmatpush1.bf16.msra.mxu0 0
    %6520 = vmatprep.subr.bf16.mxu0 %v6496
    %6521 = vmatpush1.bf16.msra.mxu0 %v6495
    %6522 = vmatprep.subr.bf16.mxu0 0
    %6523 = vmatpush2.bf16.msra.mxu0 0
    %6524 = vmatprep.subr.bf16.mxu0 0
    %6525 = vmatpush2.bf16.msra.mxu0 0
    %6526 = vmatprep.subr.bf16.mxu0 0
    %6527 = vmatpush2.bf16.msra.mxu0 0
    %6528 = vmatprep.subr.bf16.mxu0 0
    %6529 = vmatpush2.bf16.msra.mxu0 0
    %6530 = vmatprep.subr.bf16.mxu0 0
    %6531 = vmatpush2.bf16.msra.mxu0 0
    %6532 = vmatprep.subr.bf16.mxu0 0
    %6533 = vmatpush2.bf16.msra.mxu0 0
    %6534 = vmatprep.subr.bf16.mxu0 0
    %6535 = vmatpush2.bf16.msra.mxu0 0
    %6536 = vmatprep.subr.bf16.mxu0 0
    %6537 = vmatpush2.bf16.msra.mxu0 0
    %6538 = vmatprep.mubr.bf16.mxu0 0
    %6539 = vmatmul.mubr.bf16.gmra.mxu0 %v6504
    %v6540 = vpop.f32.mrf.mxu0
    %v6541 = vadd.f32 %v6436, %v6540
    %v6542 = vpop.f32.mrf.mxu0
    %v6543 = vadd.f32 %v6438, %v6542
    %v6544 = vpop.f32.mrf.mxu0
    %v6545 = vpop.f32.mrf.mxu0
    %6546 = vdwg.mxu0
    %6547 = vmatprep.subr.bf16.mxu0 0
    %6548 = vmatpush1.bf16.msra.mxu0 0
    %6549 = vmatprep.subr.bf16.mxu0 0
    %6550 = vmatpush1.bf16.msra.mxu0 0
    %6551 = vmatprep.subr.bf16.mxu0 0
    %6552 = vmatpush1.bf16.msra.mxu0 0
    %6553 = vmatprep.subr.bf16.mxu0 0
    %6554 = vmatpush1.bf16.msra.mxu0 0
    %6555 = vmatprep.subr.bf16.mxu0 0
    %6556 = vmatpush1.bf16.msra.mxu0 0
    %6557 = vmatprep.subr.bf16.mxu0 0
    %6558 = vmatpush1.bf16.msra.mxu0 0
    %6559 = vmatprep.subr.bf16.mxu0 0
    %6560 = vmatpush1.bf16.msra.mxu0 0
    %6561 = vmatprep.subr.bf16.mxu0 %v6498
    %6562 = vmatpush1.bf16.msra.mxu0 %v6497
    %6563 = vmatprep.subr.bf16.mxu0 0
    %6564 = vmatpush2.bf16.msra.mxu0 0
    %6565 = vmatprep.subr.bf16.mxu0 0
    %6566 = vmatpush2.bf16.msra.mxu0 0
    %6567 = vmatprep.subr.bf16.mxu0 0
    %6568 = vmatpush2.bf16.msra.mxu0 0
    %6569 = vmatprep.subr.bf16.mxu0 0
    %6570 = vmatpush2.bf16.msra.mxu0 0
    %6571 = vmatprep.subr.bf16.mxu0 0
    %6572 = vmatpush2.bf16.msra.mxu0 0
    %6573 = vmatprep.subr.bf16.mxu0 0
    %6574 = vmatpush2.bf16.msra.mxu0 0
    %6575 = vmatprep.subr.bf16.mxu0 0
    %6576 = vmatpush2.bf16.msra.mxu0 0
    %6577 = vmatprep.subr.bf16.mxu0 0
    %6578 = vmatpush2.bf16.msra.mxu0 0
    %6579 = vmatprep.mubr.bf16.mxu0 0
    %6580 = vmatmul.mubr.bf16.gmra.mxu0 %v6504
    %v6581 = vpop.f32.mrf.mxu0
    %v6582 = vadd.f32 %v6477, %v6581
    %v6583 = vpop.f32.mrf.mxu0
    %v6584 = vadd.f32 %v6479, %v6583
    %v6585 = vpop.f32.mrf.mxu0
    %v6586 = vpop.f32.mrf.mxu0
    %6587 = vdwg.mxu0
    %v6588 = vadd.f32 %v6541, %v120
    %v6589 = vadd.f32 %v6543, %v124
    %v6590 = vadd.f32 %v6582, %v128
    %v6591 = vadd.f32 %v6584, %v132
    %v6592 = vxor.u32 %v6588, 2147483648
    %v6593 = vxor.u32 %v6589, 2147483648
    %v6594 = vxor.u32 %v6590, 2147483648
    %v6595 = vmul.f32 %v6592, 1.442695
    %v6596 = vpow.pop %v6595
    %v6597 = vmul.f32 %v6593, 1.442695
    %v6598 = vpow.pop %v6597
    %v6599 = vmul.f32 %v6594, 1.442695
    %v6600 = vpow.pop %v6599
    %v6601 = vadd.f32 %v6596, 1.0
    %v6602 = vadd.f32 %v6598, 1.0
    %v6603 = vadd.f32 %v6600, 1.0
    %v6604 = vrcp.pop %v6601
    %v6605 = vmul.f32 1.0, %v6604
    %v6606 = vrcp.pop %v6602
    %v6607 = vmul.f32 1.0, %v6606
    %v6608 = vrcp.pop %v6603
    %v6609 = vmul.f32 1.0, %v6608
    %v6610 = vtanh.pop %v6591
    %v6611 = vmul.f32 %v6607, %v5615
    %v6612 = vmul.f32 %v6605, %v6610
    %v6613 = vadd.f32 %v6611, %v6612
    %v6614 = vtanh.pop %v6613
    %v6615 = vmul.f32 %v6609, %v6614
    %v6616 = vsel %vm6202, 1, 0
    %6617 = vset.pattern.permute.xlu0 0
    %6618 = vperm.xlu0 %6617, %v6616
    %v6619 = vpop.permute.xlu0 %6618
    %vm6620 = vcmp.eq.s32.totalorder %v6619, 1
    %v6621 = vsel %vm6620, %v6615, %v5614
    %v6622 = vsel %vm6620, %v6613, %v5615
    %v6623 = vpack.c.bf16 %v6621, %v6621
    %v6624 = vld [vmem:[#allocation10] sm:$0xff]
    %v6625 = vld [vmem:[#allocation10 + $0x8] sm:$0xff]
    %v6626 = vld [vmem:[#allocation10 + $0x10] sm:$0xff]
    %v6627 = vld [vmem:[#allocation10 + $0x18] sm:$0xff]
    %v6628 = vld [vmem:[#allocation10 + $0x20] sm:$0xff]
    %v6629 = vld [vmem:[#allocation10 + $0x28] sm:$0xff]
    %v6630 = vld [vmem:[#allocation10 + $0x30] sm:$0xff]
    %v6631 = vld [vmem:[#allocation10 + $0x38] sm:$0xff]
    %v6632 = vld [vmem:[#allocation10 + $0x40] sm:$0xff]
    %v6633 = vld [vmem:[#allocation10 + $0x48] sm:$0xff]
    %v6634 = vld [vmem:[#allocation10 + $0x50] sm:$0xff]
    %v6635 = vld [vmem:[#allocation10 + $0x58] sm:$0xff]
    %v6636 = vld [vmem:[#allocation10 + $0x60] sm:$0xff]
    %v6637 = vld [vmem:[#allocation10 + $0x68] sm:$0xff]
    %v6638 = vld [vmem:[#allocation10 + $0x70] sm:$0xff]
    %v6639 = vld [vmem:[#allocation10 + $0x78] sm:$0xff]
    %v6640 = vld [vmem:[#allocation10 + $0x80] sm:$0xff]
    %v6641 = vld [vmem:[#allocation10 + $0x88] sm:$0xff]
    %v6642 = vld [vmem:[#allocation10 + $0x90] sm:$0xff]
    %v6643 = vld [vmem:[#allocation10 + $0x98] sm:$0xff]
    %v6644 = vld [vmem:[#allocation10 + $0xa0] sm:$0xff]
    %v6645 = vld [vmem:[#allocation10 + $0xa8] sm:$0xff]
    %v6646 = vld [vmem:[#allocation10 + $0xb0] sm:$0xff]
    %v6647 = vld [vmem:[#allocation10 + $0xb8] sm:$0xff]
    %v6648 = vld [vmem:[#allocation10 + $0xc0] sm:$0xff]
    %v6649 = vld [vmem:[#allocation10 + $0xc8] sm:$0xff]
    %v6650 = vld [vmem:[#allocation10 + $0xd0] sm:$0xff]
    %v6651 = vld [vmem:[#allocation10 + $0xd8] sm:$0xff]
    %v6652 = vld [vmem:[#allocation10 + $0xe0] sm:$0xff]
    %v6653 = vld [vmem:[#allocation10 + $0xe8] sm:$0xff]
    %v6654 = vld [vmem:[#allocation10 + $0xf0] sm:$0xff]
    %v6655 = vld [vmem:[#allocation10 + $0xf8] sm:$0xff]
    %v6656 = vpack.c.bf16 %v6194, %v6194
    %v6657 = vld [vmem:[#allocation12] sm:$0xff]
    %v6658 = vld [vmem:[#allocation12 + $0x8] sm:$0xff]
    %v6659 = vld [vmem:[#allocation12 + $0x10] sm:$0xff]
    %v6660 = vld [vmem:[#allocation12 + $0x18] sm:$0xff]
    %v6661 = vld [vmem:[#allocation12 + $0x20] sm:$0xff]
    %v6662 = vld [vmem:[#allocation12 + $0x28] sm:$0xff]
    %v6663 = vld [vmem:[#allocation12 + $0x30] sm:$0xff]
    %v6664 = vld [vmem:[#allocation12 + $0x38] sm:$0xff]
    %v6665 = vld [vmem:[#allocation12 + $0x40] sm:$0xff]
    %v6666 = vld [vmem:[#allocation12 + $0x48] sm:$0xff]
    %v6667 = vld [vmem:[#allocation12 + $0x50] sm:$0xff]
    %v6668 = vld [vmem:[#allocation12 + $0x58] sm:$0xff]
    %v6669 = vld [vmem:[#allocation12 + $0x60] sm:$0xff]
    %v6670 = vld [vmem:[#allocation12 + $0x68] sm:$0xff]
    %v6671 = vld [vmem:[#allocation12 + $0x70] sm:$0xff]
    %v6672 = vld [vmem:[#allocation12 + $0x78] sm:$0xff]
    %v6673 = vld [vmem:[#allocation12 + $0x80] sm:$0xff]
    %v6674 = vld [vmem:[#allocation12 + $0x88] sm:$0xff]
    %v6675 = vld [vmem:[#allocation12 + $0x90] sm:$0xff]
    %v6676 = vld [vmem:[#allocation12 + $0x98] sm:$0xff]
    %v6677 = vld [vmem:[#allocation12 + $0xa0] sm:$0xff]
    %v6678 = vld [vmem:[#allocation12 + $0xa8] sm:$0xff]
    %v6679 = vld [vmem:[#allocation12 + $0xb0] sm:$0xff]
    %v6680 = vld [vmem:[#allocation12 + $0xb8] sm:$0xff]
    %v6681 = vld [vmem:[#allocation12 + $0xc0] sm:$0xff]
    %v6682 = vld [vmem:[#allocation12 + $0xc8] sm:$0xff]
    %v6683 = vld [vmem:[#allocation12 + $0xd0] sm:$0xff]
    %v6684 = vld [vmem:[#allocation12 + $0xd8] sm:$0xff]
    %v6685 = vld [vmem:[#allocation12 + $0xe0] sm:$0xff]
    %v6686 = vld [vmem:[#allocation12 + $0xe8] sm:$0xff]
    %v6687 = vld [vmem:[#allocation12 + $0xf0] sm:$0xff]
    %v6688 = vld [vmem:[#allocation12 + $0xf8] sm:$0xff]
    %v6721 = vunpack.c.l.b16 %v6657
    %v6722 = vunpack.c.h.b16 %v6657
    %v6723 = vunpack.c.l.b16 %v6658
    %v6724 = vunpack.c.h.b16 %v6658
    %v6725 = vunpack.c.l.b16 %v6659
    %v6726 = vunpack.c.h.b16 %v6659
    %v6727 = vunpack.c.l.b16 %v6660
    %v6728 = vunpack.c.h.b16 %v6660
    %v6729 = vunpack.c.l.b16 %v6661
    %v6730 = vunpack.c.h.b16 %v6661
    %v6731 = vunpack.c.l.b16 %v6662
    %v6732 = vunpack.c.h.b16 %v6662
    %v6733 = vunpack.c.l.b16 %v6663
    %v6734 = vunpack.c.h.b16 %v6663
    %v6735 = vunpack.c.l.b16 %v6664
    %v6736 = vunpack.c.h.b16 %v6664
    %v6737 = vunpack.c.l.b16 %v6665
    %v6738 = vunpack.c.h.b16 %v6665
    %v6739 = vunpack.c.l.b16 %v6666
    %v6740 = vunpack.c.h.b16 %v6666
    %v6741 = vunpack.c.l.b16 %v6667
    %v6742 = vunpack.c.h.b16 %v6667
    %v6743 = vunpack.c.l.b16 %v6668
    %v6744 = vunpack.c.h.b16 %v6668
    %v6745 = vunpack.c.l.b16 %v6669
    %v6746 = vunpack.c.h.b16 %v6669
    %v6747 = vunpack.c.l.b16 %v6670
    %v6748 = vunpack.c.h.b16 %v6670
    %v6749 = vunpack.c.l.b16 %v6671
    %v6750 = vunpack.c.h.b16 %v6671
    %v6751 = vunpack.c.l.b16 %v6672
    %v6752 = vunpack.c.h.b16 %v6672
    %v6753 = vunpack.c.l.b16 %v6673
    %v6754 = vunpack.c.h.b16 %v6673
    %v6755 = vunpack.c.l.b16 %v6674
    %v6756 = vunpack.c.h.b16 %v6674
    %v6757 = vunpack.c.l.b16 %v6675
    %v6758 = vunpack.c.h.b16 %v6675
    %v6759 = vunpack.c.l.b16 %v6676
    %v6760 = vunpack.c.h.b16 %v6676
    %v6761 = vunpack.c.l.b16 %v6677
    %v6762 = vunpack.c.h.b16 %v6677
    %v6763 = vunpack.c.l.b16 %v6678
    %v6764 = vunpack.c.h.b16 %v6678
    %v6765 = vunpack.c.l.b16 %v6679
    %v6766 = vunpack.c.h.b16 %v6679
    %v6767 = vunpack.c.l.b16 %v6680
    %v6768 = vunpack.c.h.b16 %v6680
    %v6769 = vunpack.c.l.b16 %v6681
    %v6770 = vunpack.c.h.b16 %v6681
    %v6771 = vunpack.c.l.b16 %v6682
    %v6772 = vunpack.c.h.b16 %v6682
    %v6773 = vunpack.c.l.b16 %v6683
    %v6774 = vunpack.c.h.b16 %v6683
    %v6775 = vunpack.c.l.b16 %v6684
    %v6776 = vunpack.c.h.b16 %v6684
    %v6777 = vunpack.c.l.b16 %v6685
    %v6778 = vunpack.c.h.b16 %v6685
    %v6779 = vunpack.c.l.b16 %v6686
    %v6780 = vunpack.c.h.b16 %v6686
    %v6781 = vunpack.c.l.b16 %v6687
    %v6782 = vunpack.c.h.b16 %v6687
    %v6783 = vunpack.c.l.b16 %v6688
    %v6784 = vunpack.c.h.b16 %v6688
    %v6785 = vpack.c.b16 %v6725, %v6721
    %v6786 = vpack.c.b16 %v6726, %v6722
    %v6787 = vpack.c.b16 %v6727, %v6723
    %v6788 = vpack.c.b16 %v6728, %v6724
    %v6789 = vpack.c.b16 %v6733, %v6729
    %v6790 = vpack.c.b16 %v6734, %v6730
    %v6791 = vpack.c.b16 %v6735, %v6731
    %v6792 = vpack.c.b16 %v6736, %v6732
    %v6793 = vpack.c.b16 %v6741, %v6737
    %v6794 = vpack.c.b16 %v6742, %v6738
    %v6795 = vpack.c.b16 %v6743, %v6739
    %v6796 = vpack.c.b16 %v6744, %v6740
    %v6797 = vpack.c.b16 %v6749, %v6745
    %v6798 = vpack.c.b16 %v6750, %v6746
    %v6799 = vpack.c.b16 %v6751, %v6747
    %v6800 = vpack.c.b16 %v6752, %v6748
    %v6801 = vpack.c.b16 %v6757, %v6753
    %v6802 = vpack.c.b16 %v6758, %v6754
    %v6803 = vpack.c.b16 %v6759, %v6755
    %v6804 = vpack.c.b16 %v6760, %v6756
    %v6805 = vpack.c.b16 %v6765, %v6761
    %v6806 = vpack.c.b16 %v6766, %v6762
    %v6807 = vpack.c.b16 %v6767, %v6763
    %v6808 = vpack.c.b16 %v6768, %v6764
    %v6809 = vpack.c.b16 %v6773, %v6769
    %v6810 = vpack.c.b16 %v6774, %v6770
    %v6811 = vpack.c.b16 %v6775, %v6771
    %v6812 = vpack.c.b16 %v6776, %v6772
    %v6813 = vpack.c.b16 %v6781, %v6777
    %v6814 = vpack.c.b16 %v6782, %v6778
    %v6815 = vpack.c.b16 %v6783, %v6779
    %v6816 = vpack.c.b16 %v6784, %v6780
    %6849 = vmatprep.subr.bf16.mxu0 %v6814
    %6850 = vmatpush1.bf16.msra.mxu0 %v6813
    %6851 = vmatprep.subr.bf16.mxu0 %v6810
    %6852 = vmatpush1.bf16.msra.mxu0 %v6809
    %6853 = vmatprep.subr.bf16.mxu0 %v6806
    %6854 = vmatpush1.bf16.msra.mxu0 %v6805
    %6855 = vmatprep.subr.bf16.mxu0 %v6802
    %6856 = vmatpush1.bf16.msra.mxu0 %v6801
    %6857 = vmatprep.subr.bf16.mxu0 %v6798
    %6858 = vmatpush1.bf16.msra.mxu0 %v6797
    %6859 = vmatprep.subr.bf16.mxu0 %v6794
    %6860 = vmatpush1.bf16.msra.mxu0 %v6793
    %6861 = vmatprep.subr.bf16.mxu0 %v6790
    %6862 = vmatpush1.bf16.msra.mxu0 %v6789
    %6863 = vmatprep.subr.bf16.mxu0 %v6786
    %6864 = vmatpush1.bf16.msra.mxu0 %v6785
    %6865 = vmatprep.subr.bf16.mxu0 0
    %6866 = vmatpush2.bf16.msra.mxu0 0
    %6867 = vmatprep.subr.bf16.mxu0 0
    %6868 = vmatpush2.bf16.msra.mxu0 0
    %6869 = vmatprep.subr.bf16.mxu0 0
    %6870 = vmatpush2.bf16.msra.mxu0 0
    %6871 = vmatprep.subr.bf16.mxu0 0
    %6872 = vmatpush2.bf16.msra.mxu0 0
    %6873 = vmatprep.subr.bf16.mxu0 0
    %6874 = vmatpush2.bf16.msra.mxu0 0
    %6875 = vmatprep.subr.bf16.mxu0 0
    %6876 = vmatpush2.bf16.msra.mxu0 0
    %6877 = vmatprep.subr.bf16.mxu0 0
    %6878 = vmatpush2.bf16.msra.mxu0 0
    %6879 = vmatprep.subr.bf16.mxu0 0
    %6880 = vmatpush2.bf16.msra.mxu0 0
    %6881 = vmatprep.mubr.bf16.mxu0 0
    %6882 = vmatmul.mubr.bf16.gmra.mxu0 %v6656
    %v6883 = vpop.f32.mrf.mxu0
    %v6884 = vadd.f32 0.0, %v6883
    %v6885 = vpop.f32.mrf.mxu0
    %v6886 = vadd.f32 0.0, %v6885
    %v6887 = vpop.f32.mrf.mxu0
    %v6888 = vpop.f32.mrf.mxu0
    %6889 = vdwg.mxu0
    %6890 = vmatprep.subr.bf16.mxu0 %v6816
    %6891 = vmatpush1.bf16.msra.mxu0 %v6815
    %6892 = vmatprep.subr.bf16.mxu0 %v6812
    %6893 = vmatpush1.bf16.msra.mxu0 %v6811
    %6894 = vmatprep.subr.bf16.mxu0 %v6808
    %6895 = vmatpush1.bf16.msra.mxu0 %v6807
    %6896 = vmatprep.subr.bf16.mxu0 %v6804
    %6897 = vmatpush1.bf16.msra.mxu0 %v6803
    %6898 = vmatprep.subr.bf16.mxu0 %v6800
    %6899 = vmatpush1.bf16.msra.mxu0 %v6799
    %6900 = vmatprep.subr.bf16.mxu0 %v6796
    %6901 = vmatpush1.bf16.msra.mxu0 %v6795
    %6902 = vmatprep.subr.bf16.mxu0 %v6792
    %6903 = vmatpush1.bf16.msra.mxu0 %v6791
    %6904 = vmatprep.subr.bf16.mxu0 %v6788
    %6905 = vmatpush1.bf16.msra.mxu0 %v6787
    %6906 = vmatprep.subr.bf16.mxu0 0
    %6907 = vmatpush2.bf16.msra.mxu0 0
    %6908 = vmatprep.subr.bf16.mxu0 0
    %6909 = vmatpush2.bf16.msra.mxu0 0
    %6910 = vmatprep.subr.bf16.mxu0 0
    %6911 = vmatpush2.bf16.msra.mxu0 0
    %6912 = vmatprep.subr.bf16.mxu0 0
    %6913 = vmatpush2.bf16.msra.mxu0 0
    %6914 = vmatprep.subr.bf16.mxu0 0
    %6915 = vmatpush2.bf16.msra.mxu0 0
    %6916 = vmatprep.subr.bf16.mxu0 0
    %6917 = vmatpush2.bf16.msra.mxu0 0
    %6918 = vmatprep.subr.bf16.mxu0 0
    %6919 = vmatpush2.bf16.msra.mxu0 0
    %6920 = vmatprep.subr.bf16.mxu0 0
    %6921 = vmatpush2.bf16.msra.mxu0 0
    %6922 = vmatprep.mubr.bf16.mxu0 0
    %6923 = vmatmul.mubr.bf16.gmra.mxu0 %v6656
    %v6924 = vpop.f32.mrf.mxu0
    %v6925 = vadd.f32 0.0, %v6924
    %v6926 = vpop.f32.mrf.mxu0
    %v6927 = vadd.f32 0.0, %v6926
    %v6928 = vpop.f32.mrf.mxu0
    %v6929 = vpop.f32.mrf.mxu0
    %6930 = vdwg.mxu0
    %v6963 = vunpack.c.l.b16 %v6624
    %v6964 = vunpack.c.h.b16 %v6624
    %v6965 = vunpack.c.l.b16 %v6625
    %v6966 = vunpack.c.h.b16 %v6625
    %v6967 = vunpack.c.l.b16 %v6626
    %v6968 = vunpack.c.h.b16 %v6626
    %v6969 = vunpack.c.l.b16 %v6627
    %v6970 = vunpack.c.h.b16 %v6627
    %v6971 = vunpack.c.l.b16 %v6628
    %v6972 = vunpack.c.h.b16 %v6628
    %v6973 = vunpack.c.l.b16 %v6629
    %v6974 = vunpack.c.h.b16 %v6629
    %v6975 = vunpack.c.l.b16 %v6630
    %v6976 = vunpack.c.h.b16 %v6630
    %v6977 = vunpack.c.l.b16 %v6631
    %v6978 = vunpack.c.h.b16 %v6631
    %v6979 = vunpack.c.l.b16 %v6632
    %v6980 = vunpack.c.h.b16 %v6632
    %v6981 = vunpack.c.l.b16 %v6633
    %v6982 = vunpack.c.h.b16 %v6633
    %v6983 = vunpack.c.l.b16 %v6634
    %v6984 = vunpack.c.h.b16 %v6634
    %v6985 = vunpack.c.l.b16 %v6635
    %v6986 = vunpack.c.h.b16 %v6635
    %v6987 = vunpack.c.l.b16 %v6636
    %v6988 = vunpack.c.h.b16 %v6636
    %v6989 = vunpack.c.l.b16 %v6637
    %v6990 = vunpack.c.h.b16 %v6637
    %v6991 = vunpack.c.l.b16 %v6638
    %v6992 = vunpack.c.h.b16 %v6638
    %v6993 = vunpack.c.l.b16 %v6639
    %v6994 = vunpack.c.h.b16 %v6639
    %v6995 = vunpack.c.l.b16 %v6640
    %v6996 = vunpack.c.h.b16 %v6640
    %v6997 = vunpack.c.l.b16 %v6641
    %v6998 = vunpack.c.h.b16 %v6641
    %v6999 = vunpack.c.l.b16 %v6642
    %v7000 = vunpack.c.h.b16 %v6642
    %v7001 = vunpack.c.l.b16 %v6643
    %v7002 = vunpack.c.h.b16 %v6643
    %v7003 = vunpack.c.l.b16 %v6644
    %v7004 = vunpack.c.h.b16 %v6644
    %v7005 = vunpack.c.l.b16 %v6645
    %v7006 = vunpack.c.h.b16 %v6645
    %v7007 = vunpack.c.l.b16 %v6646
    %v7008 = vunpack.c.h.b16 %v6646
    %v7009 = vunpack.c.l.b16 %v6647
    %v7010 = vunpack.c.h.b16 %v6647
    %v7011 = vunpack.c.l.b16 %v6648
    %v7012 = vunpack.c.h.b16 %v6648
    %v7013 = vunpack.c.l.b16 %v6649
    %v7014 = vunpack.c.h.b16 %v6649
    %v7015 = vunpack.c.l.b16 %v6650
    %v7016 = vunpack.c.h.b16 %v6650
    %v7017 = vunpack.c.l.b16 %v6651
    %v7018 = vunpack.c.h.b16 %v6651
    %v7019 = vunpack.c.l.b16 %v6652
    %v7020 = vunpack.c.h.b16 %v6652
    %v7021 = vunpack.c.l.b16 %v6653
    %v7022 = vunpack.c.h.b16 %v6653
    %v7023 = vunpack.c.l.b16 %v6654
    %v7024 = vunpack.c.h.b16 %v6654
    %v7025 = vunpack.c.l.b16 %v6655
    %v7026 = vunpack.c.h.b16 %v6655
    %v7027 = vpack.c.b16 %v6967, %v6963
    %v7028 = vpack.c.b16 %v6968, %v6964
    %v7029 = vpack.c.b16 %v6969, %v6965
    %v7030 = vpack.c.b16 %v6970, %v6966
    %v7031 = vpack.c.b16 %v6975, %v6971
    %v7032 = vpack.c.b16 %v6976, %v6972
    %v7033 = vpack.c.b16 %v6977, %v6973
    %v7034 = vpack.c.b16 %v6978, %v6974
    %v7035 = vpack.c.b16 %v6983, %v6979
    %v7036 = vpack.c.b16 %v6984, %v6980
    %v7037 = vpack.c.b16 %v6985, %v6981
    %v7038 = vpack.c.b16 %v6986, %v6982
    %v7039 = vpack.c.b16 %v6991, %v6987
    %v7040 = vpack.c.b16 %v6992, %v6988
    %v7041 = vpack.c.b16 %v6993, %v6989
    %v7042 = vpack.c.b16 %v6994, %v6990
    %v7043 = vpack.c.b16 %v6999, %v6995
    %v7044 = vpack.c.b16 %v7000, %v6996
    %v7045 = vpack.c.b16 %v7001, %v6997
    %v7046 = vpack.c.b16 %v7002, %v6998
    %v7047 = vpack.c.b16 %v7007, %v7003
    %v7048 = vpack.c.b16 %v7008, %v7004
    %v7049 = vpack.c.b16 %v7009, %v7005
    %v7050 = vpack.c.b16 %v7010, %v7006
    %v7051 = vpack.c.b16 %v7015, %v7011
    %v7052 = vpack.c.b16 %v7016, %v7012
    %v7053 = vpack.c.b16 %v7017, %v7013
    %v7054 = vpack.c.b16 %v7018, %v7014
    %v7055 = vpack.c.b16 %v7023, %v7019
    %v7056 = vpack.c.b16 %v7024, %v7020
    %v7057 = vpack.c.b16 %v7025, %v7021
    %v7058 = vpack.c.b16 %v7026, %v7022
    %7091 = vmatprep.subr.bf16.mxu0 %v7056
    %7092 = vmatpush1.bf16.msra.mxu0 %v7055
    %7093 = vmatprep.subr.bf16.mxu0 %v7052
    %7094 = vmatpush1.bf16.msra.mxu0 %v7051
    %7095 = vmatprep.subr.bf16.mxu0 %v7048
    %7096 = vmatpush1.bf16.msra.mxu0 %v7047
    %7097 = vmatprep.subr.bf16.mxu0 %v7044
    %7098 = vmatpush1.bf16.msra.mxu0 %v7043
    %7099 = vmatprep.subr.bf16.mxu0 %v7040
    %7100 = vmatpush1.bf16.msra.mxu0 %v7039
    %7101 = vmatprep.subr.bf16.mxu0 %v7036
    %7102 = vmatpush1.bf16.msra.mxu0 %v7035
    %7103 = vmatprep.subr.bf16.mxu0 %v7032
    %7104 = vmatpush1.bf16.msra.mxu0 %v7031
    %7105 = vmatprep.subr.bf16.mxu0 %v7028
    %7106 = vmatpush1.bf16.msra.mxu0 %v7027
    %7107 = vmatprep.subr.bf16.mxu0 0
    %7108 = vmatpush2.bf16.msra.mxu0 0
    %7109 = vmatprep.subr.bf16.mxu0 0
    %7110 = vmatpush2.bf16.msra.mxu0 0
    %7111 = vmatprep.subr.bf16.mxu0 0
    %7112 = vmatpush2.bf16.msra.mxu0 0
    %7113 = vmatprep.subr.bf16.mxu0 0
    %7114 = vmatpush2.bf16.msra.mxu0 0
    %7115 = vmatprep.subr.bf16.mxu0 0
    %7116 = vmatpush2.bf16.msra.mxu0 0
    %7117 = vmatprep.subr.bf16.mxu0 0
    %7118 = vmatpush2.bf16.msra.mxu0 0
    %7119 = vmatprep.subr.bf16.mxu0 0
    %7120 = vmatpush2.bf16.msra.mxu0 0
    %7121 = vmatprep.subr.bf16.mxu0 0
    %7122 = vmatpush2.bf16.msra.mxu0 0
    %7123 = vmatprep.mubr.bf16.mxu0 0
    %7124 = vmatmul.mubr.bf16.gmra.mxu0 %v6623
    %v7125 = vpop.f32.mrf.mxu0
    %v7126 = vadd.f32 %v6884, %v7125
    %v7127 = vpop.f32.mrf.mxu0
    %v7128 = vadd.f32 %v6886, %v7127
    %v7129 = vpop.f32.mrf.mxu0
    %v7130 = vpop.f32.mrf.mxu0
    %7131 = vdwg.mxu0
    %7132 = vmatprep.subr.bf16.mxu0 %v7058
    %7133 = vmatpush1.bf16.msra.mxu0 %v7057
    %7134 = vmatprep.subr.bf16.mxu0 %v7054
    %7135 = vmatpush1.bf16.msra.mxu0 %v7053
    %7136 = vmatprep.subr.bf16.mxu0 %v7050
    %7137 = vmatpush1.bf16.msra.mxu0 %v7049
    %7138 = vmatprep.subr.bf16.mxu0 %v7046
    %7139 = vmatpush1.bf16.msra.mxu0 %v7045
    %7140 = vmatprep.subr.bf16.mxu0 %v7042
    %7141 = vmatpush1.bf16.msra.mxu0 %v7041
    %7142 = vmatprep.subr.bf16.mxu0 %v7038
    %7143 = vmatpush1.bf16.msra.mxu0 %v7037
    %7144 = vmatprep.subr.bf16.mxu0 %v7034
    %7145 = vmatpush1.bf16.msra.mxu0 %v7033
    %7146 = vmatprep.subr.bf16.mxu0 %v7030
    %7147 = vmatpush1.bf16.msra.mxu0 %v7029
    %7148 = vmatprep.subr.bf16.mxu0 0
    %7149 = vmatpush2.bf16.msra.mxu0 0
    %7150 = vmatprep.subr.bf16.mxu0 0
    %7151 = vmatpush2.bf16.msra.mxu0 0
    %7152 = vmatprep.subr.bf16.mxu0 0
    %7153 = vmatpush2.bf16.msra.mxu0 0
    %7154 = vmatprep.subr.bf16.mxu0 0
    %7155 = vmatpush2.bf16.msra.mxu0 0
    %7156 = vmatprep.subr.bf16.mxu0 0
    %7157 = vmatpush2.bf16.msra.mxu0 0
    %7158 = vmatprep.subr.bf16.mxu0 0
    %7159 = vmatpush2.bf16.msra.mxu0 0
    %7160 = vmatprep.subr.bf16.mxu0 0
    %7161 = vmatpush2.bf16.msra.mxu0 0
    %7162 = vmatprep.subr.bf16.mxu0 0
    %7163 = vmatpush2.bf16.msra.mxu0 0
    %7164 = vmatprep.mubr.bf16.mxu0 0
    %7165 = vmatmul.mubr.bf16.gmra.mxu0 %v6623
    %v7166 = vpop.f32.mrf.mxu0
    %v7167 = vadd.f32 %v6925, %v7166
    %v7168 = vpop.f32.mrf.mxu0
    %v7169 = vadd.f32 %v6927, %v7168
    %v7170 = vpop.f32.mrf.mxu0
    %v7171 = vpop.f32.mrf.mxu0
    %7172 = vdwg.mxu0
    %v7173 = vadd.f32 %v7126, %v142
    %v7174 = vadd.f32 %v7128, %v146
    %v7175 = vadd.f32 %v7167, %v150
    %v7176 = vadd.f32 %v7169, %v154
    %v7177 = vxor.u32 %v7173, 2147483648
    %v7178 = vxor.u32 %v7174, 2147483648
    %v7179 = vxor.u32 %v7175, 2147483648
    %v7180 = vmul.f32 %v7177, 1.442695
    %v7181 = vpow.pop %v7180
    %v7182 = vmul.f32 %v7178, 1.442695
    %v7183 = vpow.pop %v7182
    %v7184 = vmul.f32 %v7179, 1.442695
    %v7185 = vpow.pop %v7184
    %v7186 = vadd.f32 %v7181, 1.0
    %v7187 = vadd.f32 %v7183, 1.0
    %v7188 = vadd.f32 %v7185, 1.0
    %v7189 = vrcp.pop %v7186
    %v7190 = vmul.f32 1.0, %v7189
    %v7191 = vrcp.pop %v7187
    %v7192 = vmul.f32 1.0, %v7191
    %v7193 = vrcp.pop %v7188
    %v7194 = vmul.f32 1.0, %v7193
    %v7195 = vtanh.pop %v7176
    %v7196 = vmul.f32 %v7192, %v6195
    %v7197 = vmul.f32 %v7190, %v7195
    %v7198 = vadd.f32 %v7196, %v7197
    %v7199 = vtanh.pop %v7198
    %v7200 = vmul.f32 %v7194, %v7199
    %v7201 = vsel %vm6620, %v7200, %v6194
    %v7202 = vsel %vm6620, %v7198, %v6195
    %v7203 = vsel %vm6620, %v7200, 0.0
    %v7204 = vpack.c.bf16 %v7203, %v7203
    %s7205 = scalar_lea.vmem [#allocation13], 24
    %7206 = vst [vmem:[%s7205] sm:$0xf] %v7204
    %s7207 = sadd.s32 %s107, 7
    %v7208 = vstv %s7207
    %vm7209 = vcmp.lt.s32.totalorder %v7208, %v108
    %s7210 = scalar_lea.vmem [#allocation4], 28
    %v7211 = vld [vmem:[%s7210] sm:$0xf]
    %v7212 = vld [vmem:[#allocation7] sm:$0xff]
    %v7213 = vld [vmem:[#allocation7 + $0x8] sm:$0xff]
    %v7214 = vld [vmem:[#allocation7 + $0x10] sm:$0xff]
    %v7215 = vld [vmem:[#allocation7 + $0x18] sm:$0xff]
    %v7216 = vld [vmem:[#allocation9] sm:$0xff]
    %v7217 = vld [vmem:[#allocation9 + $0x8] sm:$0xff]
    %v7218 = vld [vmem:[#allocation9 + $0x10] sm:$0xff]
    %v7219 = vld [vmem:[#allocation9 + $0x18] sm:$0xff]
    %v7220 = vld [vmem:[#allocation9 + $0x20] sm:$0xff]
    %v7221 = vld [vmem:[#allocation9 + $0x28] sm:$0xff]
    %v7222 = vld [vmem:[#allocation9 + $0x30] sm:$0xff]
    %v7223 = vld [vmem:[#allocation9 + $0x38] sm:$0xff]
    %v7224 = vld [vmem:[#allocation9 + $0x40] sm:$0xff]
    %v7225 = vld [vmem:[#allocation9 + $0x48] sm:$0xff]
    %v7226 = vld [vmem:[#allocation9 + $0x50] sm:$0xff]
    %v7227 = vld [vmem:[#allocation9 + $0x58] sm:$0xff]
    %v7228 = vld [vmem:[#allocation9 + $0x60] sm:$0xff]
    %v7229 = vld [vmem:[#allocation9 + $0x68] sm:$0xff]
    %v7230 = vld [vmem:[#allocation9 + $0x70] sm:$0xff]
    %v7231 = vld [vmem:[#allocation9 + $0x78] sm:$0xff]
    %v7232 = vld [vmem:[#allocation9 + $0x80] sm:$0xff]
    %v7233 = vld [vmem:[#allocation9 + $0x88] sm:$0xff]
    %v7234 = vld [vmem:[#allocation9 + $0x90] sm:$0xff]
    %v7235 = vld [vmem:[#allocation9 + $0x98] sm:$0xff]
    %v7236 = vld [vmem:[#allocation9 + $0xa0] sm:$0xff]
    %v7237 = vld [vmem:[#allocation9 + $0xa8] sm:$0xff]
    %v7238 = vld [vmem:[#allocation9 + $0xb0] sm:$0xff]
    %v7239 = vld [vmem:[#allocation9 + $0xb8] sm:$0xff]
    %v7240 = vld [vmem:[#allocation9 + $0xc0] sm:$0xff]
    %v7241 = vld [vmem:[#allocation9 + $0xc8] sm:$0xff]
    %v7242 = vld [vmem:[#allocation9 + $0xd0] sm:$0xff]
    %v7243 = vld [vmem:[#allocation9 + $0xd8] sm:$0xff]
    %v7244 = vld [vmem:[#allocation9 + $0xe0] sm:$0xff]
    %v7245 = vld [vmem:[#allocation9 + $0xe8] sm:$0xff]
    %v7246 = vld [vmem:[#allocation9 + $0xf0] sm:$0xff]
    %v7247 = vld [vmem:[#allocation9 + $0xf8] sm:$0xff]
    %v7280 = vunpack.c.l.b16 %v7216
    %v7281 = vunpack.c.h.b16 %v7216
    %v7282 = vunpack.c.l.b16 %v7217
    %v7283 = vunpack.c.h.b16 %v7217
    %v7284 = vunpack.c.l.b16 %v7218
    %v7285 = vunpack.c.h.b16 %v7218
    %v7286 = vunpack.c.l.b16 %v7219
    %v7287 = vunpack.c.h.b16 %v7219
    %v7288 = vunpack.c.l.b16 %v7220
    %v7289 = vunpack.c.h.b16 %v7220
    %v7290 = vunpack.c.l.b16 %v7221
    %v7291 = vunpack.c.h.b16 %v7221
    %v7292 = vunpack.c.l.b16 %v7222
    %v7293 = vunpack.c.h.b16 %v7222
    %v7294 = vunpack.c.l.b16 %v7223
    %v7295 = vunpack.c.h.b16 %v7223
    %v7296 = vunpack.c.l.b16 %v7224
    %v7297 = vunpack.c.h.b16 %v7224
    %v7298 = vunpack.c.l.b16 %v7225
    %v7299 = vunpack.c.h.b16 %v7225
    %v7300 = vunpack.c.l.b16 %v7226
    %v7301 = vunpack.c.h.b16 %v7226
    %v7302 = vunpack.c.l.b16 %v7227
    %v7303 = vunpack.c.h.b16 %v7227
    %v7304 = vunpack.c.l.b16 %v7228
    %v7305 = vunpack.c.h.b16 %v7228
    %v7306 = vunpack.c.l.b16 %v7229
    %v7307 = vunpack.c.h.b16 %v7229
    %v7308 = vunpack.c.l.b16 %v7230
    %v7309 = vunpack.c.h.b16 %v7230
    %v7310 = vunpack.c.l.b16 %v7231
    %v7311 = vunpack.c.h.b16 %v7231
    %v7312 = vunpack.c.l.b16 %v7232
    %v7313 = vunpack.c.h.b16 %v7232
    %v7314 = vunpack.c.l.b16 %v7233
    %v7315 = vunpack.c.h.b16 %v7233
    %v7316 = vunpack.c.l.b16 %v7234
    %v7317 = vunpack.c.h.b16 %v7234
    %v7318 = vunpack.c.l.b16 %v7235
    %v7319 = vunpack.c.h.b16 %v7235
    %v7320 = vunpack.c.l.b16 %v7236
    %v7321 = vunpack.c.h.b16 %v7236
    %v7322 = vunpack.c.l.b16 %v7237
    %v7323 = vunpack.c.h.b16 %v7237
    %v7324 = vunpack.c.l.b16 %v7238
    %v7325 = vunpack.c.h.b16 %v7238
    %v7326 = vunpack.c.l.b16 %v7239
    %v7327 = vunpack.c.h.b16 %v7239
    %v7328 = vunpack.c.l.b16 %v7240
    %v7329 = vunpack.c.h.b16 %v7240
    %v7330 = vunpack.c.l.b16 %v7241
    %v7331 = vunpack.c.h.b16 %v7241
    %v7332 = vunpack.c.l.b16 %v7242
    %v7333 = vunpack.c.h.b16 %v7242
    %v7334 = vunpack.c.l.b16 %v7243
    %v7335 = vunpack.c.h.b16 %v7243
    %v7336 = vunpack.c.l.b16 %v7244
    %v7337 = vunpack.c.h.b16 %v7244
    %v7338 = vunpack.c.l.b16 %v7245
    %v7339 = vunpack.c.h.b16 %v7245
    %v7340 = vunpack.c.l.b16 %v7246
    %v7341 = vunpack.c.h.b16 %v7246
    %v7342 = vunpack.c.l.b16 %v7247
    %v7343 = vunpack.c.h.b16 %v7247
    %v7344 = vpack.c.b16 %v7284, %v7280
    %v7345 = vpack.c.b16 %v7285, %v7281
    %v7346 = vpack.c.b16 %v7286, %v7282
    %v7347 = vpack.c.b16 %v7287, %v7283
    %v7348 = vpack.c.b16 %v7292, %v7288
    %v7349 = vpack.c.b16 %v7293, %v7289
    %v7350 = vpack.c.b16 %v7294, %v7290
    %v7351 = vpack.c.b16 %v7295, %v7291
    %v7352 = vpack.c.b16 %v7300, %v7296
    %v7353 = vpack.c.b16 %v7301, %v7297
    %v7354 = vpack.c.b16 %v7302, %v7298
    %v7355 = vpack.c.b16 %v7303, %v7299
    %v7356 = vpack.c.b16 %v7308, %v7304
    %v7357 = vpack.c.b16 %v7309, %v7305
    %v7358 = vpack.c.b16 %v7310, %v7306
    %v7359 = vpack.c.b16 %v7311, %v7307
    %v7360 = vpack.c.b16 %v7316, %v7312
    %v7361 = vpack.c.b16 %v7317, %v7313
    %v7362 = vpack.c.b16 %v7318, %v7314
    %v7363 = vpack.c.b16 %v7319, %v7315
    %v7364 = vpack.c.b16 %v7324, %v7320
    %v7365 = vpack.c.b16 %v7325, %v7321
    %v7366 = vpack.c.b16 %v7326, %v7322
    %v7367 = vpack.c.b16 %v7327, %v7323
    %v7368 = vpack.c.b16 %v7332, %v7328
    %v7369 = vpack.c.b16 %v7333, %v7329
    %v7370 = vpack.c.b16 %v7334, %v7330
    %v7371 = vpack.c.b16 %v7335, %v7331
    %v7372 = vpack.c.b16 %v7340, %v7336
    %v7373 = vpack.c.b16 %v7341, %v7337
    %v7374 = vpack.c.b16 %v7342, %v7338
    %v7375 = vpack.c.b16 %v7343, %v7339
    %7408 = vmatprep.subr.bf16.mxu0 %v7373
    %7409 = vmatpush1.bf16.msra.mxu0 %v7372
    %7410 = vmatprep.subr.bf16.mxu0 %v7369
    %7411 = vmatpush1.bf16.msra.mxu0 %v7368
    %7412 = vmatprep.subr.bf16.mxu0 %v7365
    %7413 = vmatpush1.bf16.msra.mxu0 %v7364
    %7414 = vmatprep.subr.bf16.mxu0 %v7361
    %7415 = vmatpush1.bf16.msra.mxu0 %v7360
    %7416 = vmatprep.subr.bf16.mxu0 %v7357
    %7417 = vmatpush1.bf16.msra.mxu0 %v7356
    %7418 = vmatprep.subr.bf16.mxu0 %v7353
    %7419 = vmatpush1.bf16.msra.mxu0 %v7352
    %7420 = vmatprep.subr.bf16.mxu0 %v7349
    %7421 = vmatpush1.bf16.msra.mxu0 %v7348
    %7422 = vmatprep.subr.bf16.mxu0 %v7345
    %7423 = vmatpush1.bf16.msra.mxu0 %v7344
    %7424 = vmatprep.subr.bf16.mxu0 0
    %7425 = vmatpush2.bf16.msra.mxu0 0
    %7426 = vmatprep.subr.bf16.mxu0 0
    %7427 = vmatpush2.bf16.msra.mxu0 0
    %7428 = vmatprep.subr.bf16.mxu0 0
    %7429 = vmatpush2.bf16.msra.mxu0 0
    %7430 = vmatprep.subr.bf16.mxu0 0
    %7431 = vmatpush2.bf16.msra.mxu0 0
    %7432 = vmatprep.subr.bf16.mxu0 0
    %7433 = vmatpush2.bf16.msra.mxu0 0
    %7434 = vmatprep.subr.bf16.mxu0 0
    %7435 = vmatpush2.bf16.msra.mxu0 0
    %7436 = vmatprep.subr.bf16.mxu0 0
    %7437 = vmatpush2.bf16.msra.mxu0 0
    %7438 = vmatprep.subr.bf16.mxu0 0
    %7439 = vmatpush2.bf16.msra.mxu0 0
    %7440 = vmatprep.mubr.bf16.mxu0 0
    %7441 = vmatmul.mubr.bf16.gmra.mxu0 %v6623
    %v7442 = vpop.f32.mrf.mxu0
    %v7443 = vadd.f32 0.0, %v7442
    %v7444 = vpop.f32.mrf.mxu0
    %v7445 = vadd.f32 0.0, %v7444
    %v7446 = vpop.f32.mrf.mxu0
    %v7447 = vpop.f32.mrf.mxu0
    %7448 = vdwg.mxu0
    %7449 = vmatprep.subr.bf16.mxu0 %v7375
    %7450 = vmatpush1.bf16.msra.mxu0 %v7374
    %7451 = vmatprep.subr.bf16.mxu0 %v7371
    %7452 = vmatpush1.bf16.msra.mxu0 %v7370
    %7453 = vmatprep.subr.bf16.mxu0 %v7367
    %7454 = vmatpush1.bf16.msra.mxu0 %v7366
    %7455 = vmatprep.subr.bf16.mxu0 %v7363
    %7456 = vmatpush1.bf16.msra.mxu0 %v7362
    %7457 = vmatprep.subr.bf16.mxu0 %v7359
    %7458 = vmatpush1.bf16.msra.mxu0 %v7358
    %7459 = vmatprep.subr.bf16.mxu0 %v7355
    %7460 = vmatpush1.bf16.msra.mxu0 %v7354
    %7461 = vmatprep.subr.bf16.mxu0 %v7351
    %7462 = vmatpush1.bf16.msra.mxu0 %v7350
    %7463 = vmatprep.subr.bf16.mxu0 %v7347
    %7464 = vmatpush1.bf16.msra.mxu0 %v7346
    %7465 = vmatprep.subr.bf16.mxu0 0
    %7466 = vmatpush2.bf16.msra.mxu0 0
    %7467 = vmatprep.subr.bf16.mxu0 0
    %7468 = vmatpush2.bf16.msra.mxu0 0
    %7469 = vmatprep.subr.bf16.mxu0 0
    %7470 = vmatpush2.bf16.msra.mxu0 0
    %7471 = vmatprep.subr.bf16.mxu0 0
    %7472 = vmatpush2.bf16.msra.mxu0 0
    %7473 = vmatprep.subr.bf16.mxu0 0
    %7474 = vmatpush2.bf16.msra.mxu0 0
    %7475 = vmatprep.subr.bf16.mxu0 0
    %7476 = vmatpush2.bf16.msra.mxu0 0
    %7477 = vmatprep.subr.bf16.mxu0 0
    %7478 = vmatpush2.bf16.msra.mxu0 0
    %7479 = vmatprep.subr.bf16.mxu0 0
    %7480 = vmatpush2.bf16.msra.mxu0 0
    %7481 = vmatprep.mubr.bf16.mxu0 0
    %7482 = vmatmul.mubr.bf16.gmra.mxu0 %v6623
    %v7483 = vpop.f32.mrf.mxu0
    %v7484 = vadd.f32 0.0, %v7483
    %v7485 = vpop.f32.mrf.mxu0
    %v7486 = vadd.f32 0.0, %v7485
    %v7487 = vpop.f32.mrf.mxu0
    %v7488 = vpop.f32.mrf.mxu0
    %7489 = vdwg.mxu0
    %v7494 = vunpack.c.l.b16 %v7212
    %v7495 = vunpack.c.h.b16 %v7212
    %v7496 = vunpack.c.l.b16 %v7213
    %v7497 = vunpack.c.h.b16 %v7213
    %v7498 = vunpack.c.l.b16 %v7214
    %v7499 = vunpack.c.h.b16 %v7214
    %v7500 = vunpack.c.l.b16 %v7215
    %v7501 = vunpack.c.h.b16 %v7215
    %v7502 = vpack.c.b16 %v7498, %v7494
    %v7503 = vpack.c.b16 %v7499, %v7495
    %v7504 = vpack.c.b16 %v7500, %v7496
    %v7505 = vpack.c.b16 %v7501, %v7497
    %v7511 = vsel %vm461, %v7211, 0
    %7513 = vmatprep.subr.bf16.mxu0 0
    %7514 = vmatpush1.bf16.msra.mxu0 0
    %7515 = vmatprep.subr.bf16.mxu0 0
    %7516 = vmatpush1.bf16.msra.mxu0 0
    %7517 = vmatprep.subr.bf16.mxu0 0
    %7518 = vmatpush1.bf16.msra.mxu0 0
    %7519 = vmatprep.subr.bf16.mxu0 0
    %7520 = vmatpush1.bf16.msra.mxu0 0
    %7521 = vmatprep.subr.bf16.mxu0 0
    %7522 = vmatpush1.bf16.msra.mxu0 0
    %7523 = vmatprep.subr.bf16.mxu0 0
    %7524 = vmatpush1.bf16.msra.mxu0 0
    %7525 = vmatprep.subr.bf16.mxu0 0
    %7526 = vmatpush1.bf16.msra.mxu0 0
    %7527 = vmatprep.subr.bf16.mxu0 %v7503
    %7528 = vmatpush1.bf16.msra.mxu0 %v7502
    %7529 = vmatprep.subr.bf16.mxu0 0
    %7530 = vmatpush2.bf16.msra.mxu0 0
    %7531 = vmatprep.subr.bf16.mxu0 0
    %7532 = vmatpush2.bf16.msra.mxu0 0
    %7533 = vmatprep.subr.bf16.mxu0 0
    %7534 = vmatpush2.bf16.msra.mxu0 0
    %7535 = vmatprep.subr.bf16.mxu0 0
    %7536 = vmatpush2.bf16.msra.mxu0 0
    %7537 = vmatprep.subr.bf16.mxu0 0
    %7538 = vmatpush2.bf16.msra.mxu0 0
    %7539 = vmatprep.subr.bf16.mxu0 0
    %7540 = vmatpush2.bf16.msra.mxu0 0
    %7541 = vmatprep.subr.bf16.mxu0 0
    %7542 = vmatpush2.bf16.msra.mxu0 0
    %7543 = vmatprep.subr.bf16.mxu0 0
    %7544 = vmatpush2.bf16.msra.mxu0 0
    %7545 = vmatprep.mubr.bf16.mxu0 0
    %7546 = vmatmul.mubr.bf16.gmra.mxu0 %v7511
    %v7547 = vpop.f32.mrf.mxu0
    %v7548 = vadd.f32 %v7443, %v7547
    %v7549 = vpop.f32.mrf.mxu0
    %v7550 = vadd.f32 %v7445, %v7549
    %v7551 = vpop.f32.mrf.mxu0
    %v7552 = vpop.f32.mrf.mxu0
    %7553 = vdwg.mxu0
    %7554 = vmatprep.subr.bf16.mxu0 0
    %7555 = vmatpush1.bf16.msra.mxu0 0
    %7556 = vmatprep.subr.bf16.mxu0 0
    %7557 = vmatpush1.bf16.msra.mxu0 0
    %7558 = vmatprep.subr.bf16.mxu0 0
    %7559 = vmatpush1.bf16.msra.mxu0 0
    %7560 = vmatprep.subr.bf16.mxu0 0
    %7561 = vmatpush1.bf16.msra.mxu0 0
    %7562 = vmatprep.subr.bf16.mxu0 0
    %7563 = vmatpush1.bf16.msra.mxu0 0
    %7564 = vmatprep.subr.bf16.mxu0 0
    %7565 = vmatpush1.bf16.msra.mxu0 0
    %7566 = vmatprep.subr.bf16.mxu0 0
    %7567 = vmatpush1.bf16.msra.mxu0 0
    %7568 = vmatprep.subr.bf16.mxu0 %v7505
    %7569 = vmatpush1.bf16.msra.mxu0 %v7504
    %7570 = vmatprep.subr.bf16.mxu0 0
    %7571 = vmatpush2.bf16.msra.mxu0 0
    %7572 = vmatprep.subr.bf16.mxu0 0
    %7573 = vmatpush2.bf16.msra.mxu0 0
    %7574 = vmatprep.subr.bf16.mxu0 0
    %7575 = vmatpush2.bf16.msra.mxu0 0
    %7576 = vmatprep.subr.bf16.mxu0 0
    %7577 = vmatpush2.bf16.msra.mxu0 0
    %7578 = vmatprep.subr.bf16.mxu0 0
    %7579 = vmatpush2.bf16.msra.mxu0 0
    %7580 = vmatprep.subr.bf16.mxu0 0
    %7581 = vmatpush2.bf16.msra.mxu0 0
    %7582 = vmatprep.subr.bf16.mxu0 0
    %7583 = vmatpush2.bf16.msra.mxu0 0
    %7584 = vmatprep.subr.bf16.mxu0 0
    %7585 = vmatpush2.bf16.msra.mxu0 0
    %7586 = vmatprep.mubr.bf16.mxu0 0
    %7587 = vmatmul.mubr.bf16.gmra.mxu0 %v7511
    %v7588 = vpop.f32.mrf.mxu0
    %v7589 = vadd.f32 %v7484, %v7588
    %v7590 = vpop.f32.mrf.mxu0
    %v7591 = vadd.f32 %v7486, %v7590
    %v7592 = vpop.f32.mrf.mxu0
    %v7593 = vpop.f32.mrf.mxu0
    %7594 = vdwg.mxu0
    %v7595 = vadd.f32 %v7548, %v120
    %v7596 = vadd.f32 %v7550, %v124
    %v7597 = vadd.f32 %v7589, %v128
    %v7598 = vadd.f32 %v7591, %v132
    %v7599 = vxor.u32 %v7595, 2147483648
    %v7600 = vxor.u32 %v7596, 2147483648
    %v7601 = vxor.u32 %v7597, 2147483648
    %v7602 = vmul.f32 %v7599, 1.442695
    %v7603 = vpow.pop %v7602
    %v7604 = vmul.f32 %v7600, 1.442695
    %v7605 = vpow.pop %v7604
    %v7606 = vmul.f32 %v7601, 1.442695
    %v7607 = vpow.pop %v7606
    %v7608 = vadd.f32 %v7603, 1.0
    %v7609 = vadd.f32 %v7605, 1.0
    %v7610 = vadd.f32 %v7607, 1.0
    %v7611 = vrcp.pop %v7608
    %v7612 = vmul.f32 1.0, %v7611
    %v7613 = vrcp.pop %v7609
    %v7614 = vmul.f32 1.0, %v7613
    %v7615 = vrcp.pop %v7610
    %v7616 = vmul.f32 1.0, %v7615
    %v7617 = vtanh.pop %v7598
    %v7618 = vmul.f32 %v7614, %v6622
    %v7619 = vmul.f32 %v7612, %v7617
    %v7620 = vadd.f32 %v7618, %v7619
    %v7621 = vtanh.pop %v7620
    %v7622 = vmul.f32 %v7616, %v7621
    %v7623 = vsel %vm7209, 1, 0
    %7624 = vset.pattern.permute.xlu0 0
    %7625 = vperm.xlu0 %7624, %v7623
    %v7626 = vpop.permute.xlu0 %7625
    %vm7627 = vcmp.eq.s32.totalorder %v7626, 1
    %v7628 = vsel %vm7627, %v7622, %v6621
    %v7629 = vsel %vm7627, %v7620, %v6622
    %v7630 = vpack.c.bf16 %v7628, %v7628
    %v7631 = vld [vmem:[#allocation10] sm:$0xff]
    %v7632 = vld [vmem:[#allocation10 + $0x8] sm:$0xff]
    %v7633 = vld [vmem:[#allocation10 + $0x10] sm:$0xff]
    %v7634 = vld [vmem:[#allocation10 + $0x18] sm:$0xff]
    %v7635 = vld [vmem:[#allocation10 + $0x20] sm:$0xff]
    %v7636 = vld [vmem:[#allocation10 + $0x28] sm:$0xff]
    %v7637 = vld [vmem:[#allocation10 + $0x30] sm:$0xff]
    %v7638 = vld [vmem:[#allocation10 + $0x38] sm:$0xff]
    %v7639 = vld [vmem:[#allocation10 + $0x40] sm:$0xff]
    %v7640 = vld [vmem:[#allocation10 + $0x48] sm:$0xff]
    %v7641 = vld [vmem:[#allocation10 + $0x50] sm:$0xff]
    %v7642 = vld [vmem:[#allocation10 + $0x58] sm:$0xff]
    %v7643 = vld [vmem:[#allocation10 + $0x60] sm:$0xff]
    %v7644 = vld [vmem:[#allocation10 + $0x68] sm:$0xff]
    %v7645 = vld [vmem:[#allocation10 + $0x70] sm:$0xff]
    %v7646 = vld [vmem:[#allocation10 + $0x78] sm:$0xff]
    %v7647 = vld [vmem:[#allocation10 + $0x80] sm:$0xff]
    %v7648 = vld [vmem:[#allocation10 + $0x88] sm:$0xff]
    %v7649 = vld [vmem:[#allocation10 + $0x90] sm:$0xff]
    %v7650 = vld [vmem:[#allocation10 + $0x98] sm:$0xff]
    %v7651 = vld [vmem:[#allocation10 + $0xa0] sm:$0xff]
    %v7652 = vld [vmem:[#allocation10 + $0xa8] sm:$0xff]
    %v7653 = vld [vmem:[#allocation10 + $0xb0] sm:$0xff]
    %v7654 = vld [vmem:[#allocation10 + $0xb8] sm:$0xff]
    %v7655 = vld [vmem:[#allocation10 + $0xc0] sm:$0xff]
    %v7656 = vld [vmem:[#allocation10 + $0xc8] sm:$0xff]
    %v7657 = vld [vmem:[#allocation10 + $0xd0] sm:$0xff]
    %v7658 = vld [vmem:[#allocation10 + $0xd8] sm:$0xff]
    %v7659 = vld [vmem:[#allocation10 + $0xe0] sm:$0xff]
    %v7660 = vld [vmem:[#allocation10 + $0xe8] sm:$0xff]
    %v7661 = vld [vmem:[#allocation10 + $0xf0] sm:$0xff]
    %v7662 = vld [vmem:[#allocation10 + $0xf8] sm:$0xff]
    %v7663 = vpack.c.bf16 %v7201, %v7201
    %v7664 = vld [vmem:[#allocation12] sm:$0xff]
    %v7665 = vld [vmem:[#allocation12 + $0x8] sm:$0xff]
    %v7666 = vld [vmem:[#allocation12 + $0x10] sm:$0xff]
    %v7667 = vld [vmem:[#allocation12 + $0x18] sm:$0xff]
    %v7668 = vld [vmem:[#allocation12 + $0x20] sm:$0xff]
    %v7669 = vld [vmem:[#allocation12 + $0x28] sm:$0xff]
    %v7670 = vld [vmem:[#allocation12 + $0x30] sm:$0xff]
    %v7671 = vld [vmem:[#allocation12 + $0x38] sm:$0xff]
    %v7672 = vld [vmem:[#allocation12 + $0x40] sm:$0xff]
    %v7673 = vld [vmem:[#allocation12 + $0x48] sm:$0xff]
    %v7674 = vld [vmem:[#allocation12 + $0x50] sm:$0xff]
    %v7675 = vld [vmem:[#allocation12 + $0x58] sm:$0xff]
    %v7676 = vld [vmem:[#allocation12 + $0x60] sm:$0xff]
    %v7677 = vld [vmem:[#allocation12 + $0x68] sm:$0xff]
    %v7678 = vld [vmem:[#allocation12 + $0x70] sm:$0xff]
    %v7679 = vld [vmem:[#allocation12 + $0x78] sm:$0xff]
    %v7680 = vld [vmem:[#allocation12 + $0x80] sm:$0xff]
    %v7681 = vld [vmem:[#allocation12 + $0x88] sm:$0xff]
    %v7682 = vld [vmem:[#allocation12 + $0x90] sm:$0xff]
    %v7683 = vld [vmem:[#allocation12 + $0x98] sm:$0xff]
    %v7684 = vld [vmem:[#allocation12 + $0xa0] sm:$0xff]
    %v7685 = vld [vmem:[#allocation12 + $0xa8] sm:$0xff]
    %v7686 = vld [vmem:[#allocation12 + $0xb0] sm:$0xff]
    %v7687 = vld [vmem:[#allocation12 + $0xb8] sm:$0xff]
    %v7688 = vld [vmem:[#allocation12 + $0xc0] sm:$0xff]
    %v7689 = vld [vmem:[#allocation12 + $0xc8] sm:$0xff]
    %v7690 = vld [vmem:[#allocation12 + $0xd0] sm:$0xff]
    %v7691 = vld [vmem:[#allocation12 + $0xd8] sm:$0xff]
    %v7692 = vld [vmem:[#allocation12 + $0xe0] sm:$0xff]
    %v7693 = vld [vmem:[#allocation12 + $0xe8] sm:$0xff]
    %v7694 = vld [vmem:[#allocation12 + $0xf0] sm:$0xff]
    %v7695 = vld [vmem:[#allocation12 + $0xf8] sm:$0xff]
    %v7728 = vunpack.c.l.b16 %v7664
    %v7729 = vunpack.c.h.b16 %v7664
    %v7730 = vunpack.c.l.b16 %v7665
    %v7731 = vunpack.c.h.b16 %v7665
    %v7732 = vunpack.c.l.b16 %v7666
    %v7733 = vunpack.c.h.b16 %v7666
    %v7734 = vunpack.c.l.b16 %v7667
    %v7735 = vunpack.c.h.b16 %v7667
    %v7736 = vunpack.c.l.b16 %v7668
    %v7737 = vunpack.c.h.b16 %v7668
    %v7738 = vunpack.c.l.b16 %v7669
    %v7739 = vunpack.c.h.b16 %v7669
    %v7740 = vunpack.c.l.b16 %v7670
    %v7741 = vunpack.c.h.b16 %v7670
    %v7742 = vunpack.c.l.b16 %v7671
    %v7743 = vunpack.c.h.b16 %v7671
    %v7744 = vunpack.c.l.b16 %v7672
    %v7745 = vunpack.c.h.b16 %v7672
    %v7746 = vunpack.c.l.b16 %v7673
    %v7747 = vunpack.c.h.b16 %v7673
    %v7748 = vunpack.c.l.b16 %v7674
    %v7749 = vunpack.c.h.b16 %v7674
    %v7750 = vunpack.c.l.b16 %v7675
    %v7751 = vunpack.c.h.b16 %v7675
    %v7752 = vunpack.c.l.b16 %v7676
    %v7753 = vunpack.c.h.b16 %v7676
    %v7754 = vunpack.c.l.b16 %v7677
    %v7755 = vunpack.c.h.b16 %v7677
    %v7756 = vunpack.c.l.b16 %v7678
    %v7757 = vunpack.c.h.b16 %v7678
    %v7758 = vunpack.c.l.b16 %v7679
    %v7759 = vunpack.c.h.b16 %v7679
    %v7760 = vunpack.c.l.b16 %v7680
    %v7761 = vunpack.c.h.b16 %v7680
    %v7762 = vunpack.c.l.b16 %v7681
    %v7763 = vunpack.c.h.b16 %v7681
    %v7764 = vunpack.c.l.b16 %v7682
    %v7765 = vunpack.c.h.b16 %v7682
    %v7766 = vunpack.c.l.b16 %v7683
    %v7767 = vunpack.c.h.b16 %v7683
    %v7768 = vunpack.c.l.b16 %v7684
    %v7769 = vunpack.c.h.b16 %v7684
    %v7770 = vunpack.c.l.b16 %v7685
    %v7771 = vunpack.c.h.b16 %v7685
    %v7772 = vunpack.c.l.b16 %v7686
    %v7773 = vunpack.c.h.b16 %v7686
    %v7774 = vunpack.c.l.b16 %v7687
    %v7775 = vunpack.c.h.b16 %v7687
    %v7776 = vunpack.c.l.b16 %v7688
    %v7777 = vunpack.c.h.b16 %v7688
    %v7778 = vunpack.c.l.b16 %v7689
    %v7779 = vunpack.c.h.b16 %v7689
    %v7780 = vunpack.c.l.b16 %v7690
    %v7781 = vunpack.c.h.b16 %v7690
    %v7782 = vunpack.c.l.b16 %v7691
    %v7783 = vunpack.c.h.b16 %v7691
    %v7784 = vunpack.c.l.b16 %v7692
    %v7785 = vunpack.c.h.b16 %v7692
    %v7786 = vunpack.c.l.b16 %v7693
    %v7787 = vunpack.c.h.b16 %v7693
    %v7788 = vunpack.c.l.b16 %v7694
    %v7789 = vunpack.c.h.b16 %v7694
    %v7790 = vunpack.c.l.b16 %v7695
    %v7791 = vunpack.c.h.b16 %v7695
    %v7792 = vpack.c.b16 %v7732, %v7728
    %v7793 = vpack.c.b16 %v7733, %v7729
    %v7794 = vpack.c.b16 %v7734, %v7730
    %v7795 = vpack.c.b16 %v7735, %v7731
    %v7796 = vpack.c.b16 %v7740, %v7736
    %v7797 = vpack.c.b16 %v7741, %v7737
    %v7798 = vpack.c.b16 %v7742, %v7738
    %v7799 = vpack.c.b16 %v7743, %v7739
    %v7800 = vpack.c.b16 %v7748, %v7744
    %v7801 = vpack.c.b16 %v7749, %v7745
    %v7802 = vpack.c.b16 %v7750, %v7746
    %v7803 = vpack.c.b16 %v7751, %v7747
    %v7804 = vpack.c.b16 %v7756, %v7752
    %v7805 = vpack.c.b16 %v7757, %v7753
    %v7806 = vpack.c.b16 %v7758, %v7754
    %v7807 = vpack.c.b16 %v7759, %v7755
    %v7808 = vpack.c.b16 %v7764, %v7760
    %v7809 = vpack.c.b16 %v7765, %v7761
    %v7810 = vpack.c.b16 %v7766, %v7762
    %v7811 = vpack.c.b16 %v7767, %v7763
    %v7812 = vpack.c.b16 %v7772, %v7768
    %v7813 = vpack.c.b16 %v7773, %v7769
    %v7814 = vpack.c.b16 %v7774, %v7770
    %v7815 = vpack.c.b16 %v7775, %v7771
    %v7816 = vpack.c.b16 %v7780, %v7776
    %v7817 = vpack.c.b16 %v7781, %v7777
    %v7818 = vpack.c.b16 %v7782, %v7778
    %v7819 = vpack.c.b16 %v7783, %v7779
    %v7820 = vpack.c.b16 %v7788, %v7784
    %v7821 = vpack.c.b16 %v7789, %v7785
    %v7822 = vpack.c.b16 %v7790, %v7786
    %v7823 = vpack.c.b16 %v7791, %v7787
    %7856 = vmatprep.subr.bf16.mxu0 %v7821
    %7857 = vmatpush1.bf16.msra.mxu0 %v7820
    %7858 = vmatprep.subr.bf16.mxu0 %v7817
    %7859 = vmatpush1.bf16.msra.mxu0 %v7816
    %7860 = vmatprep.subr.bf16.mxu0 %v7813
    %7861 = vmatpush1.bf16.msra.mxu0 %v7812
    %7862 = vmatprep.subr.bf16.mxu0 %v7809
    %7863 = vmatpush1.bf16.msra.mxu0 %v7808
    %7864 = vmatprep.subr.bf16.mxu0 %v7805
    %7865 = vmatpush1.bf16.msra.mxu0 %v7804
    %7866 = vmatprep.subr.bf16.mxu0 %v7801
    %7867 = vmatpush1.bf16.msra.mxu0 %v7800
    %7868 = vmatprep.subr.bf16.mxu0 %v7797
    %7869 = vmatpush1.bf16.msra.mxu0 %v7796
    %7870 = vmatprep.subr.bf16.mxu0 %v7793
    %7871 = vmatpush1.bf16.msra.mxu0 %v7792
    %7872 = vmatprep.subr.bf16.mxu0 0
    %7873 = vmatpush2.bf16.msra.mxu0 0
    %7874 = vmatprep.subr.bf16.mxu0 0
    %7875 = vmatpush2.bf16.msra.mxu0 0
    %7876 = vmatprep.subr.bf16.mxu0 0
    %7877 = vmatpush2.bf16.msra.mxu0 0
    %7878 = vmatprep.subr.bf16.mxu0 0
    %7879 = vmatpush2.bf16.msra.mxu0 0
    %7880 = vmatprep.subr.bf16.mxu0 0
    %7881 = vmatpush2.bf16.msra.mxu0 0
    %7882 = vmatprep.subr.bf16.mxu0 0
    %7883 = vmatpush2.bf16.msra.mxu0 0
    %7884 = vmatprep.subr.bf16.mxu0 0
    %7885 = vmatpush2.bf16.msra.mxu0 0
    %7886 = vmatprep.subr.bf16.mxu0 0
    %7887 = vmatpush2.bf16.msra.mxu0 0
    %7888 = vmatprep.mubr.bf16.mxu0 0
    %7889 = vmatmul.mubr.bf16.gmra.mxu0 %v7663
    %v7890 = vpop.f32.mrf.mxu0
    %v7891 = vadd.f32 0.0, %v7890
    %v7892 = vpop.f32.mrf.mxu0
    %v7893 = vadd.f32 0.0, %v7892
    %v7894 = vpop.f32.mrf.mxu0
    %v7895 = vpop.f32.mrf.mxu0
    %7896 = vdwg.mxu0
    %7897 = vmatprep.subr.bf16.mxu0 %v7823
    %7898 = vmatpush1.bf16.msra.mxu0 %v7822
    %7899 = vmatprep.subr.bf16.mxu0 %v7819
    %7900 = vmatpush1.bf16.msra.mxu0 %v7818
    %7901 = vmatprep.subr.bf16.mxu0 %v7815
    %7902 = vmatpush1.bf16.msra.mxu0 %v7814
    %7903 = vmatprep.subr.bf16.mxu0 %v7811
    %7904 = vmatpush1.bf16.msra.mxu0 %v7810
    %7905 = vmatprep.subr.bf16.mxu0 %v7807
    %7906 = vmatpush1.bf16.msra.mxu0 %v7806
    %7907 = vmatprep.subr.bf16.mxu0 %v7803
    %7908 = vmatpush1.bf16.msra.mxu0 %v7802
    %7909 = vmatprep.subr.bf16.mxu0 %v7799
    %7910 = vmatpush1.bf16.msra.mxu0 %v7798
    %7911 = vmatprep.subr.bf16.mxu0 %v7795
    %7912 = vmatpush1.bf16.msra.mxu0 %v7794
    %7913 = vmatprep.subr.bf16.mxu0 0
    %7914 = vmatpush2.bf16.msra.mxu0 0
    %7915 = vmatprep.subr.bf16.mxu0 0
    %7916 = vmatpush2.bf16.msra.mxu0 0
    %7917 = vmatprep.subr.bf16.mxu0 0
    %7918 = vmatpush2.bf16.msra.mxu0 0
    %7919 = vmatprep.subr.bf16.mxu0 0
    %7920 = vmatpush2.bf16.msra.mxu0 0
    %7921 = vmatprep.subr.bf16.mxu0 0
    %7922 = vmatpush2.bf16.msra.mxu0 0
    %7923 = vmatprep.subr.bf16.mxu0 0
    %7924 = vmatpush2.bf16.msra.mxu0 0
    %7925 = vmatprep.subr.bf16.mxu0 0
    %7926 = vmatpush2.bf16.msra.mxu0 0
    %7927 = vmatprep.subr.bf16.mxu0 0
    %7928 = vmatpush2.bf16.msra.mxu0 0
    %7929 = vmatprep.mubr.bf16.mxu0 0
    %7930 = vmatmul.mubr.bf16.gmra.mxu0 %v7663
    %v7931 = vpop.f32.mrf.mxu0
    %v7932 = vadd.f32 0.0, %v7931
    %v7933 = vpop.f32.mrf.mxu0
    %v7934 = vadd.f32 0.0, %v7933
    %v7935 = vpop.f32.mrf.mxu0
    %v7936 = vpop.f32.mrf.mxu0
    %7937 = vdwg.mxu0
    %v7970 = vunpack.c.l.b16 %v7631
    %v7971 = vunpack.c.h.b16 %v7631
    %v7972 = vunpack.c.l.b16 %v7632
    %v7973 = vunpack.c.h.b16 %v7632
    %v7974 = vunpack.c.l.b16 %v7633
    %v7975 = vunpack.c.h.b16 %v7633
    %v7976 = vunpack.c.l.b16 %v7634
    %v7977 = vunpack.c.h.b16 %v7634
    %v7978 = vunpack.c.l.b16 %v7635
    %v7979 = vunpack.c.h.b16 %v7635
    %v7980 = vunpack.c.l.b16 %v7636
    %v7981 = vunpack.c.h.b16 %v7636
    %v7982 = vunpack.c.l.b16 %v7637
    %v7983 = vunpack.c.h.b16 %v7637
    %v7984 = vunpack.c.l.b16 %v7638
    %v7985 = vunpack.c.h.b16 %v7638
    %v7986 = vunpack.c.l.b16 %v7639
    %v7987 = vunpack.c.h.b16 %v7639
    %v7988 = vunpack.c.l.b16 %v7640
    %v7989 = vunpack.c.h.b16 %v7640
    %v7990 = vunpack.c.l.b16 %v7641
    %v7991 = vunpack.c.h.b16 %v7641
    %v7992 = vunpack.c.l.b16 %v7642
    %v7993 = vunpack.c.h.b16 %v7642
    %v7994 = vunpack.c.l.b16 %v7643
    %v7995 = vunpack.c.h.b16 %v7643
    %v7996 = vunpack.c.l.b16 %v7644
    %v7997 = vunpack.c.h.b16 %v7644
    %v7998 = vunpack.c.l.b16 %v7645
    %v7999 = vunpack.c.h.b16 %v7645
    %v8000 = vunpack.c.l.b16 %v7646
    %v8001 = vunpack.c.h.b16 %v7646
    %v8002 = vunpack.c.l.b16 %v7647
    %v8003 = vunpack.c.h.b16 %v7647
    %v8004 = vunpack.c.l.b16 %v7648
    %v8005 = vunpack.c.h.b16 %v7648
    %v8006 = vunpack.c.l.b16 %v7649
    %v8007 = vunpack.c.h.b16 %v7649
    %v8008 = vunpack.c.l.b16 %v7650
    %v8009 = vunpack.c.h.b16 %v7650
    %v8010 = vunpack.c.l.b16 %v7651
    %v8011 = vunpack.c.h.b16 %v7651
    %v8012 = vunpack.c.l.b16 %v7652
    %v8013 = vunpack.c.h.b16 %v7652
    %v8014 = vunpack.c.l.b16 %v7653
    %v8015 = vunpack.c.h.b16 %v7653
    %v8016 = vunpack.c.l.b16 %v7654
    %v8017 = vunpack.c.h.b16 %v7654
    %v8018 = vunpack.c.l.b16 %v7655
    %v8019 = vunpack.c.h.b16 %v7655
    %v8020 = vunpack.c.l.b16 %v7656
    %v8021 = vunpack.c.h.b16 %v7656
    %v8022 = vunpack.c.l.b16 %v7657
    %v8023 = vunpack.c.h.b16 %v7657
    %v8024 = vunpack.c.l.b16 %v7658
    %v8025 = vunpack.c.h.b16 %v7658
    %v8026 = vunpack.c.l.b16 %v7659
    %v8027 = vunpack.c.h.b16 %v7659
    %v8028 = vunpack.c.l.b16 %v7660
    %v8029 = vunpack.c.h.b16 %v7660
    %v8030 = vunpack.c.l.b16 %v7661
    %v8031 = vunpack.c.h.b16 %v7661
    %v8032 = vunpack.c.l.b16 %v7662
    %v8033 = vunpack.c.h.b16 %v7662
    %v8034 = vpack.c.b16 %v7974, %v7970
    %v8035 = vpack.c.b16 %v7975, %v7971
    %v8036 = vpack.c.b16 %v7976, %v7972
    %v8037 = vpack.c.b16 %v7977, %v7973
    %v8038 = vpack.c.b16 %v7982, %v7978
    %v8039 = vpack.c.b16 %v7983, %v7979
    %v8040 = vpack.c.b16 %v7984, %v7980
    %v8041 = vpack.c.b16 %v7985, %v7981
    %v8042 = vpack.c.b16 %v7990, %v7986
    %v8043 = vpack.c.b16 %v7991, %v7987
    %v8044 = vpack.c.b16 %v7992, %v7988
    %v8045 = vpack.c.b16 %v7993, %v7989
    %v8046 = vpack.c.b16 %v7998, %v7994
    %v8047 = vpack.c.b16 %v7999, %v7995
    %v8048 = vpack.c.b16 %v8000, %v7996
    %v8049 = vpack.c.b16 %v8001, %v7997
    %v8050 = vpack.c.b16 %v8006, %v8002
    %v8051 = vpack.c.b16 %v8007, %v8003
    %v8052 = vpack.c.b16 %v8008, %v8004
    %v8053 = vpack.c.b16 %v8009, %v8005
    %v8054 = vpack.c.b16 %v8014, %v8010
    %v8055 = vpack.c.b16 %v8015, %v8011
    %v8056 = vpack.c.b16 %v8016, %v8012
    %v8057 = vpack.c.b16 %v8017, %v8013
    %v8058 = vpack.c.b16 %v8022, %v8018
    %v8059 = vpack.c.b16 %v8023, %v8019
    %v8060 = vpack.c.b16 %v8024, %v8020
    %v8061 = vpack.c.b16 %v8025, %v8021
    %v8062 = vpack.c.b16 %v8030, %v8026
    %v8063 = vpack.c.b16 %v8031, %v8027
    %v8064 = vpack.c.b16 %v8032, %v8028
    %v8065 = vpack.c.b16 %v8033, %v8029
    %8098 = vmatprep.subr.bf16.mxu0 %v8063
    %8099 = vmatpush1.bf16.msra.mxu0 %v8062
    %8100 = vmatprep.subr.bf16.mxu0 %v8059
    %8101 = vmatpush1.bf16.msra.mxu0 %v8058
    %8102 = vmatprep.subr.bf16.mxu0 %v8055
    %8103 = vmatpush1.bf16.msra.mxu0 %v8054
    %8104 = vmatprep.subr.bf16.mxu0 %v8051
    %8105 = vmatpush1.bf16.msra.mxu0 %v8050
    %8106 = vmatprep.subr.bf16.mxu0 %v8047
    %8107 = vmatpush1.bf16.msra.mxu0 %v8046
    %8108 = vmatprep.subr.bf16.mxu0 %v8043
    %8109 = vmatpush1.bf16.msra.mxu0 %v8042
    %8110 = vmatprep.subr.bf16.mxu0 %v8039
    %8111 = vmatpush1.bf16.msra.mxu0 %v8038
    %8112 = vmatprep.subr.bf16.mxu0 %v8035
    %8113 = vmatpush1.bf16.msra.mxu0 %v8034
    %8114 = vmatprep.subr.bf16.mxu0 0
    %8115 = vmatpush2.bf16.msra.mxu0 0
    %8116 = vmatprep.subr.bf16.mxu0 0
    %8117 = vmatpush2.bf16.msra.mxu0 0
    %8118 = vmatprep.subr.bf16.mxu0 0
    %8119 = vmatpush2.bf16.msra.mxu0 0
    %8120 = vmatprep.subr.bf16.mxu0 0
    %8121 = vmatpush2.bf16.msra.mxu0 0
    %8122 = vmatprep.subr.bf16.mxu0 0
    %8123 = vmatpush2.bf16.msra.mxu0 0
    %8124 = vmatprep.subr.bf16.mxu0 0
    %8125 = vmatpush2.bf16.msra.mxu0 0
    %8126 = vmatprep.subr.bf16.mxu0 0
    %8127 = vmatpush2.bf16.msra.mxu0 0
    %8128 = vmatprep.subr.bf16.mxu0 0
    %8129 = vmatpush2.bf16.msra.mxu0 0
    %8130 = vmatprep.mubr.bf16.mxu0 0
    %8131 = vmatmul.mubr.bf16.gmra.mxu0 %v7630
    %v8132 = vpop.f32.mrf.mxu0
    %v8133 = vadd.f32 %v7891, %v8132
    %v8134 = vpop.f32.mrf.mxu0
    %v8135 = vadd.f32 %v7893, %v8134
    %v8136 = vpop.f32.mrf.mxu0
    %v8137 = vpop.f32.mrf.mxu0
    %8138 = vdwg.mxu0
    %8139 = vmatprep.subr.bf16.mxu0 %v8065
    %8140 = vmatpush1.bf16.msra.mxu0 %v8064
    %8141 = vmatprep.subr.bf16.mxu0 %v8061
    %8142 = vmatpush1.bf16.msra.mxu0 %v8060
    %8143 = vmatprep.subr.bf16.mxu0 %v8057
    %8144 = vmatpush1.bf16.msra.mxu0 %v8056
    %8145 = vmatprep.subr.bf16.mxu0 %v8053
    %8146 = vmatpush1.bf16.msra.mxu0 %v8052
    %8147 = vmatprep.subr.bf16.mxu0 %v8049
    %8148 = vmatpush1.bf16.msra.mxu0 %v8048
    %8149 = vmatprep.subr.bf16.mxu0 %v8045
    %8150 = vmatpush1.bf16.msra.mxu0 %v8044
    %8151 = vmatprep.subr.bf16.mxu0 %v8041
    %8152 = vmatpush1.bf16.msra.mxu0 %v8040
    %8153 = vmatprep.subr.bf16.mxu0 %v8037
    %8154 = vmatpush1.bf16.msra.mxu0 %v8036
    %8155 = vmatprep.subr.bf16.mxu0 0
    %8156 = vmatpush2.bf16.msra.mxu0 0
    %8157 = vmatprep.subr.bf16.mxu0 0
    %8158 = vmatpush2.bf16.msra.mxu0 0
    %8159 = vmatprep.subr.bf16.mxu0 0
    %8160 = vmatpush2.bf16.msra.mxu0 0
    %8161 = vmatprep.subr.bf16.mxu0 0
    %8162 = vmatpush2.bf16.msra.mxu0 0
    %8163 = vmatprep.subr.bf16.mxu0 0
    %8164 = vmatpush2.bf16.msra.mxu0 0
    %8165 = vmatprep.subr.bf16.mxu0 0
    %8166 = vmatpush2.bf16.msra.mxu0 0
    %8167 = vmatprep.subr.bf16.mxu0 0
    %8168 = vmatpush2.bf16.msra.mxu0 0
    %8169 = vmatprep.subr.bf16.mxu0 0
    %8170 = vmatpush2.bf16.msra.mxu0 0
    %8171 = vmatprep.mubr.bf16.mxu0 0
    %8172 = vmatmul.mubr.bf16.gmra.mxu0 %v7630
    %v8173 = vpop.f32.mrf.mxu0
    %v8174 = vadd.f32 %v7932, %v8173
    %v8175 = vpop.f32.mrf.mxu0
    %v8176 = vadd.f32 %v7934, %v8175
    %v8177 = vpop.f32.mrf.mxu0
    %v8178 = vpop.f32.mrf.mxu0
    %8179 = vdwg.mxu0
    %v8180 = vadd.f32 %v8133, %v142
    %v8181 = vadd.f32 %v8135, %v146
    %v8182 = vadd.f32 %v8174, %v150
    %v8183 = vadd.f32 %v8176, %v154
    %v8184 = vxor.u32 %v8180, 2147483648
    %v8185 = vxor.u32 %v8181, 2147483648
    %v8186 = vxor.u32 %v8182, 2147483648
    %v8187 = vmul.f32 %v8184, 1.442695
    %v8188 = vpow.pop %v8187
    %v8189 = vmul.f32 %v8185, 1.442695
    %v8190 = vpow.pop %v8189
    %v8191 = vmul.f32 %v8186, 1.442695
    %v8192 = vpow.pop %v8191
    %v8193 = vadd.f32 %v8188, 1.0
    %v8194 = vadd.f32 %v8190, 1.0
    %v8195 = vadd.f32 %v8192, 1.0
    %v8196 = vrcp.pop %v8193
    %v8197 = vmul.f32 1.0, %v8196
    %v8198 = vrcp.pop %v8194
    %v8199 = vmul.f32 1.0, %v8198
    %v8200 = vrcp.pop %v8195
    %v8201 = vmul.f32 1.0, %v8200
    %v8202 = vtanh.pop %v8183
    %v8203 = vmul.f32 %v8199, %v7202
    %v8204 = vmul.f32 %v8197, %v8202
    %v8205 = vadd.f32 %v8203, %v8204
    %v8206 = vtanh.pop %v8205
    %v8207 = vmul.f32 %v8201, %v8206
    %v8208 = vsel %vm7627, %v8207, %v7201
    %v8209 = vsel %vm7627, %v8205, %v7202
    %v8210 = vsel %vm7627, %v8207, 0.0
    %v8211 = vpack.c.bf16 %v8210, %v8210
    %s8212 = scalar_lea.vmem [#allocation13], 28
    %8213 = vst [vmem:[%s8212] sm:$0xf] %v8211
    %8214 = vst [vmem:[#allocation2] sm:$0xff] %v7628
    %8215 = vst [vmem:[#allocation3] sm:$0xff] %v7629
    %8216 = vst [vmem:[%s110] sm:$0xff] %v8208
    %8217 = vst [vmem:[%s113] sm:$0xff] %v8209
    // Predicated region
    $region58: #{tpu_custom_call.1} parent=1 // pred_check
      _
    $region59: #{tpu_custom_call.1} parent=1 // pred_check_branch
      %8219 = sbr.rel (0) target = $region61
    $region60: #{tpu_custom_call.1} parent=1 // pred_region
      %s8221 = ssub.s32 512, 512
      %8222 = vsyncadd [#allocation6], %s8221
      %s8223 = sshll.u32 [#allocation13], 4
      %s8224 = int_to_ptr.vmem [resolvable:$true] %s8223
      %8229 = dma.vmem_to_hbm [thread:$0]  %s8224, 512, %s8, [#allocation6], 64, 64, 4
    $region61: #{tpu_custom_call.1} parent=1 // pred_fallthru
      _
    // Predicated region
    $region62: #{tpu_custom_call.1} parent=1 // pred_check
      _
    $region63: #{tpu_custom_call.1} parent=1 // pred_check_branch
      %8231 = sbr.rel (0) target = $region65
    $region64: #{tpu_custom_call.1} parent=1 // pred_region
      %8232 = dma.done [#allocation6], 512
    $region65: #{tpu_custom_call.1} parent=1 // pred_fallthru
      _
    %8233 = vsyncpa [#allocation5], 1
    %8234 = vsyncpa [#allocation8], 1
    %8235 = vsyncpa [#allocation11], 1
    %8236 = vsyncpa [#allocation6], 1

</llo_original>
